<compile_context>
chip_gen: v7x
topology: tpu7x:2x2x1
jax: 0.10.0
libtpu: 0.0.40
codegen_flags: <defaults>
</compile_context>

<pallas_src>
import functools

import jax
import jax.numpy as jnp
from jax.experimental import pallas as pl
from jax.experimental.pallas import tpu as pltpu


def _conv_relu_kernel(w_ref, b_ref, x_ref, o_ref, xp_ref, *, kernel_size, dilation):
    # w_ref : (Cout*Cin*K*K,)       SMEM  flat OIHW weights (scalar-prefetched)
    # b_ref : (Cout,)               SMEM  bias (scalar-prefetched)
    # x_ref : (1, Cin, H, W)        VMEM  input tile (one image)
    # o_ref : (1, co_block, H, W)   VMEM  output tile (NCHW, W on the lane axis)
    # xp_ref: (Cin, H+2p, W+2p)     VMEM  f32 scratch holding the zero-halo input
    _, cin, H, W = x_ref.shape
    _, co_block, _, _ = o_ref.shape
    _, Hp, Wp = xp_ref.shape
    K = kernel_size
    d = dilation
    p = (Hp - H) // 2
    kk = K * K

    co_base = pl.program_id(1) * co_block

    # Build the zero-halo input only once per image (first Cout block).  The c grid axis is
    # "arbitrary", so each core's first step for an image is always c == 0.  Only the border
    # is zeroed; the interior is overwritten by the (upcasting) copy.
    @pl.when(pl.program_id(1) == 0)
    def _build_halo():
        if p > 0:
            xp_ref[:, 0:p, :] = jnp.zeros((cin, p, Wp), jnp.float32)
            xp_ref[:, Hp - p:Hp, :] = jnp.zeros((cin, p, Wp), jnp.float32)
            xp_ref[:, p:p + H, 0:p] = jnp.zeros((cin, H, p), jnp.float32)
            xp_ref[:, p:p + H, Wp - p:Wp] = jnp.zeros((cin, H, p), jnp.float32)
        xp_ref[:, p:p + H, p:p + W] = x_ref[0].astype(jnp.float32)

    # Direct conv, co outermost: one live (H, W) f32 accumulator at a time (no vreg spills
    # at production tile sizes).  Bias folded into the init; per (ci, kh) a full-width row
    # slab is read once (already f32) and kw windows are cheap static lane shifts.
    for co in range(co_block):
        acc = jnp.full((H, W), b_ref[co_base + co], jnp.float32)
        for ci in range(cin):
            for kh in range(K):
                rows = xp_ref[ci, kh * d:kh * d + H, :]              # (H, W + 2p), f32
                for kw in range(K):
                    w_idx = ((co_base + co) * cin + ci) * kk + kh * K + kw
                    acc = acc + rows[:, kw * d:kw * d + W] * w_ref[w_idx]
        # Fused ReLU epilogue and NCHW store (lane axis = W).
        o_ref[0, co] = jnp.maximum(acc, 0.0).astype(o_ref.dtype)


@functools.partial(jax.jit, static_argnames=("kernel_size", "dilation"))
def conv_bn_relu(x_nchw, w_oihw, bias, *, kernel_size=3, dilation=1):
    """relu(conv2d(x, w, b, stride=1, padding=k//2 if d==1 else d, dilation=d)) in NCHW."""
    N, Cin, H, W = x_nchw.shape
    Cout = w_oihw.shape[0]
    K = kernel_size
    padding = K // 2 if dilation == 1 else dilation
    # Same-size output only (odd K with d=1, or K=3 with any dilation) -- matches the module.
    assert dilation * (K - 1) == 2 * padding, "output size would differ from input"

    # Cout tile per grid step: big enough to amortize block overhead, small enough that the
    # per-step output block stays modest.  (Prime Cout degrades to 1 -- perf cliff, not a bug.)
    co_block = min(Cout, 8)
    while Cout % co_block:
        co_block -= 1

    Hp, Wp = H + 2 * padding, W + 2 * padding
    w_flat = w_oihw.reshape(-1).astype(jnp.float32)   # OIHW is contiguous -> free reshape
    b_flat = bias.reshape(-1).astype(jnp.float32)

    # VMEM limit sized from the actual per-step footprint (double-buffered in/out blocks +
    # the f32 halo scratch) with headroom, instead of a hard-coded 48 MiB.
    elt = jnp.dtype(x_nchw.dtype).itemsize
    step_bytes = (2 * Cin * H * W * elt            # double-buffered input block
                  + 2 * co_block * H * W * elt     # double-buffered output block
                  + Cin * Hp * Wp * 4)             # f32 halo scratch
    vmem_limit = min(max(2 * step_bytes + (8 << 20), 32 << 20), 60 << 20)

    kernel = functools.partial(_conv_relu_kernel, kernel_size=K, dilation=dilation)

    return pl.pallas_call(
        kernel,
        out_shape=jax.ShapeDtypeStruct((N, Cout, H, W), x_nchw.dtype),
        grid_spec=pltpu.PrefetchScalarGridSpec(
            num_scalar_prefetch=2,      # weights + bias land in SMEM before the grid runs
            grid=(N, Cout // co_block),
            in_specs=[
                pl.BlockSpec((1, Cin, H, W), lambda n, c, w, b: (n, 0, 0, 0)),
            ],
            out_specs=pl.BlockSpec((1, co_block, H, W), lambda n, c, w, b: (n, c, 0, 0)),
            scratch_shapes=[pltpu.VMEM((Cin, Hp, Wp), jnp.float32)],
        ),
        compiler_params=pltpu.CompilerParams(
            # n parallel (megacore); c arbitrary so the per-image halo build at c==0 is
            # always executed before the other Cout blocks of that image on the same core.
            dimension_semantics=("parallel", "arbitrary"),
            vmem_limit_bytes=vmem_limit,
        ),
    )(w_flat, b_flat, x_nchw)


def _reference(x, w, b, *, dilation):
    K = w.shape[-1]
    p = K // 2 if dilation == 1 else dilation
    y = jax.lax.conv_general_dilated(
        x, w, window_strides=(1, 1), padding=((p, p), (p, p)),
        rhs_dilation=(dilation, dilation),
        dimension_numbers=("NCHW", "OIHW", "NCHW"))
    return jnp.maximum(y + b[None, :, None, None], 0.0)


if __name__ == "__main__":
    key = jax.random.PRNGKey(0)
    kx, kw, kb = jax.random.split(key, 3)

    N, Cin, Cout, H, W = 2, 4, 8, 16, 16
    K = 3

    x = jax.random.normal(kx, (N, Cin, H, W), dtype=jnp.float32)
    # Deterministic synthetic params (PyTorch-style fan-in uniform bound).
    fan_in = Cin * K * K
    bound = 1.0 / (fan_in ** 0.5)
    w = jax.random.uniform(kw, (Cout, Cin, K, K), jnp.float32, -bound, bound)
    b = jax.random.uniform(kb, (Cout,), jnp.float32, -bound, bound)

    # dilation=1 (padding = k//2)
    out = conv_bn_relu(x, w, b, kernel_size=K, dilation=1)
    out = jax.block_until_ready(out)
    ref = _reference(x, w, b, dilation=1)
    assert out.shape == (N, Cout, H, W)
    assert jnp.allclose(out, ref, atol=1e-4, rtol=1e-5), "mismatch vs reference (dilation=1)"

    # dilation=2 (padding = dilation), same module semantics.
    out2 = conv_bn_relu(x, w, b, kernel_size=K, dilation=2)
    out2 = jax.block_until_ready(out2)
    ref2 = _reference(x, w, b, dilation=2)
    assert jnp.allclose(out2, ref2, atol=1e-4, rtol=1e-5), "mismatch vs reference (dilation=2)"

    print("KERNEL_OK")
</pallas_src>

<mosaic_0001>
module attributes {stable_mosaic.version = 11 : i64} {
  func.func @_conv_relu_kernel(%arg0: i32, %arg1: i32, %arg2: memref<288xf32, #tpu.memory_space<smem>>, %arg3: memref<8xf32, #tpu.memory_space<smem>>, %arg4: memref<1x4x16x16xf32, #tpu.memory_space<vmem>>, %arg5: memref<1x8x16x16xf32, #tpu.memory_space<vmem>>, %arg6: memref<4x18x18xf32, #tpu.memory_space<vmem>>) attributes {dimension_semantics = [#tpu.dimension_semantics<parallel>, #tpu.dimension_semantics<arbitrary>], iteration_bounds = array<i64: 2, 1>, scalar_prefetch = 2 : i64, scratch_operands = 1 : i64, tpu.core_type = #tpu.core_type<tc>, window_params = [{transform_indices = @transform_0, window_bounds = array<i64: 1, 4, 16, 16>}, {transform_indices = @transform_1, window_bounds = array<i64: 1, 8, 16, 16>}]} {
    %c8_i32 = arith.constant 8 : i32
    %0 = arith.muli %arg1, %c8_i32 : i32
    %c0_i32 = arith.constant 0 : i32
    %1 = arith.cmpi eq, %arg1, %c0_i32 : i32
    %2 = arith.extui %1 : i1 to i32
    %c0_i32_0 = arith.constant 0 : i32
    %3 = arith.cmpi ne, %2, %c0_i32_0 : i32
    scf.if %3 {
      %cst_2048 = arith.constant 0.000000e+00 : f32
      %3724 = vector.broadcast %cst_2048 : f32 to vector<4x1x18xf32>
      %c0_2049 = arith.constant 0 : index
      %c0_2050 = arith.constant 0 : index
      %c0_2051 = arith.constant 0 : index
      %3725 = vector.load %arg6[%c0_2049, %c0_2050, %c0_2051] : memref<4x18x18xf32, #tpu.memory_space<vmem>>, vector<4x1x18xf32>
      tpu.vector_store %arg6[%c0_2049, %c0_2050, %c0_2051], %3724 {strides = array<i32>} : memref<4x18x18xf32, #tpu.memory_space<vmem>>, vector<4x1x18xf32>,
      %cst_2052 = arith.constant 0.000000e+00 : f32
      %3726 = vector.broadcast %cst_2052 : f32 to vector<4x1x18xf32>
      %c0_2053 = arith.constant 0 : index
      %c17 = arith.constant 17 : index
      %c0_2054 = arith.constant 0 : index
      %3727 = vector.load %arg6[%c0_2053, %c17, %c0_2054] : memref<4x18x18xf32, #tpu.memory_space<vmem>>, vector<4x1x18xf32>
      tpu.vector_store %arg6[%c0_2053, %c17, %c0_2054], %3726 {strides = array<i32>} : memref<4x18x18xf32, #tpu.memory_space<vmem>>, vector<4x1x18xf32>,
      %cst_2055 = arith.constant 0.000000e+00 : f32
      %3728 = vector.broadcast %cst_2055 : f32 to vector<4x16x1xf32>
      %c0_2056 = arith.constant 0 : index
      %c1_2057 = arith.constant 1 : index
      %c0_2058 = arith.constant 0 : index
      %3729 = vector.load %arg6[%c0_2056, %c1_2057, %c0_2058] : memref<4x18x18xf32, #tpu.memory_space<vmem>>, vector<4x16x1xf32>
      tpu.vector_store %arg6[%c0_2056, %c1_2057, %c0_2058], %3728 {strides = array<i32>} : memref<4x18x18xf32, #tpu.memory_space<vmem>>, vector<4x16x1xf32>,
      %cst_2059 = arith.constant 0.000000e+00 : f32
      %3730 = vector.broadcast %cst_2059 : f32 to vector<4x16x1xf32>
      %c0_2060 = arith.constant 0 : index
      %c1_2061 = arith.constant 1 : index
      %c17_2062 = arith.constant 17 : index
      %3731 = vector.load %arg6[%c0_2060, %c1_2061, %c17_2062] : memref<4x18x18xf32, #tpu.memory_space<vmem>>, vector<4x16x1xf32>
      tpu.vector_store %arg6[%c0_2060, %c1_2061, %c17_2062], %3730 {strides = array<i32>} : memref<4x18x18xf32, #tpu.memory_space<vmem>>, vector<4x16x1xf32>,
      %c0_2063 = arith.constant 0 : index
      %c0_2064 = arith.constant 0 : index
      %c0_2065 = arith.constant 0 : index
      %c0_2066 = arith.constant 0 : index
      %3732 = vector.load %arg4[%c0_2063, %c0_2064, %c0_2065, %c0_2066] : memref<1x4x16x16xf32, #tpu.memory_space<vmem>>, vector<1x4x16x16xf32>
      %3733 = vector.shape_cast %3732 : vector<1x4x16x16xf32> to vector<4x16x16xf32>
      %c0_2067 = arith.constant 0 : index
      %c1_2068 = arith.constant 1 : index
      %c1_2069 = arith.constant 1 : index
      %3734 = vector.load %arg6[%c0_2067, %c1_2068, %c1_2069] : memref<4x18x18xf32, #tpu.memory_space<vmem>>, vector<4x16x16xf32>
      tpu.vector_store %arg6[%c0_2067, %c1_2068, %c1_2069], %3733 {strides = array<i32>} : memref<4x18x18xf32, #tpu.memory_space<vmem>>, vector<4x16x16xf32>,
    } else {
    }
    %c0_i32_1 = arith.constant 0 : i32
    %4 = arith.addi %0, %c0_i32_1 : i32
    %5 = arith.index_cast %4 : i32 to index
    %6 = memref.load %arg3[%5] : memref<8xf32, #tpu.memory_space<smem>>
    %7 = vector.broadcast %6 : f32 to vector<16x16xf32>
    %c0 = arith.constant 0 : index
    %c0_2 = arith.constant 0 : index
    %c0_3 = arith.constant 0 : index
    %8 = vector.load %arg6[%c0, %c0_2, %c0_3] : memref<4x18x18xf32, #tpu.memory_space<vmem>>, vector<1x16x18xf32>
    %9 = vector.shape_cast %8 : vector<1x16x18xf32> to vector<16x18xf32>
    %c0_i32_4 = arith.constant 0 : i32
    %10 = arith.addi %0, %c0_i32_4 : i32
    %c4_i32 = arith.constant 4 : i32
    %11 = arith.muli %10, %c4_i32 : i32
    %c0_i32_5 = arith.constant 0 : i32
    %12 = arith.addi %11, %c0_i32_5 : i32
    %c9_i32 = arith.constant 9 : i32
    %13 = arith.muli %12, %c9_i32 : i32
    %c0_i32_6 = arith.constant 0 : i32
    %14 = arith.addi %13, %c0_i32_6 : i32
    %c0_i32_7 = arith.constant 0 : i32
    %15 = arith.addi %14, %c0_i32_7 : i32
    %16 = vector.extract_strided_slice %9 {offsets = [0, 0], sizes = [16, 16], strides = [1, 1]} : vector<16x18xf32> to vector<16x16xf32>
    %17 = arith.index_cast %15 : i32 to index
    %18 = memref.load %arg2[%17] : memref<288xf32, #tpu.memory_space<smem>>
    %19 = vector.broadcast %18 : f32 to vector<16x16xf32>
    %20 = arith.mulf %16, %19 : vector<16x16xf32>
    %21 = arith.addf %7, %20 : vector<16x16xf32>
    %c0_i32_8 = arith.constant 0 : i32
    %22 = arith.addi %0, %c0_i32_8 : i32
    %c4_i32_9 = arith.constant 4 : i32
    %23 = arith.muli %22, %c4_i32_9 : i32
    %c0_i32_10 = arith.constant 0 : i32
    %24 = arith.addi %23, %c0_i32_10 : i32
    %c9_i32_11 = arith.constant 9 : i32
    %25 = arith.muli %24, %c9_i32_11 : i32
    %c0_i32_12 = arith.constant 0 : i32
    %26 = arith.addi %25, %c0_i32_12 : i32
    %c1_i32 = arith.constant 1 : i32
    %27 = arith.addi %26, %c1_i32 : i32
    %28 = vector.extract_strided_slice %9 {offsets = [0, 1], sizes = [16, 16], strides = [1, 1]} : vector<16x18xf32> to vector<16x16xf32>
    %29 = arith.index_cast %27 : i32 to index
    %30 = memref.load %arg2[%29] : memref<288xf32, #tpu.memory_space<smem>>
    %31 = vector.broadcast %30 : f32 to vector<16x16xf32>
    %32 = arith.mulf %28, %31 : vector<16x16xf32>
    %33 = arith.addf %21, %32 : vector<16x16xf32>
    %c0_i32_13 = arith.constant 0 : i32
    %34 = arith.addi %0, %c0_i32_13 : i32
    %c4_i32_14 = arith.constant 4 : i32
    %35 = arith.muli %34, %c4_i32_14 : i32
    %c0_i32_15 = arith.constant 0 : i32
    %36 = arith.addi %35, %c0_i32_15 : i32
    %c9_i32_16 = arith.constant 9 : i32
    %37 = arith.muli %36, %c9_i32_16 : i32
    %c0_i32_17 = arith.constant 0 : i32
    %38 = arith.addi %37, %c0_i32_17 : i32
    %c2_i32 = arith.constant 2 : i32
    %39 = arith.addi %38, %c2_i32 : i32
    %40 = vector.extract_strided_slice %9 {offsets = [0, 2], sizes = [16, 16], strides = [1, 1]} : vector<16x18xf32> to vector<16x16xf32>
    %41 = arith.index_cast %39 : i32 to index
    %42 = memref.load %arg2[%41] : memref<288xf32, #tpu.memory_space<smem>>
    %43 = vector.broadcast %42 : f32 to vector<16x16xf32>
    %44 = arith.mulf %40, %43 : vector<16x16xf32>
    %45 = arith.addf %33, %44 : vector<16x16xf32>
    %c0_18 = arith.constant 0 : index
    %c1 = arith.constant 1 : index
    %c0_19 = arith.constant 0 : index
    %46 = vector.load %arg6[%c0_18, %c1, %c0_19] : memref<4x18x18xf32, #tpu.memory_space<vmem>>, vector<1x16x18xf32>
    %47 = vector.shape_cast %46 : vector<1x16x18xf32> to vector<16x18xf32>
    %c0_i32_20 = arith.constant 0 : i32
    %48 = arith.addi %0, %c0_i32_20 : i32
    %c4_i32_21 = arith.constant 4 : i32
    %49 = arith.muli %48, %c4_i32_21 : i32
    %c0_i32_22 = arith.constant 0 : i32
    %50 = arith.addi %49, %c0_i32_22 : i32
    %c9_i32_23 = arith.constant 9 : i32
    %51 = arith.muli %50, %c9_i32_23 : i32
    %c3_i32 = arith.constant 3 : i32
    %52 = arith.addi %51, %c3_i32 : i32
    %c0_i32_24 = arith.constant 0 : i32
    %53 = arith.addi %52, %c0_i32_24 : i32
    %54 = vector.extract_strided_slice %47 {offsets = [0, 0], sizes = [16, 16], strides = [1, 1]} : vector<16x18xf32> to vector<16x16xf32>
    %55 = arith.index_cast %53 : i32 to index
    %56 = memref.load %arg2[%55] : memref<288xf32, #tpu.memory_space<smem>>
    %57 = vector.broadcast %56 : f32 to vector<16x16xf32>
    %58 = arith.mulf %54, %57 : vector<16x16xf32>
    %59 = arith.addf %45, %58 : vector<16x16xf32>
    %c0_i32_25 = arith.constant 0 : i32
    %60 = arith.addi %0, %c0_i32_25 : i32
    %c4_i32_26 = arith.constant 4 : i32
    %61 = arith.muli %60, %c4_i32_26 : i32
    %c0_i32_27 = arith.constant 0 : i32
    %62 = arith.addi %61, %c0_i32_27 : i32
    %c9_i32_28 = arith.constant 9 : i32
    %63 = arith.muli %62, %c9_i32_28 : i32
    %c3_i32_29 = arith.constant 3 : i32
    %64 = arith.addi %63, %c3_i32_29 : i32
    %c1_i32_30 = arith.constant 1 : i32
    %65 = arith.addi %64, %c1_i32_30 : i32
    %66 = vector.extract_strided_slice %47 {offsets = [0, 1], sizes = [16, 16], strides = [1, 1]} : vector<16x18xf32> to vector<16x16xf32>
    %67 = arith.index_cast %65 : i32 to index
    %68 = memref.load %arg2[%67] : memref<288xf32, #tpu.memory_space<smem>>
    %69 = vector.broadcast %68 : f32 to vector<16x16xf32>
    %70 = arith.mulf %66, %69 : vector<16x16xf32>
    %71 = arith.addf %59, %70 : vector<16x16xf32>
    %c0_i32_31 = arith.constant 0 : i32
    %72 = arith.addi %0, %c0_i32_31 : i32
    %c4_i32_32 = arith.constant 4 : i32
    %73 = arith.muli %72, %c4_i32_32 : i32
    %c0_i32_33 = arith.constant 0 : i32
    %74 = arith.addi %73, %c0_i32_33 : i32
    %c9_i32_34 = arith.constant 9 : i32
    %75 = arith.muli %74, %c9_i32_34 : i32
    %c3_i32_35 = arith.constant 3 : i32
    %76 = arith.addi %75, %c3_i32_35 : i32
    %c2_i32_36 = arith.constant 2 : i32
    %77 = arith.addi %76, %c2_i32_36 : i32
    %78 = vector.extract_strided_slice %47 {offsets = [0, 2], sizes = [16, 16], strides = [1, 1]} : vector<16x18xf32> to vector<16x16xf32>
    %79 = arith.index_cast %77 : i32 to index
    %80 = memref.load %arg2[%79] : memref<288xf32, #tpu.memory_space<smem>>
    %81 = vector.broadcast %80 : f32 to vector<16x16xf32>
    %82 = arith.mulf %78, %81 : vector<16x16xf32>
    %83 = arith.addf %71, %82 : vector<16x16xf32>
    %c0_37 = arith.constant 0 : index
    %c2 = arith.constant 2 : index
    %c0_38 = arith.constant 0 : index
    %84 = vector.load %arg6[%c0_37, %c2, %c0_38] : memref<4x18x18xf32, #tpu.memory_space<vmem>>, vector<1x16x18xf32>
    %85 = vector.shape_cast %84 : vector<1x16x18xf32> to vector<16x18xf32>
    %c0_i32_39 = arith.constant 0 : i32
    %86 = arith.addi %0, %c0_i32_39 : i32
    %c4_i32_40 = arith.constant 4 : i32
    %87 = arith.muli %86, %c4_i32_40 : i32
    %c0_i32_41 = arith.constant 0 : i32
    %88 = arith.addi %87, %c0_i32_41 : i32
    %c9_i32_42 = arith.constant 9 : i32
    %89 = arith.muli %88, %c9_i32_42 : i32
    %c6_i32 = arith.constant 6 : i32
    %90 = arith.addi %89, %c6_i32 : i32
    %c0_i32_43 = arith.constant 0 : i32
    %91 = arith.addi %90, %c0_i32_43 : i32
    %92 = vector.extract_strided_slice %85 {offsets = [0, 0], sizes = [16, 16], strides = [1, 1]} : vector<16x18xf32> to vector<16x16xf32>
    %93 = arith.index_cast %91 : i32 to index
    %94 = memref.load %arg2[%93] : memref<288xf32, #tpu.memory_space<smem>>
    %95 = vector.broadcast %94 : f32 to vector<16x16xf32>
    %96 = arith.mulf %92, %95 : vector<16x16xf32>
    %97 = arith.addf %83, %96 : vector<16x16xf32>
    %c0_i32_44 = arith.constant 0 : i32
    %98 = arith.addi %0, %c0_i32_44 : i32
    %c4_i32_45 = arith.constant 4 : i32
    %99 = arith.muli %98, %c4_i32_45 : i32
    %c0_i32_46 = arith.constant 0 : i32
    %100 = arith.addi %99, %c0_i32_46 : i32
    %c9_i32_47 = arith.constant 9 : i32
    %101 = arith.muli %100, %c9_i32_47 : i32
    %c6_i32_48 = arith.constant 6 : i32
    %102 = arith.addi %101, %c6_i32_48 : i32
    %c1_i32_49 = arith.constant 1 : i32
    %103 = arith.addi %102, %c1_i32_49 : i32
    %104 = vector.extract_strided_slice %85 {offsets = [0, 1], sizes = [16, 16], strides = [1, 1]} : vector<16x18xf32> to vector<16x16xf32>
    %105 = arith.index_cast %103 : i32 to index
    %106 = memref.load %arg2[%105] : memref<288xf32, #tpu.memory_space<smem>>
    %107 = vector.broadcast %106 : f32 to vector<16x16xf32>
    %108 = arith.mulf %104, %107 : vector<16x16xf32>
    %109 = arith.addf %97, %108 : vector<16x16xf32>
    %c0_i32_50 = arith.constant 0 : i32
    %110 = arith.addi %0, %c0_i32_50 : i32
    %c4_i32_51 = arith.constant 4 : i32
    %111 = arith.muli %110, %c4_i32_51 : i32
    %c0_i32_52 = arith.constant 0 : i32
    %112 = arith.addi %111, %c0_i32_52 : i32
    %c9_i32_53 = arith.constant 9 : i32
    %113 = arith.muli %112, %c9_i32_53 : i32
    %c6_i32_54 = arith.constant 6 : i32
    %114 = arith.addi %113, %c6_i32_54 : i32
    %c2_i32_55 = arith.constant 2 : i32
    %115 = arith.addi %114, %c2_i32_55 : i32
    %116 = vector.extract_strided_slice %85 {offsets = [0, 2], sizes = [16, 16], strides = [1, 1]} : vector<16x18xf32> to vector<16x16xf32>
    %117 = arith.index_cast %115 : i32 to index
    %118 = memref.load %arg2[%117] : memref<288xf32, #tpu.memory_space<smem>>
    %119 = vector.broadcast %118 : f32 to vector<16x16xf32>
    %120 = arith.mulf %116, %119 : vector<16x16xf32>
    %121 = arith.addf %109, %120 : vector<16x16xf32>
    %c1_56 = arith.constant 1 : index
    %c0_57 = arith.constant 0 : index
    %c0_58 = arith.constant 0 : index
    %122 = vector.load %arg6[%c1_56, %c0_57, %c0_58] : memref<4x18x18xf32, #tpu.memory_space<vmem>>, vector<1x16x18xf32>
    %123 = vector.shape_cast %122 : vector<1x16x18xf32> to vector<16x18xf32>
    %c0_i32_59 = arith.constant 0 : i32
    %124 = arith.addi %0, %c0_i32_59 : i32
    %c4_i32_60 = arith.constant 4 : i32
    %125 = arith.muli %124, %c4_i32_60 : i32
    %c1_i32_61 = arith.constant 1 : i32
    %126 = arith.addi %125, %c1_i32_61 : i32
    %c9_i32_62 = arith.constant 9 : i32
    %127 = arith.muli %126, %c9_i32_62 : i32
    %c0_i32_63 = arith.constant 0 : i32
    %128 = arith.addi %127, %c0_i32_63 : i32
    %c0_i32_64 = arith.constant 0 : i32
    %129 = arith.addi %128, %c0_i32_64 : i32
    %130 = vector.extract_strided_slice %123 {offsets = [0, 0], sizes = [16, 16], strides = [1, 1]} : vector<16x18xf32> to vector<16x16xf32>
    %131 = arith.index_cast %129 : i32 to index
    %132 = memref.load %arg2[%131] : memref<288xf32, #tpu.memory_space<smem>>
    %133 = vector.broadcast %132 : f32 to vector<16x16xf32>
    %134 = arith.mulf %130, %133 : vector<16x16xf32>
    %135 = arith.addf %121, %134 : vector<16x16xf32>
    %c0_i32_65 = arith.constant 0 : i32
    %136 = arith.addi %0, %c0_i32_65 : i32
    %c4_i32_66 = arith.constant 4 : i32
    %137 = arith.muli %136, %c4_i32_66 : i32
    %c1_i32_67 = arith.constant 1 : i32
    %138 = arith.addi %137, %c1_i32_67 : i32
    %c9_i32_68 = arith.constant 9 : i32
    %139 = arith.muli %138, %c9_i32_68 : i32
    %c0_i32_69 = arith.constant 0 : i32
    %140 = arith.addi %139, %c0_i32_69 : i32
    %c1_i32_70 = arith.constant 1 : i32
    %141 = arith.addi %140, %c1_i32_70 : i32
    %142 = vector.extract_strided_slice %123 {offsets = [0, 1], sizes = [16, 16], strides = [1, 1]} : vector<16x18xf32> to vector<16x16xf32>
    %143 = arith.index_cast %141 : i32 to index
    %144 = memref.load %arg2[%143] : memref<288xf32, #tpu.memory_space<smem>>
    %145 = vector.broadcast %144 : f32 to vector<16x16xf32>
    %146 = arith.mulf %142, %145 : vector<16x16xf32>
    %147 = arith.addf %135, %146 : vector<16x16xf32>
    %c0_i32_71 = arith.constant 0 : i32
    %148 = arith.addi %0, %c0_i32_71 : i32
    %c4_i32_72 = arith.constant 4 : i32
    %149 = arith.muli %148, %c4_i32_72 : i32
    %c1_i32_73 = arith.constant 1 : i32
    %150 = arith.addi %149, %c1_i32_73 : i32
    %c9_i32_74 = arith.constant 9 : i32
    %151 = arith.muli %150, %c9_i32_74 : i32
    %c0_i32_75 = arith.constant 0 : i32
    %152 = arith.addi %151, %c0_i32_75 : i32
    %c2_i32_76 = arith.constant 2 : i32
    %153 = arith.addi %152, %c2_i32_76 : i32
    %154 = vector.extract_strided_slice %123 {offsets = [0, 2], sizes = [16, 16], strides = [1, 1]} : vector<16x18xf32> to vector<16x16xf32>
    %155 = arith.index_cast %153 : i32 to index
    %156 = memref.load %arg2[%155] : memref<288xf32, #tpu.memory_space<smem>>
    %157 = vector.broadcast %156 : f32 to vector<16x16xf32>
    %158 = arith.mulf %154, %157 : vector<16x16xf32>
    %159 = arith.addf %147, %158 : vector<16x16xf32>
    %c1_77 = arith.constant 1 : index
    %c1_78 = arith.constant 1 : index
    %c0_79 = arith.constant 0 : index
    %160 = vector.load %arg6[%c1_77, %c1_78, %c0_79] : memref<4x18x18xf32, #tpu.memory_space<vmem>>, vector<1x16x18xf32>
    %161 = vector.shape_cast %160 : vector<1x16x18xf32> to vector<16x18xf32>
    %c0_i32_80 = arith.constant 0 : i32
    %162 = arith.addi %0, %c0_i32_80 : i32
    %c4_i32_81 = arith.constant 4 : i32
    %163 = arith.muli %162, %c4_i32_81 : i32
    %c1_i32_82 = arith.constant 1 : i32
    %164 = arith.addi %163, %c1_i32_82 : i32
    %c9_i32_83 = arith.constant 9 : i32
    %165 = arith.muli %164, %c9_i32_83 : i32
    %c3_i32_84 = arith.constant 3 : i32
    %166 = arith.addi %165, %c3_i32_84 : i32
    %c0_i32_85 = arith.constant 0 : i32
    %167 = arith.addi %166, %c0_i32_85 : i32
    %168 = vector.extract_strided_slice %161 {offsets = [0, 0], sizes = [16, 16], strides = [1, 1]} : vector<16x18xf32> to vector<16x16xf32>
    %169 = arith.index_cast %167 : i32 to index
    %170 = memref.load %arg2[%169] : memref<288xf32, #tpu.memory_space<smem>>
    %171 = vector.broadcast %170 : f32 to vector<16x16xf32>
    %172 = arith.mulf %168, %171 : vector<16x16xf32>
    %173 = arith.addf %159, %172 : vector<16x16xf32>
    %c0_i32_86 = arith.constant 0 : i32
    %174 = arith.addi %0, %c0_i32_86 : i32
    %c4_i32_87 = arith.constant 4 : i32
    %175 = arith.muli %174, %c4_i32_87 : i32
    %c1_i32_88 = arith.constant 1 : i32
    %176 = arith.addi %175, %c1_i32_88 : i32
    %c9_i32_89 = arith.constant 9 : i32
    %177 = arith.muli %176, %c9_i32_89 : i32
    %c3_i32_90 = arith.constant 3 : i32
    %178 = arith.addi %177, %c3_i32_90 : i32
    %c1_i32_91 = arith.constant 1 : i32
    %179 = arith.addi %178, %c1_i32_91 : i32
    %180 = vector.extract_strided_slice %161 {offsets = [0, 1], sizes = [16, 16], strides = [1, 1]} : vector<16x18xf32> to vector<16x16xf32>
    %181 = arith.index_cast %179 : i32 to index
    %182 = memref.load %arg2[%181] : memref<288xf32, #tpu.memory_space<smem>>
    %183 = vector.broadcast %182 : f32 to vector<16x16xf32>
    %184 = arith.mulf %180, %183 : vector<16x16xf32>
    %185 = arith.addf %173, %184 : vector<16x16xf32>
    %c0_i32_92 = arith.constant 0 : i32
    %186 = arith.addi %0, %c0_i32_92 : i32
    %c4_i32_93 = arith.constant 4 : i32
    %187 = arith.muli %186, %c4_i32_93 : i32
    %c1_i32_94 = arith.constant 1 : i32
    %188 = arith.addi %187, %c1_i32_94 : i32
    %c9_i32_95 = arith.constant 9 : i32
    %189 = arith.muli %188, %c9_i32_95 : i32
    %c3_i32_96 = arith.constant 3 : i32
    %190 = arith.addi %189, %c3_i32_96 : i32
    %c2_i32_97 = arith.constant 2 : i32
    %191 = arith.addi %190, %c2_i32_97 : i32
    %192 = vector.extract_strided_slice %161 {offsets = [0, 2], sizes = [16, 16], strides = [1, 1]} : vector<16x18xf32> to vector<16x16xf32>
    %193 = arith.index_cast %191 : i32 to index
    %194 = memref.load %arg2[%193] : memref<288xf32, #tpu.memory_space<smem>>
    %195 = vector.broadcast %194 : f32 to vector<16x16xf32>
    %196 = arith.mulf %192, %195 : vector<16x16xf32>
    %197 = arith.addf %185, %196 : vector<16x16xf32>
    %c1_98 = arith.constant 1 : index
    %c2_99 = arith.constant 2 : index
    %c0_100 = arith.constant 0 : index
    %198 = vector.load %arg6[%c1_98, %c2_99, %c0_100] : memref<4x18x18xf32, #tpu.memory_space<vmem>>, vector<1x16x18xf32>
    %199 = vector.shape_cast %198 : vector<1x16x18xf32> to vector<16x18xf32>
    %c0_i32_101 = arith.constant 0 : i32
    %200 = arith.addi %0, %c0_i32_101 : i32
    %c4_i32_102 = arith.constant 4 : i32
    %201 = arith.muli %200, %c4_i32_102 : i32
    %c1_i32_103 = arith.constant 1 : i32
    %202 = arith.addi %201, %c1_i32_103 : i32
    %c9_i32_104 = arith.constant 9 : i32
    %203 = arith.muli %202, %c9_i32_104 : i32
    %c6_i32_105 = arith.constant 6 : i32
    %204 = arith.addi %203, %c6_i32_105 : i32
    %c0_i32_106 = arith.constant 0 : i32
    %205 = arith.addi %204, %c0_i32_106 : i32
    %206 = vector.extract_strided_slice %199 {offsets = [0, 0], sizes = [16, 16], strides = [1, 1]} : vector<16x18xf32> to vector<16x16xf32>
    %207 = arith.index_cast %205 : i32 to index
    %208 = memref.load %arg2[%207] : memref<288xf32, #tpu.memory_space<smem>>
    %209 = vector.broadcast %208 : f32 to vector<16x16xf32>
    %210 = arith.mulf %206, %209 : vector<16x16xf32>
    %211 = arith.addf %197, %210 : vector<16x16xf32>
    %c0_i32_107 = arith.constant 0 : i32
    %212 = arith.addi %0, %c0_i32_107 : i32
    %c4_i32_108 = arith.constant 4 : i32
    %213 = arith.muli %212, %c4_i32_108 : i32
    %c1_i32_109 = arith.constant 1 : i32
    %214 = arith.addi %213, %c1_i32_109 : i32
    %c9_i32_110 = arith.constant 9 : i32
    %215 = arith.muli %214, %c9_i32_110 : i32
    %c6_i32_111 = arith.constant 6 : i32
    %216 = arith.addi %215, %c6_i32_111 : i32
    %c1_i32_112 = arith.constant 1 : i32
    %217 = arith.addi %216, %c1_i32_112 : i32
    %218 = vector.extract_strided_slice %199 {offsets = [0, 1], sizes = [16, 16], strides = [1, 1]} : vector<16x18xf32> to vector<16x16xf32>
    %219 = arith.index_cast %217 : i32 to index
    %220 = memref.load %arg2[%219] : memref<288xf32, #tpu.memory_space<smem>>
    %221 = vector.broadcast %220 : f32 to vector<16x16xf32>
    %222 = arith.mulf %218, %221 : vector<16x16xf32>
    %223 = arith.addf %211, %222 : vector<16x16xf32>
    %c0_i32_113 = arith.constant 0 : i32
    %224 = arith.addi %0, %c0_i32_113 : i32
    %c4_i32_114 = arith.constant 4 : i32
    %225 = arith.muli %224, %c4_i32_114 : i32
    %c1_i32_115 = arith.constant 1 : i32
    %226 = arith.addi %225, %c1_i32_115 : i32
    %c9_i32_116 = arith.constant 9 : i32
    %227 = arith.muli %226, %c9_i32_116 : i32
    %c6_i32_117 = arith.constant 6 : i32
    %228 = arith.addi %227, %c6_i32_117 : i32
    %c2_i32_118 = arith.constant 2 : i32
    %229 = arith.addi %228, %c2_i32_118 : i32
    %230 = vector.extract_strided_slice %199 {offsets = [0, 2], sizes = [16, 16], strides = [1, 1]} : vector<16x18xf32> to vector<16x16xf32>
    %231 = arith.index_cast %229 : i32 to index
    %232 = memref.load %arg2[%231] : memref<288xf32, #tpu.memory_space<smem>>
    %233 = vector.broadcast %232 : f32 to vector<16x16xf32>
    %234 = arith.mulf %230, %233 : vector<16x16xf32>
    %235 = arith.addf %223, %234 : vector<16x16xf32>
    %c2_119 = arith.constant 2 : index
    %c0_120 = arith.constant 0 : index
    %c0_121 = arith.constant 0 : index
    %236 = vector.load %arg6[%c2_119, %c0_120, %c0_121] : memref<4x18x18xf32, #tpu.memory_space<vmem>>, vector<1x16x18xf32>
    %237 = vector.shape_cast %236 : vector<1x16x18xf32> to vector<16x18xf32>
    %c0_i32_122 = arith.constant 0 : i32
    %238 = arith.addi %0, %c0_i32_122 : i32
    %c4_i32_123 = arith.constant 4 : i32
    %239 = arith.muli %238, %c4_i32_123 : i32
    %c2_i32_124 = arith.constant 2 : i32
    %240 = arith.addi %239, %c2_i32_124 : i32
    %c9_i32_125 = arith.constant 9 : i32
    %241 = arith.muli %240, %c9_i32_125 : i32
    %c0_i32_126 = arith.constant 0 : i32
    %242 = arith.addi %241, %c0_i32_126 : i32
    %c0_i32_127 = arith.constant 0 : i32
    %243 = arith.addi %242, %c0_i32_127 : i32
    %244 = vector.extract_strided_slice %237 {offsets = [0, 0], sizes = [16, 16], strides = [1, 1]} : vector<16x18xf32> to vector<16x16xf32>
    %245 = arith.index_cast %243 : i32 to index
    %246 = memref.load %arg2[%245] : memref<288xf32, #tpu.memory_space<smem>>
    %247 = vector.broadcast %246 : f32 to vector<16x16xf32>
    %248 = arith.mulf %244, %247 : vector<16x16xf32>
    %249 = arith.addf %235, %248 : vector<16x16xf32>
    %c0_i32_128 = arith.constant 0 : i32
    %250 = arith.addi %0, %c0_i32_128 : i32
    %c4_i32_129 = arith.constant 4 : i32
    %251 = arith.muli %250, %c4_i32_129 : i32
    %c2_i32_130 = arith.constant 2 : i32
    %252 = arith.addi %251, %c2_i32_130 : i32
    %c9_i32_131 = arith.constant 9 : i32
    %253 = arith.muli %252, %c9_i32_131 : i32
    %c0_i32_132 = arith.constant 0 : i32
    %254 = arith.addi %253, %c0_i32_132 : i32
    %c1_i32_133 = arith.constant 1 : i32
    %255 = arith.addi %254, %c1_i32_133 : i32
    %256 = vector.extract_strided_slice %237 {offsets = [0, 1], sizes = [16, 16], strides = [1, 1]} : vector<16x18xf32> to vector<16x16xf32>
    %257 = arith.index_cast %255 : i32 to index
    %258 = memref.load %arg2[%257] : memref<288xf32, #tpu.memory_space<smem>>
    %259 = vector.broadcast %258 : f32 to vector<16x16xf32>
    %260 = arith.mulf %256, %259 : vector<16x16xf32>
    %261 = arith.addf %249, %260 : vector<16x16xf32>
    %c0_i32_134 = arith.constant 0 : i32
    %262 = arith.addi %0, %c0_i32_134 : i32
    %c4_i32_135 = arith.constant 4 : i32
    %263 = arith.muli %262, %c4_i32_135 : i32
    %c2_i32_136 = arith.constant 2 : i32
    %264 = arith.addi %263, %c2_i32_136 : i32
    %c9_i32_137 = arith.constant 9 : i32
    %265 = arith.muli %264, %c9_i32_137 : i32
    %c0_i32_138 = arith.constant 0 : i32
    %266 = arith.addi %265, %c0_i32_138 : i32
    %c2_i32_139 = arith.constant 2 : i32
    %267 = arith.addi %266, %c2_i32_139 : i32
    %268 = vector.extract_strided_slice %237 {offsets = [0, 2], sizes = [16, 16], strides = [1, 1]} : vector<16x18xf32> to vector<16x16xf32>
    %269 = arith.index_cast %267 : i32 to index
    %270 = memref.load %arg2[%269] : memref<288xf32, #tpu.memory_space<smem>>
    %271 = vector.broadcast %270 : f32 to vector<16x16xf32>
    %272 = arith.mulf %268, %271 : vector<16x16xf32>
    %273 = arith.addf %261, %272 : vector<16x16xf32>
    %c2_140 = arith.constant 2 : index
    %c1_141 = arith.constant 1 : index
    %c0_142 = arith.constant 0 : index
    %274 = vector.load %arg6[%c2_140, %c1_141, %c0_142] : memref<4x18x18xf32, #tpu.memory_space<vmem>>, vector<1x16x18xf32>
    %275 = vector.shape_cast %274 : vector<1x16x18xf32> to vector<16x18xf32>
    %c0_i32_143 = arith.constant 0 : i32
    %276 = arith.addi %0, %c0_i32_143 : i32
    %c4_i32_144 = arith.constant 4 : i32
    %277 = arith.muli %276, %c4_i32_144 : i32
    %c2_i32_145 = arith.constant 2 : i32
    %278 = arith.addi %277, %c2_i32_145 : i32
    %c9_i32_146 = arith.constant 9 : i32
    %279 = arith.muli %278, %c9_i32_146 : i32
    %c3_i32_147 = arith.constant 3 : i32
    %280 = arith.addi %279, %c3_i32_147 : i32
    %c0_i32_148 = arith.constant 0 : i32
    %281 = arith.addi %280, %c0_i32_148 : i32
    %282 = vector.extract_strided_slice %275 {offsets = [0, 0], sizes = [16, 16], strides = [1, 1]} : vector<16x18xf32> to vector<16x16xf32>
    %283 = arith.index_cast %281 : i32 to index
    %284 = memref.load %arg2[%283] : memref<288xf32, #tpu.memory_space<smem>>
    %285 = vector.broadcast %284 : f32 to vector<16x16xf32>
    %286 = arith.mulf %282, %285 : vector<16x16xf32>
    %287 = arith.addf %273, %286 : vector<16x16xf32>
    %c0_i32_149 = arith.constant 0 : i32
    %288 = arith.addi %0, %c0_i32_149 : i32
    %c4_i32_150 = arith.constant 4 : i32
    %289 = arith.muli %288, %c4_i32_150 : i32
    %c2_i32_151 = arith.constant 2 : i32
    %290 = arith.addi %289, %c2_i32_151 : i32
    %c9_i32_152 = arith.constant 9 : i32
    %291 = arith.muli %290, %c9_i32_152 : i32
    %c3_i32_153 = arith.constant 3 : i32
    %292 = arith.addi %291, %c3_i32_153 : i32
    %c1_i32_154 = arith.constant 1 : i32
    %293 = arith.addi %292, %c1_i32_154 : i32
    %294 = vector.extract_strided_slice %275 {offsets = [0, 1], sizes = [16, 16], strides = [1, 1]} : vector<16x18xf32> to vector<16x16xf32>
    %295 = arith.index_cast %293 : i32 to index
    %296 = memref.load %arg2[%295] : memref<288xf32, #tpu.memory_space<smem>>
    %297 = vector.broadcast %296 : f32 to vector<16x16xf32>
    %298 = arith.mulf %294, %297 : vector<16x16xf32>
    %299 = arith.addf %287, %298 : vector<16x16xf32>
    %c0_i32_155 = arith.constant 0 : i32
    %300 = arith.addi %0, %c0_i32_155 : i32
    %c4_i32_156 = arith.constant 4 : i32
    %301 = arith.muli %300, %c4_i32_156 : i32
    %c2_i32_157 = arith.constant 2 : i32
    %302 = arith.addi %301, %c2_i32_157 : i32
    %c9_i32_158 = arith.constant 9 : i32
    %303 = arith.muli %302, %c9_i32_158 : i32
    %c3_i32_159 = arith.constant 3 : i32
    %304 = arith.addi %303, %c3_i32_159 : i32
    %c2_i32_160 = arith.constant 2 : i32
    %305 = arith.addi %304, %c2_i32_160 : i32
    %306 = vector.extract_strided_slice %275 {offsets = [0, 2], sizes = [16, 16], strides = [1, 1]} : vector<16x18xf32> to vector<16x16xf32>
    %307 = arith.index_cast %305 : i32 to index
    %308 = memref.load %arg2[%307] : memref<288xf32, #tpu.memory_space<smem>>
    %309 = vector.broadcast %308 : f32 to vector<16x16xf32>
    %310 = arith.mulf %306, %309 : vector<16x16xf32>
    %311 = arith.addf %299, %310 : vector<16x16xf32>
    %c2_161 = arith.constant 2 : index
    %c2_162 = arith.constant 2 : index
    %c0_163 = arith.constant 0 : index
    %312 = vector.load %arg6[%c2_161, %c2_162, %c0_163] : memref<4x18x18xf32, #tpu.memory_space<vmem>>, vector<1x16x18xf32>
    %313 = vector.shape_cast %312 : vector<1x16x18xf32> to vector<16x18xf32>
    %c0_i32_164 = arith.constant 0 : i32
    %314 = arith.addi %0, %c0_i32_164 : i32
    %c4_i32_165 = arith.constant 4 : i32
    %315 = arith.muli %314, %c4_i32_165 : i32
    %c2_i32_166 = arith.constant 2 : i32
    %316 = arith.addi %315, %c2_i32_166 : i32
    %c9_i32_167 = arith.constant 9 : i32
    %317 = arith.muli %316, %c9_i32_167 : i32
    %c6_i32_168 = arith.constant 6 : i32
    %318 = arith.addi %317, %c6_i32_168 : i32
    %c0_i32_169 = arith.constant 0 : i32
    %319 = arith.addi %318, %c0_i32_169 : i32
    %320 = vector.extract_strided_slice %313 {offsets = [0, 0], sizes = [16, 16], strides = [1, 1]} : vector<16x18xf32> to vector<16x16xf32>
    %321 = arith.index_cast %319 : i32 to index
    %322 = memref.load %arg2[%321] : memref<288xf32, #tpu.memory_space<smem>>
    %323 = vector.broadcast %322 : f32 to vector<16x16xf32>
    %324 = arith.mulf %320, %323 : vector<16x16xf32>
    %325 = arith.addf %311, %324 : vector<16x16xf32>
    %c0_i32_170 = arith.constant 0 : i32
    %326 = arith.addi %0, %c0_i32_170 : i32
    %c4_i32_171 = arith.constant 4 : i32
    %327 = arith.muli %326, %c4_i32_171 : i32
    %c2_i32_172 = arith.constant 2 : i32
    %328 = arith.addi %327, %c2_i32_172 : i32
    %c9_i32_173 = arith.constant 9 : i32
    %329 = arith.muli %328, %c9_i32_173 : i32
    %c6_i32_174 = arith.constant 6 : i32
    %330 = arith.addi %329, %c6_i32_174 : i32
    %c1_i32_175 = arith.constant 1 : i32
    %331 = arith.addi %330, %c1_i32_175 : i32
    %332 = vector.extract_strided_slice %313 {offsets = [0, 1], sizes = [16, 16], strides = [1, 1]} : vector<16x18xf32> to vector<16x16xf32>
    %333 = arith.index_cast %331 : i32 to index
    %334 = memref.load %arg2[%333] : memref<288xf32, #tpu.memory_space<smem>>
    %335 = vector.broadcast %334 : f32 to vector<16x16xf32>
    %336 = arith.mulf %332, %335 : vector<16x16xf32>
    %337 = arith.addf %325, %336 : vector<16x16xf32>
    %c0_i32_176 = arith.constant 0 : i32
    %338 = arith.addi %0, %c0_i32_176 : i32
    %c4_i32_177 = arith.constant 4 : i32
    %339 = arith.muli %338, %c4_i32_177 : i32
    %c2_i32_178 = arith.constant 2 : i32
    %340 = arith.addi %339, %c2_i32_178 : i32
    %c9_i32_179 = arith.constant 9 : i32
    %341 = arith.muli %340, %c9_i32_179 : i32
    %c6_i32_180 = arith.constant 6 : i32
    %342 = arith.addi %341, %c6_i32_180 : i32
    %c2_i32_181 = arith.constant 2 : i32
    %343 = arith.addi %342, %c2_i32_181 : i32
    %344 = vector.extract_strided_slice %313 {offsets = [0, 2], sizes = [16, 16], strides = [1, 1]} : vector<16x18xf32> to vector<16x16xf32>
    %345 = arith.index_cast %343 : i32 to index
    %346 = memref.load %arg2[%345] : memref<288xf32, #tpu.memory_space<smem>>
    %347 = vector.broadcast %346 : f32 to vector<16x16xf32>
    %348 = arith.mulf %344, %347 : vector<16x16xf32>
    %349 = arith.addf %337, %348 : vector<16x16xf32>
    %c3 = arith.constant 3 : index
    %c0_182 = arith.constant 0 : index
    %c0_183 = arith.constant 0 : index
    %350 = vector.load %arg6[%c3, %c0_182, %c0_183] : memref<4x18x18xf32, #tpu.memory_space<vmem>>, vector<1x16x18xf32>
    %351 = vector.shape_cast %350 : vector<1x16x18xf32> to vector<16x18xf32>
    %c0_i32_184 = arith.constant 0 : i32
    %352 = arith.addi %0, %c0_i32_184 : i32
    %c4_i32_185 = arith.constant 4 : i32
    %353 = arith.muli %352, %c4_i32_185 : i32
    %c3_i32_186 = arith.constant 3 : i32
    %354 = arith.addi %353, %c3_i32_186 : i32
    %c9_i32_187 = arith.constant 9 : i32
    %355 = arith.muli %354, %c9_i32_187 : i32
    %c0_i32_188 = arith.constant 0 : i32
    %356 = arith.addi %355, %c0_i32_188 : i32
    %c0_i32_189 = arith.constant 0 : i32
    %357 = arith.addi %356, %c0_i32_189 : i32
    %358 = vector.extract_strided_slice %351 {offsets = [0, 0], sizes = [16, 16], strides = [1, 1]} : vector<16x18xf32> to vector<16x16xf32>
    %359 = arith.index_cast %357 : i32 to index
    %360 = memref.load %arg2[%359] : memref<288xf32, #tpu.memory_space<smem>>
    %361 = vector.broadcast %360 : f32 to vector<16x16xf32>
    %362 = arith.mulf %358, %361 : vector<16x16xf32>
    %363 = arith.addf %349, %362 : vector<16x16xf32>
    %c0_i32_190 = arith.constant 0 : i32
    %364 = arith.addi %0, %c0_i32_190 : i32
    %c4_i32_191 = arith.constant 4 : i32
    %365 = arith.muli %364, %c4_i32_191 : i32
    %c3_i32_192 = arith.constant 3 : i32
    %366 = arith.addi %365, %c3_i32_192 : i32
    %c9_i32_193 = arith.constant 9 : i32
    %367 = arith.muli %366, %c9_i32_193 : i32
    %c0_i32_194 = arith.constant 0 : i32
    %368 = arith.addi %367, %c0_i32_194 : i32
    %c1_i32_195 = arith.constant 1 : i32
    %369 = arith.addi %368, %c1_i32_195 : i32
    %370 = vector.extract_strided_slice %351 {offsets = [0, 1], sizes = [16, 16], strides = [1, 1]} : vector<16x18xf32> to vector<16x16xf32>
    %371 = arith.index_cast %369 : i32 to index
    %372 = memref.load %arg2[%371] : memref<288xf32, #tpu.memory_space<smem>>
    %373 = vector.broadcast %372 : f32 to vector<16x16xf32>
    %374 = arith.mulf %370, %373 : vector<16x16xf32>
    %375 = arith.addf %363, %374 : vector<16x16xf32>
    %c0_i32_196 = arith.constant 0 : i32
    %376 = arith.addi %0, %c0_i32_196 : i32
    %c4_i32_197 = arith.constant 4 : i32
    %377 = arith.muli %376, %c4_i32_197 : i32
    %c3_i32_198 = arith.constant 3 : i32
    %378 = arith.addi %377, %c3_i32_198 : i32
    %c9_i32_199 = arith.constant 9 : i32
    %379 = arith.muli %378, %c9_i32_199 : i32
    %c0_i32_200 = arith.constant 0 : i32
    %380 = arith.addi %379, %c0_i32_200 : i32
    %c2_i32_201 = arith.constant 2 : i32
    %381 = arith.addi %380, %c2_i32_201 : i32
    %382 = vector.extract_strided_slice %351 {offsets = [0, 2], sizes = [16, 16], strides = [1, 1]} : vector<16x18xf32> to vector<16x16xf32>
    %383 = arith.index_cast %381 : i32 to index
    %384 = memref.load %arg2[%383] : memref<288xf32, #tpu.memory_space<smem>>
    %385 = vector.broadcast %384 : f32 to vector<16x16xf32>
    %386 = arith.mulf %382, %385 : vector<16x16xf32>
    %387 = arith.addf %375, %386 : vector<16x16xf32>
    %c3_202 = arith.constant 3 : index
    %c1_203 = arith.constant 1 : index
    %c0_204 = arith.constant 0 : index
    %388 = vector.load %arg6[%c3_202, %c1_203, %c0_204] : memref<4x18x18xf32, #tpu.memory_space<vmem>>, vector<1x16x18xf32>
    %389 = vector.shape_cast %388 : vector<1x16x18xf32> to vector<16x18xf32>
    %c0_i32_205 = arith.constant 0 : i32
    %390 = arith.addi %0, %c0_i32_205 : i32
    %c4_i32_206 = arith.constant 4 : i32
    %391 = arith.muli %390, %c4_i32_206 : i32
    %c3_i32_207 = arith.constant 3 : i32
    %392 = arith.addi %391, %c3_i32_207 : i32
    %c9_i32_208 = arith.constant 9 : i32
    %393 = arith.muli %392, %c9_i32_208 : i32
    %c3_i32_209 = arith.constant 3 : i32
    %394 = arith.addi %393, %c3_i32_209 : i32
    %c0_i32_210 = arith.constant 0 : i32
    %395 = arith.addi %394, %c0_i32_210 : i32
    %396 = vector.extract_strided_slice %389 {offsets = [0, 0], sizes = [16, 16], strides = [1, 1]} : vector<16x18xf32> to vector<16x16xf32>
    %397 = arith.index_cast %395 : i32 to index
    %398 = memref.load %arg2[%397] : memref<288xf32, #tpu.memory_space<smem>>
    %399 = vector.broadcast %398 : f32 to vector<16x16xf32>
    %400 = arith.mulf %396, %399 : vector<16x16xf32>
    %401 = arith.addf %387, %400 : vector<16x16xf32>
    %c0_i32_211 = arith.constant 0 : i32
    %402 = arith.addi %0, %c0_i32_211 : i32
    %c4_i32_212 = arith.constant 4 : i32
    %403 = arith.muli %402, %c4_i32_212 : i32
    %c3_i32_213 = arith.constant 3 : i32
    %404 = arith.addi %403, %c3_i32_213 : i32
    %c9_i32_214 = arith.constant 9 : i32
    %405 = arith.muli %404, %c9_i32_214 : i32
    %c3_i32_215 = arith.constant 3 : i32
    %406 = arith.addi %405, %c3_i32_215 : i32
    %c1_i32_216 = arith.constant 1 : i32
    %407 = arith.addi %406, %c1_i32_216 : i32
    %408 = vector.extract_strided_slice %389 {offsets = [0, 1], sizes = [16, 16], strides = [1, 1]} : vector<16x18xf32> to vector<16x16xf32>
    %409 = arith.index_cast %407 : i32 to index
    %410 = memref.load %arg2[%409] : memref<288xf32, #tpu.memory_space<smem>>
    %411 = vector.broadcast %410 : f32 to vector<16x16xf32>
    %412 = arith.mulf %408, %411 : vector<16x16xf32>
    %413 = arith.addf %401, %412 : vector<16x16xf32>
    %c0_i32_217 = arith.constant 0 : i32
    %414 = arith.addi %0, %c0_i32_217 : i32
    %c4_i32_218 = arith.constant 4 : i32
    %415 = arith.muli %414, %c4_i32_218 : i32
    %c3_i32_219 = arith.constant 3 : i32
    %416 = arith.addi %415, %c3_i32_219 : i32
    %c9_i32_220 = arith.constant 9 : i32
    %417 = arith.muli %416, %c9_i32_220 : i32
    %c3_i32_221 = arith.constant 3 : i32
    %418 = arith.addi %417, %c3_i32_221 : i32
    %c2_i32_222 = arith.constant 2 : i32
    %419 = arith.addi %418, %c2_i32_222 : i32
    %420 = vector.extract_strided_slice %389 {offsets = [0, 2], sizes = [16, 16], strides = [1, 1]} : vector<16x18xf32> to vector<16x16xf32>
    %421 = arith.index_cast %419 : i32 to index
    %422 = memref.load %arg2[%421] : memref<288xf32, #tpu.memory_space<smem>>
    %423 = vector.broadcast %422 : f32 to vector<16x16xf32>
    %424 = arith.mulf %420, %423 : vector<16x16xf32>
    %425 = arith.addf %413, %424 : vector<16x16xf32>
    %c3_223 = arith.constant 3 : index
    %c2_224 = arith.constant 2 : index
    %c0_225 = arith.constant 0 : index
    %426 = vector.load %arg6[%c3_223, %c2_224, %c0_225] : memref<4x18x18xf32, #tpu.memory_space<vmem>>, vector<1x16x18xf32>
    %427 = vector.shape_cast %426 : vector<1x16x18xf32> to vector<16x18xf32>
    %c0_i32_226 = arith.constant 0 : i32
    %428 = arith.addi %0, %c0_i32_226 : i32
    %c4_i32_227 = arith.constant 4 : i32
    %429 = arith.muli %428, %c4_i32_227 : i32
    %c3_i32_228 = arith.constant 3 : i32
    %430 = arith.addi %429, %c3_i32_228 : i32
    %c9_i32_229 = arith.constant 9 : i32
    %431 = arith.muli %430, %c9_i32_229 : i32
    %c6_i32_230 = arith.constant 6 : i32
    %432 = arith.addi %431, %c6_i32_230 : i32
    %c0_i32_231 = arith.constant 0 : i32
    %433 = arith.addi %432, %c0_i32_231 : i32
    %434 = vector.extract_strided_slice %427 {offsets = [0, 0], sizes = [16, 16], strides = [1, 1]} : vector<16x18xf32> to vector<16x16xf32>
    %435 = arith.index_cast %433 : i32 to index
    %436 = memref.load %arg2[%435] : memref<288xf32, #tpu.memory_space<smem>>
    %437 = vector.broadcast %436 : f32 to vector<16x16xf32>
    %438 = arith.mulf %434, %437 : vector<16x16xf32>
    %439 = arith.addf %425, %438 : vector<16x16xf32>
    %c0_i32_232 = arith.constant 0 : i32
    %440 = arith.addi %0, %c0_i32_232 : i32
    %c4_i32_233 = arith.constant 4 : i32
    %441 = arith.muli %440, %c4_i32_233 : i32
    %c3_i32_234 = arith.constant 3 : i32
    %442 = arith.addi %441, %c3_i32_234 : i32
    %c9_i32_235 = arith.constant 9 : i32
    %443 = arith.muli %442, %c9_i32_235 : i32
    %c6_i32_236 = arith.constant 6 : i32
    %444 = arith.addi %443, %c6_i32_236 : i32
    %c1_i32_237 = arith.constant 1 : i32
    %445 = arith.addi %444, %c1_i32_237 : i32
    %446 = vector.extract_strided_slice %427 {offsets = [0, 1], sizes = [16, 16], strides = [1, 1]} : vector<16x18xf32> to vector<16x16xf32>
    %447 = arith.index_cast %445 : i32 to index
    %448 = memref.load %arg2[%447] : memref<288xf32, #tpu.memory_space<smem>>
    %449 = vector.broadcast %448 : f32 to vector<16x16xf32>
    %450 = arith.mulf %446, %449 : vector<16x16xf32>
    %451 = arith.addf %439, %450 : vector<16x16xf32>
    %c0_i32_238 = arith.constant 0 : i32
    %452 = arith.addi %0, %c0_i32_238 : i32
    %c4_i32_239 = arith.constant 4 : i32
    %453 = arith.muli %452, %c4_i32_239 : i32
    %c3_i32_240 = arith.constant 3 : i32
    %454 = arith.addi %453, %c3_i32_240 : i32
    %c9_i32_241 = arith.constant 9 : i32
    %455 = arith.muli %454, %c9_i32_241 : i32
    %c6_i32_242 = arith.constant 6 : i32
    %456 = arith.addi %455, %c6_i32_242 : i32
    %c2_i32_243 = arith.constant 2 : i32
    %457 = arith.addi %456, %c2_i32_243 : i32
    %458 = vector.extract_strided_slice %427 {offsets = [0, 2], sizes = [16, 16], strides = [1, 1]} : vector<16x18xf32> to vector<16x16xf32>
    %459 = arith.index_cast %457 : i32 to index
    %460 = memref.load %arg2[%459] : memref<288xf32, #tpu.memory_space<smem>>
    %461 = vector.broadcast %460 : f32 to vector<16x16xf32>
    %462 = arith.mulf %458, %461 : vector<16x16xf32>
    %463 = arith.addf %451, %462 : vector<16x16xf32>
    %cst = arith.constant 0.000000e+00 : f32
    %464 = vector.broadcast %cst : f32 to vector<16x16xf32>
    %465 = arith.maximumf %463, %464 : vector<16x16xf32>
    %c0_244 = arith.constant 0 : index
    %c0_245 = arith.constant 0 : index
    %c0_246 = arith.constant 0 : index
    %c0_247 = arith.constant 0 : index
    %466 = vector.load %arg5[%c0_244, %c0_245, %c0_246, %c0_247] : memref<1x8x16x16xf32, #tpu.memory_space<vmem>>, vector<1x1x16x16xf32>
    %467 = vector.shape_cast %466 : vector<1x1x16x16xf32> to vector<16x16xf32>
    %468 = vector.shape_cast %465 : vector<16x16xf32> to vector<1x1x16x16xf32>
    tpu.vector_store %arg5[%c0_244, %c0_245, %c0_246, %c0_247], %468 {strides = array<i32>} : memref<1x8x16x16xf32, #tpu.memory_space<vmem>>, vector<1x1x16x16xf32>,
    %c1_i32_248 = arith.constant 1 : i32
    %469 = arith.addi %0, %c1_i32_248 : i32
    %470 = arith.index_cast %469 : i32 to index
    %471 = memref.load %arg3[%470] : memref<8xf32, #tpu.memory_space<smem>>
    %472 = vector.broadcast %471 : f32 to vector<16x16xf32>
    %c0_249 = arith.constant 0 : index
    %c0_250 = arith.constant 0 : index
    %c0_251 = arith.constant 0 : index
    %473 = vector.load %arg6[%c0_249, %c0_250, %c0_251] : memref<4x18x18xf32, #tpu.memory_space<vmem>>, vector<1x16x18xf32>
    %474 = vector.shape_cast %473 : vector<1x16x18xf32> to vector<16x18xf32>
    %c1_i32_252 = arith.constant 1 : i32
    %475 = arith.addi %0, %c1_i32_252 : i32
    %c4_i32_253 = arith.constant 4 : i32
    %476 = arith.muli %475, %c4_i32_253 : i32
    %c0_i32_254 = arith.constant 0 : i32
    %477 = arith.addi %476, %c0_i32_254 : i32
    %c9_i32_255 = arith.constant 9 : i32
    %478 = arith.muli %477, %c9_i32_255 : i32
    %c0_i32_256 = arith.constant 0 : i32
    %479 = arith.addi %478, %c0_i32_256 : i32
    %c0_i32_257 = arith.constant 0 : i32
    %480 = arith.addi %479, %c0_i32_257 : i32
    %481 = vector.extract_strided_slice %474 {offsets = [0, 0], sizes = [16, 16], strides = [1, 1]} : vector<16x18xf32> to vector<16x16xf32>
    %482 = arith.index_cast %480 : i32 to index
    %483 = memref.load %arg2[%482] : memref<288xf32, #tpu.memory_space<smem>>
    %484 = vector.broadcast %483 : f32 to vector<16x16xf32>
    %485 = arith.mulf %481, %484 : vector<16x16xf32>
    %486 = arith.addf %472, %485 : vector<16x16xf32>
    %c1_i32_258 = arith.constant 1 : i32
    %487 = arith.addi %0, %c1_i32_258 : i32
    %c4_i32_259 = arith.constant 4 : i32
    %488 = arith.muli %487, %c4_i32_259 : i32
    %c0_i32_260 = arith.constant 0 : i32
    %489 = arith.addi %488, %c0_i32_260 : i32
    %c9_i32_261 = arith.constant 9 : i32
    %490 = arith.muli %489, %c9_i32_261 : i32
    %c0_i32_262 = arith.constant 0 : i32
    %491 = arith.addi %490, %c0_i32_262 : i32
    %c1_i32_263 = arith.constant 1 : i32
    %492 = arith.addi %491, %c1_i32_263 : i32
    %493 = vector.extract_strided_slice %474 {offsets = [0, 1], sizes = [16, 16], strides = [1, 1]} : vector<16x18xf32> to vector<16x16xf32>
    %494 = arith.index_cast %492 : i32 to index
    %495 = memref.load %arg2[%494] : memref<288xf32, #tpu.memory_space<smem>>
    %496 = vector.broadcast %495 : f32 to vector<16x16xf32>
    %497 = arith.mulf %493, %496 : vector<16x16xf32>
    %498 = arith.addf %486, %497 : vector<16x16xf32>
    %c1_i32_264 = arith.constant 1 : i32
    %499 = arith.addi %0, %c1_i32_264 : i32
    %c4_i32_265 = arith.constant 4 : i32
    %500 = arith.muli %499, %c4_i32_265 : i32
    %c0_i32_266 = arith.constant 0 : i32
    %501 = arith.addi %500, %c0_i32_266 : i32
    %c9_i32_267 = arith.constant 9 : i32
    %502 = arith.muli %501, %c9_i32_267 : i32
    %c0_i32_268 = arith.constant 0 : i32
    %503 = arith.addi %502, %c0_i32_268 : i32
    %c2_i32_269 = arith.constant 2 : i32
    %504 = arith.addi %503, %c2_i32_269 : i32
    %505 = vector.extract_strided_slice %474 {offsets = [0, 2], sizes = [16, 16], strides = [1, 1]} : vector<16x18xf32> to vector<16x16xf32>
    %506 = arith.index_cast %504 : i32 to index
    %507 = memref.load %arg2[%506] : memref<288xf32, #tpu.memory_space<smem>>
    %508 = vector.broadcast %507 : f32 to vector<16x16xf32>
    %509 = arith.mulf %505, %508 : vector<16x16xf32>
    %510 = arith.addf %498, %509 : vector<16x16xf32>
    %c0_270 = arith.constant 0 : index
    %c1_271 = arith.constant 1 : index
    %c0_272 = arith.constant 0 : index
    %511 = vector.load %arg6[%c0_270, %c1_271, %c0_272] : memref<4x18x18xf32, #tpu.memory_space<vmem>>, vector<1x16x18xf32>
    %512 = vector.shape_cast %511 : vector<1x16x18xf32> to vector<16x18xf32>
    %c1_i32_273 = arith.constant 1 : i32
    %513 = arith.addi %0, %c1_i32_273 : i32
    %c4_i32_274 = arith.constant 4 : i32
    %514 = arith.muli %513, %c4_i32_274 : i32
    %c0_i32_275 = arith.constant 0 : i32
    %515 = arith.addi %514, %c0_i32_275 : i32
    %c9_i32_276 = arith.constant 9 : i32
    %516 = arith.muli %515, %c9_i32_276 : i32
    %c3_i32_277 = arith.constant 3 : i32
    %517 = arith.addi %516, %c3_i32_277 : i32
    %c0_i32_278 = arith.constant 0 : i32
    %518 = arith.addi %517, %c0_i32_278 : i32
    %519 = vector.extract_strided_slice %512 {offsets = [0, 0], sizes = [16, 16], strides = [1, 1]} : vector<16x18xf32> to vector<16x16xf32>
    %520 = arith.index_cast %518 : i32 to index
    %521 = memref.load %arg2[%520] : memref<288xf32, #tpu.memory_space<smem>>
    %522 = vector.broadcast %521 : f32 to vector<16x16xf32>
    %523 = arith.mulf %519, %522 : vector<16x16xf32>
    %524 = arith.addf %510, %523 : vector<16x16xf32>
    %c1_i32_279 = arith.constant 1 : i32
    %525 = arith.addi %0, %c1_i32_279 : i32
    %c4_i32_280 = arith.constant 4 : i32
    %526 = arith.muli %525, %c4_i32_280 : i32
    %c0_i32_281 = arith.constant 0 : i32
    %527 = arith.addi %526, %c0_i32_281 : i32
    %c9_i32_282 = arith.constant 9 : i32
    %528 = arith.muli %527, %c9_i32_282 : i32
    %c3_i32_283 = arith.constant 3 : i32
    %529 = arith.addi %528, %c3_i32_283 : i32
    %c1_i32_284 = arith.constant 1 : i32
    %530 = arith.addi %529, %c1_i32_284 : i32
    %531 = vector.extract_strided_slice %512 {offsets = [0, 1], sizes = [16, 16], strides = [1, 1]} : vector<16x18xf32> to vector<16x16xf32>
    %532 = arith.index_cast %530 : i32 to index
    %533 = memref.load %arg2[%532] : memref<288xf32, #tpu.memory_space<smem>>
    %534 = vector.broadcast %533 : f32 to vector<16x16xf32>
    %535 = arith.mulf %531, %534 : vector<16x16xf32>
    %536 = arith.addf %524, %535 : vector<16x16xf32>
    %c1_i32_285 = arith.constant 1 : i32
    %537 = arith.addi %0, %c1_i32_285 : i32
    %c4_i32_286 = arith.constant 4 : i32
    %538 = arith.muli %537, %c4_i32_286 : i32
    %c0_i32_287 = arith.constant 0 : i32
    %539 = arith.addi %538, %c0_i32_287 : i32
    %c9_i32_288 = arith.constant 9 : i32
    %540 = arith.muli %539, %c9_i32_288 : i32
    %c3_i32_289 = arith.constant 3 : i32
    %541 = arith.addi %540, %c3_i32_289 : i32
    %c2_i32_290 = arith.constant 2 : i32
    %542 = arith.addi %541, %c2_i32_290 : i32
    %543 = vector.extract_strided_slice %512 {offsets = [0, 2], sizes = [16, 16], strides = [1, 1]} : vector<16x18xf32> to vector<16x16xf32>
    %544 = arith.index_cast %542 : i32 to index
    %545 = memref.load %arg2[%544] : memref<288xf32, #tpu.memory_space<smem>>
    %546 = vector.broadcast %545 : f32 to vector<16x16xf32>
    %547 = arith.mulf %543, %546 : vector<16x16xf32>
    %548 = arith.addf %536, %547 : vector<16x16xf32>
    %c0_291 = arith.constant 0 : index
    %c2_292 = arith.constant 2 : index
    %c0_293 = arith.constant 0 : index
    %549 = vector.load %arg6[%c0_291, %c2_292, %c0_293] : memref<4x18x18xf32, #tpu.memory_space<vmem>>, vector<1x16x18xf32>
    %550 = vector.shape_cast %549 : vector<1x16x18xf32> to vector<16x18xf32>
    %c1_i32_294 = arith.constant 1 : i32
    %551 = arith.addi %0, %c1_i32_294 : i32
    %c4_i32_295 = arith.constant 4 : i32
    %552 = arith.muli %551, %c4_i32_295 : i32
    %c0_i32_296 = arith.constant 0 : i32
    %553 = arith.addi %552, %c0_i32_296 : i32
    %c9_i32_297 = arith.constant 9 : i32
    %554 = arith.muli %553, %c9_i32_297 : i32
    %c6_i32_298 = arith.constant 6 : i32
    %555 = arith.addi %554, %c6_i32_298 : i32
    %c0_i32_299 = arith.constant 0 : i32
    %556 = arith.addi %555, %c0_i32_299 : i32
    %557 = vector.extract_strided_slice %550 {offsets = [0, 0], sizes = [16, 16], strides = [1, 1]} : vector<16x18xf32> to vector<16x16xf32>
    %558 = arith.index_cast %556 : i32 to index
    %559 = memref.load %arg2[%558] : memref<288xf32, #tpu.memory_space<smem>>
    %560 = vector.broadcast %559 : f32 to vector<16x16xf32>
    %561 = arith.mulf %557, %560 : vector<16x16xf32>
    %562 = arith.addf %548, %561 : vector<16x16xf32>
    %c1_i32_300 = arith.constant 1 : i32
    %563 = arith.addi %0, %c1_i32_300 : i32
    %c4_i32_301 = arith.constant 4 : i32
    %564 = arith.muli %563, %c4_i32_301 : i32
    %c0_i32_302 = arith.constant 0 : i32
    %565 = arith.addi %564, %c0_i32_302 : i32
    %c9_i32_303 = arith.constant 9 : i32
    %566 = arith.muli %565, %c9_i32_303 : i32
    %c6_i32_304 = arith.constant 6 : i32
    %567 = arith.addi %566, %c6_i32_304 : i32
    %c1_i32_305 = arith.constant 1 : i32
    %568 = arith.addi %567, %c1_i32_305 : i32
    %569 = vector.extract_strided_slice %550 {offsets = [0, 1], sizes = [16, 16], strides = [1, 1]} : vector<16x18xf32> to vector<16x16xf32>
    %570 = arith.index_cast %568 : i32 to index
    %571 = memref.load %arg2[%570] : memref<288xf32, #tpu.memory_space<smem>>
    %572 = vector.broadcast %571 : f32 to vector<16x16xf32>
    %573 = arith.mulf %569, %572 : vector<16x16xf32>
    %574 = arith.addf %562, %573 : vector<16x16xf32>
    %c1_i32_306 = arith.constant 1 : i32
    %575 = arith.addi %0, %c1_i32_306 : i32
    %c4_i32_307 = arith.constant 4 : i32
    %576 = arith.muli %575, %c4_i32_307 : i32
    %c0_i32_308 = arith.constant 0 : i32
    %577 = arith.addi %576, %c0_i32_308 : i32
    %c9_i32_309 = arith.constant 9 : i32
    %578 = arith.muli %577, %c9_i32_309 : i32
    %c6_i32_310 = arith.constant 6 : i32
    %579 = arith.addi %578, %c6_i32_310 : i32
    %c2_i32_311 = arith.constant 2 : i32
    %580 = arith.addi %579, %c2_i32_311 : i32
    %581 = vector.extract_strided_slice %550 {offsets = [0, 2], sizes = [16, 16], strides = [1, 1]} : vector<16x18xf32> to vector<16x16xf32>
    %582 = arith.index_cast %580 : i32 to index
    %583 = memref.load %arg2[%582] : memref<288xf32, #tpu.memory_space<smem>>
    %584 = vector.broadcast %583 : f32 to vector<16x16xf32>
    %585 = arith.mulf %581, %584 : vector<16x16xf32>
    %586 = arith.addf %574, %585 : vector<16x16xf32>
    %c1_312 = arith.constant 1 : index
    %c0_313 = arith.constant 0 : index
    %c0_314 = arith.constant 0 : index
    %587 = vector.load %arg6[%c1_312, %c0_313, %c0_314] : memref<4x18x18xf32, #tpu.memory_space<vmem>>, vector<1x16x18xf32>
    %588 = vector.shape_cast %587 : vector<1x16x18xf32> to vector<16x18xf32>
    %c1_i32_315 = arith.constant 1 : i32
    %589 = arith.addi %0, %c1_i32_315 : i32
    %c4_i32_316 = arith.constant 4 : i32
    %590 = arith.muli %589, %c4_i32_316 : i32
    %c1_i32_317 = arith.constant 1 : i32
    %591 = arith.addi %590, %c1_i32_317 : i32
    %c9_i32_318 = arith.constant 9 : i32
    %592 = arith.muli %591, %c9_i32_318 : i32
    %c0_i32_319 = arith.constant 0 : i32
    %593 = arith.addi %592, %c0_i32_319 : i32
    %c0_i32_320 = arith.constant 0 : i32
    %594 = arith.addi %593, %c0_i32_320 : i32
    %595 = vector.extract_strided_slice %588 {offsets = [0, 0], sizes = [16, 16], strides = [1, 1]} : vector<16x18xf32> to vector<16x16xf32>
    %596 = arith.index_cast %594 : i32 to index
    %597 = memref.load %arg2[%596] : memref<288xf32, #tpu.memory_space<smem>>
    %598 = vector.broadcast %597 : f32 to vector<16x16xf32>
    %599 = arith.mulf %595, %598 : vector<16x16xf32>
    %600 = arith.addf %586, %599 : vector<16x16xf32>
    %c1_i32_321 = arith.constant 1 : i32
    %601 = arith.addi %0, %c1_i32_321 : i32
    %c4_i32_322 = arith.constant 4 : i32
    %602 = arith.muli %601, %c4_i32_322 : i32
    %c1_i32_323 = arith.constant 1 : i32
    %603 = arith.addi %602, %c1_i32_323 : i32
    %c9_i32_324 = arith.constant 9 : i32
    %604 = arith.muli %603, %c9_i32_324 : i32
    %c0_i32_325 = arith.constant 0 : i32
    %605 = arith.addi %604, %c0_i32_325 : i32
    %c1_i32_326 = arith.constant 1 : i32
    %606 = arith.addi %605, %c1_i32_326 : i32
    %607 = vector.extract_strided_slice %588 {offsets = [0, 1], sizes = [16, 16], strides = [1, 1]} : vector<16x18xf32> to vector<16x16xf32>
    %608 = arith.index_cast %606 : i32 to index
    %609 = memref.load %arg2[%608] : memref<288xf32, #tpu.memory_space<smem>>
    %610 = vector.broadcast %609 : f32 to vector<16x16xf32>
    %611 = arith.mulf %607, %610 : vector<16x16xf32>
    %612 = arith.addf %600, %611 : vector<16x16xf32>
    %c1_i32_327 = arith.constant 1 : i32
    %613 = arith.addi %0, %c1_i32_327 : i32
    %c4_i32_328 = arith.constant 4 : i32
    %614 = arith.muli %613, %c4_i32_328 : i32
    %c1_i32_329 = arith.constant 1 : i32
    %615 = arith.addi %614, %c1_i32_329 : i32
    %c9_i32_330 = arith.constant 9 : i32
    %616 = arith.muli %615, %c9_i32_330 : i32
    %c0_i32_331 = arith.constant 0 : i32
    %617 = arith.addi %616, %c0_i32_331 : i32
    %c2_i32_332 = arith.constant 2 : i32
    %618 = arith.addi %617, %c2_i32_332 : i32
    %619 = vector.extract_strided_slice %588 {offsets = [0, 2], sizes = [16, 16], strides = [1, 1]} : vector<16x18xf32> to vector<16x16xf32>
    %620 = arith.index_cast %618 : i32 to index
    %621 = memref.load %arg2[%620] : memref<288xf32, #tpu.memory_space<smem>>
    %622 = vector.broadcast %621 : f32 to vector<16x16xf32>
    %623 = arith.mulf %619, %622 : vector<16x16xf32>
    %624 = arith.addf %612, %623 : vector<16x16xf32>
    %c1_333 = arith.constant 1 : index
    %c1_334 = arith.constant 1 : index
    %c0_335 = arith.constant 0 : index
    %625 = vector.load %arg6[%c1_333, %c1_334, %c0_335] : memref<4x18x18xf32, #tpu.memory_space<vmem>>, vector<1x16x18xf32>
    %626 = vector.shape_cast %625 : vector<1x16x18xf32> to vector<16x18xf32>
    %c1_i32_336 = arith.constant 1 : i32
    %627 = arith.addi %0, %c1_i32_336 : i32
    %c4_i32_337 = arith.constant 4 : i32
    %628 = arith.muli %627, %c4_i32_337 : i32
    %c1_i32_338 = arith.constant 1 : i32
    %629 = arith.addi %628, %c1_i32_338 : i32
    %c9_i32_339 = arith.constant 9 : i32
    %630 = arith.muli %629, %c9_i32_339 : i32
    %c3_i32_340 = arith.constant 3 : i32
    %631 = arith.addi %630, %c3_i32_340 : i32
    %c0_i32_341 = arith.constant 0 : i32
    %632 = arith.addi %631, %c0_i32_341 : i32
    %633 = vector.extract_strided_slice %626 {offsets = [0, 0], sizes = [16, 16], strides = [1, 1]} : vector<16x18xf32> to vector<16x16xf32>
    %634 = arith.index_cast %632 : i32 to index
    %635 = memref.load %arg2[%634] : memref<288xf32, #tpu.memory_space<smem>>
    %636 = vector.broadcast %635 : f32 to vector<16x16xf32>
    %637 = arith.mulf %633, %636 : vector<16x16xf32>
    %638 = arith.addf %624, %637 : vector<16x16xf32>
    %c1_i32_342 = arith.constant 1 : i32
    %639 = arith.addi %0, %c1_i32_342 : i32
    %c4_i32_343 = arith.constant 4 : i32
    %640 = arith.muli %639, %c4_i32_343 : i32
    %c1_i32_344 = arith.constant 1 : i32
    %641 = arith.addi %640, %c1_i32_344 : i32
    %c9_i32_345 = arith.constant 9 : i32
    %642 = arith.muli %641, %c9_i32_345 : i32
    %c3_i32_346 = arith.constant 3 : i32
    %643 = arith.addi %642, %c3_i32_346 : i32
    %c1_i32_347 = arith.constant 1 : i32
    %644 = arith.addi %643, %c1_i32_347 : i32
    %645 = vector.extract_strided_slice %626 {offsets = [0, 1], sizes = [16, 16], strides = [1, 1]} : vector<16x18xf32> to vector<16x16xf32>
    %646 = arith.index_cast %644 : i32 to index
    %647 = memref.load %arg2[%646] : memref<288xf32, #tpu.memory_space<smem>>
    %648 = vector.broadcast %647 : f32 to vector<16x16xf32>
    %649 = arith.mulf %645, %648 : vector<16x16xf32>
    %650 = arith.addf %638, %649 : vector<16x16xf32>
    %c1_i32_348 = arith.constant 1 : i32
    %651 = arith.addi %0, %c1_i32_348 : i32
    %c4_i32_349 = arith.constant 4 : i32
    %652 = arith.muli %651, %c4_i32_349 : i32
    %c1_i32_350 = arith.constant 1 : i32
    %653 = arith.addi %652, %c1_i32_350 : i32
    %c9_i32_351 = arith.constant 9 : i32
    %654 = arith.muli %653, %c9_i32_351 : i32
    %c3_i32_352 = arith.constant 3 : i32
    %655 = arith.addi %654, %c3_i32_352 : i32
    %c2_i32_353 = arith.constant 2 : i32
    %656 = arith.addi %655, %c2_i32_353 : i32
    %657 = vector.extract_strided_slice %626 {offsets = [0, 2], sizes = [16, 16], strides = [1, 1]} : vector<16x18xf32> to vector<16x16xf32>
    %658 = arith.index_cast %656 : i32 to index
    %659 = memref.load %arg2[%658] : memref<288xf32, #tpu.memory_space<smem>>
    %660 = vector.broadcast %659 : f32 to vector<16x16xf32>
    %661 = arith.mulf %657, %660 : vector<16x16xf32>
    %662 = arith.addf %650, %661 : vector<16x16xf32>
    %c1_354 = arith.constant 1 : index
    %c2_355 = arith.constant 2 : index
    %c0_356 = arith.constant 0 : index
    %663 = vector.load %arg6[%c1_354, %c2_355, %c0_356] : memref<4x18x18xf32, #tpu.memory_space<vmem>>, vector<1x16x18xf32>
    %664 = vector.shape_cast %663 : vector<1x16x18xf32> to vector<16x18xf32>
    %c1_i32_357 = arith.constant 1 : i32
    %665 = arith.addi %0, %c1_i32_357 : i32
    %c4_i32_358 = arith.constant 4 : i32
    %666 = arith.muli %665, %c4_i32_358 : i32
    %c1_i32_359 = arith.constant 1 : i32
    %667 = arith.addi %666, %c1_i32_359 : i32
    %c9_i32_360 = arith.constant 9 : i32
    %668 = arith.muli %667, %c9_i32_360 : i32
    %c6_i32_361 = arith.constant 6 : i32
    %669 = arith.addi %668, %c6_i32_361 : i32
    %c0_i32_362 = arith.constant 0 : i32
    %670 = arith.addi %669, %c0_i32_362 : i32
    %671 = vector.extract_strided_slice %664 {offsets = [0, 0], sizes = [16, 16], strides = [1, 1]} : vector<16x18xf32> to vector<16x16xf32>
    %672 = arith.index_cast %670 : i32 to index
    %673 = memref.load %arg2[%672] : memref<288xf32, #tpu.memory_space<smem>>
    %674 = vector.broadcast %673 : f32 to vector<16x16xf32>
    %675 = arith.mulf %671, %674 : vector<16x16xf32>
    %676 = arith.addf %662, %675 : vector<16x16xf32>
    %c1_i32_363 = arith.constant 1 : i32
    %677 = arith.addi %0, %c1_i32_363 : i32
    %c4_i32_364 = arith.constant 4 : i32
    %678 = arith.muli %677, %c4_i32_364 : i32
    %c1_i32_365 = arith.constant 1 : i32
    %679 = arith.addi %678, %c1_i32_365 : i32
    %c9_i32_366 = arith.constant 9 : i32
    %680 = arith.muli %679, %c9_i32_366 : i32
    %c6_i32_367 = arith.constant 6 : i32
    %681 = arith.addi %680, %c6_i32_367 : i32
    %c1_i32_368 = arith.constant 1 : i32
    %682 = arith.addi %681, %c1_i32_368 : i32
    %683 = vector.extract_strided_slice %664 {offsets = [0, 1], sizes = [16, 16], strides = [1, 1]} : vector<16x18xf32> to vector<16x16xf32>
    %684 = arith.index_cast %682 : i32 to index
    %685 = memref.load %arg2[%684] : memref<288xf32, #tpu.memory_space<smem>>
    %686 = vector.broadcast %685 : f32 to vector<16x16xf32>
    %687 = arith.mulf %683, %686 : vector<16x16xf32>
    %688 = arith.addf %676, %687 : vector<16x16xf32>
    %c1_i32_369 = arith.constant 1 : i32
    %689 = arith.addi %0, %c1_i32_369 : i32
    %c4_i32_370 = arith.constant 4 : i32
    %690 = arith.muli %689, %c4_i32_370 : i32
    %c1_i32_371 = arith.constant 1 : i32
    %691 = arith.addi %690, %c1_i32_371 : i32
    %c9_i32_372 = arith.constant 9 : i32
    %692 = arith.muli %691, %c9_i32_372 : i32
    %c6_i32_373 = arith.constant 6 : i32
    %693 = arith.addi %692, %c6_i32_373 : i32
    %c2_i32_374 = arith.constant 2 : i32
    %694 = arith.addi %693, %c2_i32_374 : i32
    %695 = vector.extract_strided_slice %664 {offsets = [0, 2], sizes = [16, 16], strides = [1, 1]} : vector<16x18xf32> to vector<16x16xf32>
    %696 = arith.index_cast %694 : i32 to index
    %697 = memref.load %arg2[%696] : memref<288xf32, #tpu.memory_space<smem>>
    %698 = vector.broadcast %697 : f32 to vector<16x16xf32>
    %699 = arith.mulf %695, %698 : vector<16x16xf32>
    %700 = arith.addf %688, %699 : vector<16x16xf32>
    %c2_375 = arith.constant 2 : index
    %c0_376 = arith.constant 0 : index
    %c0_377 = arith.constant 0 : index
    %701 = vector.load %arg6[%c2_375, %c0_376, %c0_377] : memref<4x18x18xf32, #tpu.memory_space<vmem>>, vector<1x16x18xf32>
    %702 = vector.shape_cast %701 : vector<1x16x18xf32> to vector<16x18xf32>
    %c1_i32_378 = arith.constant 1 : i32
    %703 = arith.addi %0, %c1_i32_378 : i32
    %c4_i32_379 = arith.constant 4 : i32
    %704 = arith.muli %703, %c4_i32_379 : i32
    %c2_i32_380 = arith.constant 2 : i32
    %705 = arith.addi %704, %c2_i32_380 : i32
    %c9_i32_381 = arith.constant 9 : i32
    %706 = arith.muli %705, %c9_i32_381 : i32
    %c0_i32_382 = arith.constant 0 : i32
    %707 = arith.addi %706, %c0_i32_382 : i32
    %c0_i32_383 = arith.constant 0 : i32
    %708 = arith.addi %707, %c0_i32_383 : i32
    %709 = vector.extract_strided_slice %702 {offsets = [0, 0], sizes = [16, 16], strides = [1, 1]} : vector<16x18xf32> to vector<16x16xf32>
    %710 = arith.index_cast %708 : i32 to index
    %711 = memref.load %arg2[%710] : memref<288xf32, #tpu.memory_space<smem>>
    %712 = vector.broadcast %711 : f32 to vector<16x16xf32>
    %713 = arith.mulf %709, %712 : vector<16x16xf32>
    %714 = arith.addf %700, %713 : vector<16x16xf32>
    %c1_i32_384 = arith.constant 1 : i32
    %715 = arith.addi %0, %c1_i32_384 : i32
    %c4_i32_385 = arith.constant 4 : i32
    %716 = arith.muli %715, %c4_i32_385 : i32
    %c2_i32_386 = arith.constant 2 : i32
    %717 = arith.addi %716, %c2_i32_386 : i32
    %c9_i32_387 = arith.constant 9 : i32
    %718 = arith.muli %717, %c9_i32_387 : i32
    %c0_i32_388 = arith.constant 0 : i32
    %719 = arith.addi %718, %c0_i32_388 : i32
    %c1_i32_389 = arith.constant 1 : i32
    %720 = arith.addi %719, %c1_i32_389 : i32
    %721 = vector.extract_strided_slice %702 {offsets = [0, 1], sizes = [16, 16], strides = [1, 1]} : vector<16x18xf32> to vector<16x16xf32>
    %722 = arith.index_cast %720 : i32 to index
    %723 = memref.load %arg2[%722] : memref<288xf32, #tpu.memory_space<smem>>
    %724 = vector.broadcast %723 : f32 to vector<16x16xf32>
    %725 = arith.mulf %721, %724 : vector<16x16xf32>
    %726 = arith.addf %714, %725 : vector<16x16xf32>
    %c1_i32_390 = arith.constant 1 : i32
    %727 = arith.addi %0, %c1_i32_390 : i32
    %c4_i32_391 = arith.constant 4 : i32
    %728 = arith.muli %727, %c4_i32_391 : i32
    %c2_i32_392 = arith.constant 2 : i32
    %729 = arith.addi %728, %c2_i32_392 : i32
    %c9_i32_393 = arith.constant 9 : i32
    %730 = arith.muli %729, %c9_i32_393 : i32
    %c0_i32_394 = arith.constant 0 : i32
    %731 = arith.addi %730, %c0_i32_394 : i32
    %c2_i32_395 = arith.constant 2 : i32
    %732 = arith.addi %731, %c2_i32_395 : i32
    %733 = vector.extract_strided_slice %702 {offsets = [0, 2], sizes = [16, 16], strides = [1, 1]} : vector<16x18xf32> to vector<16x16xf32>
    %734 = arith.index_cast %732 : i32 to index
    %735 = memref.load %arg2[%734] : memref<288xf32, #tpu.memory_space<smem>>
    %736 = vector.broadcast %735 : f32 to vector<16x16xf32>
    %737 = arith.mulf %733, %736 : vector<16x16xf32>
    %738 = arith.addf %726, %737 : vector<16x16xf32>
    %c2_396 = arith.constant 2 : index
    %c1_397 = arith.constant 1 : index
    %c0_398 = arith.constant 0 : index
    %739 = vector.load %arg6[%c2_396, %c1_397, %c0_398] : memref<4x18x18xf32, #tpu.memory_space<vmem>>, vector<1x16x18xf32>
    %740 = vector.shape_cast %739 : vector<1x16x18xf32> to vector<16x18xf32>
    %c1_i32_399 = arith.constant 1 : i32
    %741 = arith.addi %0, %c1_i32_399 : i32
    %c4_i32_400 = arith.constant 4 : i32
    %742 = arith.muli %741, %c4_i32_400 : i32
    %c2_i32_401 = arith.constant 2 : i32
    %743 = arith.addi %742, %c2_i32_401 : i32
    %c9_i32_402 = arith.constant 9 : i32
    %744 = arith.muli %743, %c9_i32_402 : i32
    %c3_i32_403 = arith.constant 3 : i32
    %745 = arith.addi %744, %c3_i32_403 : i32
    %c0_i32_404 = arith.constant 0 : i32
    %746 = arith.addi %745, %c0_i32_404 : i32
    %747 = vector.extract_strided_slice %740 {offsets = [0, 0], sizes = [16, 16], strides = [1, 1]} : vector<16x18xf32> to vector<16x16xf32>
    %748 = arith.index_cast %746 : i32 to index
    %749 = memref.load %arg2[%748] : memref<288xf32, #tpu.memory_space<smem>>
    %750 = vector.broadcast %749 : f32 to vector<16x16xf32>
    %751 = arith.mulf %747, %750 : vector<16x16xf32>
    %752 = arith.addf %738, %751 : vector<16x16xf32>
    %c1_i32_405 = arith.constant 1 : i32
    %753 = arith.addi %0, %c1_i32_405 : i32
    %c4_i32_406 = arith.constant 4 : i32
    %754 = arith.muli %753, %c4_i32_406 : i32
    %c2_i32_407 = arith.constant 2 : i32
    %755 = arith.addi %754, %c2_i32_407 : i32
    %c9_i32_408 = arith.constant 9 : i32
    %756 = arith.muli %755, %c9_i32_408 : i32
    %c3_i32_409 = arith.constant 3 : i32
    %757 = arith.addi %756, %c3_i32_409 : i32
    %c1_i32_410 = arith.constant 1 : i32
    %758 = arith.addi %757, %c1_i32_410 : i32
    %759 = vector.extract_strided_slice %740 {offsets = [0, 1], sizes = [16, 16], strides = [1, 1]} : vector<16x18xf32> to vector<16x16xf32>
    %760 = arith.index_cast %758 : i32 to index
    %761 = memref.load %arg2[%760] : memref<288xf32, #tpu.memory_space<smem>>
    %762 = vector.broadcast %761 : f32 to vector<16x16xf32>
    %763 = arith.mulf %759, %762 : vector<16x16xf32>
    %764 = arith.addf %752, %763 : vector<16x16xf32>
    %c1_i32_411 = arith.constant 1 : i32
    %765 = arith.addi %0, %c1_i32_411 : i32
    %c4_i32_412 = arith.constant 4 : i32
    %766 = arith.muli %765, %c4_i32_412 : i32
    %c2_i32_413 = arith.constant 2 : i32
    %767 = arith.addi %766, %c2_i32_413 : i32
    %c9_i32_414 = arith.constant 9 : i32
    %768 = arith.muli %767, %c9_i32_414 : i32
    %c3_i32_415 = arith.constant 3 : i32
    %769 = arith.addi %768, %c3_i32_415 : i32
    %c2_i32_416 = arith.constant 2 : i32
    %770 = arith.addi %769, %c2_i32_416 : i32
    %771 = vector.extract_strided_slice %740 {offsets = [0, 2], sizes = [16, 16], strides = [1, 1]} : vector<16x18xf32> to vector<16x16xf32>
    %772 = arith.index_cast %770 : i32 to index
    %773 = memref.load %arg2[%772] : memref<288xf32, #tpu.memory_space<smem>>
    %774 = vector.broadcast %773 : f32 to vector<16x16xf32>
    %775 = arith.mulf %771, %774 : vector<16x16xf32>
    %776 = arith.addf %764, %775 : vector<16x16xf32>
    %c2_417 = arith.constant 2 : index
    %c2_418 = arith.constant 2 : index
    %c0_419 = arith.constant 0 : index
    %777 = vector.load %arg6[%c2_417, %c2_418, %c0_419] : memref<4x18x18xf32, #tpu.memory_space<vmem>>, vector<1x16x18xf32>
    %778 = vector.shape_cast %777 : vector<1x16x18xf32> to vector<16x18xf32>
    %c1_i32_420 = arith.constant 1 : i32
    %779 = arith.addi %0, %c1_i32_420 : i32
    %c4_i32_421 = arith.constant 4 : i32
    %780 = arith.muli %779, %c4_i32_421 : i32
    %c2_i32_422 = arith.constant 2 : i32
    %781 = arith.addi %780, %c2_i32_422 : i32
    %c9_i32_423 = arith.constant 9 : i32
    %782 = arith.muli %781, %c9_i32_423 : i32
    %c6_i32_424 = arith.constant 6 : i32
    %783 = arith.addi %782, %c6_i32_424 : i32
    %c0_i32_425 = arith.constant 0 : i32
    %784 = arith.addi %783, %c0_i32_425 : i32
    %785 = vector.extract_strided_slice %778 {offsets = [0, 0], sizes = [16, 16], strides = [1, 1]} : vector<16x18xf32> to vector<16x16xf32>
    %786 = arith.index_cast %784 : i32 to index
    %787 = memref.load %arg2[%786] : memref<288xf32, #tpu.memory_space<smem>>
    %788 = vector.broadcast %787 : f32 to vector<16x16xf32>
    %789 = arith.mulf %785, %788 : vector<16x16xf32>
    %790 = arith.addf %776, %789 : vector<16x16xf32>
    %c1_i32_426 = arith.constant 1 : i32
    %791 = arith.addi %0, %c1_i32_426 : i32
    %c4_i32_427 = arith.constant 4 : i32
    %792 = arith.muli %791, %c4_i32_427 : i32
    %c2_i32_428 = arith.constant 2 : i32
    %793 = arith.addi %792, %c2_i32_428 : i32
    %c9_i32_429 = arith.constant 9 : i32
    %794 = arith.muli %793, %c9_i32_429 : i32
    %c6_i32_430 = arith.constant 6 : i32
    %795 = arith.addi %794, %c6_i32_430 : i32
    %c1_i32_431 = arith.constant 1 : i32
    %796 = arith.addi %795, %c1_i32_431 : i32
    %797 = vector.extract_strided_slice %778 {offsets = [0, 1], sizes = [16, 16], strides = [1, 1]} : vector<16x18xf32> to vector<16x16xf32>
    %798 = arith.index_cast %796 : i32 to index
    %799 = memref.load %arg2[%798] : memref<288xf32, #tpu.memory_space<smem>>
    %800 = vector.broadcast %799 : f32 to vector<16x16xf32>
    %801 = arith.mulf %797, %800 : vector<16x16xf32>
    %802 = arith.addf %790, %801 : vector<16x16xf32>
    %c1_i32_432 = arith.constant 1 : i32
    %803 = arith.addi %0, %c1_i32_432 : i32
    %c4_i32_433 = arith.constant 4 : i32
    %804 = arith.muli %803, %c4_i32_433 : i32
    %c2_i32_434 = arith.constant 2 : i32
    %805 = arith.addi %804, %c2_i32_434 : i32
    %c9_i32_435 = arith.constant 9 : i32
    %806 = arith.muli %805, %c9_i32_435 : i32
    %c6_i32_436 = arith.constant 6 : i32
    %807 = arith.addi %806, %c6_i32_436 : i32
    %c2_i32_437 = arith.constant 2 : i32
    %808 = arith.addi %807, %c2_i32_437 : i32
    %809 = vector.extract_strided_slice %778 {offsets = [0, 2], sizes = [16, 16], strides = [1, 1]} : vector<16x18xf32> to vector<16x16xf32>
    %810 = arith.index_cast %808 : i32 to index
    %811 = memref.load %arg2[%810] : memref<288xf32, #tpu.memory_space<smem>>
    %812 = vector.broadcast %811 : f32 to vector<16x16xf32>
    %813 = arith.mulf %809, %812 : vector<16x16xf32>
    %814 = arith.addf %802, %813 : vector<16x16xf32>
    %c3_438 = arith.constant 3 : index
    %c0_439 = arith.constant 0 : index
    %c0_440 = arith.constant 0 : index
    %815 = vector.load %arg6[%c3_438, %c0_439, %c0_440] : memref<4x18x18xf32, #tpu.memory_space<vmem>>, vector<1x16x18xf32>
    %816 = vector.shape_cast %815 : vector<1x16x18xf32> to vector<16x18xf32>
    %c1_i32_441 = arith.constant 1 : i32
    %817 = arith.addi %0, %c1_i32_441 : i32
    %c4_i32_442 = arith.constant 4 : i32
    %818 = arith.muli %817, %c4_i32_442 : i32
    %c3_i32_443 = arith.constant 3 : i32
    %819 = arith.addi %818, %c3_i32_443 : i32
    %c9_i32_444 = arith.constant 9 : i32
    %820 = arith.muli %819, %c9_i32_444 : i32
    %c0_i32_445 = arith.constant 0 : i32
    %821 = arith.addi %820, %c0_i32_445 : i32
    %c0_i32_446 = arith.constant 0 : i32
    %822 = arith.addi %821, %c0_i32_446 : i32
    %823 = vector.extract_strided_slice %816 {offsets = [0, 0], sizes = [16, 16], strides = [1, 1]} : vector<16x18xf32> to vector<16x16xf32>
    %824 = arith.index_cast %822 : i32 to index
    %825 = memref.load %arg2[%824] : memref<288xf32, #tpu.memory_space<smem>>
    %826 = vector.broadcast %825 : f32 to vector<16x16xf32>
    %827 = arith.mulf %823, %826 : vector<16x16xf32>
    %828 = arith.addf %814, %827 : vector<16x16xf32>
    %c1_i32_447 = arith.constant 1 : i32
    %829 = arith.addi %0, %c1_i32_447 : i32
    %c4_i32_448 = arith.constant 4 : i32
    %830 = arith.muli %829, %c4_i32_448 : i32
    %c3_i32_449 = arith.constant 3 : i32
    %831 = arith.addi %830, %c3_i32_449 : i32
    %c9_i32_450 = arith.constant 9 : i32
    %832 = arith.muli %831, %c9_i32_450 : i32
    %c0_i32_451 = arith.constant 0 : i32
    %833 = arith.addi %832, %c0_i32_451 : i32
    %c1_i32_452 = arith.constant 1 : i32
    %834 = arith.addi %833, %c1_i32_452 : i32
    %835 = vector.extract_strided_slice %816 {offsets = [0, 1], sizes = [16, 16], strides = [1, 1]} : vector<16x18xf32> to vector<16x16xf32>
    %836 = arith.index_cast %834 : i32 to index
    %837 = memref.load %arg2[%836] : memref<288xf32, #tpu.memory_space<smem>>
    %838 = vector.broadcast %837 : f32 to vector<16x16xf32>
    %839 = arith.mulf %835, %838 : vector<16x16xf32>
    %840 = arith.addf %828, %839 : vector<16x16xf32>
    %c1_i32_453 = arith.constant 1 : i32
    %841 = arith.addi %0, %c1_i32_453 : i32
    %c4_i32_454 = arith.constant 4 : i32
    %842 = arith.muli %841, %c4_i32_454 : i32
    %c3_i32_455 = arith.constant 3 : i32
    %843 = arith.addi %842, %c3_i32_455 : i32
    %c9_i32_456 = arith.constant 9 : i32
    %844 = arith.muli %843, %c9_i32_456 : i32
    %c0_i32_457 = arith.constant 0 : i32
    %845 = arith.addi %844, %c0_i32_457 : i32
    %c2_i32_458 = arith.constant 2 : i32
    %846 = arith.addi %845, %c2_i32_458 : i32
    %847 = vector.extract_strided_slice %816 {offsets = [0, 2], sizes = [16, 16], strides = [1, 1]} : vector<16x18xf32> to vector<16x16xf32>
    %848 = arith.index_cast %846 : i32 to index
    %849 = memref.load %arg2[%848] : memref<288xf32, #tpu.memory_space<smem>>
    %850 = vector.broadcast %849 : f32 to vector<16x16xf32>
    %851 = arith.mulf %847, %850 : vector<16x16xf32>
    %852 = arith.addf %840, %851 : vector<16x16xf32>
    %c3_459 = arith.constant 3 : index
    %c1_460 = arith.constant 1 : index
    %c0_461 = arith.constant 0 : index
    %853 = vector.load %arg6[%c3_459, %c1_460, %c0_461] : memref<4x18x18xf32, #tpu.memory_space<vmem>>, vector<1x16x18xf32>
    %854 = vector.shape_cast %853 : vector<1x16x18xf32> to vector<16x18xf32>
    %c1_i32_462 = arith.constant 1 : i32
    %855 = arith.addi %0, %c1_i32_462 : i32
    %c4_i32_463 = arith.constant 4 : i32
    %856 = arith.muli %855, %c4_i32_463 : i32
    %c3_i32_464 = arith.constant 3 : i32
    %857 = arith.addi %856, %c3_i32_464 : i32
    %c9_i32_465 = arith.constant 9 : i32
    %858 = arith.muli %857, %c9_i32_465 : i32
    %c3_i32_466 = arith.constant 3 : i32
    %859 = arith.addi %858, %c3_i32_466 : i32
    %c0_i32_467 = arith.constant 0 : i32
    %860 = arith.addi %859, %c0_i32_467 : i32
    %861 = vector.extract_strided_slice %854 {offsets = [0, 0], sizes = [16, 16], strides = [1, 1]} : vector<16x18xf32> to vector<16x16xf32>
    %862 = arith.index_cast %860 : i32 to index
    %863 = memref.load %arg2[%862] : memref<288xf32, #tpu.memory_space<smem>>
    %864 = vector.broadcast %863 : f32 to vector<16x16xf32>
    %865 = arith.mulf %861, %864 : vector<16x16xf32>
    %866 = arith.addf %852, %865 : vector<16x16xf32>
    %c1_i32_468 = arith.constant 1 : i32
    %867 = arith.addi %0, %c1_i32_468 : i32
    %c4_i32_469 = arith.constant 4 : i32
    %868 = arith.muli %867, %c4_i32_469 : i32
    %c3_i32_470 = arith.constant 3 : i32
    %869 = arith.addi %868, %c3_i32_470 : i32
    %c9_i32_471 = arith.constant 9 : i32
    %870 = arith.muli %869, %c9_i32_471 : i32
    %c3_i32_472 = arith.constant 3 : i32
    %871 = arith.addi %870, %c3_i32_472 : i32
    %c1_i32_473 = arith.constant 1 : i32
    %872 = arith.addi %871, %c1_i32_473 : i32
    %873 = vector.extract_strided_slice %854 {offsets = [0, 1], sizes = [16, 16], strides = [1, 1]} : vector<16x18xf32> to vector<16x16xf32>
    %874 = arith.index_cast %872 : i32 to index
    %875 = memref.load %arg2[%874] : memref<288xf32, #tpu.memory_space<smem>>
    %876 = vector.broadcast %875 : f32 to vector<16x16xf32>
    %877 = arith.mulf %873, %876 : vector<16x16xf32>
    %878 = arith.addf %866, %877 : vector<16x16xf32>
    %c1_i32_474 = arith.constant 1 : i32
    %879 = arith.addi %0, %c1_i32_474 : i32
    %c4_i32_475 = arith.constant 4 : i32
    %880 = arith.muli %879, %c4_i32_475 : i32
    %c3_i32_476 = arith.constant 3 : i32
    %881 = arith.addi %880, %c3_i32_476 : i32
    %c9_i32_477 = arith.constant 9 : i32
    %882 = arith.muli %881, %c9_i32_477 : i32
    %c3_i32_478 = arith.constant 3 : i32
    %883 = arith.addi %882, %c3_i32_478 : i32
    %c2_i32_479 = arith.constant 2 : i32
    %884 = arith.addi %883, %c2_i32_479 : i32
    %885 = vector.extract_strided_slice %854 {offsets = [0, 2], sizes = [16, 16], strides = [1, 1]} : vector<16x18xf32> to vector<16x16xf32>
    %886 = arith.index_cast %884 : i32 to index
    %887 = memref.load %arg2[%886] : memref<288xf32, #tpu.memory_space<smem>>
    %888 = vector.broadcast %887 : f32 to vector<16x16xf32>
    %889 = arith.mulf %885, %888 : vector<16x16xf32>
    %890 = arith.addf %878, %889 : vector<16x16xf32>
    %c3_480 = arith.constant 3 : index
    %c2_481 = arith.constant 2 : index
    %c0_482 = arith.constant 0 : index
    %891 = vector.load %arg6[%c3_480, %c2_481, %c0_482] : memref<4x18x18xf32, #tpu.memory_space<vmem>>, vector<1x16x18xf32>
    %892 = vector.shape_cast %891 : vector<1x16x18xf32> to vector<16x18xf32>
    %c1_i32_483 = arith.constant 1 : i32
    %893 = arith.addi %0, %c1_i32_483 : i32
    %c4_i32_484 = arith.constant 4 : i32
    %894 = arith.muli %893, %c4_i32_484 : i32
    %c3_i32_485 = arith.constant 3 : i32
    %895 = arith.addi %894, %c3_i32_485 : i32
    %c9_i32_486 = arith.constant 9 : i32
    %896 = arith.muli %895, %c9_i32_486 : i32
    %c6_i32_487 = arith.constant 6 : i32
    %897 = arith.addi %896, %c6_i32_487 : i32
    %c0_i32_488 = arith.constant 0 : i32
    %898 = arith.addi %897, %c0_i32_488 : i32
    %899 = vector.extract_strided_slice %892 {offsets = [0, 0], sizes = [16, 16], strides = [1, 1]} : vector<16x18xf32> to vector<16x16xf32>
    %900 = arith.index_cast %898 : i32 to index
    %901 = memref.load %arg2[%900] : memref<288xf32, #tpu.memory_space<smem>>
    %902 = vector.broadcast %901 : f32 to vector<16x16xf32>
    %903 = arith.mulf %899, %902 : vector<16x16xf32>
    %904 = arith.addf %890, %903 : vector<16x16xf32>
    %c1_i32_489 = arith.constant 1 : i32
    %905 = arith.addi %0, %c1_i32_489 : i32
    %c4_i32_490 = arith.constant 4 : i32
    %906 = arith.muli %905, %c4_i32_490 : i32
    %c3_i32_491 = arith.constant 3 : i32
    %907 = arith.addi %906, %c3_i32_491 : i32
    %c9_i32_492 = arith.constant 9 : i32
    %908 = arith.muli %907, %c9_i32_492 : i32
    %c6_i32_493 = arith.constant 6 : i32
    %909 = arith.addi %908, %c6_i32_493 : i32
    %c1_i32_494 = arith.constant 1 : i32
    %910 = arith.addi %909, %c1_i32_494 : i32
    %911 = vector.extract_strided_slice %892 {offsets = [0, 1], sizes = [16, 16], strides = [1, 1]} : vector<16x18xf32> to vector<16x16xf32>
    %912 = arith.index_cast %910 : i32 to index
    %913 = memref.load %arg2[%912] : memref<288xf32, #tpu.memory_space<smem>>
    %914 = vector.broadcast %913 : f32 to vector<16x16xf32>
    %915 = arith.mulf %911, %914 : vector<16x16xf32>
    %916 = arith.addf %904, %915 : vector<16x16xf32>
    %c1_i32_495 = arith.constant 1 : i32
    %917 = arith.addi %0, %c1_i32_495 : i32
    %c4_i32_496 = arith.constant 4 : i32
    %918 = arith.muli %917, %c4_i32_496 : i32
    %c3_i32_497 = arith.constant 3 : i32
    %919 = arith.addi %918, %c3_i32_497 : i32
    %c9_i32_498 = arith.constant 9 : i32
    %920 = arith.muli %919, %c9_i32_498 : i32
    %c6_i32_499 = arith.constant 6 : i32
    %921 = arith.addi %920, %c6_i32_499 : i32
    %c2_i32_500 = arith.constant 2 : i32
    %922 = arith.addi %921, %c2_i32_500 : i32
    %923 = vector.extract_strided_slice %892 {offsets = [0, 2], sizes = [16, 16], strides = [1, 1]} : vector<16x18xf32> to vector<16x16xf32>
    %924 = arith.index_cast %922 : i32 to index
    %925 = memref.load %arg2[%924] : memref<288xf32, #tpu.memory_space<smem>>
    %926 = vector.broadcast %925 : f32 to vector<16x16xf32>
    %927 = arith.mulf %923, %926 : vector<16x16xf32>
    %928 = arith.addf %916, %927 : vector<16x16xf32>
    %cst_501 = arith.constant 0.000000e+00 : f32
    %929 = vector.broadcast %cst_501 : f32 to vector<16x16xf32>
    %930 = arith.maximumf %928, %929 : vector<16x16xf32>
    %c0_502 = arith.constant 0 : index
    %c1_503 = arith.constant 1 : index
    %c0_504 = arith.constant 0 : index
    %c0_505 = arith.constant 0 : index
    %931 = vector.load %arg5[%c0_502, %c1_503, %c0_504, %c0_505] : memref<1x8x16x16xf32, #tpu.memory_space<vmem>>, vector<1x1x16x16xf32>
    %932 = vector.shape_cast %931 : vector<1x1x16x16xf32> to vector<16x16xf32>
    %933 = vector.shape_cast %930 : vector<16x16xf32> to vector<1x1x16x16xf32>
    tpu.vector_store %arg5[%c0_502, %c1_503, %c0_504, %c0_505], %933 {strides = array<i32>} : memref<1x8x16x16xf32, #tpu.memory_space<vmem>>, vector<1x1x16x16xf32>,
    %c2_i32_506 = arith.constant 2 : i32
    %934 = arith.addi %0, %c2_i32_506 : i32
    %935 = arith.index_cast %934 : i32 to index
    %936 = memref.load %arg3[%935] : memref<8xf32, #tpu.memory_space<smem>>
    %937 = vector.broadcast %936 : f32 to vector<16x16xf32>
    %c0_507 = arith.constant 0 : index
    %c0_508 = arith.constant 0 : index
    %c0_509 = arith.constant 0 : index
    %938 = vector.load %arg6[%c0_507, %c0_508, %c0_509] : memref<4x18x18xf32, #tpu.memory_space<vmem>>, vector<1x16x18xf32>
    %939 = vector.shape_cast %938 : vector<1x16x18xf32> to vector<16x18xf32>
    %c2_i32_510 = arith.constant 2 : i32
    %940 = arith.addi %0, %c2_i32_510 : i32
    %c4_i32_511 = arith.constant 4 : i32
    %941 = arith.muli %940, %c4_i32_511 : i32
    %c0_i32_512 = arith.constant 0 : i32
    %942 = arith.addi %941, %c0_i32_512 : i32
    %c9_i32_513 = arith.constant 9 : i32
    %943 = arith.muli %942, %c9_i32_513 : i32
    %c0_i32_514 = arith.constant 0 : i32
    %944 = arith.addi %943, %c0_i32_514 : i32
    %c0_i32_515 = arith.constant 0 : i32
    %945 = arith.addi %944, %c0_i32_515 : i32
    %946 = vector.extract_strided_slice %939 {offsets = [0, 0], sizes = [16, 16], strides = [1, 1]} : vector<16x18xf32> to vector<16x16xf32>
    %947 = arith.index_cast %945 : i32 to index
    %948 = memref.load %arg2[%947] : memref<288xf32, #tpu.memory_space<smem>>
    %949 = vector.broadcast %948 : f32 to vector<16x16xf32>
    %950 = arith.mulf %946, %949 : vector<16x16xf32>
    %951 = arith.addf %937, %950 : vector<16x16xf32>
    %c2_i32_516 = arith.constant 2 : i32
    %952 = arith.addi %0, %c2_i32_516 : i32
    %c4_i32_517 = arith.constant 4 : i32
    %953 = arith.muli %952, %c4_i32_517 : i32
    %c0_i32_518 = arith.constant 0 : i32
    %954 = arith.addi %953, %c0_i32_518 : i32
    %c9_i32_519 = arith.constant 9 : i32
    %955 = arith.muli %954, %c9_i32_519 : i32
    %c0_i32_520 = arith.constant 0 : i32
    %956 = arith.addi %955, %c0_i32_520 : i32
    %c1_i32_521 = arith.constant 1 : i32
    %957 = arith.addi %956, %c1_i32_521 : i32
    %958 = vector.extract_strided_slice %939 {offsets = [0, 1], sizes = [16, 16], strides = [1, 1]} : vector<16x18xf32> to vector<16x16xf32>
    %959 = arith.index_cast %957 : i32 to index
    %960 = memref.load %arg2[%959] : memref<288xf32, #tpu.memory_space<smem>>
    %961 = vector.broadcast %960 : f32 to vector<16x16xf32>
    %962 = arith.mulf %958, %961 : vector<16x16xf32>
    %963 = arith.addf %951, %962 : vector<16x16xf32>
    %c2_i32_522 = arith.constant 2 : i32
    %964 = arith.addi %0, %c2_i32_522 : i32
    %c4_i32_523 = arith.constant 4 : i32
    %965 = arith.muli %964, %c4_i32_523 : i32
    %c0_i32_524 = arith.constant 0 : i32
    %966 = arith.addi %965, %c0_i32_524 : i32
    %c9_i32_525 = arith.constant 9 : i32
    %967 = arith.muli %966, %c9_i32_525 : i32
    %c0_i32_526 = arith.constant 0 : i32
    %968 = arith.addi %967, %c0_i32_526 : i32
    %c2_i32_527 = arith.constant 2 : i32
    %969 = arith.addi %968, %c2_i32_527 : i32
    %970 = vector.extract_strided_slice %939 {offsets = [0, 2], sizes = [16, 16], strides = [1, 1]} : vector<16x18xf32> to vector<16x16xf32>
    %971 = arith.index_cast %969 : i32 to index
    %972 = memref.load %arg2[%971] : memref<288xf32, #tpu.memory_space<smem>>
    %973 = vector.broadcast %972 : f32 to vector<16x16xf32>
    %974 = arith.mulf %970, %973 : vector<16x16xf32>
    %975 = arith.addf %963, %974 : vector<16x16xf32>
    %c0_528 = arith.constant 0 : index
    %c1_529 = arith.constant 1 : index
    %c0_530 = arith.constant 0 : index
    %976 = vector.load %arg6[%c0_528, %c1_529, %c0_530] : memref<4x18x18xf32, #tpu.memory_space<vmem>>, vector<1x16x18xf32>
    %977 = vector.shape_cast %976 : vector<1x16x18xf32> to vector<16x18xf32>
    %c2_i32_531 = arith.constant 2 : i32
    %978 = arith.addi %0, %c2_i32_531 : i32
    %c4_i32_532 = arith.constant 4 : i32
    %979 = arith.muli %978, %c4_i32_532 : i32
    %c0_i32_533 = arith.constant 0 : i32
    %980 = arith.addi %979, %c0_i32_533 : i32
    %c9_i32_534 = arith.constant 9 : i32
    %981 = arith.muli %980, %c9_i32_534 : i32
    %c3_i32_535 = arith.constant 3 : i32
    %982 = arith.addi %981, %c3_i32_535 : i32
    %c0_i32_536 = arith.constant 0 : i32
    %983 = arith.addi %982, %c0_i32_536 : i32
    %984 = vector.extract_strided_slice %977 {offsets = [0, 0], sizes = [16, 16], strides = [1, 1]} : vector<16x18xf32> to vector<16x16xf32>
    %985 = arith.index_cast %983 : i32 to index
    %986 = memref.load %arg2[%985] : memref<288xf32, #tpu.memory_space<smem>>
    %987 = vector.broadcast %986 : f32 to vector<16x16xf32>
    %988 = arith.mulf %984, %987 : vector<16x16xf32>
    %989 = arith.addf %975, %988 : vector<16x16xf32>
    %c2_i32_537 = arith.constant 2 : i32
    %990 = arith.addi %0, %c2_i32_537 : i32
    %c4_i32_538 = arith.constant 4 : i32
    %991 = arith.muli %990, %c4_i32_538 : i32
    %c0_i32_539 = arith.constant 0 : i32
    %992 = arith.addi %991, %c0_i32_539 : i32
    %c9_i32_540 = arith.constant 9 : i32
    %993 = arith.muli %992, %c9_i32_540 : i32
    %c3_i32_541 = arith.constant 3 : i32
    %994 = arith.addi %993, %c3_i32_541 : i32
    %c1_i32_542 = arith.constant 1 : i32
    %995 = arith.addi %994, %c1_i32_542 : i32
    %996 = vector.extract_strided_slice %977 {offsets = [0, 1], sizes = [16, 16], strides = [1, 1]} : vector<16x18xf32> to vector<16x16xf32>
    %997 = arith.index_cast %995 : i32 to index
    %998 = memref.load %arg2[%997] : memref<288xf32, #tpu.memory_space<smem>>
    %999 = vector.broadcast %998 : f32 to vector<16x16xf32>
    %1000 = arith.mulf %996, %999 : vector<16x16xf32>
    %1001 = arith.addf %989, %1000 : vector<16x16xf32>
    %c2_i32_543 = arith.constant 2 : i32
    %1002 = arith.addi %0, %c2_i32_543 : i32
    %c4_i32_544 = arith.constant 4 : i32
    %1003 = arith.muli %1002, %c4_i32_544 : i32
    %c0_i32_545 = arith.constant 0 : i32
    %1004 = arith.addi %1003, %c0_i32_545 : i32
    %c9_i32_546 = arith.constant 9 : i32
    %1005 = arith.muli %1004, %c9_i32_546 : i32
    %c3_i32_547 = arith.constant 3 : i32
    %1006 = arith.addi %1005, %c3_i32_547 : i32
    %c2_i32_548 = arith.constant 2 : i32
    %1007 = arith.addi %1006, %c2_i32_548 : i32
    %1008 = vector.extract_strided_slice %977 {offsets = [0, 2], sizes = [16, 16], strides = [1, 1]} : vector<16x18xf32> to vector<16x16xf32>
    %1009 = arith.index_cast %1007 : i32 to index
    %1010 = memref.load %arg2[%1009] : memref<288xf32, #tpu.memory_space<smem>>
    %1011 = vector.broadcast %1010 : f32 to vector<16x16xf32>
    %1012 = arith.mulf %1008, %1011 : vector<16x16xf32>
    %1013 = arith.addf %1001, %1012 : vector<16x16xf32>
    %c0_549 = arith.constant 0 : index
    %c2_550 = arith.constant 2 : index
    %c0_551 = arith.constant 0 : index
    %1014 = vector.load %arg6[%c0_549, %c2_550, %c0_551] : memref<4x18x18xf32, #tpu.memory_space<vmem>>, vector<1x16x18xf32>
    %1015 = vector.shape_cast %1014 : vector<1x16x18xf32> to vector<16x18xf32>
    %c2_i32_552 = arith.constant 2 : i32
    %1016 = arith.addi %0, %c2_i32_552 : i32
    %c4_i32_553 = arith.constant 4 : i32
    %1017 = arith.muli %1016, %c4_i32_553 : i32
    %c0_i32_554 = arith.constant 0 : i32
    %1018 = arith.addi %1017, %c0_i32_554 : i32
    %c9_i32_555 = arith.constant 9 : i32
    %1019 = arith.muli %1018, %c9_i32_555 : i32
    %c6_i32_556 = arith.constant 6 : i32
    %1020 = arith.addi %1019, %c6_i32_556 : i32
    %c0_i32_557 = arith.constant 0 : i32
    %1021 = arith.addi %1020, %c0_i32_557 : i32
    %1022 = vector.extract_strided_slice %1015 {offsets = [0, 0], sizes = [16, 16], strides = [1, 1]} : vector<16x18xf32> to vector<16x16xf32>
    %1023 = arith.index_cast %1021 : i32 to index
    %1024 = memref.load %arg2[%1023] : memref<288xf32, #tpu.memory_space<smem>>
    %1025 = vector.broadcast %1024 : f32 to vector<16x16xf32>
    %1026 = arith.mulf %1022, %1025 : vector<16x16xf32>
    %1027 = arith.addf %1013, %1026 : vector<16x16xf32>
    %c2_i32_558 = arith.constant 2 : i32
    %1028 = arith.addi %0, %c2_i32_558 : i32
    %c4_i32_559 = arith.constant 4 : i32
    %1029 = arith.muli %1028, %c4_i32_559 : i32
    %c0_i32_560 = arith.constant 0 : i32
    %1030 = arith.addi %1029, %c0_i32_560 : i32
    %c9_i32_561 = arith.constant 9 : i32
    %1031 = arith.muli %1030, %c9_i32_561 : i32
    %c6_i32_562 = arith.constant 6 : i32
    %1032 = arith.addi %1031, %c6_i32_562 : i32
    %c1_i32_563 = arith.constant 1 : i32
    %1033 = arith.addi %1032, %c1_i32_563 : i32
    %1034 = vector.extract_strided_slice %1015 {offsets = [0, 1], sizes = [16, 16], strides = [1, 1]} : vector<16x18xf32> to vector<16x16xf32>
    %1035 = arith.index_cast %1033 : i32 to index
    %1036 = memref.load %arg2[%1035] : memref<288xf32, #tpu.memory_space<smem>>
    %1037 = vector.broadcast %1036 : f32 to vector<16x16xf32>
    %1038 = arith.mulf %1034, %1037 : vector<16x16xf32>
    %1039 = arith.addf %1027, %1038 : vector<16x16xf32>
    %c2_i32_564 = arith.constant 2 : i32
    %1040 = arith.addi %0, %c2_i32_564 : i32
    %c4_i32_565 = arith.constant 4 : i32
    %1041 = arith.muli %1040, %c4_i32_565 : i32
    %c0_i32_566 = arith.constant 0 : i32
    %1042 = arith.addi %1041, %c0_i32_566 : i32
    %c9_i32_567 = arith.constant 9 : i32
    %1043 = arith.muli %1042, %c9_i32_567 : i32
    %c6_i32_568 = arith.constant 6 : i32
    %1044 = arith.addi %1043, %c6_i32_568 : i32
    %c2_i32_569 = arith.constant 2 : i32
    %1045 = arith.addi %1044, %c2_i32_569 : i32
    %1046 = vector.extract_strided_slice %1015 {offsets = [0, 2], sizes = [16, 16], strides = [1, 1]} : vector<16x18xf32> to vector<16x16xf32>
    %1047 = arith.index_cast %1045 : i32 to index
    %1048 = memref.load %arg2[%1047] : memref<288xf32, #tpu.memory_space<smem>>
    %1049 = vector.broadcast %1048 : f32 to vector<16x16xf32>
    %1050 = arith.mulf %1046, %1049 : vector<16x16xf32>
    %1051 = arith.addf %1039, %1050 : vector<16x16xf32>
    %c1_570 = arith.constant 1 : index
    %c0_571 = arith.constant 0 : index
    %c0_572 = arith.constant 0 : index
    %1052 = vector.load %arg6[%c1_570, %c0_571, %c0_572] : memref<4x18x18xf32, #tpu.memory_space<vmem>>, vector<1x16x18xf32>
    %1053 = vector.shape_cast %1052 : vector<1x16x18xf32> to vector<16x18xf32>
    %c2_i32_573 = arith.constant 2 : i32
    %1054 = arith.addi %0, %c2_i32_573 : i32
    %c4_i32_574 = arith.constant 4 : i32
    %1055 = arith.muli %1054, %c4_i32_574 : i32
    %c1_i32_575 = arith.constant 1 : i32
    %1056 = arith.addi %1055, %c1_i32_575 : i32
    %c9_i32_576 = arith.constant 9 : i32
    %1057 = arith.muli %1056, %c9_i32_576 : i32
    %c0_i32_577 = arith.constant 0 : i32
    %1058 = arith.addi %1057, %c0_i32_577 : i32
    %c0_i32_578 = arith.constant 0 : i32
    %1059 = arith.addi %1058, %c0_i32_578 : i32
    %1060 = vector.extract_strided_slice %1053 {offsets = [0, 0], sizes = [16, 16], strides = [1, 1]} : vector<16x18xf32> to vector<16x16xf32>
    %1061 = arith.index_cast %1059 : i32 to index
    %1062 = memref.load %arg2[%1061] : memref<288xf32, #tpu.memory_space<smem>>
    %1063 = vector.broadcast %1062 : f32 to vector<16x16xf32>
    %1064 = arith.mulf %1060, %1063 : vector<16x16xf32>
    %1065 = arith.addf %1051, %1064 : vector<16x16xf32>
    %c2_i32_579 = arith.constant 2 : i32
    %1066 = arith.addi %0, %c2_i32_579 : i32
    %c4_i32_580 = arith.constant 4 : i32
    %1067 = arith.muli %1066, %c4_i32_580 : i32
    %c1_i32_581 = arith.constant 1 : i32
    %1068 = arith.addi %1067, %c1_i32_581 : i32
    %c9_i32_582 = arith.constant 9 : i32
    %1069 = arith.muli %1068, %c9_i32_582 : i32
    %c0_i32_583 = arith.constant 0 : i32
    %1070 = arith.addi %1069, %c0_i32_583 : i32
    %c1_i32_584 = arith.constant 1 : i32
    %1071 = arith.addi %1070, %c1_i32_584 : i32
    %1072 = vector.extract_strided_slice %1053 {offsets = [0, 1], sizes = [16, 16], strides = [1, 1]} : vector<16x18xf32> to vector<16x16xf32>
    %1073 = arith.index_cast %1071 : i32 to index
    %1074 = memref.load %arg2[%1073] : memref<288xf32, #tpu.memory_space<smem>>
    %1075 = vector.broadcast %1074 : f32 to vector<16x16xf32>
    %1076 = arith.mulf %1072, %1075 : vector<16x16xf32>
    %1077 = arith.addf %1065, %1076 : vector<16x16xf32>
    %c2_i32_585 = arith.constant 2 : i32
    %1078 = arith.addi %0, %c2_i32_585 : i32
    %c4_i32_586 = arith.constant 4 : i32
    %1079 = arith.muli %1078, %c4_i32_586 : i32
    %c1_i32_587 = arith.constant 1 : i32
    %1080 = arith.addi %1079, %c1_i32_587 : i32
    %c9_i32_588 = arith.constant 9 : i32
    %1081 = arith.muli %1080, %c9_i32_588 : i32
    %c0_i32_589 = arith.constant 0 : i32
    %1082 = arith.addi %1081, %c0_i32_589 : i32
    %c2_i32_590 = arith.constant 2 : i32
    %1083 = arith.addi %1082, %c2_i32_590 : i32
    %1084 = vector.extract_strided_slice %1053 {offsets = [0, 2], sizes = [16, 16], strides = [1, 1]} : vector<16x18xf32> to vector<16x16xf32>
    %1085 = arith.index_cast %1083 : i32 to index
    %1086 = memref.load %arg2[%1085] : memref<288xf32, #tpu.memory_space<smem>>
    %1087 = vector.broadcast %1086 : f32 to vector<16x16xf32>
    %1088 = arith.mulf %1084, %1087 : vector<16x16xf32>
    %1089 = arith.addf %1077, %1088 : vector<16x16xf32>
    %c1_591 = arith.constant 1 : index
    %c1_592 = arith.constant 1 : index
    %c0_593 = arith.constant 0 : index
    %1090 = vector.load %arg6[%c1_591, %c1_592, %c0_593] : memref<4x18x18xf32, #tpu.memory_space<vmem>>, vector<1x16x18xf32>
    %1091 = vector.shape_cast %1090 : vector<1x16x18xf32> to vector<16x18xf32>
    %c2_i32_594 = arith.constant 2 : i32
    %1092 = arith.addi %0, %c2_i32_594 : i32
    %c4_i32_595 = arith.constant 4 : i32
    %1093 = arith.muli %1092, %c4_i32_595 : i32
    %c1_i32_596 = arith.constant 1 : i32
    %1094 = arith.addi %1093, %c1_i32_596 : i32
    %c9_i32_597 = arith.constant 9 : i32
    %1095 = arith.muli %1094, %c9_i32_597 : i32
    %c3_i32_598 = arith.constant 3 : i32
    %1096 = arith.addi %1095, %c3_i32_598 : i32
    %c0_i32_599 = arith.constant 0 : i32
    %1097 = arith.addi %1096, %c0_i32_599 : i32
    %1098 = vector.extract_strided_slice %1091 {offsets = [0, 0], sizes = [16, 16], strides = [1, 1]} : vector<16x18xf32> to vector<16x16xf32>
    %1099 = arith.index_cast %1097 : i32 to index
    %1100 = memref.load %arg2[%1099] : memref<288xf32, #tpu.memory_space<smem>>
    %1101 = vector.broadcast %1100 : f32 to vector<16x16xf32>
    %1102 = arith.mulf %1098, %1101 : vector<16x16xf32>
    %1103 = arith.addf %1089, %1102 : vector<16x16xf32>
    %c2_i32_600 = arith.constant 2 : i32
    %1104 = arith.addi %0, %c2_i32_600 : i32
    %c4_i32_601 = arith.constant 4 : i32
    %1105 = arith.muli %1104, %c4_i32_601 : i32
    %c1_i32_602 = arith.constant 1 : i32
    %1106 = arith.addi %1105, %c1_i32_602 : i32
    %c9_i32_603 = arith.constant 9 : i32
    %1107 = arith.muli %1106, %c9_i32_603 : i32
    %c3_i32_604 = arith.constant 3 : i32
    %1108 = arith.addi %1107, %c3_i32_604 : i32
    %c1_i32_605 = arith.constant 1 : i32
    %1109 = arith.addi %1108, %c1_i32_605 : i32
    %1110 = vector.extract_strided_slice %1091 {offsets = [0, 1], sizes = [16, 16], strides = [1, 1]} : vector<16x18xf32> to vector<16x16xf32>
    %1111 = arith.index_cast %1109 : i32 to index
    %1112 = memref.load %arg2[%1111] : memref<288xf32, #tpu.memory_space<smem>>
    %1113 = vector.broadcast %1112 : f32 to vector<16x16xf32>
    %1114 = arith.mulf %1110, %1113 : vector<16x16xf32>
    %1115 = arith.addf %1103, %1114 : vector<16x16xf32>
    %c2_i32_606 = arith.constant 2 : i32
    %1116 = arith.addi %0, %c2_i32_606 : i32
    %c4_i32_607 = arith.constant 4 : i32
    %1117 = arith.muli %1116, %c4_i32_607 : i32
    %c1_i32_608 = arith.constant 1 : i32
    %1118 = arith.addi %1117, %c1_i32_608 : i32
    %c9_i32_609 = arith.constant 9 : i32
    %1119 = arith.muli %1118, %c9_i32_609 : i32
    %c3_i32_610 = arith.constant 3 : i32
    %1120 = arith.addi %1119, %c3_i32_610 : i32
    %c2_i32_611 = arith.constant 2 : i32
    %1121 = arith.addi %1120, %c2_i32_611 : i32
    %1122 = vector.extract_strided_slice %1091 {offsets = [0, 2], sizes = [16, 16], strides = [1, 1]} : vector<16x18xf32> to vector<16x16xf32>
    %1123 = arith.index_cast %1121 : i32 to index
    %1124 = memref.load %arg2[%1123] : memref<288xf32, #tpu.memory_space<smem>>
    %1125 = vector.broadcast %1124 : f32 to vector<16x16xf32>
    %1126 = arith.mulf %1122, %1125 : vector<16x16xf32>
    %1127 = arith.addf %1115, %1126 : vector<16x16xf32>
    %c1_612 = arith.constant 1 : index
    %c2_613 = arith.constant 2 : index
    %c0_614 = arith.constant 0 : index
    %1128 = vector.load %arg6[%c1_612, %c2_613, %c0_614] : memref<4x18x18xf32, #tpu.memory_space<vmem>>, vector<1x16x18xf32>
    %1129 = vector.shape_cast %1128 : vector<1x16x18xf32> to vector<16x18xf32>
    %c2_i32_615 = arith.constant 2 : i32
    %1130 = arith.addi %0, %c2_i32_615 : i32
    %c4_i32_616 = arith.constant 4 : i32
    %1131 = arith.muli %1130, %c4_i32_616 : i32
    %c1_i32_617 = arith.constant 1 : i32
    %1132 = arith.addi %1131, %c1_i32_617 : i32
    %c9_i32_618 = arith.constant 9 : i32
    %1133 = arith.muli %1132, %c9_i32_618 : i32
    %c6_i32_619 = arith.constant 6 : i32
    %1134 = arith.addi %1133, %c6_i32_619 : i32
    %c0_i32_620 = arith.constant 0 : i32
    %1135 = arith.addi %1134, %c0_i32_620 : i32
    %1136 = vector.extract_strided_slice %1129 {offsets = [0, 0], sizes = [16, 16], strides = [1, 1]} : vector<16x18xf32> to vector<16x16xf32>
    %1137 = arith.index_cast %1135 : i32 to index
    %1138 = memref.load %arg2[%1137] : memref<288xf32, #tpu.memory_space<smem>>
    %1139 = vector.broadcast %1138 : f32 to vector<16x16xf32>
    %1140 = arith.mulf %1136, %1139 : vector<16x16xf32>
    %1141 = arith.addf %1127, %1140 : vector<16x16xf32>
    %c2_i32_621 = arith.constant 2 : i32
    %1142 = arith.addi %0, %c2_i32_621 : i32
    %c4_i32_622 = arith.constant 4 : i32
    %1143 = arith.muli %1142, %c4_i32_622 : i32
    %c1_i32_623 = arith.constant 1 : i32
    %1144 = arith.addi %1143, %c1_i32_623 : i32
    %c9_i32_624 = arith.constant 9 : i32
    %1145 = arith.muli %1144, %c9_i32_624 : i32
    %c6_i32_625 = arith.constant 6 : i32
    %1146 = arith.addi %1145, %c6_i32_625 : i32
    %c1_i32_626 = arith.constant 1 : i32
    %1147 = arith.addi %1146, %c1_i32_626 : i32
    %1148 = vector.extract_strided_slice %1129 {offsets = [0, 1], sizes = [16, 16], strides = [1, 1]} : vector<16x18xf32> to vector<16x16xf32>
    %1149 = arith.index_cast %1147 : i32 to index
    %1150 = memref.load %arg2[%1149] : memref<288xf32, #tpu.memory_space<smem>>
    %1151 = vector.broadcast %1150 : f32 to vector<16x16xf32>
    %1152 = arith.mulf %1148, %1151 : vector<16x16xf32>
    %1153 = arith.addf %1141, %1152 : vector<16x16xf32>
    %c2_i32_627 = arith.constant 2 : i32
    %1154 = arith.addi %0, %c2_i32_627 : i32
    %c4_i32_628 = arith.constant 4 : i32
    %1155 = arith.muli %1154, %c4_i32_628 : i32
    %c1_i32_629 = arith.constant 1 : i32
    %1156 = arith.addi %1155, %c1_i32_629 : i32
    %c9_i32_630 = arith.constant 9 : i32
    %1157 = arith.muli %1156, %c9_i32_630 : i32
    %c6_i32_631 = arith.constant 6 : i32
    %1158 = arith.addi %1157, %c6_i32_631 : i32
    %c2_i32_632 = arith.constant 2 : i32
    %1159 = arith.addi %1158, %c2_i32_632 : i32
    %1160 = vector.extract_strided_slice %1129 {offsets = [0, 2], sizes = [16, 16], strides = [1, 1]} : vector<16x18xf32> to vector<16x16xf32>
    %1161 = arith.index_cast %1159 : i32 to index
    %1162 = memref.load %arg2[%1161] : memref<288xf32, #tpu.memory_space<smem>>
    %1163 = vector.broadcast %1162 : f32 to vector<16x16xf32>
    %1164 = arith.mulf %1160, %1163 : vector<16x16xf32>
    %1165 = arith.addf %1153, %1164 : vector<16x16xf32>
    %c2_633 = arith.constant 2 : index
    %c0_634 = arith.constant 0 : index
    %c0_635 = arith.constant 0 : index
    %1166 = vector.load %arg6[%c2_633, %c0_634, %c0_635] : memref<4x18x18xf32, #tpu.memory_space<vmem>>, vector<1x16x18xf32>
    %1167 = vector.shape_cast %1166 : vector<1x16x18xf32> to vector<16x18xf32>
    %c2_i32_636 = arith.constant 2 : i32
    %1168 = arith.addi %0, %c2_i32_636 : i32
    %c4_i32_637 = arith.constant 4 : i32
    %1169 = arith.muli %1168, %c4_i32_637 : i32
    %c2_i32_638 = arith.constant 2 : i32
    %1170 = arith.addi %1169, %c2_i32_638 : i32
    %c9_i32_639 = arith.constant 9 : i32
    %1171 = arith.muli %1170, %c9_i32_639 : i32
    %c0_i32_640 = arith.constant 0 : i32
    %1172 = arith.addi %1171, %c0_i32_640 : i32
    %c0_i32_641 = arith.constant 0 : i32
    %1173 = arith.addi %1172, %c0_i32_641 : i32
    %1174 = vector.extract_strided_slice %1167 {offsets = [0, 0], sizes = [16, 16], strides = [1, 1]} : vector<16x18xf32> to vector<16x16xf32>
    %1175 = arith.index_cast %1173 : i32 to index
    %1176 = memref.load %arg2[%1175] : memref<288xf32, #tpu.memory_space<smem>>
    %1177 = vector.broadcast %1176 : f32 to vector<16x16xf32>
    %1178 = arith.mulf %1174, %1177 : vector<16x16xf32>
    %1179 = arith.addf %1165, %1178 : vector<16x16xf32>
    %c2_i32_642 = arith.constant 2 : i32
    %1180 = arith.addi %0, %c2_i32_642 : i32
    %c4_i32_643 = arith.constant 4 : i32
    %1181 = arith.muli %1180, %c4_i32_643 : i32
    %c2_i32_644 = arith.constant 2 : i32
    %1182 = arith.addi %1181, %c2_i32_644 : i32
    %c9_i32_645 = arith.constant 9 : i32
    %1183 = arith.muli %1182, %c9_i32_645 : i32
    %c0_i32_646 = arith.constant 0 : i32
    %1184 = arith.addi %1183, %c0_i32_646 : i32
    %c1_i32_647 = arith.constant 1 : i32
    %1185 = arith.addi %1184, %c1_i32_647 : i32
    %1186 = vector.extract_strided_slice %1167 {offsets = [0, 1], sizes = [16, 16], strides = [1, 1]} : vector<16x18xf32> to vector<16x16xf32>
    %1187 = arith.index_cast %1185 : i32 to index
    %1188 = memref.load %arg2[%1187] : memref<288xf32, #tpu.memory_space<smem>>
    %1189 = vector.broadcast %1188 : f32 to vector<16x16xf32>
    %1190 = arith.mulf %1186, %1189 : vector<16x16xf32>
    %1191 = arith.addf %1179, %1190 : vector<16x16xf32>
    %c2_i32_648 = arith.constant 2 : i32
    %1192 = arith.addi %0, %c2_i32_648 : i32
    %c4_i32_649 = arith.constant 4 : i32
    %1193 = arith.muli %1192, %c4_i32_649 : i32
    %c2_i32_650 = arith.constant 2 : i32
    %1194 = arith.addi %1193, %c2_i32_650 : i32
    %c9_i32_651 = arith.constant 9 : i32
    %1195 = arith.muli %1194, %c9_i32_651 : i32
    %c0_i32_652 = arith.constant 0 : i32
    %1196 = arith.addi %1195, %c0_i32_652 : i32
    %c2_i32_653 = arith.constant 2 : i32
    %1197 = arith.addi %1196, %c2_i32_653 : i32
    %1198 = vector.extract_strided_slice %1167 {offsets = [0, 2], sizes = [16, 16], strides = [1, 1]} : vector<16x18xf32> to vector<16x16xf32>
    %1199 = arith.index_cast %1197 : i32 to index
    %1200 = memref.load %arg2[%1199] : memref<288xf32, #tpu.memory_space<smem>>
    %1201 = vector.broadcast %1200 : f32 to vector<16x16xf32>
    %1202 = arith.mulf %1198, %1201 : vector<16x16xf32>
    %1203 = arith.addf %1191, %1202 : vector<16x16xf32>
    %c2_654 = arith.constant 2 : index
    %c1_655 = arith.constant 1 : index
    %c0_656 = arith.constant 0 : index
    %1204 = vector.load %arg6[%c2_654, %c1_655, %c0_656] : memref<4x18x18xf32, #tpu.memory_space<vmem>>, vector<1x16x18xf32>
    %1205 = vector.shape_cast %1204 : vector<1x16x18xf32> to vector<16x18xf32>
    %c2_i32_657 = arith.constant 2 : i32
    %1206 = arith.addi %0, %c2_i32_657 : i32
    %c4_i32_658 = arith.constant 4 : i32
    %1207 = arith.muli %1206, %c4_i32_658 : i32
    %c2_i32_659 = arith.constant 2 : i32
    %1208 = arith.addi %1207, %c2_i32_659 : i32
    %c9_i32_660 = arith.constant 9 : i32
    %1209 = arith.muli %1208, %c9_i32_660 : i32
    %c3_i32_661 = arith.constant 3 : i32
    %1210 = arith.addi %1209, %c3_i32_661 : i32
    %c0_i32_662 = arith.constant 0 : i32
    %1211 = arith.addi %1210, %c0_i32_662 : i32
    %1212 = vector.extract_strided_slice %1205 {offsets = [0, 0], sizes = [16, 16], strides = [1, 1]} : vector<16x18xf32> to vector<16x16xf32>
    %1213 = arith.index_cast %1211 : i32 to index
    %1214 = memref.load %arg2[%1213] : memref<288xf32, #tpu.memory_space<smem>>
    %1215 = vector.broadcast %1214 : f32 to vector<16x16xf32>
    %1216 = arith.mulf %1212, %1215 : vector<16x16xf32>
    %1217 = arith.addf %1203, %1216 : vector<16x16xf32>
    %c2_i32_663 = arith.constant 2 : i32
    %1218 = arith.addi %0, %c2_i32_663 : i32
    %c4_i32_664 = arith.constant 4 : i32
    %1219 = arith.muli %1218, %c4_i32_664 : i32
    %c2_i32_665 = arith.constant 2 : i32
    %1220 = arith.addi %1219, %c2_i32_665 : i32
    %c9_i32_666 = arith.constant 9 : i32
    %1221 = arith.muli %1220, %c9_i32_666 : i32
    %c3_i32_667 = arith.constant 3 : i32
    %1222 = arith.addi %1221, %c3_i32_667 : i32
    %c1_i32_668 = arith.constant 1 : i32
    %1223 = arith.addi %1222, %c1_i32_668 : i32
    %1224 = vector.extract_strided_slice %1205 {offsets = [0, 1], sizes = [16, 16], strides = [1, 1]} : vector<16x18xf32> to vector<16x16xf32>
    %1225 = arith.index_cast %1223 : i32 to index
    %1226 = memref.load %arg2[%1225] : memref<288xf32, #tpu.memory_space<smem>>
    %1227 = vector.broadcast %1226 : f32 to vector<16x16xf32>
    %1228 = arith.mulf %1224, %1227 : vector<16x16xf32>
    %1229 = arith.addf %1217, %1228 : vector<16x16xf32>
    %c2_i32_669 = arith.constant 2 : i32
    %1230 = arith.addi %0, %c2_i32_669 : i32
    %c4_i32_670 = arith.constant 4 : i32
    %1231 = arith.muli %1230, %c4_i32_670 : i32
    %c2_i32_671 = arith.constant 2 : i32
    %1232 = arith.addi %1231, %c2_i32_671 : i32
    %c9_i32_672 = arith.constant 9 : i32
    %1233 = arith.muli %1232, %c9_i32_672 : i32
    %c3_i32_673 = arith.constant 3 : i32
    %1234 = arith.addi %1233, %c3_i32_673 : i32
    %c2_i32_674 = arith.constant 2 : i32
    %1235 = arith.addi %1234, %c2_i32_674 : i32
    %1236 = vector.extract_strided_slice %1205 {offsets = [0, 2], sizes = [16, 16], strides = [1, 1]} : vector<16x18xf32> to vector<16x16xf32>
    %1237 = arith.index_cast %1235 : i32 to index
    %1238 = memref.load %arg2[%1237] : memref<288xf32, #tpu.memory_space<smem>>
    %1239 = vector.broadcast %1238 : f32 to vector<16x16xf32>
    %1240 = arith.mulf %1236, %1239 : vector<16x16xf32>
    %1241 = arith.addf %1229, %1240 : vector<16x16xf32>
    %c2_675 = arith.constant 2 : index
    %c2_676 = arith.constant 2 : index
    %c0_677 = arith.constant 0 : index
    %1242 = vector.load %arg6[%c2_675, %c2_676, %c0_677] : memref<4x18x18xf32, #tpu.memory_space<vmem>>, vector<1x16x18xf32>
    %1243 = vector.shape_cast %1242 : vector<1x16x18xf32> to vector<16x18xf32>
    %c2_i32_678 = arith.constant 2 : i32
    %1244 = arith.addi %0, %c2_i32_678 : i32
    %c4_i32_679 = arith.constant 4 : i32
    %1245 = arith.muli %1244, %c4_i32_679 : i32
    %c2_i32_680 = arith.constant 2 : i32
    %1246 = arith.addi %1245, %c2_i32_680 : i32
    %c9_i32_681 = arith.constant 9 : i32
    %1247 = arith.muli %1246, %c9_i32_681 : i32
    %c6_i32_682 = arith.constant 6 : i32
    %1248 = arith.addi %1247, %c6_i32_682 : i32
    %c0_i32_683 = arith.constant 0 : i32
    %1249 = arith.addi %1248, %c0_i32_683 : i32
    %1250 = vector.extract_strided_slice %1243 {offsets = [0, 0], sizes = [16, 16], strides = [1, 1]} : vector<16x18xf32> to vector<16x16xf32>
    %1251 = arith.index_cast %1249 : i32 to index
    %1252 = memref.load %arg2[%1251] : memref<288xf32, #tpu.memory_space<smem>>
    %1253 = vector.broadcast %1252 : f32 to vector<16x16xf32>
    %1254 = arith.mulf %1250, %1253 : vector<16x16xf32>
    %1255 = arith.addf %1241, %1254 : vector<16x16xf32>
    %c2_i32_684 = arith.constant 2 : i32
    %1256 = arith.addi %0, %c2_i32_684 : i32
    %c4_i32_685 = arith.constant 4 : i32
    %1257 = arith.muli %1256, %c4_i32_685 : i32
    %c2_i32_686 = arith.constant 2 : i32
    %1258 = arith.addi %1257, %c2_i32_686 : i32
    %c9_i32_687 = arith.constant 9 : i32
    %1259 = arith.muli %1258, %c9_i32_687 : i32
    %c6_i32_688 = arith.constant 6 : i32
    %1260 = arith.addi %1259, %c6_i32_688 : i32
    %c1_i32_689 = arith.constant 1 : i32
    %1261 = arith.addi %1260, %c1_i32_689 : i32
    %1262 = vector.extract_strided_slice %1243 {offsets = [0, 1], sizes = [16, 16], strides = [1, 1]} : vector<16x18xf32> to vector<16x16xf32>
    %1263 = arith.index_cast %1261 : i32 to index
    %1264 = memref.load %arg2[%1263] : memref<288xf32, #tpu.memory_space<smem>>
    %1265 = vector.broadcast %1264 : f32 to vector<16x16xf32>
    %1266 = arith.mulf %1262, %1265 : vector<16x16xf32>
    %1267 = arith.addf %1255, %1266 : vector<16x16xf32>
    %c2_i32_690 = arith.constant 2 : i32
    %1268 = arith.addi %0, %c2_i32_690 : i32
    %c4_i32_691 = arith.constant 4 : i32
    %1269 = arith.muli %1268, %c4_i32_691 : i32
    %c2_i32_692 = arith.constant 2 : i32
    %1270 = arith.addi %1269, %c2_i32_692 : i32
    %c9_i32_693 = arith.constant 9 : i32
    %1271 = arith.muli %1270, %c9_i32_693 : i32
    %c6_i32_694 = arith.constant 6 : i32
    %1272 = arith.addi %1271, %c6_i32_694 : i32
    %c2_i32_695 = arith.constant 2 : i32
    %1273 = arith.addi %1272, %c2_i32_695 : i32
    %1274 = vector.extract_strided_slice %1243 {offsets = [0, 2], sizes = [16, 16], strides = [1, 1]} : vector<16x18xf32> to vector<16x16xf32>
    %1275 = arith.index_cast %1273 : i32 to index
    %1276 = memref.load %arg2[%1275] : memref<288xf32, #tpu.memory_space<smem>>
    %1277 = vector.broadcast %1276 : f32 to vector<16x16xf32>
    %1278 = arith.mulf %1274, %1277 : vector<16x16xf32>
    %1279 = arith.addf %1267, %1278 : vector<16x16xf32>
    %c3_696 = arith.constant 3 : index
    %c0_697 = arith.constant 0 : index
    %c0_698 = arith.constant 0 : index
    %1280 = vector.load %arg6[%c3_696, %c0_697, %c0_698] : memref<4x18x18xf32, #tpu.memory_space<vmem>>, vector<1x16x18xf32>
    %1281 = vector.shape_cast %1280 : vector<1x16x18xf32> to vector<16x18xf32>
    %c2_i32_699 = arith.constant 2 : i32
    %1282 = arith.addi %0, %c2_i32_699 : i32
    %c4_i32_700 = arith.constant 4 : i32
    %1283 = arith.muli %1282, %c4_i32_700 : i32
    %c3_i32_701 = arith.constant 3 : i32
    %1284 = arith.addi %1283, %c3_i32_701 : i32
    %c9_i32_702 = arith.constant 9 : i32
    %1285 = arith.muli %1284, %c9_i32_702 : i32
    %c0_i32_703 = arith.constant 0 : i32
    %1286 = arith.addi %1285, %c0_i32_703 : i32
    %c0_i32_704 = arith.constant 0 : i32
    %1287 = arith.addi %1286, %c0_i32_704 : i32
    %1288 = vector.extract_strided_slice %1281 {offsets = [0, 0], sizes = [16, 16], strides = [1, 1]} : vector<16x18xf32> to vector<16x16xf32>
    %1289 = arith.index_cast %1287 : i32 to index
    %1290 = memref.load %arg2[%1289] : memref<288xf32, #tpu.memory_space<smem>>
    %1291 = vector.broadcast %1290 : f32 to vector<16x16xf32>
    %1292 = arith.mulf %1288, %1291 : vector<16x16xf32>
    %1293 = arith.addf %1279, %1292 : vector<16x16xf32>
    %c2_i32_705 = arith.constant 2 : i32
    %1294 = arith.addi %0, %c2_i32_705 : i32
    %c4_i32_706 = arith.constant 4 : i32
    %1295 = arith.muli %1294, %c4_i32_706 : i32
    %c3_i32_707 = arith.constant 3 : i32
    %1296 = arith.addi %1295, %c3_i32_707 : i32
    %c9_i32_708 = arith.constant 9 : i32
    %1297 = arith.muli %1296, %c9_i32_708 : i32
    %c0_i32_709 = arith.constant 0 : i32
    %1298 = arith.addi %1297, %c0_i32_709 : i32
    %c1_i32_710 = arith.constant 1 : i32
    %1299 = arith.addi %1298, %c1_i32_710 : i32
    %1300 = vector.extract_strided_slice %1281 {offsets = [0, 1], sizes = [16, 16], strides = [1, 1]} : vector<16x18xf32> to vector<16x16xf32>
    %1301 = arith.index_cast %1299 : i32 to index
    %1302 = memref.load %arg2[%1301] : memref<288xf32, #tpu.memory_space<smem>>
    %1303 = vector.broadcast %1302 : f32 to vector<16x16xf32>
    %1304 = arith.mulf %1300, %1303 : vector<16x16xf32>
    %1305 = arith.addf %1293, %1304 : vector<16x16xf32>
    %c2_i32_711 = arith.constant 2 : i32
    %1306 = arith.addi %0, %c2_i32_711 : i32
    %c4_i32_712 = arith.constant 4 : i32
    %1307 = arith.muli %1306, %c4_i32_712 : i32
    %c3_i32_713 = arith.constant 3 : i32
    %1308 = arith.addi %1307, %c3_i32_713 : i32
    %c9_i32_714 = arith.constant 9 : i32
    %1309 = arith.muli %1308, %c9_i32_714 : i32
    %c0_i32_715 = arith.constant 0 : i32
    %1310 = arith.addi %1309, %c0_i32_715 : i32
    %c2_i32_716 = arith.constant 2 : i32
    %1311 = arith.addi %1310, %c2_i32_716 : i32
    %1312 = vector.extract_strided_slice %1281 {offsets = [0, 2], sizes = [16, 16], strides = [1, 1]} : vector<16x18xf32> to vector<16x16xf32>
    %1313 = arith.index_cast %1311 : i32 to index
    %1314 = memref.load %arg2[%1313] : memref<288xf32, #tpu.memory_space<smem>>
    %1315 = vector.broadcast %1314 : f32 to vector<16x16xf32>
    %1316 = arith.mulf %1312, %1315 : vector<16x16xf32>
    %1317 = arith.addf %1305, %1316 : vector<16x16xf32>
    %c3_717 = arith.constant 3 : index
    %c1_718 = arith.constant 1 : index
    %c0_719 = arith.constant 0 : index
    %1318 = vector.load %arg6[%c3_717, %c1_718, %c0_719] : memref<4x18x18xf32, #tpu.memory_space<vmem>>, vector<1x16x18xf32>
    %1319 = vector.shape_cast %1318 : vector<1x16x18xf32> to vector<16x18xf32>
    %c2_i32_720 = arith.constant 2 : i32
    %1320 = arith.addi %0, %c2_i32_720 : i32
    %c4_i32_721 = arith.constant 4 : i32
    %1321 = arith.muli %1320, %c4_i32_721 : i32
    %c3_i32_722 = arith.constant 3 : i32
    %1322 = arith.addi %1321, %c3_i32_722 : i32
    %c9_i32_723 = arith.constant 9 : i32
    %1323 = arith.muli %1322, %c9_i32_723 : i32
    %c3_i32_724 = arith.constant 3 : i32
    %1324 = arith.addi %1323, %c3_i32_724 : i32
    %c0_i32_725 = arith.constant 0 : i32
    %1325 = arith.addi %1324, %c0_i32_725 : i32
    %1326 = vector.extract_strided_slice %1319 {offsets = [0, 0], sizes = [16, 16], strides = [1, 1]} : vector<16x18xf32> to vector<16x16xf32>
    %1327 = arith.index_cast %1325 : i32 to index
    %1328 = memref.load %arg2[%1327] : memref<288xf32, #tpu.memory_space<smem>>
    %1329 = vector.broadcast %1328 : f32 to vector<16x16xf32>
    %1330 = arith.mulf %1326, %1329 : vector<16x16xf32>
    %1331 = arith.addf %1317, %1330 : vector<16x16xf32>
    %c2_i32_726 = arith.constant 2 : i32
    %1332 = arith.addi %0, %c2_i32_726 : i32
    %c4_i32_727 = arith.constant 4 : i32
    %1333 = arith.muli %1332, %c4_i32_727 : i32
    %c3_i32_728 = arith.constant 3 : i32
    %1334 = arith.addi %1333, %c3_i32_728 : i32
    %c9_i32_729 = arith.constant 9 : i32
    %1335 = arith.muli %1334, %c9_i32_729 : i32
    %c3_i32_730 = arith.constant 3 : i32
    %1336 = arith.addi %1335, %c3_i32_730 : i32
    %c1_i32_731 = arith.constant 1 : i32
    %1337 = arith.addi %1336, %c1_i32_731 : i32
    %1338 = vector.extract_strided_slice %1319 {offsets = [0, 1], sizes = [16, 16], strides = [1, 1]} : vector<16x18xf32> to vector<16x16xf32>
    %1339 = arith.index_cast %1337 : i32 to index
    %1340 = memref.load %arg2[%1339] : memref<288xf32, #tpu.memory_space<smem>>
    %1341 = vector.broadcast %1340 : f32 to vector<16x16xf32>
    %1342 = arith.mulf %1338, %1341 : vector<16x16xf32>
    %1343 = arith.addf %1331, %1342 : vector<16x16xf32>
    %c2_i32_732 = arith.constant 2 : i32
    %1344 = arith.addi %0, %c2_i32_732 : i32
    %c4_i32_733 = arith.constant 4 : i32
    %1345 = arith.muli %1344, %c4_i32_733 : i32
    %c3_i32_734 = arith.constant 3 : i32
    %1346 = arith.addi %1345, %c3_i32_734 : i32
    %c9_i32_735 = arith.constant 9 : i32
    %1347 = arith.muli %1346, %c9_i32_735 : i32
    %c3_i32_736 = arith.constant 3 : i32
    %1348 = arith.addi %1347, %c3_i32_736 : i32
    %c2_i32_737 = arith.constant 2 : i32
    %1349 = arith.addi %1348, %c2_i32_737 : i32
    %1350 = vector.extract_strided_slice %1319 {offsets = [0, 2], sizes = [16, 16], strides = [1, 1]} : vector<16x18xf32> to vector<16x16xf32>
    %1351 = arith.index_cast %1349 : i32 to index
    %1352 = memref.load %arg2[%1351] : memref<288xf32, #tpu.memory_space<smem>>
    %1353 = vector.broadcast %1352 : f32 to vector<16x16xf32>
    %1354 = arith.mulf %1350, %1353 : vector<16x16xf32>
    %1355 = arith.addf %1343, %1354 : vector<16x16xf32>
    %c3_738 = arith.constant 3 : index
    %c2_739 = arith.constant 2 : index
    %c0_740 = arith.constant 0 : index
    %1356 = vector.load %arg6[%c3_738, %c2_739, %c0_740] : memref<4x18x18xf32, #tpu.memory_space<vmem>>, vector<1x16x18xf32>
    %1357 = vector.shape_cast %1356 : vector<1x16x18xf32> to vector<16x18xf32>
    %c2_i32_741 = arith.constant 2 : i32
    %1358 = arith.addi %0, %c2_i32_741 : i32
    %c4_i32_742 = arith.constant 4 : i32
    %1359 = arith.muli %1358, %c4_i32_742 : i32
    %c3_i32_743 = arith.constant 3 : i32
    %1360 = arith.addi %1359, %c3_i32_743 : i32
    %c9_i32_744 = arith.constant 9 : i32
    %1361 = arith.muli %1360, %c9_i32_744 : i32
    %c6_i32_745 = arith.constant 6 : i32
    %1362 = arith.addi %1361, %c6_i32_745 : i32
    %c0_i32_746 = arith.constant 0 : i32
    %1363 = arith.addi %1362, %c0_i32_746 : i32
    %1364 = vector.extract_strided_slice %1357 {offsets = [0, 0], sizes = [16, 16], strides = [1, 1]} : vector<16x18xf32> to vector<16x16xf32>
    %1365 = arith.index_cast %1363 : i32 to index
    %1366 = memref.load %arg2[%1365] : memref<288xf32, #tpu.memory_space<smem>>
    %1367 = vector.broadcast %1366 : f32 to vector<16x16xf32>
    %1368 = arith.mulf %1364, %1367 : vector<16x16xf32>
    %1369 = arith.addf %1355, %1368 : vector<16x16xf32>
    %c2_i32_747 = arith.constant 2 : i32
    %1370 = arith.addi %0, %c2_i32_747 : i32
    %c4_i32_748 = arith.constant 4 : i32
    %1371 = arith.muli %1370, %c4_i32_748 : i32
    %c3_i32_749 = arith.constant 3 : i32
    %1372 = arith.addi %1371, %c3_i32_749 : i32
    %c9_i32_750 = arith.constant 9 : i32
    %1373 = arith.muli %1372, %c9_i32_750 : i32
    %c6_i32_751 = arith.constant 6 : i32
    %1374 = arith.addi %1373, %c6_i32_751 : i32
    %c1_i32_752 = arith.constant 1 : i32
    %1375 = arith.addi %1374, %c1_i32_752 : i32
    %1376 = vector.extract_strided_slice %1357 {offsets = [0, 1], sizes = [16, 16], strides = [1, 1]} : vector<16x18xf32> to vector<16x16xf32>
    %1377 = arith.index_cast %1375 : i32 to index
    %1378 = memref.load %arg2[%1377] : memref<288xf32, #tpu.memory_space<smem>>
    %1379 = vector.broadcast %1378 : f32 to vector<16x16xf32>
    %1380 = arith.mulf %1376, %1379 : vector<16x16xf32>
    %1381 = arith.addf %1369, %1380 : vector<16x16xf32>
    %c2_i32_753 = arith.constant 2 : i32
    %1382 = arith.addi %0, %c2_i32_753 : i32
    %c4_i32_754 = arith.constant 4 : i32
    %1383 = arith.muli %1382, %c4_i32_754 : i32
    %c3_i32_755 = arith.constant 3 : i32
    %1384 = arith.addi %1383, %c3_i32_755 : i32
    %c9_i32_756 = arith.constant 9 : i32
    %1385 = arith.muli %1384, %c9_i32_756 : i32
    %c6_i32_757 = arith.constant 6 : i32
    %1386 = arith.addi %1385, %c6_i32_757 : i32
    %c2_i32_758 = arith.constant 2 : i32
    %1387 = arith.addi %1386, %c2_i32_758 : i32
    %1388 = vector.extract_strided_slice %1357 {offsets = [0, 2], sizes = [16, 16], strides = [1, 1]} : vector<16x18xf32> to vector<16x16xf32>
    %1389 = arith.index_cast %1387 : i32 to index
    %1390 = memref.load %arg2[%1389] : memref<288xf32, #tpu.memory_space<smem>>
    %1391 = vector.broadcast %1390 : f32 to vector<16x16xf32>
    %1392 = arith.mulf %1388, %1391 : vector<16x16xf32>
    %1393 = arith.addf %1381, %1392 : vector<16x16xf32>
    %cst_759 = arith.constant 0.000000e+00 : f32
    %1394 = vector.broadcast %cst_759 : f32 to vector<16x16xf32>
    %1395 = arith.maximumf %1393, %1394 : vector<16x16xf32>
    %c0_760 = arith.constant 0 : index
    %c2_761 = arith.constant 2 : index
    %c0_762 = arith.constant 0 : index
    %c0_763 = arith.constant 0 : index
    %1396 = vector.load %arg5[%c0_760, %c2_761, %c0_762, %c0_763] : memref<1x8x16x16xf32, #tpu.memory_space<vmem>>, vector<1x1x16x16xf32>
    %1397 = vector.shape_cast %1396 : vector<1x1x16x16xf32> to vector<16x16xf32>
    %1398 = vector.shape_cast %1395 : vector<16x16xf32> to vector<1x1x16x16xf32>
    tpu.vector_store %arg5[%c0_760, %c2_761, %c0_762, %c0_763], %1398 {strides = array<i32>} : memref<1x8x16x16xf32, #tpu.memory_space<vmem>>, vector<1x1x16x16xf32>,
    %c3_i32_764 = arith.constant 3 : i32
    %1399 = arith.addi %0, %c3_i32_764 : i32
    %1400 = arith.index_cast %1399 : i32 to index
    %1401 = memref.load %arg3[%1400] : memref<8xf32, #tpu.memory_space<smem>>
    %1402 = vector.broadcast %1401 : f32 to vector<16x16xf32>
    %c0_765 = arith.constant 0 : index
    %c0_766 = arith.constant 0 : index
    %c0_767 = arith.constant 0 : index
    %1403 = vector.load %arg6[%c0_765, %c0_766, %c0_767] : memref<4x18x18xf32, #tpu.memory_space<vmem>>, vector<1x16x18xf32>
    %1404 = vector.shape_cast %1403 : vector<1x16x18xf32> to vector<16x18xf32>
    %c3_i32_768 = arith.constant 3 : i32
    %1405 = arith.addi %0, %c3_i32_768 : i32
    %c4_i32_769 = arith.constant 4 : i32
    %1406 = arith.muli %1405, %c4_i32_769 : i32
    %c0_i32_770 = arith.constant 0 : i32
    %1407 = arith.addi %1406, %c0_i32_770 : i32
    %c9_i32_771 = arith.constant 9 : i32
    %1408 = arith.muli %1407, %c9_i32_771 : i32
    %c0_i32_772 = arith.constant 0 : i32
    %1409 = arith.addi %1408, %c0_i32_772 : i32
    %c0_i32_773 = arith.constant 0 : i32
    %1410 = arith.addi %1409, %c0_i32_773 : i32
    %1411 = vector.extract_strided_slice %1404 {offsets = [0, 0], sizes = [16, 16], strides = [1, 1]} : vector<16x18xf32> to vector<16x16xf32>
    %1412 = arith.index_cast %1410 : i32 to index
    %1413 = memref.load %arg2[%1412] : memref<288xf32, #tpu.memory_space<smem>>
    %1414 = vector.broadcast %1413 : f32 to vector<16x16xf32>
    %1415 = arith.mulf %1411, %1414 : vector<16x16xf32>
    %1416 = arith.addf %1402, %1415 : vector<16x16xf32>
    %c3_i32_774 = arith.constant 3 : i32
    %1417 = arith.addi %0, %c3_i32_774 : i32
    %c4_i32_775 = arith.constant 4 : i32
    %1418 = arith.muli %1417, %c4_i32_775 : i32
    %c0_i32_776 = arith.constant 0 : i32
    %1419 = arith.addi %1418, %c0_i32_776 : i32
    %c9_i32_777 = arith.constant 9 : i32
    %1420 = arith.muli %1419, %c9_i32_777 : i32
    %c0_i32_778 = arith.constant 0 : i32
    %1421 = arith.addi %1420, %c0_i32_778 : i32
    %c1_i32_779 = arith.constant 1 : i32
    %1422 = arith.addi %1421, %c1_i32_779 : i32
    %1423 = vector.extract_strided_slice %1404 {offsets = [0, 1], sizes = [16, 16], strides = [1, 1]} : vector<16x18xf32> to vector<16x16xf32>
    %1424 = arith.index_cast %1422 : i32 to index
    %1425 = memref.load %arg2[%1424] : memref<288xf32, #tpu.memory_space<smem>>
    %1426 = vector.broadcast %1425 : f32 to vector<16x16xf32>
    %1427 = arith.mulf %1423, %1426 : vector<16x16xf32>
    %1428 = arith.addf %1416, %1427 : vector<16x16xf32>
    %c3_i32_780 = arith.constant 3 : i32
    %1429 = arith.addi %0, %c3_i32_780 : i32
    %c4_i32_781 = arith.constant 4 : i32
    %1430 = arith.muli %1429, %c4_i32_781 : i32
    %c0_i32_782 = arith.constant 0 : i32
    %1431 = arith.addi %1430, %c0_i32_782 : i32
    %c9_i32_783 = arith.constant 9 : i32
    %1432 = arith.muli %1431, %c9_i32_783 : i32
    %c0_i32_784 = arith.constant 0 : i32
    %1433 = arith.addi %1432, %c0_i32_784 : i32
    %c2_i32_785 = arith.constant 2 : i32
    %1434 = arith.addi %1433, %c2_i32_785 : i32
    %1435 = vector.extract_strided_slice %1404 {offsets = [0, 2], sizes = [16, 16], strides = [1, 1]} : vector<16x18xf32> to vector<16x16xf32>
    %1436 = arith.index_cast %1434 : i32 to index
    %1437 = memref.load %arg2[%1436] : memref<288xf32, #tpu.memory_space<smem>>
    %1438 = vector.broadcast %1437 : f32 to vector<16x16xf32>
    %1439 = arith.mulf %1435, %1438 : vector<16x16xf32>
    %1440 = arith.addf %1428, %1439 : vector<16x16xf32>
    %c0_786 = arith.constant 0 : index
    %c1_787 = arith.constant 1 : index
    %c0_788 = arith.constant 0 : index
    %1441 = vector.load %arg6[%c0_786, %c1_787, %c0_788] : memref<4x18x18xf32, #tpu.memory_space<vmem>>, vector<1x16x18xf32>
    %1442 = vector.shape_cast %1441 : vector<1x16x18xf32> to vector<16x18xf32>
    %c3_i32_789 = arith.constant 3 : i32
    %1443 = arith.addi %0, %c3_i32_789 : i32
    %c4_i32_790 = arith.constant 4 : i32
    %1444 = arith.muli %1443, %c4_i32_790 : i32
    %c0_i32_791 = arith.constant 0 : i32
    %1445 = arith.addi %1444, %c0_i32_791 : i32
    %c9_i32_792 = arith.constant 9 : i32
    %1446 = arith.muli %1445, %c9_i32_792 : i32
    %c3_i32_793 = arith.constant 3 : i32
    %1447 = arith.addi %1446, %c3_i32_793 : i32
    %c0_i32_794 = arith.constant 0 : i32
    %1448 = arith.addi %1447, %c0_i32_794 : i32
    %1449 = vector.extract_strided_slice %1442 {offsets = [0, 0], sizes = [16, 16], strides = [1, 1]} : vector<16x18xf32> to vector<16x16xf32>
    %1450 = arith.index_cast %1448 : i32 to index
    %1451 = memref.load %arg2[%1450] : memref<288xf32, #tpu.memory_space<smem>>
    %1452 = vector.broadcast %1451 : f32 to vector<16x16xf32>
    %1453 = arith.mulf %1449, %1452 : vector<16x16xf32>
    %1454 = arith.addf %1440, %1453 : vector<16x16xf32>
    %c3_i32_795 = arith.constant 3 : i32
    %1455 = arith.addi %0, %c3_i32_795 : i32
    %c4_i32_796 = arith.constant 4 : i32
    %1456 = arith.muli %1455, %c4_i32_796 : i32
    %c0_i32_797 = arith.constant 0 : i32
    %1457 = arith.addi %1456, %c0_i32_797 : i32
    %c9_i32_798 = arith.constant 9 : i32
    %1458 = arith.muli %1457, %c9_i32_798 : i32
    %c3_i32_799 = arith.constant 3 : i32
    %1459 = arith.addi %1458, %c3_i32_799 : i32
    %c1_i32_800 = arith.constant 1 : i32
    %1460 = arith.addi %1459, %c1_i32_800 : i32
    %1461 = vector.extract_strided_slice %1442 {offsets = [0, 1], sizes = [16, 16], strides = [1, 1]} : vector<16x18xf32> to vector<16x16xf32>
    %1462 = arith.index_cast %1460 : i32 to index
    %1463 = memref.load %arg2[%1462] : memref<288xf32, #tpu.memory_space<smem>>
    %1464 = vector.broadcast %1463 : f32 to vector<16x16xf32>
    %1465 = arith.mulf %1461, %1464 : vector<16x16xf32>
    %1466 = arith.addf %1454, %1465 : vector<16x16xf32>
    %c3_i32_801 = arith.constant 3 : i32
    %1467 = arith.addi %0, %c3_i32_801 : i32
    %c4_i32_802 = arith.constant 4 : i32
    %1468 = arith.muli %1467, %c4_i32_802 : i32
    %c0_i32_803 = arith.constant 0 : i32
    %1469 = arith.addi %1468, %c0_i32_803 : i32
    %c9_i32_804 = arith.constant 9 : i32
    %1470 = arith.muli %1469, %c9_i32_804 : i32
    %c3_i32_805 = arith.constant 3 : i32
    %1471 = arith.addi %1470, %c3_i32_805 : i32
    %c2_i32_806 = arith.constant 2 : i32
    %1472 = arith.addi %1471, %c2_i32_806 : i32
    %1473 = vector.extract_strided_slice %1442 {offsets = [0, 2], sizes = [16, 16], strides = [1, 1]} : vector<16x18xf32> to vector<16x16xf32>
    %1474 = arith.index_cast %1472 : i32 to index
    %1475 = memref.load %arg2[%1474] : memref<288xf32, #tpu.memory_space<smem>>
    %1476 = vector.broadcast %1475 : f32 to vector<16x16xf32>
    %1477 = arith.mulf %1473, %1476 : vector<16x16xf32>
    %1478 = arith.addf %1466, %1477 : vector<16x16xf32>
    %c0_807 = arith.constant 0 : index
    %c2_808 = arith.constant 2 : index
    %c0_809 = arith.constant 0 : index
    %1479 = vector.load %arg6[%c0_807, %c2_808, %c0_809] : memref<4x18x18xf32, #tpu.memory_space<vmem>>, vector<1x16x18xf32>
    %1480 = vector.shape_cast %1479 : vector<1x16x18xf32> to vector<16x18xf32>
    %c3_i32_810 = arith.constant 3 : i32
    %1481 = arith.addi %0, %c3_i32_810 : i32
    %c4_i32_811 = arith.constant 4 : i32
    %1482 = arith.muli %1481, %c4_i32_811 : i32
    %c0_i32_812 = arith.constant 0 : i32
    %1483 = arith.addi %1482, %c0_i32_812 : i32
    %c9_i32_813 = arith.constant 9 : i32
    %1484 = arith.muli %1483, %c9_i32_813 : i32
    %c6_i32_814 = arith.constant 6 : i32
    %1485 = arith.addi %1484, %c6_i32_814 : i32
    %c0_i32_815 = arith.constant 0 : i32
    %1486 = arith.addi %1485, %c0_i32_815 : i32
    %1487 = vector.extract_strided_slice %1480 {offsets = [0, 0], sizes = [16, 16], strides = [1, 1]} : vector<16x18xf32> to vector<16x16xf32>
    %1488 = arith.index_cast %1486 : i32 to index
    %1489 = memref.load %arg2[%1488] : memref<288xf32, #tpu.memory_space<smem>>
    %1490 = vector.broadcast %1489 : f32 to vector<16x16xf32>
    %1491 = arith.mulf %1487, %1490 : vector<16x16xf32>
    %1492 = arith.addf %1478, %1491 : vector<16x16xf32>
    %c3_i32_816 = arith.constant 3 : i32
    %1493 = arith.addi %0, %c3_i32_816 : i32
    %c4_i32_817 = arith.constant 4 : i32
    %1494 = arith.muli %1493, %c4_i32_817 : i32
    %c0_i32_818 = arith.constant 0 : i32
    %1495 = arith.addi %1494, %c0_i32_818 : i32
    %c9_i32_819 = arith.constant 9 : i32
    %1496 = arith.muli %1495, %c9_i32_819 : i32
    %c6_i32_820 = arith.constant 6 : i32
    %1497 = arith.addi %1496, %c6_i32_820 : i32
    %c1_i32_821 = arith.constant 1 : i32
    %1498 = arith.addi %1497, %c1_i32_821 : i32
    %1499 = vector.extract_strided_slice %1480 {offsets = [0, 1], sizes = [16, 16], strides = [1, 1]} : vector<16x18xf32> to vector<16x16xf32>
    %1500 = arith.index_cast %1498 : i32 to index
    %1501 = memref.load %arg2[%1500] : memref<288xf32, #tpu.memory_space<smem>>
    %1502 = vector.broadcast %1501 : f32 to vector<16x16xf32>
    %1503 = arith.mulf %1499, %1502 : vector<16x16xf32>
    %1504 = arith.addf %1492, %1503 : vector<16x16xf32>
    %c3_i32_822 = arith.constant 3 : i32
    %1505 = arith.addi %0, %c3_i32_822 : i32
    %c4_i32_823 = arith.constant 4 : i32
    %1506 = arith.muli %1505, %c4_i32_823 : i32
    %c0_i32_824 = arith.constant 0 : i32
    %1507 = arith.addi %1506, %c0_i32_824 : i32
    %c9_i32_825 = arith.constant 9 : i32
    %1508 = arith.muli %1507, %c9_i32_825 : i32
    %c6_i32_826 = arith.constant 6 : i32
    %1509 = arith.addi %1508, %c6_i32_826 : i32
    %c2_i32_827 = arith.constant 2 : i32
    %1510 = arith.addi %1509, %c2_i32_827 : i32
    %1511 = vector.extract_strided_slice %1480 {offsets = [0, 2], sizes = [16, 16], strides = [1, 1]} : vector<16x18xf32> to vector<16x16xf32>
    %1512 = arith.index_cast %1510 : i32 to index
    %1513 = memref.load %arg2[%1512] : memref<288xf32, #tpu.memory_space<smem>>
    %1514 = vector.broadcast %1513 : f32 to vector<16x16xf32>
    %1515 = arith.mulf %1511, %1514 : vector<16x16xf32>
    %1516 = arith.addf %1504, %1515 : vector<16x16xf32>
    %c1_828 = arith.constant 1 : index
    %c0_829 = arith.constant 0 : index
    %c0_830 = arith.constant 0 : index
    %1517 = vector.load %arg6[%c1_828, %c0_829, %c0_830] : memref<4x18x18xf32, #tpu.memory_space<vmem>>, vector<1x16x18xf32>
    %1518 = vector.shape_cast %1517 : vector<1x16x18xf32> to vector<16x18xf32>
    %c3_i32_831 = arith.constant 3 : i32
    %1519 = arith.addi %0, %c3_i32_831 : i32
    %c4_i32_832 = arith.constant 4 : i32
    %1520 = arith.muli %1519, %c4_i32_832 : i32
    %c1_i32_833 = arith.constant 1 : i32
    %1521 = arith.addi %1520, %c1_i32_833 : i32
    %c9_i32_834 = arith.constant 9 : i32
    %1522 = arith.muli %1521, %c9_i32_834 : i32
    %c0_i32_835 = arith.constant 0 : i32
    %1523 = arith.addi %1522, %c0_i32_835 : i32
    %c0_i32_836 = arith.constant 0 : i32
    %1524 = arith.addi %1523, %c0_i32_836 : i32
    %1525 = vector.extract_strided_slice %1518 {offsets = [0, 0], sizes = [16, 16], strides = [1, 1]} : vector<16x18xf32> to vector<16x16xf32>
    %1526 = arith.index_cast %1524 : i32 to index
    %1527 = memref.load %arg2[%1526] : memref<288xf32, #tpu.memory_space<smem>>
    %1528 = vector.broadcast %1527 : f32 to vector<16x16xf32>
    %1529 = arith.mulf %1525, %1528 : vector<16x16xf32>
    %1530 = arith.addf %1516, %1529 : vector<16x16xf32>
    %c3_i32_837 = arith.constant 3 : i32
    %1531 = arith.addi %0, %c3_i32_837 : i32
    %c4_i32_838 = arith.constant 4 : i32
    %1532 = arith.muli %1531, %c4_i32_838 : i32
    %c1_i32_839 = arith.constant 1 : i32
    %1533 = arith.addi %1532, %c1_i32_839 : i32
    %c9_i32_840 = arith.constant 9 : i32
    %1534 = arith.muli %1533, %c9_i32_840 : i32
    %c0_i32_841 = arith.constant 0 : i32
    %1535 = arith.addi %1534, %c0_i32_841 : i32
    %c1_i32_842 = arith.constant 1 : i32
    %1536 = arith.addi %1535, %c1_i32_842 : i32
    %1537 = vector.extract_strided_slice %1518 {offsets = [0, 1], sizes = [16, 16], strides = [1, 1]} : vector<16x18xf32> to vector<16x16xf32>
    %1538 = arith.index_cast %1536 : i32 to index
    %1539 = memref.load %arg2[%1538] : memref<288xf32, #tpu.memory_space<smem>>
    %1540 = vector.broadcast %1539 : f32 to vector<16x16xf32>
    %1541 = arith.mulf %1537, %1540 : vector<16x16xf32>
    %1542 = arith.addf %1530, %1541 : vector<16x16xf32>
    %c3_i32_843 = arith.constant 3 : i32
    %1543 = arith.addi %0, %c3_i32_843 : i32
    %c4_i32_844 = arith.constant 4 : i32
    %1544 = arith.muli %1543, %c4_i32_844 : i32
    %c1_i32_845 = arith.constant 1 : i32
    %1545 = arith.addi %1544, %c1_i32_845 : i32
    %c9_i32_846 = arith.constant 9 : i32
    %1546 = arith.muli %1545, %c9_i32_846 : i32
    %c0_i32_847 = arith.constant 0 : i32
    %1547 = arith.addi %1546, %c0_i32_847 : i32
    %c2_i32_848 = arith.constant 2 : i32
    %1548 = arith.addi %1547, %c2_i32_848 : i32
    %1549 = vector.extract_strided_slice %1518 {offsets = [0, 2], sizes = [16, 16], strides = [1, 1]} : vector<16x18xf32> to vector<16x16xf32>
    %1550 = arith.index_cast %1548 : i32 to index
    %1551 = memref.load %arg2[%1550] : memref<288xf32, #tpu.memory_space<smem>>
    %1552 = vector.broadcast %1551 : f32 to vector<16x16xf32>
    %1553 = arith.mulf %1549, %1552 : vector<16x16xf32>
    %1554 = arith.addf %1542, %1553 : vector<16x16xf32>
    %c1_849 = arith.constant 1 : index
    %c1_850 = arith.constant 1 : index
    %c0_851 = arith.constant 0 : index
    %1555 = vector.load %arg6[%c1_849, %c1_850, %c0_851] : memref<4x18x18xf32, #tpu.memory_space<vmem>>, vector<1x16x18xf32>
    %1556 = vector.shape_cast %1555 : vector<1x16x18xf32> to vector<16x18xf32>
    %c3_i32_852 = arith.constant 3 : i32
    %1557 = arith.addi %0, %c3_i32_852 : i32
    %c4_i32_853 = arith.constant 4 : i32
    %1558 = arith.muli %1557, %c4_i32_853 : i32
    %c1_i32_854 = arith.constant 1 : i32
    %1559 = arith.addi %1558, %c1_i32_854 : i32
    %c9_i32_855 = arith.constant 9 : i32
    %1560 = arith.muli %1559, %c9_i32_855 : i32
    %c3_i32_856 = arith.constant 3 : i32
    %1561 = arith.addi %1560, %c3_i32_856 : i32
    %c0_i32_857 = arith.constant 0 : i32
    %1562 = arith.addi %1561, %c0_i32_857 : i32
    %1563 = vector.extract_strided_slice %1556 {offsets = [0, 0], sizes = [16, 16], strides = [1, 1]} : vector<16x18xf32> to vector<16x16xf32>
    %1564 = arith.index_cast %1562 : i32 to index
    %1565 = memref.load %arg2[%1564] : memref<288xf32, #tpu.memory_space<smem>>
    %1566 = vector.broadcast %1565 : f32 to vector<16x16xf32>
    %1567 = arith.mulf %1563, %1566 : vector<16x16xf32>
    %1568 = arith.addf %1554, %1567 : vector<16x16xf32>
    %c3_i32_858 = arith.constant 3 : i32
    %1569 = arith.addi %0, %c3_i32_858 : i32
    %c4_i32_859 = arith.constant 4 : i32
    %1570 = arith.muli %1569, %c4_i32_859 : i32
    %c1_i32_860 = arith.constant 1 : i32
    %1571 = arith.addi %1570, %c1_i32_860 : i32
    %c9_i32_861 = arith.constant 9 : i32
    %1572 = arith.muli %1571, %c9_i32_861 : i32
    %c3_i32_862 = arith.constant 3 : i32
    %1573 = arith.addi %1572, %c3_i32_862 : i32
    %c1_i32_863 = arith.constant 1 : i32
    %1574 = arith.addi %1573, %c1_i32_863 : i32
    %1575 = vector.extract_strided_slice %1556 {offsets = [0, 1], sizes = [16, 16], strides = [1, 1]} : vector<16x18xf32> to vector<16x16xf32>
    %1576 = arith.index_cast %1574 : i32 to index
    %1577 = memref.load %arg2[%1576] : memref<288xf32, #tpu.memory_space<smem>>
    %1578 = vector.broadcast %1577 : f32 to vector<16x16xf32>
    %1579 = arith.mulf %1575, %1578 : vector<16x16xf32>
    %1580 = arith.addf %1568, %1579 : vector<16x16xf32>
    %c3_i32_864 = arith.constant 3 : i32
    %1581 = arith.addi %0, %c3_i32_864 : i32
    %c4_i32_865 = arith.constant 4 : i32
    %1582 = arith.muli %1581, %c4_i32_865 : i32
    %c1_i32_866 = arith.constant 1 : i32
    %1583 = arith.addi %1582, %c1_i32_866 : i32
    %c9_i32_867 = arith.constant 9 : i32
    %1584 = arith.muli %1583, %c9_i32_867 : i32
    %c3_i32_868 = arith.constant 3 : i32
    %1585 = arith.addi %1584, %c3_i32_868 : i32
    %c2_i32_869 = arith.constant 2 : i32
    %1586 = arith.addi %1585, %c2_i32_869 : i32
    %1587 = vector.extract_strided_slice %1556 {offsets = [0, 2], sizes = [16, 16], strides = [1, 1]} : vector<16x18xf32> to vector<16x16xf32>
    %1588 = arith.index_cast %1586 : i32 to index
    %1589 = memref.load %arg2[%1588] : memref<288xf32, #tpu.memory_space<smem>>
    %1590 = vector.broadcast %1589 : f32 to vector<16x16xf32>
    %1591 = arith.mulf %1587, %1590 : vector<16x16xf32>
    %1592 = arith.addf %1580, %1591 : vector<16x16xf32>
    %c1_870 = arith.constant 1 : index
    %c2_871 = arith.constant 2 : index
    %c0_872 = arith.constant 0 : index
    %1593 = vector.load %arg6[%c1_870, %c2_871, %c0_872] : memref<4x18x18xf32, #tpu.memory_space<vmem>>, vector<1x16x18xf32>
    %1594 = vector.shape_cast %1593 : vector<1x16x18xf32> to vector<16x18xf32>
    %c3_i32_873 = arith.constant 3 : i32
    %1595 = arith.addi %0, %c3_i32_873 : i32
    %c4_i32_874 = arith.constant 4 : i32
    %1596 = arith.muli %1595, %c4_i32_874 : i32
    %c1_i32_875 = arith.constant 1 : i32
    %1597 = arith.addi %1596, %c1_i32_875 : i32
    %c9_i32_876 = arith.constant 9 : i32
    %1598 = arith.muli %1597, %c9_i32_876 : i32
    %c6_i32_877 = arith.constant 6 : i32
    %1599 = arith.addi %1598, %c6_i32_877 : i32
    %c0_i32_878 = arith.constant 0 : i32
    %1600 = arith.addi %1599, %c0_i32_878 : i32
    %1601 = vector.extract_strided_slice %1594 {offsets = [0, 0], sizes = [16, 16], strides = [1, 1]} : vector<16x18xf32> to vector<16x16xf32>
    %1602 = arith.index_cast %1600 : i32 to index
    %1603 = memref.load %arg2[%1602] : memref<288xf32, #tpu.memory_space<smem>>
    %1604 = vector.broadcast %1603 : f32 to vector<16x16xf32>
    %1605 = arith.mulf %1601, %1604 : vector<16x16xf32>
    %1606 = arith.addf %1592, %1605 : vector<16x16xf32>
    %c3_i32_879 = arith.constant 3 : i32
    %1607 = arith.addi %0, %c3_i32_879 : i32
    %c4_i32_880 = arith.constant 4 : i32
    %1608 = arith.muli %1607, %c4_i32_880 : i32
    %c1_i32_881 = arith.constant 1 : i32
    %1609 = arith.addi %1608, %c1_i32_881 : i32
    %c9_i32_882 = arith.constant 9 : i32
    %1610 = arith.muli %1609, %c9_i32_882 : i32
    %c6_i32_883 = arith.constant 6 : i32
    %1611 = arith.addi %1610, %c6_i32_883 : i32
    %c1_i32_884 = arith.constant 1 : i32
    %1612 = arith.addi %1611, %c1_i32_884 : i32
    %1613 = vector.extract_strided_slice %1594 {offsets = [0, 1], sizes = [16, 16], strides = [1, 1]} : vector<16x18xf32> to vector<16x16xf32>
    %1614 = arith.index_cast %1612 : i32 to index
    %1615 = memref.load %arg2[%1614] : memref<288xf32, #tpu.memory_space<smem>>
    %1616 = vector.broadcast %1615 : f32 to vector<16x16xf32>
    %1617 = arith.mulf %1613, %1616 : vector<16x16xf32>
    %1618 = arith.addf %1606, %1617 : vector<16x16xf32>
    %c3_i32_885 = arith.constant 3 : i32
    %1619 = arith.addi %0, %c3_i32_885 : i32
    %c4_i32_886 = arith.constant 4 : i32
    %1620 = arith.muli %1619, %c4_i32_886 : i32
    %c1_i32_887 = arith.constant 1 : i32
    %1621 = arith.addi %1620, %c1_i32_887 : i32
    %c9_i32_888 = arith.constant 9 : i32
    %1622 = arith.muli %1621, %c9_i32_888 : i32
    %c6_i32_889 = arith.constant 6 : i32
    %1623 = arith.addi %1622, %c6_i32_889 : i32
    %c2_i32_890 = arith.constant 2 : i32
    %1624 = arith.addi %1623, %c2_i32_890 : i32
    %1625 = vector.extract_strided_slice %1594 {offsets = [0, 2], sizes = [16, 16], strides = [1, 1]} : vector<16x18xf32> to vector<16x16xf32>
    %1626 = arith.index_cast %1624 : i32 to index
    %1627 = memref.load %arg2[%1626] : memref<288xf32, #tpu.memory_space<smem>>
    %1628 = vector.broadcast %1627 : f32 to vector<16x16xf32>
    %1629 = arith.mulf %1625, %1628 : vector<16x16xf32>
    %1630 = arith.addf %1618, %1629 : vector<16x16xf32>
    %c2_891 = arith.constant 2 : index
    %c0_892 = arith.constant 0 : index
    %c0_893 = arith.constant 0 : index
    %1631 = vector.load %arg6[%c2_891, %c0_892, %c0_893] : memref<4x18x18xf32, #tpu.memory_space<vmem>>, vector<1x16x18xf32>
    %1632 = vector.shape_cast %1631 : vector<1x16x18xf32> to vector<16x18xf32>
    %c3_i32_894 = arith.constant 3 : i32
    %1633 = arith.addi %0, %c3_i32_894 : i32
    %c4_i32_895 = arith.constant 4 : i32
    %1634 = arith.muli %1633, %c4_i32_895 : i32
    %c2_i32_896 = arith.constant 2 : i32
    %1635 = arith.addi %1634, %c2_i32_896 : i32
    %c9_i32_897 = arith.constant 9 : i32
    %1636 = arith.muli %1635, %c9_i32_897 : i32
    %c0_i32_898 = arith.constant 0 : i32
    %1637 = arith.addi %1636, %c0_i32_898 : i32
    %c0_i32_899 = arith.constant 0 : i32
    %1638 = arith.addi %1637, %c0_i32_899 : i32
    %1639 = vector.extract_strided_slice %1632 {offsets = [0, 0], sizes = [16, 16], strides = [1, 1]} : vector<16x18xf32> to vector<16x16xf32>
    %1640 = arith.index_cast %1638 : i32 to index
    %1641 = memref.load %arg2[%1640] : memref<288xf32, #tpu.memory_space<smem>>
    %1642 = vector.broadcast %1641 : f32 to vector<16x16xf32>
    %1643 = arith.mulf %1639, %1642 : vector<16x16xf32>
    %1644 = arith.addf %1630, %1643 : vector<16x16xf32>
    %c3_i32_900 = arith.constant 3 : i32
    %1645 = arith.addi %0, %c3_i32_900 : i32
    %c4_i32_901 = arith.constant 4 : i32
    %1646 = arith.muli %1645, %c4_i32_901 : i32
    %c2_i32_902 = arith.constant 2 : i32
    %1647 = arith.addi %1646, %c2_i32_902 : i32
    %c9_i32_903 = arith.constant 9 : i32
    %1648 = arith.muli %1647, %c9_i32_903 : i32
    %c0_i32_904 = arith.constant 0 : i32
    %1649 = arith.addi %1648, %c0_i32_904 : i32
    %c1_i32_905 = arith.constant 1 : i32
    %1650 = arith.addi %1649, %c1_i32_905 : i32
    %1651 = vector.extract_strided_slice %1632 {offsets = [0, 1], sizes = [16, 16], strides = [1, 1]} : vector<16x18xf32> to vector<16x16xf32>
    %1652 = arith.index_cast %1650 : i32 to index
    %1653 = memref.load %arg2[%1652] : memref<288xf32, #tpu.memory_space<smem>>
    %1654 = vector.broadcast %1653 : f32 to vector<16x16xf32>
    %1655 = arith.mulf %1651, %1654 : vector<16x16xf32>
    %1656 = arith.addf %1644, %1655 : vector<16x16xf32>
    %c3_i32_906 = arith.constant 3 : i32
    %1657 = arith.addi %0, %c3_i32_906 : i32
    %c4_i32_907 = arith.constant 4 : i32
    %1658 = arith.muli %1657, %c4_i32_907 : i32
    %c2_i32_908 = arith.constant 2 : i32
    %1659 = arith.addi %1658, %c2_i32_908 : i32
    %c9_i32_909 = arith.constant 9 : i32
    %1660 = arith.muli %1659, %c9_i32_909 : i32
    %c0_i32_910 = arith.constant 0 : i32
    %1661 = arith.addi %1660, %c0_i32_910 : i32
    %c2_i32_911 = arith.constant 2 : i32
    %1662 = arith.addi %1661, %c2_i32_911 : i32
    %1663 = vector.extract_strided_slice %1632 {offsets = [0, 2], sizes = [16, 16], strides = [1, 1]} : vector<16x18xf32> to vector<16x16xf32>
    %1664 = arith.index_cast %1662 : i32 to index
    %1665 = memref.load %arg2[%1664] : memref<288xf32, #tpu.memory_space<smem>>
    %1666 = vector.broadcast %1665 : f32 to vector<16x16xf32>
    %1667 = arith.mulf %1663, %1666 : vector<16x16xf32>
    %1668 = arith.addf %1656, %1667 : vector<16x16xf32>
    %c2_912 = arith.constant 2 : index
    %c1_913 = arith.constant 1 : index
    %c0_914 = arith.constant 0 : index
    %1669 = vector.load %arg6[%c2_912, %c1_913, %c0_914] : memref<4x18x18xf32, #tpu.memory_space<vmem>>, vector<1x16x18xf32>
    %1670 = vector.shape_cast %1669 : vector<1x16x18xf32> to vector<16x18xf32>
    %c3_i32_915 = arith.constant 3 : i32
    %1671 = arith.addi %0, %c3_i32_915 : i32
    %c4_i32_916 = arith.constant 4 : i32
    %1672 = arith.muli %1671, %c4_i32_916 : i32
    %c2_i32_917 = arith.constant 2 : i32
    %1673 = arith.addi %1672, %c2_i32_917 : i32
    %c9_i32_918 = arith.constant 9 : i32
    %1674 = arith.muli %1673, %c9_i32_918 : i32
    %c3_i32_919 = arith.constant 3 : i32
    %1675 = arith.addi %1674, %c3_i32_919 : i32
    %c0_i32_920 = arith.constant 0 : i32
    %1676 = arith.addi %1675, %c0_i32_920 : i32
    %1677 = vector.extract_strided_slice %1670 {offsets = [0, 0], sizes = [16, 16], strides = [1, 1]} : vector<16x18xf32> to vector<16x16xf32>
    %1678 = arith.index_cast %1676 : i32 to index
    %1679 = memref.load %arg2[%1678] : memref<288xf32, #tpu.memory_space<smem>>
    %1680 = vector.broadcast %1679 : f32 to vector<16x16xf32>
    %1681 = arith.mulf %1677, %1680 : vector<16x16xf32>
    %1682 = arith.addf %1668, %1681 : vector<16x16xf32>
    %c3_i32_921 = arith.constant 3 : i32
    %1683 = arith.addi %0, %c3_i32_921 : i32
    %c4_i32_922 = arith.constant 4 : i32
    %1684 = arith.muli %1683, %c4_i32_922 : i32
    %c2_i32_923 = arith.constant 2 : i32
    %1685 = arith.addi %1684, %c2_i32_923 : i32
    %c9_i32_924 = arith.constant 9 : i32
    %1686 = arith.muli %1685, %c9_i32_924 : i32
    %c3_i32_925 = arith.constant 3 : i32
    %1687 = arith.addi %1686, %c3_i32_925 : i32
    %c1_i32_926 = arith.constant 1 : i32
    %1688 = arith.addi %1687, %c1_i32_926 : i32
    %1689 = vector.extract_strided_slice %1670 {offsets = [0, 1], sizes = [16, 16], strides = [1, 1]} : vector<16x18xf32> to vector<16x16xf32>
    %1690 = arith.index_cast %1688 : i32 to index
    %1691 = memref.load %arg2[%1690] : memref<288xf32, #tpu.memory_space<smem>>
    %1692 = vector.broadcast %1691 : f32 to vector<16x16xf32>
    %1693 = arith.mulf %1689, %1692 : vector<16x16xf32>
    %1694 = arith.addf %1682, %1693 : vector<16x16xf32>
    %c3_i32_927 = arith.constant 3 : i32
    %1695 = arith.addi %0, %c3_i32_927 : i32
    %c4_i32_928 = arith.constant 4 : i32
    %1696 = arith.muli %1695, %c4_i32_928 : i32
    %c2_i32_929 = arith.constant 2 : i32
    %1697 = arith.addi %1696, %c2_i32_929 : i32
    %c9_i32_930 = arith.constant 9 : i32
    %1698 = arith.muli %1697, %c9_i32_930 : i32
    %c3_i32_931 = arith.constant 3 : i32
    %1699 = arith.addi %1698, %c3_i32_931 : i32
    %c2_i32_932 = arith.constant 2 : i32
    %1700 = arith.addi %1699, %c2_i32_932 : i32
    %1701 = vector.extract_strided_slice %1670 {offsets = [0, 2], sizes = [16, 16], strides = [1, 1]} : vector<16x18xf32> to vector<16x16xf32>
    %1702 = arith.index_cast %1700 : i32 to index
    %1703 = memref.load %arg2[%1702] : memref<288xf32, #tpu.memory_space<smem>>
    %1704 = vector.broadcast %1703 : f32 to vector<16x16xf32>
    %1705 = arith.mulf %1701, %1704 : vector<16x16xf32>
    %1706 = arith.addf %1694, %1705 : vector<16x16xf32>
    %c2_933 = arith.constant 2 : index
    %c2_934 = arith.constant 2 : index
    %c0_935 = arith.constant 0 : index
    %1707 = vector.load %arg6[%c2_933, %c2_934, %c0_935] : memref<4x18x18xf32, #tpu.memory_space<vmem>>, vector<1x16x18xf32>
    %1708 = vector.shape_cast %1707 : vector<1x16x18xf32> to vector<16x18xf32>
    %c3_i32_936 = arith.constant 3 : i32
    %1709 = arith.addi %0, %c3_i32_936 : i32
    %c4_i32_937 = arith.constant 4 : i32
    %1710 = arith.muli %1709, %c4_i32_937 : i32
    %c2_i32_938 = arith.constant 2 : i32
    %1711 = arith.addi %1710, %c2_i32_938 : i32
    %c9_i32_939 = arith.constant 9 : i32
    %1712 = arith.muli %1711, %c9_i32_939 : i32
    %c6_i32_940 = arith.constant 6 : i32
    %1713 = arith.addi %1712, %c6_i32_940 : i32
    %c0_i32_941 = arith.constant 0 : i32
    %1714 = arith.addi %1713, %c0_i32_941 : i32
    %1715 = vector.extract_strided_slice %1708 {offsets = [0, 0], sizes = [16, 16], strides = [1, 1]} : vector<16x18xf32> to vector<16x16xf32>
    %1716 = arith.index_cast %1714 : i32 to index
    %1717 = memref.load %arg2[%1716] : memref<288xf32, #tpu.memory_space<smem>>
    %1718 = vector.broadcast %1717 : f32 to vector<16x16xf32>
    %1719 = arith.mulf %1715, %1718 : vector<16x16xf32>
    %1720 = arith.addf %1706, %1719 : vector<16x16xf32>
    %c3_i32_942 = arith.constant 3 : i32
    %1721 = arith.addi %0, %c3_i32_942 : i32
    %c4_i32_943 = arith.constant 4 : i32
    %1722 = arith.muli %1721, %c4_i32_943 : i32
    %c2_i32_944 = arith.constant 2 : i32
    %1723 = arith.addi %1722, %c2_i32_944 : i32
    %c9_i32_945 = arith.constant 9 : i32
    %1724 = arith.muli %1723, %c9_i32_945 : i32
    %c6_i32_946 = arith.constant 6 : i32
    %1725 = arith.addi %1724, %c6_i32_946 : i32
    %c1_i32_947 = arith.constant 1 : i32
    %1726 = arith.addi %1725, %c1_i32_947 : i32
    %1727 = vector.extract_strided_slice %1708 {offsets = [0, 1], sizes = [16, 16], strides = [1, 1]} : vector<16x18xf32> to vector<16x16xf32>
    %1728 = arith.index_cast %1726 : i32 to index
    %1729 = memref.load %arg2[%1728] : memref<288xf32, #tpu.memory_space<smem>>
    %1730 = vector.broadcast %1729 : f32 to vector<16x16xf32>
    %1731 = arith.mulf %1727, %1730 : vector<16x16xf32>
    %1732 = arith.addf %1720, %1731 : vector<16x16xf32>
    %c3_i32_948 = arith.constant 3 : i32
    %1733 = arith.addi %0, %c3_i32_948 : i32
    %c4_i32_949 = arith.constant 4 : i32
    %1734 = arith.muli %1733, %c4_i32_949 : i32
    %c2_i32_950 = arith.constant 2 : i32
    %1735 = arith.addi %1734, %c2_i32_950 : i32
    %c9_i32_951 = arith.constant 9 : i32
    %1736 = arith.muli %1735, %c9_i32_951 : i32
    %c6_i32_952 = arith.constant 6 : i32
    %1737 = arith.addi %1736, %c6_i32_952 : i32
    %c2_i32_953 = arith.constant 2 : i32
    %1738 = arith.addi %1737, %c2_i32_953 : i32
    %1739 = vector.extract_strided_slice %1708 {offsets = [0, 2], sizes = [16, 16], strides = [1, 1]} : vector<16x18xf32> to vector<16x16xf32>
    %1740 = arith.index_cast %1738 : i32 to index
    %1741 = memref.load %arg2[%1740] : memref<288xf32, #tpu.memory_space<smem>>
    %1742 = vector.broadcast %1741 : f32 to vector<16x16xf32>
    %1743 = arith.mulf %1739, %1742 : vector<16x16xf32>
    %1744 = arith.addf %1732, %1743 : vector<16x16xf32>
    %c3_954 = arith.constant 3 : index
    %c0_955 = arith.constant 0 : index
    %c0_956 = arith.constant 0 : index
    %1745 = vector.load %arg6[%c3_954, %c0_955, %c0_956] : memref<4x18x18xf32, #tpu.memory_space<vmem>>, vector<1x16x18xf32>
    %1746 = vector.shape_cast %1745 : vector<1x16x18xf32> to vector<16x18xf32>
    %c3_i32_957 = arith.constant 3 : i32
    %1747 = arith.addi %0, %c3_i32_957 : i32
    %c4_i32_958 = arith.constant 4 : i32
    %1748 = arith.muli %1747, %c4_i32_958 : i32
    %c3_i32_959 = arith.constant 3 : i32
    %1749 = arith.addi %1748, %c3_i32_959 : i32
    %c9_i32_960 = arith.constant 9 : i32
    %1750 = arith.muli %1749, %c9_i32_960 : i32
    %c0_i32_961 = arith.constant 0 : i32
    %1751 = arith.addi %1750, %c0_i32_961 : i32
    %c0_i32_962 = arith.constant 0 : i32
    %1752 = arith.addi %1751, %c0_i32_962 : i32
    %1753 = vector.extract_strided_slice %1746 {offsets = [0, 0], sizes = [16, 16], strides = [1, 1]} : vector<16x18xf32> to vector<16x16xf32>
    %1754 = arith.index_cast %1752 : i32 to index
    %1755 = memref.load %arg2[%1754] : memref<288xf32, #tpu.memory_space<smem>>
    %1756 = vector.broadcast %1755 : f32 to vector<16x16xf32>
    %1757 = arith.mulf %1753, %1756 : vector<16x16xf32>
    %1758 = arith.addf %1744, %1757 : vector<16x16xf32>
    %c3_i32_963 = arith.constant 3 : i32
    %1759 = arith.addi %0, %c3_i32_963 : i32
    %c4_i32_964 = arith.constant 4 : i32
    %1760 = arith.muli %1759, %c4_i32_964 : i32
    %c3_i32_965 = arith.constant 3 : i32
    %1761 = arith.addi %1760, %c3_i32_965 : i32
    %c9_i32_966 = arith.constant 9 : i32
    %1762 = arith.muli %1761, %c9_i32_966 : i32
    %c0_i32_967 = arith.constant 0 : i32
    %1763 = arith.addi %1762, %c0_i32_967 : i32
    %c1_i32_968 = arith.constant 1 : i32
    %1764 = arith.addi %1763, %c1_i32_968 : i32
    %1765 = vector.extract_strided_slice %1746 {offsets = [0, 1], sizes = [16, 16], strides = [1, 1]} : vector<16x18xf32> to vector<16x16xf32>
    %1766 = arith.index_cast %1764 : i32 to index
    %1767 = memref.load %arg2[%1766] : memref<288xf32, #tpu.memory_space<smem>>
    %1768 = vector.broadcast %1767 : f32 to vector<16x16xf32>
    %1769 = arith.mulf %1765, %1768 : vector<16x16xf32>
    %1770 = arith.addf %1758, %1769 : vector<16x16xf32>
    %c3_i32_969 = arith.constant 3 : i32
    %1771 = arith.addi %0, %c3_i32_969 : i32
    %c4_i32_970 = arith.constant 4 : i32
    %1772 = arith.muli %1771, %c4_i32_970 : i32
    %c3_i32_971 = arith.constant 3 : i32
    %1773 = arith.addi %1772, %c3_i32_971 : i32
    %c9_i32_972 = arith.constant 9 : i32
    %1774 = arith.muli %1773, %c9_i32_972 : i32
    %c0_i32_973 = arith.constant 0 : i32
    %1775 = arith.addi %1774, %c0_i32_973 : i32
    %c2_i32_974 = arith.constant 2 : i32
    %1776 = arith.addi %1775, %c2_i32_974 : i32
    %1777 = vector.extract_strided_slice %1746 {offsets = [0, 2], sizes = [16, 16], strides = [1, 1]} : vector<16x18xf32> to vector<16x16xf32>
    %1778 = arith.index_cast %1776 : i32 to index
    %1779 = memref.load %arg2[%1778] : memref<288xf32, #tpu.memory_space<smem>>
    %1780 = vector.broadcast %1779 : f32 to vector<16x16xf32>
    %1781 = arith.mulf %1777, %1780 : vector<16x16xf32>
    %1782 = arith.addf %1770, %1781 : vector<16x16xf32>
    %c3_975 = arith.constant 3 : index
    %c1_976 = arith.constant 1 : index
    %c0_977 = arith.constant 0 : index
    %1783 = vector.load %arg6[%c3_975, %c1_976, %c0_977] : memref<4x18x18xf32, #tpu.memory_space<vmem>>, vector<1x16x18xf32>
    %1784 = vector.shape_cast %1783 : vector<1x16x18xf32> to vector<16x18xf32>
    %c3_i32_978 = arith.constant 3 : i32
    %1785 = arith.addi %0, %c3_i32_978 : i32
    %c4_i32_979 = arith.constant 4 : i32
    %1786 = arith.muli %1785, %c4_i32_979 : i32
    %c3_i32_980 = arith.constant 3 : i32
    %1787 = arith.addi %1786, %c3_i32_980 : i32
    %c9_i32_981 = arith.constant 9 : i32
    %1788 = arith.muli %1787, %c9_i32_981 : i32
    %c3_i32_982 = arith.constant 3 : i32
    %1789 = arith.addi %1788, %c3_i32_982 : i32
    %c0_i32_983 = arith.constant 0 : i32
    %1790 = arith.addi %1789, %c0_i32_983 : i32
    %1791 = vector.extract_strided_slice %1784 {offsets = [0, 0], sizes = [16, 16], strides = [1, 1]} : vector<16x18xf32> to vector<16x16xf32>
    %1792 = arith.index_cast %1790 : i32 to index
    %1793 = memref.load %arg2[%1792] : memref<288xf32, #tpu.memory_space<smem>>
    %1794 = vector.broadcast %1793 : f32 to vector<16x16xf32>
    %1795 = arith.mulf %1791, %1794 : vector<16x16xf32>
    %1796 = arith.addf %1782, %1795 : vector<16x16xf32>
    %c3_i32_984 = arith.constant 3 : i32
    %1797 = arith.addi %0, %c3_i32_984 : i32
    %c4_i32_985 = arith.constant 4 : i32
    %1798 = arith.muli %1797, %c4_i32_985 : i32
    %c3_i32_986 = arith.constant 3 : i32
    %1799 = arith.addi %1798, %c3_i32_986 : i32
    %c9_i32_987 = arith.constant 9 : i32
    %1800 = arith.muli %1799, %c9_i32_987 : i32
    %c3_i32_988 = arith.constant 3 : i32
    %1801 = arith.addi %1800, %c3_i32_988 : i32
    %c1_i32_989 = arith.constant 1 : i32
    %1802 = arith.addi %1801, %c1_i32_989 : i32
    %1803 = vector.extract_strided_slice %1784 {offsets = [0, 1], sizes = [16, 16], strides = [1, 1]} : vector<16x18xf32> to vector<16x16xf32>
    %1804 = arith.index_cast %1802 : i32 to index
    %1805 = memref.load %arg2[%1804] : memref<288xf32, #tpu.memory_space<smem>>
    %1806 = vector.broadcast %1805 : f32 to vector<16x16xf32>
    %1807 = arith.mulf %1803, %1806 : vector<16x16xf32>
    %1808 = arith.addf %1796, %1807 : vector<16x16xf32>
    %c3_i32_990 = arith.constant 3 : i32
    %1809 = arith.addi %0, %c3_i32_990 : i32
    %c4_i32_991 = arith.constant 4 : i32
    %1810 = arith.muli %1809, %c4_i32_991 : i32
    %c3_i32_992 = arith.constant 3 : i32
    %1811 = arith.addi %1810, %c3_i32_992 : i32
    %c9_i32_993 = arith.constant 9 : i32
    %1812 = arith.muli %1811, %c9_i32_993 : i32
    %c3_i32_994 = arith.constant 3 : i32
    %1813 = arith.addi %1812, %c3_i32_994 : i32
    %c2_i32_995 = arith.constant 2 : i32
    %1814 = arith.addi %1813, %c2_i32_995 : i32
    %1815 = vector.extract_strided_slice %1784 {offsets = [0, 2], sizes = [16, 16], strides = [1, 1]} : vector<16x18xf32> to vector<16x16xf32>
    %1816 = arith.index_cast %1814 : i32 to index
    %1817 = memref.load %arg2[%1816] : memref<288xf32, #tpu.memory_space<smem>>
    %1818 = vector.broadcast %1817 : f32 to vector<16x16xf32>
    %1819 = arith.mulf %1815, %1818 : vector<16x16xf32>
    %1820 = arith.addf %1808, %1819 : vector<16x16xf32>
    %c3_996 = arith.constant 3 : index
    %c2_997 = arith.constant 2 : index
    %c0_998 = arith.constant 0 : index
    %1821 = vector.load %arg6[%c3_996, %c2_997, %c0_998] : memref<4x18x18xf32, #tpu.memory_space<vmem>>, vector<1x16x18xf32>
    %1822 = vector.shape_cast %1821 : vector<1x16x18xf32> to vector<16x18xf32>
    %c3_i32_999 = arith.constant 3 : i32
    %1823 = arith.addi %0, %c3_i32_999 : i32
    %c4_i32_1000 = arith.constant 4 : i32
    %1824 = arith.muli %1823, %c4_i32_1000 : i32
    %c3_i32_1001 = arith.constant 3 : i32
    %1825 = arith.addi %1824, %c3_i32_1001 : i32
    %c9_i32_1002 = arith.constant 9 : i32
    %1826 = arith.muli %1825, %c9_i32_1002 : i32
    %c6_i32_1003 = arith.constant 6 : i32
    %1827 = arith.addi %1826, %c6_i32_1003 : i32
    %c0_i32_1004 = arith.constant 0 : i32
    %1828 = arith.addi %1827, %c0_i32_1004 : i32
    %1829 = vector.extract_strided_slice %1822 {offsets = [0, 0], sizes = [16, 16], strides = [1, 1]} : vector<16x18xf32> to vector<16x16xf32>
    %1830 = arith.index_cast %1828 : i32 to index
    %1831 = memref.load %arg2[%1830] : memref<288xf32, #tpu.memory_space<smem>>
    %1832 = vector.broadcast %1831 : f32 to vector<16x16xf32>
    %1833 = arith.mulf %1829, %1832 : vector<16x16xf32>
    %1834 = arith.addf %1820, %1833 : vector<16x16xf32>
    %c3_i32_1005 = arith.constant 3 : i32
    %1835 = arith.addi %0, %c3_i32_1005 : i32
    %c4_i32_1006 = arith.constant 4 : i32
    %1836 = arith.muli %1835, %c4_i32_1006 : i32
    %c3_i32_1007 = arith.constant 3 : i32
    %1837 = arith.addi %1836, %c3_i32_1007 : i32
    %c9_i32_1008 = arith.constant 9 : i32
    %1838 = arith.muli %1837, %c9_i32_1008 : i32
    %c6_i32_1009 = arith.constant 6 : i32
    %1839 = arith.addi %1838, %c6_i32_1009 : i32
    %c1_i32_1010 = arith.constant 1 : i32
    %1840 = arith.addi %1839, %c1_i32_1010 : i32
    %1841 = vector.extract_strided_slice %1822 {offsets = [0, 1], sizes = [16, 16], strides = [1, 1]} : vector<16x18xf32> to vector<16x16xf32>
    %1842 = arith.index_cast %1840 : i32 to index
    %1843 = memref.load %arg2[%1842] : memref<288xf32, #tpu.memory_space<smem>>
    %1844 = vector.broadcast %1843 : f32 to vector<16x16xf32>
    %1845 = arith.mulf %1841, %1844 : vector<16x16xf32>
    %1846 = arith.addf %1834, %1845 : vector<16x16xf32>
    %c3_i32_1011 = arith.constant 3 : i32
    %1847 = arith.addi %0, %c3_i32_1011 : i32
    %c4_i32_1012 = arith.constant 4 : i32
    %1848 = arith.muli %1847, %c4_i32_1012 : i32
    %c3_i32_1013 = arith.constant 3 : i32
    %1849 = arith.addi %1848, %c3_i32_1013 : i32
    %c9_i32_1014 = arith.constant 9 : i32
    %1850 = arith.muli %1849, %c9_i32_1014 : i32
    %c6_i32_1015 = arith.constant 6 : i32
    %1851 = arith.addi %1850, %c6_i32_1015 : i32
    %c2_i32_1016 = arith.constant 2 : i32
    %1852 = arith.addi %1851, %c2_i32_1016 : i32
    %1853 = vector.extract_strided_slice %1822 {offsets = [0, 2], sizes = [16, 16], strides = [1, 1]} : vector<16x18xf32> to vector<16x16xf32>
    %1854 = arith.index_cast %1852 : i32 to index
    %1855 = memref.load %arg2[%1854] : memref<288xf32, #tpu.memory_space<smem>>
    %1856 = vector.broadcast %1855 : f32 to vector<16x16xf32>
    %1857 = arith.mulf %1853, %1856 : vector<16x16xf32>
    %1858 = arith.addf %1846, %1857 : vector<16x16xf32>
    %cst_1017 = arith.constant 0.000000e+00 : f32
    %1859 = vector.broadcast %cst_1017 : f32 to vector<16x16xf32>
    %1860 = arith.maximumf %1858, %1859 : vector<16x16xf32>
    %c0_1018 = arith.constant 0 : index
    %c3_1019 = arith.constant 3 : index
    %c0_1020 = arith.constant 0 : index
    %c0_1021 = arith.constant 0 : index
    %1861 = vector.load %arg5[%c0_1018, %c3_1019, %c0_1020, %c0_1021] : memref<1x8x16x16xf32, #tpu.memory_space<vmem>>, vector<1x1x16x16xf32>
    %1862 = vector.shape_cast %1861 : vector<1x1x16x16xf32> to vector<16x16xf32>
    %1863 = vector.shape_cast %1860 : vector<16x16xf32> to vector<1x1x16x16xf32>
    tpu.vector_store %arg5[%c0_1018, %c3_1019, %c0_1020, %c0_1021], %1863 {strides = array<i32>} : memref<1x8x16x16xf32, #tpu.memory_space<vmem>>, vector<1x1x16x16xf32>,
    %c4_i32_1022 = arith.constant 4 : i32
    %1864 = arith.addi %0, %c4_i32_1022 : i32
    %1865 = arith.index_cast %1864 : i32 to index
    %1866 = memref.load %arg3[%1865] : memref<8xf32, #tpu.memory_space<smem>>
    %1867 = vector.broadcast %1866 : f32 to vector<16x16xf32>
    %c0_1023 = arith.constant 0 : index
    %c0_1024 = arith.constant 0 : index
    %c0_1025 = arith.constant 0 : index
    %1868 = vector.load %arg6[%c0_1023, %c0_1024, %c0_1025] : memref<4x18x18xf32, #tpu.memory_space<vmem>>, vector<1x16x18xf32>
    %1869 = vector.shape_cast %1868 : vector<1x16x18xf32> to vector<16x18xf32>
    %c4_i32_1026 = arith.constant 4 : i32
    %1870 = arith.addi %0, %c4_i32_1026 : i32
    %c4_i32_1027 = arith.constant 4 : i32
    %1871 = arith.muli %1870, %c4_i32_1027 : i32
    %c0_i32_1028 = arith.constant 0 : i32
    %1872 = arith.addi %1871, %c0_i32_1028 : i32
    %c9_i32_1029 = arith.constant 9 : i32
    %1873 = arith.muli %1872, %c9_i32_1029 : i32
    %c0_i32_1030 = arith.constant 0 : i32
    %1874 = arith.addi %1873, %c0_i32_1030 : i32
    %c0_i32_1031 = arith.constant 0 : i32
    %1875 = arith.addi %1874, %c0_i32_1031 : i32
    %1876 = vector.extract_strided_slice %1869 {offsets = [0, 0], sizes = [16, 16], strides = [1, 1]} : vector<16x18xf32> to vector<16x16xf32>
    %1877 = arith.index_cast %1875 : i32 to index
    %1878 = memref.load %arg2[%1877] : memref<288xf32, #tpu.memory_space<smem>>
    %1879 = vector.broadcast %1878 : f32 to vector<16x16xf32>
    %1880 = arith.mulf %1876, %1879 : vector<16x16xf32>
    %1881 = arith.addf %1867, %1880 : vector<16x16xf32>
    %c4_i32_1032 = arith.constant 4 : i32
    %1882 = arith.addi %0, %c4_i32_1032 : i32
    %c4_i32_1033 = arith.constant 4 : i32
    %1883 = arith.muli %1882, %c4_i32_1033 : i32
    %c0_i32_1034 = arith.constant 0 : i32
    %1884 = arith.addi %1883, %c0_i32_1034 : i32
    %c9_i32_1035 = arith.constant 9 : i32
    %1885 = arith.muli %1884, %c9_i32_1035 : i32
    %c0_i32_1036 = arith.constant 0 : i32
    %1886 = arith.addi %1885, %c0_i32_1036 : i32
    %c1_i32_1037 = arith.constant 1 : i32
    %1887 = arith.addi %1886, %c1_i32_1037 : i32
    %1888 = vector.extract_strided_slice %1869 {offsets = [0, 1], sizes = [16, 16], strides = [1, 1]} : vector<16x18xf32> to vector<16x16xf32>
    %1889 = arith.index_cast %1887 : i32 to index
    %1890 = memref.load %arg2[%1889] : memref<288xf32, #tpu.memory_space<smem>>
    %1891 = vector.broadcast %1890 : f32 to vector<16x16xf32>
    %1892 = arith.mulf %1888, %1891 : vector<16x16xf32>
    %1893 = arith.addf %1881, %1892 : vector<16x16xf32>
    %c4_i32_1038 = arith.constant 4 : i32
    %1894 = arith.addi %0, %c4_i32_1038 : i32
    %c4_i32_1039 = arith.constant 4 : i32
    %1895 = arith.muli %1894, %c4_i32_1039 : i32
    %c0_i32_1040 = arith.constant 0 : i32
    %1896 = arith.addi %1895, %c0_i32_1040 : i32
    %c9_i32_1041 = arith.constant 9 : i32
    %1897 = arith.muli %1896, %c9_i32_1041 : i32
    %c0_i32_1042 = arith.constant 0 : i32
    %1898 = arith.addi %1897, %c0_i32_1042 : i32
    %c2_i32_1043 = arith.constant 2 : i32
    %1899 = arith.addi %1898, %c2_i32_1043 : i32
    %1900 = vector.extract_strided_slice %1869 {offsets = [0, 2], sizes = [16, 16], strides = [1, 1]} : vector<16x18xf32> to vector<16x16xf32>
    %1901 = arith.index_cast %1899 : i32 to index
    %1902 = memref.load %arg2[%1901] : memref<288xf32, #tpu.memory_space<smem>>
    %1903 = vector.broadcast %1902 : f32 to vector<16x16xf32>
    %1904 = arith.mulf %1900, %1903 : vector<16x16xf32>
    %1905 = arith.addf %1893, %1904 : vector<16x16xf32>
    %c0_1044 = arith.constant 0 : index
    %c1_1045 = arith.constant 1 : index
    %c0_1046 = arith.constant 0 : index
    %1906 = vector.load %arg6[%c0_1044, %c1_1045, %c0_1046] : memref<4x18x18xf32, #tpu.memory_space<vmem>>, vector<1x16x18xf32>
    %1907 = vector.shape_cast %1906 : vector<1x16x18xf32> to vector<16x18xf32>
    %c4_i32_1047 = arith.constant 4 : i32
    %1908 = arith.addi %0, %c4_i32_1047 : i32
    %c4_i32_1048 = arith.constant 4 : i32
    %1909 = arith.muli %1908, %c4_i32_1048 : i32
    %c0_i32_1049 = arith.constant 0 : i32
    %1910 = arith.addi %1909, %c0_i32_1049 : i32
    %c9_i32_1050 = arith.constant 9 : i32
    %1911 = arith.muli %1910, %c9_i32_1050 : i32
    %c3_i32_1051 = arith.constant 3 : i32
    %1912 = arith.addi %1911, %c3_i32_1051 : i32
    %c0_i32_1052 = arith.constant 0 : i32
    %1913 = arith.addi %1912, %c0_i32_1052 : i32
    %1914 = vector.extract_strided_slice %1907 {offsets = [0, 0], sizes = [16, 16], strides = [1, 1]} : vector<16x18xf32> to vector<16x16xf32>
    %1915 = arith.index_cast %1913 : i32 to index
    %1916 = memref.load %arg2[%1915] : memref<288xf32, #tpu.memory_space<smem>>
    %1917 = vector.broadcast %1916 : f32 to vector<16x16xf32>
    %1918 = arith.mulf %1914, %1917 : vector<16x16xf32>
    %1919 = arith.addf %1905, %1918 : vector<16x16xf32>
    %c4_i32_1053 = arith.constant 4 : i32
    %1920 = arith.addi %0, %c4_i32_1053 : i32
    %c4_i32_1054 = arith.constant 4 : i32
    %1921 = arith.muli %1920, %c4_i32_1054 : i32
    %c0_i32_1055 = arith.constant 0 : i32
    %1922 = arith.addi %1921, %c0_i32_1055 : i32
    %c9_i32_1056 = arith.constant 9 : i32
    %1923 = arith.muli %1922, %c9_i32_1056 : i32
    %c3_i32_1057 = arith.constant 3 : i32
    %1924 = arith.addi %1923, %c3_i32_1057 : i32
    %c1_i32_1058 = arith.constant 1 : i32
    %1925 = arith.addi %1924, %c1_i32_1058 : i32
    %1926 = vector.extract_strided_slice %1907 {offsets = [0, 1], sizes = [16, 16], strides = [1, 1]} : vector<16x18xf32> to vector<16x16xf32>
    %1927 = arith.index_cast %1925 : i32 to index
    %1928 = memref.load %arg2[%1927] : memref<288xf32, #tpu.memory_space<smem>>
    %1929 = vector.broadcast %1928 : f32 to vector<16x16xf32>
    %1930 = arith.mulf %1926, %1929 : vector<16x16xf32>
    %1931 = arith.addf %1919, %1930 : vector<16x16xf32>
    %c4_i32_1059 = arith.constant 4 : i32
    %1932 = arith.addi %0, %c4_i32_1059 : i32
    %c4_i32_1060 = arith.constant 4 : i32
    %1933 = arith.muli %1932, %c4_i32_1060 : i32
    %c0_i32_1061 = arith.constant 0 : i32
    %1934 = arith.addi %1933, %c0_i32_1061 : i32
    %c9_i32_1062 = arith.constant 9 : i32
    %1935 = arith.muli %1934, %c9_i32_1062 : i32
    %c3_i32_1063 = arith.constant 3 : i32
    %1936 = arith.addi %1935, %c3_i32_1063 : i32
    %c2_i32_1064 = arith.constant 2 : i32
    %1937 = arith.addi %1936, %c2_i32_1064 : i32
    %1938 = vector.extract_strided_slice %1907 {offsets = [0, 2], sizes = [16, 16], strides = [1, 1]} : vector<16x18xf32> to vector<16x16xf32>
    %1939 = arith.index_cast %1937 : i32 to index
    %1940 = memref.load %arg2[%1939] : memref<288xf32, #tpu.memory_space<smem>>
    %1941 = vector.broadcast %1940 : f32 to vector<16x16xf32>
    %1942 = arith.mulf %1938, %1941 : vector<16x16xf32>
    %1943 = arith.addf %1931, %1942 : vector<16x16xf32>
    %c0_1065 = arith.constant 0 : index
    %c2_1066 = arith.constant 2 : index
    %c0_1067 = arith.constant 0 : index
    %1944 = vector.load %arg6[%c0_1065, %c2_1066, %c0_1067] : memref<4x18x18xf32, #tpu.memory_space<vmem>>, vector<1x16x18xf32>
    %1945 = vector.shape_cast %1944 : vector<1x16x18xf32> to vector<16x18xf32>
    %c4_i32_1068 = arith.constant 4 : i32
    %1946 = arith.addi %0, %c4_i32_1068 : i32
    %c4_i32_1069 = arith.constant 4 : i32
    %1947 = arith.muli %1946, %c4_i32_1069 : i32
    %c0_i32_1070 = arith.constant 0 : i32
    %1948 = arith.addi %1947, %c0_i32_1070 : i32
    %c9_i32_1071 = arith.constant 9 : i32
    %1949 = arith.muli %1948, %c9_i32_1071 : i32
    %c6_i32_1072 = arith.constant 6 : i32
    %1950 = arith.addi %1949, %c6_i32_1072 : i32
    %c0_i32_1073 = arith.constant 0 : i32
    %1951 = arith.addi %1950, %c0_i32_1073 : i32
    %1952 = vector.extract_strided_slice %1945 {offsets = [0, 0], sizes = [16, 16], strides = [1, 1]} : vector<16x18xf32> to vector<16x16xf32>
    %1953 = arith.index_cast %1951 : i32 to index
    %1954 = memref.load %arg2[%1953] : memref<288xf32, #tpu.memory_space<smem>>
    %1955 = vector.broadcast %1954 : f32 to vector<16x16xf32>
    %1956 = arith.mulf %1952, %1955 : vector<16x16xf32>
    %1957 = arith.addf %1943, %1956 : vector<16x16xf32>
    %c4_i32_1074 = arith.constant 4 : i32
    %1958 = arith.addi %0, %c4_i32_1074 : i32
    %c4_i32_1075 = arith.constant 4 : i32
    %1959 = arith.muli %1958, %c4_i32_1075 : i32
    %c0_i32_1076 = arith.constant 0 : i32
    %1960 = arith.addi %1959, %c0_i32_1076 : i32
    %c9_i32_1077 = arith.constant 9 : i32
    %1961 = arith.muli %1960, %c9_i32_1077 : i32
    %c6_i32_1078 = arith.constant 6 : i32
    %1962 = arith.addi %1961, %c6_i32_1078 : i32
    %c1_i32_1079 = arith.constant 1 : i32
    %1963 = arith.addi %1962, %c1_i32_1079 : i32
    %1964 = vector.extract_strided_slice %1945 {offsets = [0, 1], sizes = [16, 16], strides = [1, 1]} : vector<16x18xf32> to vector<16x16xf32>
    %1965 = arith.index_cast %1963 : i32 to index
    %1966 = memref.load %arg2[%1965] : memref<288xf32, #tpu.memory_space<smem>>
    %1967 = vector.broadcast %1966 : f32 to vector<16x16xf32>
    %1968 = arith.mulf %1964, %1967 : vector<16x16xf32>
    %1969 = arith.addf %1957, %1968 : vector<16x16xf32>
    %c4_i32_1080 = arith.constant 4 : i32
    %1970 = arith.addi %0, %c4_i32_1080 : i32
    %c4_i32_1081 = arith.constant 4 : i32
    %1971 = arith.muli %1970, %c4_i32_1081 : i32
    %c0_i32_1082 = arith.constant 0 : i32
    %1972 = arith.addi %1971, %c0_i32_1082 : i32
    %c9_i32_1083 = arith.constant 9 : i32
    %1973 = arith.muli %1972, %c9_i32_1083 : i32
    %c6_i32_1084 = arith.constant 6 : i32
    %1974 = arith.addi %1973, %c6_i32_1084 : i32
    %c2_i32_1085 = arith.constant 2 : i32
    %1975 = arith.addi %1974, %c2_i32_1085 : i32
    %1976 = vector.extract_strided_slice %1945 {offsets = [0, 2], sizes = [16, 16], strides = [1, 1]} : vector<16x18xf32> to vector<16x16xf32>
    %1977 = arith.index_cast %1975 : i32 to index
    %1978 = memref.load %arg2[%1977] : memref<288xf32, #tpu.memory_space<smem>>
    %1979 = vector.broadcast %1978 : f32 to vector<16x16xf32>
    %1980 = arith.mulf %1976, %1979 : vector<16x16xf32>
    %1981 = arith.addf %1969, %1980 : vector<16x16xf32>
    %c1_1086 = arith.constant 1 : index
    %c0_1087 = arith.constant 0 : index
    %c0_1088 = arith.constant 0 : index
    %1982 = vector.load %arg6[%c1_1086, %c0_1087, %c0_1088] : memref<4x18x18xf32, #tpu.memory_space<vmem>>, vector<1x16x18xf32>
    %1983 = vector.shape_cast %1982 : vector<1x16x18xf32> to vector<16x18xf32>
    %c4_i32_1089 = arith.constant 4 : i32
    %1984 = arith.addi %0, %c4_i32_1089 : i32
    %c4_i32_1090 = arith.constant 4 : i32
    %1985 = arith.muli %1984, %c4_i32_1090 : i32
    %c1_i32_1091 = arith.constant 1 : i32
    %1986 = arith.addi %1985, %c1_i32_1091 : i32
    %c9_i32_1092 = arith.constant 9 : i32
    %1987 = arith.muli %1986, %c9_i32_1092 : i32
    %c0_i32_1093 = arith.constant 0 : i32
    %1988 = arith.addi %1987, %c0_i32_1093 : i32
    %c0_i32_1094 = arith.constant 0 : i32
    %1989 = arith.addi %1988, %c0_i32_1094 : i32
    %1990 = vector.extract_strided_slice %1983 {offsets = [0, 0], sizes = [16, 16], strides = [1, 1]} : vector<16x18xf32> to vector<16x16xf32>
    %1991 = arith.index_cast %1989 : i32 to index
    %1992 = memref.load %arg2[%1991] : memref<288xf32, #tpu.memory_space<smem>>
    %1993 = vector.broadcast %1992 : f32 to vector<16x16xf32>
    %1994 = arith.mulf %1990, %1993 : vector<16x16xf32>
    %1995 = arith.addf %1981, %1994 : vector<16x16xf32>
    %c4_i32_1095 = arith.constant 4 : i32
    %1996 = arith.addi %0, %c4_i32_1095 : i32
    %c4_i32_1096 = arith.constant 4 : i32
    %1997 = arith.muli %1996, %c4_i32_1096 : i32
    %c1_i32_1097 = arith.constant 1 : i32
    %1998 = arith.addi %1997, %c1_i32_1097 : i32
    %c9_i32_1098 = arith.constant 9 : i32
    %1999 = arith.muli %1998, %c9_i32_1098 : i32
    %c0_i32_1099 = arith.constant 0 : i32
    %2000 = arith.addi %1999, %c0_i32_1099 : i32
    %c1_i32_1100 = arith.constant 1 : i32
    %2001 = arith.addi %2000, %c1_i32_1100 : i32
    %2002 = vector.extract_strided_slice %1983 {offsets = [0, 1], sizes = [16, 16], strides = [1, 1]} : vector<16x18xf32> to vector<16x16xf32>
    %2003 = arith.index_cast %2001 : i32 to index
    %2004 = memref.load %arg2[%2003] : memref<288xf32, #tpu.memory_space<smem>>
    %2005 = vector.broadcast %2004 : f32 to vector<16x16xf32>
    %2006 = arith.mulf %2002, %2005 : vector<16x16xf32>
    %2007 = arith.addf %1995, %2006 : vector<16x16xf32>
    %c4_i32_1101 = arith.constant 4 : i32
    %2008 = arith.addi %0, %c4_i32_1101 : i32
    %c4_i32_1102 = arith.constant 4 : i32
    %2009 = arith.muli %2008, %c4_i32_1102 : i32
    %c1_i32_1103 = arith.constant 1 : i32
    %2010 = arith.addi %2009, %c1_i32_1103 : i32
    %c9_i32_1104 = arith.constant 9 : i32
    %2011 = arith.muli %2010, %c9_i32_1104 : i32
    %c0_i32_1105 = arith.constant 0 : i32
    %2012 = arith.addi %2011, %c0_i32_1105 : i32
    %c2_i32_1106 = arith.constant 2 : i32
    %2013 = arith.addi %2012, %c2_i32_1106 : i32
    %2014 = vector.extract_strided_slice %1983 {offsets = [0, 2], sizes = [16, 16], strides = [1, 1]} : vector<16x18xf32> to vector<16x16xf32>
    %2015 = arith.index_cast %2013 : i32 to index
    %2016 = memref.load %arg2[%2015] : memref<288xf32, #tpu.memory_space<smem>>
    %2017 = vector.broadcast %2016 : f32 to vector<16x16xf32>
    %2018 = arith.mulf %2014, %2017 : vector<16x16xf32>
    %2019 = arith.addf %2007, %2018 : vector<16x16xf32>
    %c1_1107 = arith.constant 1 : index
    %c1_1108 = arith.constant 1 : index
    %c0_1109 = arith.constant 0 : index
    %2020 = vector.load %arg6[%c1_1107, %c1_1108, %c0_1109] : memref<4x18x18xf32, #tpu.memory_space<vmem>>, vector<1x16x18xf32>
    %2021 = vector.shape_cast %2020 : vector<1x16x18xf32> to vector<16x18xf32>
    %c4_i32_1110 = arith.constant 4 : i32
    %2022 = arith.addi %0, %c4_i32_1110 : i32
    %c4_i32_1111 = arith.constant 4 : i32
    %2023 = arith.muli %2022, %c4_i32_1111 : i32
    %c1_i32_1112 = arith.constant 1 : i32
    %2024 = arith.addi %2023, %c1_i32_1112 : i32
    %c9_i32_1113 = arith.constant 9 : i32
    %2025 = arith.muli %2024, %c9_i32_1113 : i32
    %c3_i32_1114 = arith.constant 3 : i32
    %2026 = arith.addi %2025, %c3_i32_1114 : i32
    %c0_i32_1115 = arith.constant 0 : i32
    %2027 = arith.addi %2026, %c0_i32_1115 : i32
    %2028 = vector.extract_strided_slice %2021 {offsets = [0, 0], sizes = [16, 16], strides = [1, 1]} : vector<16x18xf32> to vector<16x16xf32>
    %2029 = arith.index_cast %2027 : i32 to index
    %2030 = memref.load %arg2[%2029] : memref<288xf32, #tpu.memory_space<smem>>
    %2031 = vector.broadcast %2030 : f32 to vector<16x16xf32>
    %2032 = arith.mulf %2028, %2031 : vector<16x16xf32>
    %2033 = arith.addf %2019, %2032 : vector<16x16xf32>
    %c4_i32_1116 = arith.constant 4 : i32
    %2034 = arith.addi %0, %c4_i32_1116 : i32
    %c4_i32_1117 = arith.constant 4 : i32
    %2035 = arith.muli %2034, %c4_i32_1117 : i32
    %c1_i32_1118 = arith.constant 1 : i32
    %2036 = arith.addi %2035, %c1_i32_1118 : i32
    %c9_i32_1119 = arith.constant 9 : i32
    %2037 = arith.muli %2036, %c9_i32_1119 : i32
    %c3_i32_1120 = arith.constant 3 : i32
    %2038 = arith.addi %2037, %c3_i32_1120 : i32
    %c1_i32_1121 = arith.constant 1 : i32
    %2039 = arith.addi %2038, %c1_i32_1121 : i32
    %2040 = vector.extract_strided_slice %2021 {offsets = [0, 1], sizes = [16, 16], strides = [1, 1]} : vector<16x18xf32> to vector<16x16xf32>
    %2041 = arith.index_cast %2039 : i32 to index
    %2042 = memref.load %arg2[%2041] : memref<288xf32, #tpu.memory_space<smem>>
    %2043 = vector.broadcast %2042 : f32 to vector<16x16xf32>
    %2044 = arith.mulf %2040, %2043 : vector<16x16xf32>
    %2045 = arith.addf %2033, %2044 : vector<16x16xf32>
    %c4_i32_1122 = arith.constant 4 : i32
    %2046 = arith.addi %0, %c4_i32_1122 : i32
    %c4_i32_1123 = arith.constant 4 : i32
    %2047 = arith.muli %2046, %c4_i32_1123 : i32
    %c1_i32_1124 = arith.constant 1 : i32
    %2048 = arith.addi %2047, %c1_i32_1124 : i32
    %c9_i32_1125 = arith.constant 9 : i32
    %2049 = arith.muli %2048, %c9_i32_1125 : i32
    %c3_i32_1126 = arith.constant 3 : i32
    %2050 = arith.addi %2049, %c3_i32_1126 : i32
    %c2_i32_1127 = arith.constant 2 : i32
    %2051 = arith.addi %2050, %c2_i32_1127 : i32
    %2052 = vector.extract_strided_slice %2021 {offsets = [0, 2], sizes = [16, 16], strides = [1, 1]} : vector<16x18xf32> to vector<16x16xf32>
    %2053 = arith.index_cast %2051 : i32 to index
    %2054 = memref.load %arg2[%2053] : memref<288xf32, #tpu.memory_space<smem>>
    %2055 = vector.broadcast %2054 : f32 to vector<16x16xf32>
    %2056 = arith.mulf %2052, %2055 : vector<16x16xf32>
    %2057 = arith.addf %2045, %2056 : vector<16x16xf32>
    %c1_1128 = arith.constant 1 : index
    %c2_1129 = arith.constant 2 : index
    %c0_1130 = arith.constant 0 : index
    %2058 = vector.load %arg6[%c1_1128, %c2_1129, %c0_1130] : memref<4x18x18xf32, #tpu.memory_space<vmem>>, vector<1x16x18xf32>
    %2059 = vector.shape_cast %2058 : vector<1x16x18xf32> to vector<16x18xf32>
    %c4_i32_1131 = arith.constant 4 : i32
    %2060 = arith.addi %0, %c4_i32_1131 : i32
    %c4_i32_1132 = arith.constant 4 : i32
    %2061 = arith.muli %2060, %c4_i32_1132 : i32
    %c1_i32_1133 = arith.constant 1 : i32
    %2062 = arith.addi %2061, %c1_i32_1133 : i32
    %c9_i32_1134 = arith.constant 9 : i32
    %2063 = arith.muli %2062, %c9_i32_1134 : i32
    %c6_i32_1135 = arith.constant 6 : i32
    %2064 = arith.addi %2063, %c6_i32_1135 : i32
    %c0_i32_1136 = arith.constant 0 : i32
    %2065 = arith.addi %2064, %c0_i32_1136 : i32
    %2066 = vector.extract_strided_slice %2059 {offsets = [0, 0], sizes = [16, 16], strides = [1, 1]} : vector<16x18xf32> to vector<16x16xf32>
    %2067 = arith.index_cast %2065 : i32 to index
    %2068 = memref.load %arg2[%2067] : memref<288xf32, #tpu.memory_space<smem>>
    %2069 = vector.broadcast %2068 : f32 to vector<16x16xf32>
    %2070 = arith.mulf %2066, %2069 : vector<16x16xf32>
    %2071 = arith.addf %2057, %2070 : vector<16x16xf32>
    %c4_i32_1137 = arith.constant 4 : i32
    %2072 = arith.addi %0, %c4_i32_1137 : i32
    %c4_i32_1138 = arith.constant 4 : i32
    %2073 = arith.muli %2072, %c4_i32_1138 : i32
    %c1_i32_1139 = arith.constant 1 : i32
    %2074 = arith.addi %2073, %c1_i32_1139 : i32
    %c9_i32_1140 = arith.constant 9 : i32
    %2075 = arith.muli %2074, %c9_i32_1140 : i32
    %c6_i32_1141 = arith.constant 6 : i32
    %2076 = arith.addi %2075, %c6_i32_1141 : i32
    %c1_i32_1142 = arith.constant 1 : i32
    %2077 = arith.addi %2076, %c1_i32_1142 : i32
    %2078 = vector.extract_strided_slice %2059 {offsets = [0, 1], sizes = [16, 16], strides = [1, 1]} : vector<16x18xf32> to vector<16x16xf32>
    %2079 = arith.index_cast %2077 : i32 to index
    %2080 = memref.load %arg2[%2079] : memref<288xf32, #tpu.memory_space<smem>>
    %2081 = vector.broadcast %2080 : f32 to vector<16x16xf32>
    %2082 = arith.mulf %2078, %2081 : vector<16x16xf32>
    %2083 = arith.addf %2071, %2082 : vector<16x16xf32>
    %c4_i32_1143 = arith.constant 4 : i32
    %2084 = arith.addi %0, %c4_i32_1143 : i32
    %c4_i32_1144 = arith.constant 4 : i32
    %2085 = arith.muli %2084, %c4_i32_1144 : i32
    %c1_i32_1145 = arith.constant 1 : i32
    %2086 = arith.addi %2085, %c1_i32_1145 : i32
    %c9_i32_1146 = arith.constant 9 : i32
    %2087 = arith.muli %2086, %c9_i32_1146 : i32
    %c6_i32_1147 = arith.constant 6 : i32
    %2088 = arith.addi %2087, %c6_i32_1147 : i32
    %c2_i32_1148 = arith.constant 2 : i32
    %2089 = arith.addi %2088, %c2_i32_1148 : i32
    %2090 = vector.extract_strided_slice %2059 {offsets = [0, 2], sizes = [16, 16], strides = [1, 1]} : vector<16x18xf32> to vector<16x16xf32>
    %2091 = arith.index_cast %2089 : i32 to index
    %2092 = memref.load %arg2[%2091] : memref<288xf32, #tpu.memory_space<smem>>
    %2093 = vector.broadcast %2092 : f32 to vector<16x16xf32>
    %2094 = arith.mulf %2090, %2093 : vector<16x16xf32>
    %2095 = arith.addf %2083, %2094 : vector<16x16xf32>
    %c2_1149 = arith.constant 2 : index
    %c0_1150 = arith.constant 0 : index
    %c0_1151 = arith.constant 0 : index
    %2096 = vector.load %arg6[%c2_1149, %c0_1150, %c0_1151] : memref<4x18x18xf32, #tpu.memory_space<vmem>>, vector<1x16x18xf32>
    %2097 = vector.shape_cast %2096 : vector<1x16x18xf32> to vector<16x18xf32>
    %c4_i32_1152 = arith.constant 4 : i32
    %2098 = arith.addi %0, %c4_i32_1152 : i32
    %c4_i32_1153 = arith.constant 4 : i32
    %2099 = arith.muli %2098, %c4_i32_1153 : i32
    %c2_i32_1154 = arith.constant 2 : i32
    %2100 = arith.addi %2099, %c2_i32_1154 : i32
    %c9_i32_1155 = arith.constant 9 : i32
    %2101 = arith.muli %2100, %c9_i32_1155 : i32
    %c0_i32_1156 = arith.constant 0 : i32
    %2102 = arith.addi %2101, %c0_i32_1156 : i32
    %c0_i32_1157 = arith.constant 0 : i32
    %2103 = arith.addi %2102, %c0_i32_1157 : i32
    %2104 = vector.extract_strided_slice %2097 {offsets = [0, 0], sizes = [16, 16], strides = [1, 1]} : vector<16x18xf32> to vector<16x16xf32>
    %2105 = arith.index_cast %2103 : i32 to index
    %2106 = memref.load %arg2[%2105] : memref<288xf32, #tpu.memory_space<smem>>
    %2107 = vector.broadcast %2106 : f32 to vector<16x16xf32>
    %2108 = arith.mulf %2104, %2107 : vector<16x16xf32>
    %2109 = arith.addf %2095, %2108 : vector<16x16xf32>
    %c4_i32_1158 = arith.constant 4 : i32
    %2110 = arith.addi %0, %c4_i32_1158 : i32
    %c4_i32_1159 = arith.constant 4 : i32
    %2111 = arith.muli %2110, %c4_i32_1159 : i32
    %c2_i32_1160 = arith.constant 2 : i32
    %2112 = arith.addi %2111, %c2_i32_1160 : i32
    %c9_i32_1161 = arith.constant 9 : i32
    %2113 = arith.muli %2112, %c9_i32_1161 : i32
    %c0_i32_1162 = arith.constant 0 : i32
    %2114 = arith.addi %2113, %c0_i32_1162 : i32
    %c1_i32_1163 = arith.constant 1 : i32
    %2115 = arith.addi %2114, %c1_i32_1163 : i32
    %2116 = vector.extract_strided_slice %2097 {offsets = [0, 1], sizes = [16, 16], strides = [1, 1]} : vector<16x18xf32> to vector<16x16xf32>
    %2117 = arith.index_cast %2115 : i32 to index
    %2118 = memref.load %arg2[%2117] : memref<288xf32, #tpu.memory_space<smem>>
    %2119 = vector.broadcast %2118 : f32 to vector<16x16xf32>
    %2120 = arith.mulf %2116, %2119 : vector<16x16xf32>
    %2121 = arith.addf %2109, %2120 : vector<16x16xf32>
    %c4_i32_1164 = arith.constant 4 : i32
    %2122 = arith.addi %0, %c4_i32_1164 : i32
    %c4_i32_1165 = arith.constant 4 : i32
    %2123 = arith.muli %2122, %c4_i32_1165 : i32
    %c2_i32_1166 = arith.constant 2 : i32
    %2124 = arith.addi %2123, %c2_i32_1166 : i32
    %c9_i32_1167 = arith.constant 9 : i32
    %2125 = arith.muli %2124, %c9_i32_1167 : i32
    %c0_i32_1168 = arith.constant 0 : i32
    %2126 = arith.addi %2125, %c0_i32_1168 : i32
    %c2_i32_1169 = arith.constant 2 : i32
    %2127 = arith.addi %2126, %c2_i32_1169 : i32
    %2128 = vector.extract_strided_slice %2097 {offsets = [0, 2], sizes = [16, 16], strides = [1, 1]} : vector<16x18xf32> to vector<16x16xf32>
    %2129 = arith.index_cast %2127 : i32 to index
    %2130 = memref.load %arg2[%2129] : memref<288xf32, #tpu.memory_space<smem>>
    %2131 = vector.broadcast %2130 : f32 to vector<16x16xf32>
    %2132 = arith.mulf %2128, %2131 : vector<16x16xf32>
    %2133 = arith.addf %2121, %2132 : vector<16x16xf32>
    %c2_1170 = arith.constant 2 : index
    %c1_1171 = arith.constant 1 : index
    %c0_1172 = arith.constant 0 : index
    %2134 = vector.load %arg6[%c2_1170, %c1_1171, %c0_1172] : memref<4x18x18xf32, #tpu.memory_space<vmem>>, vector<1x16x18xf32>
    %2135 = vector.shape_cast %2134 : vector<1x16x18xf32> to vector<16x18xf32>
    %c4_i32_1173 = arith.constant 4 : i32
    %2136 = arith.addi %0, %c4_i32_1173 : i32
    %c4_i32_1174 = arith.constant 4 : i32
    %2137 = arith.muli %2136, %c4_i32_1174 : i32
    %c2_i32_1175 = arith.constant 2 : i32
    %2138 = arith.addi %2137, %c2_i32_1175 : i32
    %c9_i32_1176 = arith.constant 9 : i32
    %2139 = arith.muli %2138, %c9_i32_1176 : i32
    %c3_i32_1177 = arith.constant 3 : i32
    %2140 = arith.addi %2139, %c3_i32_1177 : i32
    %c0_i32_1178 = arith.constant 0 : i32
    %2141 = arith.addi %2140, %c0_i32_1178 : i32
    %2142 = vector.extract_strided_slice %2135 {offsets = [0, 0], sizes = [16, 16], strides = [1, 1]} : vector<16x18xf32> to vector<16x16xf32>
    %2143 = arith.index_cast %2141 : i32 to index
    %2144 = memref.load %arg2[%2143] : memref<288xf32, #tpu.memory_space<smem>>
    %2145 = vector.broadcast %2144 : f32 to vector<16x16xf32>
    %2146 = arith.mulf %2142, %2145 : vector<16x16xf32>
    %2147 = arith.addf %2133, %2146 : vector<16x16xf32>
    %c4_i32_1179 = arith.constant 4 : i32
    %2148 = arith.addi %0, %c4_i32_1179 : i32
    %c4_i32_1180 = arith.constant 4 : i32
    %2149 = arith.muli %2148, %c4_i32_1180 : i32
    %c2_i32_1181 = arith.constant 2 : i32
    %2150 = arith.addi %2149, %c2_i32_1181 : i32
    %c9_i32_1182 = arith.constant 9 : i32
    %2151 = arith.muli %2150, %c9_i32_1182 : i32
    %c3_i32_1183 = arith.constant 3 : i32
    %2152 = arith.addi %2151, %c3_i32_1183 : i32
    %c1_i32_1184 = arith.constant 1 : i32
    %2153 = arith.addi %2152, %c1_i32_1184 : i32
    %2154 = vector.extract_strided_slice %2135 {offsets = [0, 1], sizes = [16, 16], strides = [1, 1]} : vector<16x18xf32> to vector<16x16xf32>
    %2155 = arith.index_cast %2153 : i32 to index
    %2156 = memref.load %arg2[%2155] : memref<288xf32, #tpu.memory_space<smem>>
    %2157 = vector.broadcast %2156 : f32 to vector<16x16xf32>
    %2158 = arith.mulf %2154, %2157 : vector<16x16xf32>
    %2159 = arith.addf %2147, %2158 : vector<16x16xf32>
    %c4_i32_1185 = arith.constant 4 : i32
    %2160 = arith.addi %0, %c4_i32_1185 : i32
    %c4_i32_1186 = arith.constant 4 : i32
    %2161 = arith.muli %2160, %c4_i32_1186 : i32
    %c2_i32_1187 = arith.constant 2 : i32
    %2162 = arith.addi %2161, %c2_i32_1187 : i32
    %c9_i32_1188 = arith.constant 9 : i32
    %2163 = arith.muli %2162, %c9_i32_1188 : i32
    %c3_i32_1189 = arith.constant 3 : i32
    %2164 = arith.addi %2163, %c3_i32_1189 : i32
    %c2_i32_1190 = arith.constant 2 : i32
    %2165 = arith.addi %2164, %c2_i32_1190 : i32
    %2166 = vector.extract_strided_slice %2135 {offsets = [0, 2], sizes = [16, 16], strides = [1, 1]} : vector<16x18xf32> to vector<16x16xf32>
    %2167 = arith.index_cast %2165 : i32 to index
    %2168 = memref.load %arg2[%2167] : memref<288xf32, #tpu.memory_space<smem>>
    %2169 = vector.broadcast %2168 : f32 to vector<16x16xf32>
    %2170 = arith.mulf %2166, %2169 : vector<16x16xf32>
    %2171 = arith.addf %2159, %2170 : vector<16x16xf32>
    %c2_1191 = arith.constant 2 : index
    %c2_1192 = arith.constant 2 : index
    %c0_1193 = arith.constant 0 : index
    %2172 = vector.load %arg6[%c2_1191, %c2_1192, %c0_1193] : memref<4x18x18xf32, #tpu.memory_space<vmem>>, vector<1x16x18xf32>
    %2173 = vector.shape_cast %2172 : vector<1x16x18xf32> to vector<16x18xf32>
    %c4_i32_1194 = arith.constant 4 : i32
    %2174 = arith.addi %0, %c4_i32_1194 : i32
    %c4_i32_1195 = arith.constant 4 : i32
    %2175 = arith.muli %2174, %c4_i32_1195 : i32
    %c2_i32_1196 = arith.constant 2 : i32
    %2176 = arith.addi %2175, %c2_i32_1196 : i32
    %c9_i32_1197 = arith.constant 9 : i32
    %2177 = arith.muli %2176, %c9_i32_1197 : i32
    %c6_i32_1198 = arith.constant 6 : i32
    %2178 = arith.addi %2177, %c6_i32_1198 : i32
    %c0_i32_1199 = arith.constant 0 : i32
    %2179 = arith.addi %2178, %c0_i32_1199 : i32
    %2180 = vector.extract_strided_slice %2173 {offsets = [0, 0], sizes = [16, 16], strides = [1, 1]} : vector<16x18xf32> to vector<16x16xf32>
    %2181 = arith.index_cast %2179 : i32 to index
    %2182 = memref.load %arg2[%2181] : memref<288xf32, #tpu.memory_space<smem>>
    %2183 = vector.broadcast %2182 : f32 to vector<16x16xf32>
    %2184 = arith.mulf %2180, %2183 : vector<16x16xf32>
    %2185 = arith.addf %2171, %2184 : vector<16x16xf32>
    %c4_i32_1200 = arith.constant 4 : i32
    %2186 = arith.addi %0, %c4_i32_1200 : i32
    %c4_i32_1201 = arith.constant 4 : i32
    %2187 = arith.muli %2186, %c4_i32_1201 : i32
    %c2_i32_1202 = arith.constant 2 : i32
    %2188 = arith.addi %2187, %c2_i32_1202 : i32
    %c9_i32_1203 = arith.constant 9 : i32
    %2189 = arith.muli %2188, %c9_i32_1203 : i32
    %c6_i32_1204 = arith.constant 6 : i32
    %2190 = arith.addi %2189, %c6_i32_1204 : i32
    %c1_i32_1205 = arith.constant 1 : i32
    %2191 = arith.addi %2190, %c1_i32_1205 : i32
    %2192 = vector.extract_strided_slice %2173 {offsets = [0, 1], sizes = [16, 16], strides = [1, 1]} : vector<16x18xf32> to vector<16x16xf32>
    %2193 = arith.index_cast %2191 : i32 to index
    %2194 = memref.load %arg2[%2193] : memref<288xf32, #tpu.memory_space<smem>>
    %2195 = vector.broadcast %2194 : f32 to vector<16x16xf32>
    %2196 = arith.mulf %2192, %2195 : vector<16x16xf32>
    %2197 = arith.addf %2185, %2196 : vector<16x16xf32>
    %c4_i32_1206 = arith.constant 4 : i32
    %2198 = arith.addi %0, %c4_i32_1206 : i32
    %c4_i32_1207 = arith.constant 4 : i32
    %2199 = arith.muli %2198, %c4_i32_1207 : i32
    %c2_i32_1208 = arith.constant 2 : i32
    %2200 = arith.addi %2199, %c2_i32_1208 : i32
    %c9_i32_1209 = arith.constant 9 : i32
    %2201 = arith.muli %2200, %c9_i32_1209 : i32
    %c6_i32_1210 = arith.constant 6 : i32
    %2202 = arith.addi %2201, %c6_i32_1210 : i32
    %c2_i32_1211 = arith.constant 2 : i32
    %2203 = arith.addi %2202, %c2_i32_1211 : i32
    %2204 = vector.extract_strided_slice %2173 {offsets = [0, 2], sizes = [16, 16], strides = [1, 1]} : vector<16x18xf32> to vector<16x16xf32>
    %2205 = arith.index_cast %2203 : i32 to index
    %2206 = memref.load %arg2[%2205] : memref<288xf32, #tpu.memory_space<smem>>
    %2207 = vector.broadcast %2206 : f32 to vector<16x16xf32>
    %2208 = arith.mulf %2204, %2207 : vector<16x16xf32>
    %2209 = arith.addf %2197, %2208 : vector<16x16xf32>
    %c3_1212 = arith.constant 3 : index
    %c0_1213 = arith.constant 0 : index
    %c0_1214 = arith.constant 0 : index
    %2210 = vector.load %arg6[%c3_1212, %c0_1213, %c0_1214] : memref<4x18x18xf32, #tpu.memory_space<vmem>>, vector<1x16x18xf32>
    %2211 = vector.shape_cast %2210 : vector<1x16x18xf32> to vector<16x18xf32>
    %c4_i32_1215 = arith.constant 4 : i32
    %2212 = arith.addi %0, %c4_i32_1215 : i32
    %c4_i32_1216 = arith.constant 4 : i32
    %2213 = arith.muli %2212, %c4_i32_1216 : i32
    %c3_i32_1217 = arith.constant 3 : i32
    %2214 = arith.addi %2213, %c3_i32_1217 : i32
    %c9_i32_1218 = arith.constant 9 : i32
    %2215 = arith.muli %2214, %c9_i32_1218 : i32
    %c0_i32_1219 = arith.constant 0 : i32
    %2216 = arith.addi %2215, %c0_i32_1219 : i32
    %c0_i32_1220 = arith.constant 0 : i32
    %2217 = arith.addi %2216, %c0_i32_1220 : i32
    %2218 = vector.extract_strided_slice %2211 {offsets = [0, 0], sizes = [16, 16], strides = [1, 1]} : vector<16x18xf32> to vector<16x16xf32>
    %2219 = arith.index_cast %2217 : i32 to index
    %2220 = memref.load %arg2[%2219] : memref<288xf32, #tpu.memory_space<smem>>
    %2221 = vector.broadcast %2220 : f32 to vector<16x16xf32>
    %2222 = arith.mulf %2218, %2221 : vector<16x16xf32>
    %2223 = arith.addf %2209, %2222 : vector<16x16xf32>
    %c4_i32_1221 = arith.constant 4 : i32
    %2224 = arith.addi %0, %c4_i32_1221 : i32
    %c4_i32_1222 = arith.constant 4 : i32
    %2225 = arith.muli %2224, %c4_i32_1222 : i32
    %c3_i32_1223 = arith.constant 3 : i32
    %2226 = arith.addi %2225, %c3_i32_1223 : i32
    %c9_i32_1224 = arith.constant 9 : i32
    %2227 = arith.muli %2226, %c9_i32_1224 : i32
    %c0_i32_1225 = arith.constant 0 : i32
    %2228 = arith.addi %2227, %c0_i32_1225 : i32
    %c1_i32_1226 = arith.constant 1 : i32
    %2229 = arith.addi %2228, %c1_i32_1226 : i32
    %2230 = vector.extract_strided_slice %2211 {offsets = [0, 1], sizes = [16, 16], strides = [1, 1]} : vector<16x18xf32> to vector<16x16xf32>
    %2231 = arith.index_cast %2229 : i32 to index
    %2232 = memref.load %arg2[%2231] : memref<288xf32, #tpu.memory_space<smem>>
    %2233 = vector.broadcast %2232 : f32 to vector<16x16xf32>
    %2234 = arith.mulf %2230, %2233 : vector<16x16xf32>
    %2235 = arith.addf %2223, %2234 : vector<16x16xf32>
    %c4_i32_1227 = arith.constant 4 : i32
    %2236 = arith.addi %0, %c4_i32_1227 : i32
    %c4_i32_1228 = arith.constant 4 : i32
    %2237 = arith.muli %2236, %c4_i32_1228 : i32
    %c3_i32_1229 = arith.constant 3 : i32
    %2238 = arith.addi %2237, %c3_i32_1229 : i32
    %c9_i32_1230 = arith.constant 9 : i32
    %2239 = arith.muli %2238, %c9_i32_1230 : i32
    %c0_i32_1231 = arith.constant 0 : i32
    %2240 = arith.addi %2239, %c0_i32_1231 : i32
    %c2_i32_1232 = arith.constant 2 : i32
    %2241 = arith.addi %2240, %c2_i32_1232 : i32
    %2242 = vector.extract_strided_slice %2211 {offsets = [0, 2], sizes = [16, 16], strides = [1, 1]} : vector<16x18xf32> to vector<16x16xf32>
    %2243 = arith.index_cast %2241 : i32 to index
    %2244 = memref.load %arg2[%2243] : memref<288xf32, #tpu.memory_space<smem>>
    %2245 = vector.broadcast %2244 : f32 to vector<16x16xf32>
    %2246 = arith.mulf %2242, %2245 : vector<16x16xf32>
    %2247 = arith.addf %2235, %2246 : vector<16x16xf32>
    %c3_1233 = arith.constant 3 : index
    %c1_1234 = arith.constant 1 : index
    %c0_1235 = arith.constant 0 : index
    %2248 = vector.load %arg6[%c3_1233, %c1_1234, %c0_1235] : memref<4x18x18xf32, #tpu.memory_space<vmem>>, vector<1x16x18xf32>
    %2249 = vector.shape_cast %2248 : vector<1x16x18xf32> to vector<16x18xf32>
    %c4_i32_1236 = arith.constant 4 : i32
    %2250 = arith.addi %0, %c4_i32_1236 : i32
    %c4_i32_1237 = arith.constant 4 : i32
    %2251 = arith.muli %2250, %c4_i32_1237 : i32
    %c3_i32_1238 = arith.constant 3 : i32
    %2252 = arith.addi %2251, %c3_i32_1238 : i32
    %c9_i32_1239 = arith.constant 9 : i32
    %2253 = arith.muli %2252, %c9_i32_1239 : i32
    %c3_i32_1240 = arith.constant 3 : i32
    %2254 = arith.addi %2253, %c3_i32_1240 : i32
    %c0_i32_1241 = arith.constant 0 : i32
    %2255 = arith.addi %2254, %c0_i32_1241 : i32
    %2256 = vector.extract_strided_slice %2249 {offsets = [0, 0], sizes = [16, 16], strides = [1, 1]} : vector<16x18xf32> to vector<16x16xf32>
    %2257 = arith.index_cast %2255 : i32 to index
    %2258 = memref.load %arg2[%2257] : memref<288xf32, #tpu.memory_space<smem>>
    %2259 = vector.broadcast %2258 : f32 to vector<16x16xf32>
    %2260 = arith.mulf %2256, %2259 : vector<16x16xf32>
    %2261 = arith.addf %2247, %2260 : vector<16x16xf32>
    %c4_i32_1242 = arith.constant 4 : i32
    %2262 = arith.addi %0, %c4_i32_1242 : i32
    %c4_i32_1243 = arith.constant 4 : i32
    %2263 = arith.muli %2262, %c4_i32_1243 : i32
    %c3_i32_1244 = arith.constant 3 : i32
    %2264 = arith.addi %2263, %c3_i32_1244 : i32
    %c9_i32_1245 = arith.constant 9 : i32
    %2265 = arith.muli %2264, %c9_i32_1245 : i32
    %c3_i32_1246 = arith.constant 3 : i32
    %2266 = arith.addi %2265, %c3_i32_1246 : i32
    %c1_i32_1247 = arith.constant 1 : i32
    %2267 = arith.addi %2266, %c1_i32_1247 : i32
    %2268 = vector.extract_strided_slice %2249 {offsets = [0, 1], sizes = [16, 16], strides = [1, 1]} : vector<16x18xf32> to vector<16x16xf32>
    %2269 = arith.index_cast %2267 : i32 to index
    %2270 = memref.load %arg2[%2269] : memref<288xf32, #tpu.memory_space<smem>>
    %2271 = vector.broadcast %2270 : f32 to vector<16x16xf32>
    %2272 = arith.mulf %2268, %2271 : vector<16x16xf32>
    %2273 = arith.addf %2261, %2272 : vector<16x16xf32>
    %c4_i32_1248 = arith.constant 4 : i32
    %2274 = arith.addi %0, %c4_i32_1248 : i32
    %c4_i32_1249 = arith.constant 4 : i32
    %2275 = arith.muli %2274, %c4_i32_1249 : i32
    %c3_i32_1250 = arith.constant 3 : i32
    %2276 = arith.addi %2275, %c3_i32_1250 : i32
    %c9_i32_1251 = arith.constant 9 : i32
    %2277 = arith.muli %2276, %c9_i32_1251 : i32
    %c3_i32_1252 = arith.constant 3 : i32
    %2278 = arith.addi %2277, %c3_i32_1252 : i32
    %c2_i32_1253 = arith.constant 2 : i32
    %2279 = arith.addi %2278, %c2_i32_1253 : i32
    %2280 = vector.extract_strided_slice %2249 {offsets = [0, 2], sizes = [16, 16], strides = [1, 1]} : vector<16x18xf32> to vector<16x16xf32>
    %2281 = arith.index_cast %2279 : i32 to index
    %2282 = memref.load %arg2[%2281] : memref<288xf32, #tpu.memory_space<smem>>
    %2283 = vector.broadcast %2282 : f32 to vector<16x16xf32>
    %2284 = arith.mulf %2280, %2283 : vector<16x16xf32>
    %2285 = arith.addf %2273, %2284 : vector<16x16xf32>
    %c3_1254 = arith.constant 3 : index
    %c2_1255 = arith.constant 2 : index
    %c0_1256 = arith.constant 0 : index
    %2286 = vector.load %arg6[%c3_1254, %c2_1255, %c0_1256] : memref<4x18x18xf32, #tpu.memory_space<vmem>>, vector<1x16x18xf32>
    %2287 = vector.shape_cast %2286 : vector<1x16x18xf32> to vector<16x18xf32>
    %c4_i32_1257 = arith.constant 4 : i32
    %2288 = arith.addi %0, %c4_i32_1257 : i32
    %c4_i32_1258 = arith.constant 4 : i32
    %2289 = arith.muli %2288, %c4_i32_1258 : i32
    %c3_i32_1259 = arith.constant 3 : i32
    %2290 = arith.addi %2289, %c3_i32_1259 : i32
    %c9_i32_1260 = arith.constant 9 : i32
    %2291 = arith.muli %2290, %c9_i32_1260 : i32
    %c6_i32_1261 = arith.constant 6 : i32
    %2292 = arith.addi %2291, %c6_i32_1261 : i32
    %c0_i32_1262 = arith.constant 0 : i32
    %2293 = arith.addi %2292, %c0_i32_1262 : i32
    %2294 = vector.extract_strided_slice %2287 {offsets = [0, 0], sizes = [16, 16], strides = [1, 1]} : vector<16x18xf32> to vector<16x16xf32>
    %2295 = arith.index_cast %2293 : i32 to index
    %2296 = memref.load %arg2[%2295] : memref<288xf32, #tpu.memory_space<smem>>
    %2297 = vector.broadcast %2296 : f32 to vector<16x16xf32>
    %2298 = arith.mulf %2294, %2297 : vector<16x16xf32>
    %2299 = arith.addf %2285, %2298 : vector<16x16xf32>
    %c4_i32_1263 = arith.constant 4 : i32
    %2300 = arith.addi %0, %c4_i32_1263 : i32
    %c4_i32_1264 = arith.constant 4 : i32
    %2301 = arith.muli %2300, %c4_i32_1264 : i32
    %c3_i32_1265 = arith.constant 3 : i32
    %2302 = arith.addi %2301, %c3_i32_1265 : i32
    %c9_i32_1266 = arith.constant 9 : i32
    %2303 = arith.muli %2302, %c9_i32_1266 : i32
    %c6_i32_1267 = arith.constant 6 : i32
    %2304 = arith.addi %2303, %c6_i32_1267 : i32
    %c1_i32_1268 = arith.constant 1 : i32
    %2305 = arith.addi %2304, %c1_i32_1268 : i32
    %2306 = vector.extract_strided_slice %2287 {offsets = [0, 1], sizes = [16, 16], strides = [1, 1]} : vector<16x18xf32> to vector<16x16xf32>
    %2307 = arith.index_cast %2305 : i32 to index
    %2308 = memref.load %arg2[%2307] : memref<288xf32, #tpu.memory_space<smem>>
    %2309 = vector.broadcast %2308 : f32 to vector<16x16xf32>
    %2310 = arith.mulf %2306, %2309 : vector<16x16xf32>
    %2311 = arith.addf %2299, %2310 : vector<16x16xf32>
    %c4_i32_1269 = arith.constant 4 : i32
    %2312 = arith.addi %0, %c4_i32_1269 : i32
    %c4_i32_1270 = arith.constant 4 : i32
    %2313 = arith.muli %2312, %c4_i32_1270 : i32
    %c3_i32_1271 = arith.constant 3 : i32
    %2314 = arith.addi %2313, %c3_i32_1271 : i32
    %c9_i32_1272 = arith.constant 9 : i32
    %2315 = arith.muli %2314, %c9_i32_1272 : i32
    %c6_i32_1273 = arith.constant 6 : i32
    %2316 = arith.addi %2315, %c6_i32_1273 : i32
    %c2_i32_1274 = arith.constant 2 : i32
    %2317 = arith.addi %2316, %c2_i32_1274 : i32
    %2318 = vector.extract_strided_slice %2287 {offsets = [0, 2], sizes = [16, 16], strides = [1, 1]} : vector<16x18xf32> to vector<16x16xf32>
    %2319 = arith.index_cast %2317 : i32 to index
    %2320 = memref.load %arg2[%2319] : memref<288xf32, #tpu.memory_space<smem>>
    %2321 = vector.broadcast %2320 : f32 to vector<16x16xf32>
    %2322 = arith.mulf %2318, %2321 : vector<16x16xf32>
    %2323 = arith.addf %2311, %2322 : vector<16x16xf32>
    %cst_1275 = arith.constant 0.000000e+00 : f32
    %2324 = vector.broadcast %cst_1275 : f32 to vector<16x16xf32>
    %2325 = arith.maximumf %2323, %2324 : vector<16x16xf32>
    %c0_1276 = arith.constant 0 : index
    %c4 = arith.constant 4 : index
    %c0_1277 = arith.constant 0 : index
    %c0_1278 = arith.constant 0 : index
    %2326 = vector.load %arg5[%c0_1276, %c4, %c0_1277, %c0_1278] : memref<1x8x16x16xf32, #tpu.memory_space<vmem>>, vector<1x1x16x16xf32>
    %2327 = vector.shape_cast %2326 : vector<1x1x16x16xf32> to vector<16x16xf32>
    %2328 = vector.shape_cast %2325 : vector<16x16xf32> to vector<1x1x16x16xf32>
    tpu.vector_store %arg5[%c0_1276, %c4, %c0_1277, %c0_1278], %2328 {strides = array<i32>} : memref<1x8x16x16xf32, #tpu.memory_space<vmem>>, vector<1x1x16x16xf32>,
    %c5_i32 = arith.constant 5 : i32
    %2329 = arith.addi %0, %c5_i32 : i32
    %2330 = arith.index_cast %2329 : i32 to index
    %2331 = memref.load %arg3[%2330] : memref<8xf32, #tpu.memory_space<smem>>
    %2332 = vector.broadcast %2331 : f32 to vector<16x16xf32>
    %c0_1279 = arith.constant 0 : index
    %c0_1280 = arith.constant 0 : index
    %c0_1281 = arith.constant 0 : index
    %2333 = vector.load %arg6[%c0_1279, %c0_1280, %c0_1281] : memref<4x18x18xf32, #tpu.memory_space<vmem>>, vector<1x16x18xf32>
    %2334 = vector.shape_cast %2333 : vector<1x16x18xf32> to vector<16x18xf32>
    %c5_i32_1282 = arith.constant 5 : i32
    %2335 = arith.addi %0, %c5_i32_1282 : i32
    %c4_i32_1283 = arith.constant 4 : i32
    %2336 = arith.muli %2335, %c4_i32_1283 : i32
    %c0_i32_1284 = arith.constant 0 : i32
    %2337 = arith.addi %2336, %c0_i32_1284 : i32
    %c9_i32_1285 = arith.constant 9 : i32
    %2338 = arith.muli %2337, %c9_i32_1285 : i32
    %c0_i32_1286 = arith.constant 0 : i32
    %2339 = arith.addi %2338, %c0_i32_1286 : i32
    %c0_i32_1287 = arith.constant 0 : i32
    %2340 = arith.addi %2339, %c0_i32_1287 : i32
    %2341 = vector.extract_strided_slice %2334 {offsets = [0, 0], sizes = [16, 16], strides = [1, 1]} : vector<16x18xf32> to vector<16x16xf32>
    %2342 = arith.index_cast %2340 : i32 to index
    %2343 = memref.load %arg2[%2342] : memref<288xf32, #tpu.memory_space<smem>>
    %2344 = vector.broadcast %2343 : f32 to vector<16x16xf32>
    %2345 = arith.mulf %2341, %2344 : vector<16x16xf32>
    %2346 = arith.addf %2332, %2345 : vector<16x16xf32>
    %c5_i32_1288 = arith.constant 5 : i32
    %2347 = arith.addi %0, %c5_i32_1288 : i32
    %c4_i32_1289 = arith.constant 4 : i32
    %2348 = arith.muli %2347, %c4_i32_1289 : i32
    %c0_i32_1290 = arith.constant 0 : i32
    %2349 = arith.addi %2348, %c0_i32_1290 : i32
    %c9_i32_1291 = arith.constant 9 : i32
    %2350 = arith.muli %2349, %c9_i32_1291 : i32
    %c0_i32_1292 = arith.constant 0 : i32
    %2351 = arith.addi %2350, %c0_i32_1292 : i32
    %c1_i32_1293 = arith.constant 1 : i32
    %2352 = arith.addi %2351, %c1_i32_1293 : i32
    %2353 = vector.extract_strided_slice %2334 {offsets = [0, 1], sizes = [16, 16], strides = [1, 1]} : vector<16x18xf32> to vector<16x16xf32>
    %2354 = arith.index_cast %2352 : i32 to index
    %2355 = memref.load %arg2[%2354] : memref<288xf32, #tpu.memory_space<smem>>
    %2356 = vector.broadcast %2355 : f32 to vector<16x16xf32>
    %2357 = arith.mulf %2353, %2356 : vector<16x16xf32>
    %2358 = arith.addf %2346, %2357 : vector<16x16xf32>
    %c5_i32_1294 = arith.constant 5 : i32
    %2359 = arith.addi %0, %c5_i32_1294 : i32
    %c4_i32_1295 = arith.constant 4 : i32
    %2360 = arith.muli %2359, %c4_i32_1295 : i32
    %c0_i32_1296 = arith.constant 0 : i32
    %2361 = arith.addi %2360, %c0_i32_1296 : i32
    %c9_i32_1297 = arith.constant 9 : i32
    %2362 = arith.muli %2361, %c9_i32_1297 : i32
    %c0_i32_1298 = arith.constant 0 : i32
    %2363 = arith.addi %2362, %c0_i32_1298 : i32
    %c2_i32_1299 = arith.constant 2 : i32
    %2364 = arith.addi %2363, %c2_i32_1299 : i32
    %2365 = vector.extract_strided_slice %2334 {offsets = [0, 2], sizes = [16, 16], strides = [1, 1]} : vector<16x18xf32> to vector<16x16xf32>
    %2366 = arith.index_cast %2364 : i32 to index
    %2367 = memref.load %arg2[%2366] : memref<288xf32, #tpu.memory_space<smem>>
    %2368 = vector.broadcast %2367 : f32 to vector<16x16xf32>
    %2369 = arith.mulf %2365, %2368 : vector<16x16xf32>
    %2370 = arith.addf %2358, %2369 : vector<16x16xf32>
    %c0_1300 = arith.constant 0 : index
    %c1_1301 = arith.constant 1 : index
    %c0_1302 = arith.constant 0 : index
    %2371 = vector.load %arg6[%c0_1300, %c1_1301, %c0_1302] : memref<4x18x18xf32, #tpu.memory_space<vmem>>, vector<1x16x18xf32>
    %2372 = vector.shape_cast %2371 : vector<1x16x18xf32> to vector<16x18xf32>
    %c5_i32_1303 = arith.constant 5 : i32
    %2373 = arith.addi %0, %c5_i32_1303 : i32
    %c4_i32_1304 = arith.constant 4 : i32
    %2374 = arith.muli %2373, %c4_i32_1304 : i32
    %c0_i32_1305 = arith.constant 0 : i32
    %2375 = arith.addi %2374, %c0_i32_1305 : i32
    %c9_i32_1306 = arith.constant 9 : i32
    %2376 = arith.muli %2375, %c9_i32_1306 : i32
    %c3_i32_1307 = arith.constant 3 : i32
    %2377 = arith.addi %2376, %c3_i32_1307 : i32
    %c0_i32_1308 = arith.constant 0 : i32
    %2378 = arith.addi %2377, %c0_i32_1308 : i32
    %2379 = vector.extract_strided_slice %2372 {offsets = [0, 0], sizes = [16, 16], strides = [1, 1]} : vector<16x18xf32> to vector<16x16xf32>
    %2380 = arith.index_cast %2378 : i32 to index
    %2381 = memref.load %arg2[%2380] : memref<288xf32, #tpu.memory_space<smem>>
    %2382 = vector.broadcast %2381 : f32 to vector<16x16xf32>
    %2383 = arith.mulf %2379, %2382 : vector<16x16xf32>
    %2384 = arith.addf %2370, %2383 : vector<16x16xf32>
    %c5_i32_1309 = arith.constant 5 : i32
    %2385 = arith.addi %0, %c5_i32_1309 : i32
    %c4_i32_1310 = arith.constant 4 : i32
    %2386 = arith.muli %2385, %c4_i32_1310 : i32
    %c0_i32_1311 = arith.constant 0 : i32
    %2387 = arith.addi %2386, %c0_i32_1311 : i32
    %c9_i32_1312 = arith.constant 9 : i32
    %2388 = arith.muli %2387, %c9_i32_1312 : i32
    %c3_i32_1313 = arith.constant 3 : i32
    %2389 = arith.addi %2388, %c3_i32_1313 : i32
    %c1_i32_1314 = arith.constant 1 : i32
    %2390 = arith.addi %2389, %c1_i32_1314 : i32
    %2391 = vector.extract_strided_slice %2372 {offsets = [0, 1], sizes = [16, 16], strides = [1, 1]} : vector<16x18xf32> to vector<16x16xf32>
    %2392 = arith.index_cast %2390 : i32 to index
    %2393 = memref.load %arg2[%2392] : memref<288xf32, #tpu.memory_space<smem>>
    %2394 = vector.broadcast %2393 : f32 to vector<16x16xf32>
    %2395 = arith.mulf %2391, %2394 : vector<16x16xf32>
    %2396 = arith.addf %2384, %2395 : vector<16x16xf32>
    %c5_i32_1315 = arith.constant 5 : i32
    %2397 = arith.addi %0, %c5_i32_1315 : i32
    %c4_i32_1316 = arith.constant 4 : i32
    %2398 = arith.muli %2397, %c4_i32_1316 : i32
    %c0_i32_1317 = arith.constant 0 : i32
    %2399 = arith.addi %2398, %c0_i32_1317 : i32
    %c9_i32_1318 = arith.constant 9 : i32
    %2400 = arith.muli %2399, %c9_i32_1318 : i32
    %c3_i32_1319 = arith.constant 3 : i32
    %2401 = arith.addi %2400, %c3_i32_1319 : i32
    %c2_i32_1320 = arith.constant 2 : i32
    %2402 = arith.addi %2401, %c2_i32_1320 : i32
    %2403 = vector.extract_strided_slice %2372 {offsets = [0, 2], sizes = [16, 16], strides = [1, 1]} : vector<16x18xf32> to vector<16x16xf32>
    %2404 = arith.index_cast %2402 : i32 to index
    %2405 = memref.load %arg2[%2404] : memref<288xf32, #tpu.memory_space<smem>>
    %2406 = vector.broadcast %2405 : f32 to vector<16x16xf32>
    %2407 = arith.mulf %2403, %2406 : vector<16x16xf32>
    %2408 = arith.addf %2396, %2407 : vector<16x16xf32>
    %c0_1321 = arith.constant 0 : index
    %c2_1322 = arith.constant 2 : index
    %c0_1323 = arith.constant 0 : index
    %2409 = vector.load %arg6[%c0_1321, %c2_1322, %c0_1323] : memref<4x18x18xf32, #tpu.memory_space<vmem>>, vector<1x16x18xf32>
    %2410 = vector.shape_cast %2409 : vector<1x16x18xf32> to vector<16x18xf32>
    %c5_i32_1324 = arith.constant 5 : i32
    %2411 = arith.addi %0, %c5_i32_1324 : i32
    %c4_i32_1325 = arith.constant 4 : i32
    %2412 = arith.muli %2411, %c4_i32_1325 : i32
    %c0_i32_1326 = arith.constant 0 : i32
    %2413 = arith.addi %2412, %c0_i32_1326 : i32
    %c9_i32_1327 = arith.constant 9 : i32
    %2414 = arith.muli %2413, %c9_i32_1327 : i32
    %c6_i32_1328 = arith.constant 6 : i32
    %2415 = arith.addi %2414, %c6_i32_1328 : i32
    %c0_i32_1329 = arith.constant 0 : i32
    %2416 = arith.addi %2415, %c0_i32_1329 : i32
    %2417 = vector.extract_strided_slice %2410 {offsets = [0, 0], sizes = [16, 16], strides = [1, 1]} : vector<16x18xf32> to vector<16x16xf32>
    %2418 = arith.index_cast %2416 : i32 to index
    %2419 = memref.load %arg2[%2418] : memref<288xf32, #tpu.memory_space<smem>>
    %2420 = vector.broadcast %2419 : f32 to vector<16x16xf32>
    %2421 = arith.mulf %2417, %2420 : vector<16x16xf32>
    %2422 = arith.addf %2408, %2421 : vector<16x16xf32>
    %c5_i32_1330 = arith.constant 5 : i32
    %2423 = arith.addi %0, %c5_i32_1330 : i32
    %c4_i32_1331 = arith.constant 4 : i32
    %2424 = arith.muli %2423, %c4_i32_1331 : i32
    %c0_i32_1332 = arith.constant 0 : i32
    %2425 = arith.addi %2424, %c0_i32_1332 : i32
    %c9_i32_1333 = arith.constant 9 : i32
    %2426 = arith.muli %2425, %c9_i32_1333 : i32
    %c6_i32_1334 = arith.constant 6 : i32
    %2427 = arith.addi %2426, %c6_i32_1334 : i32
    %c1_i32_1335 = arith.constant 1 : i32
    %2428 = arith.addi %2427, %c1_i32_1335 : i32
    %2429 = vector.extract_strided_slice %2410 {offsets = [0, 1], sizes = [16, 16], strides = [1, 1]} : vector<16x18xf32> to vector<16x16xf32>
    %2430 = arith.index_cast %2428 : i32 to index
    %2431 = memref.load %arg2[%2430] : memref<288xf32, #tpu.memory_space<smem>>
    %2432 = vector.broadcast %2431 : f32 to vector<16x16xf32>
    %2433 = arith.mulf %2429, %2432 : vector<16x16xf32>
    %2434 = arith.addf %2422, %2433 : vector<16x16xf32>
    %c5_i32_1336 = arith.constant 5 : i32
    %2435 = arith.addi %0, %c5_i32_1336 : i32
    %c4_i32_1337 = arith.constant 4 : i32
    %2436 = arith.muli %2435, %c4_i32_1337 : i32
    %c0_i32_1338 = arith.constant 0 : i32
    %2437 = arith.addi %2436, %c0_i32_1338 : i32
    %c9_i32_1339 = arith.constant 9 : i32
    %2438 = arith.muli %2437, %c9_i32_1339 : i32
    %c6_i32_1340 = arith.constant 6 : i32
    %2439 = arith.addi %2438, %c6_i32_1340 : i32
    %c2_i32_1341 = arith.constant 2 : i32
    %2440 = arith.addi %2439, %c2_i32_1341 : i32
    %2441 = vector.extract_strided_slice %2410 {offsets = [0, 2], sizes = [16, 16], strides = [1, 1]} : vector<16x18xf32> to vector<16x16xf32>
    %2442 = arith.index_cast %2440 : i32 to index
    %2443 = memref.load %arg2[%2442] : memref<288xf32, #tpu.memory_space<smem>>
    %2444 = vector.broadcast %2443 : f32 to vector<16x16xf32>
    %2445 = arith.mulf %2441, %2444 : vector<16x16xf32>
    %2446 = arith.addf %2434, %2445 : vector<16x16xf32>
    %c1_1342 = arith.constant 1 : index
    %c0_1343 = arith.constant 0 : index
    %c0_1344 = arith.constant 0 : index
    %2447 = vector.load %arg6[%c1_1342, %c0_1343, %c0_1344] : memref<4x18x18xf32, #tpu.memory_space<vmem>>, vector<1x16x18xf32>
    %2448 = vector.shape_cast %2447 : vector<1x16x18xf32> to vector<16x18xf32>
    %c5_i32_1345 = arith.constant 5 : i32
    %2449 = arith.addi %0, %c5_i32_1345 : i32
    %c4_i32_1346 = arith.constant 4 : i32
    %2450 = arith.muli %2449, %c4_i32_1346 : i32
    %c1_i32_1347 = arith.constant 1 : i32
    %2451 = arith.addi %2450, %c1_i32_1347 : i32
    %c9_i32_1348 = arith.constant 9 : i32
    %2452 = arith.muli %2451, %c9_i32_1348 : i32
    %c0_i32_1349 = arith.constant 0 : i32
    %2453 = arith.addi %2452, %c0_i32_1349 : i32
    %c0_i32_1350 = arith.constant 0 : i32
    %2454 = arith.addi %2453, %c0_i32_1350 : i32
    %2455 = vector.extract_strided_slice %2448 {offsets = [0, 0], sizes = [16, 16], strides = [1, 1]} : vector<16x18xf32> to vector<16x16xf32>
    %2456 = arith.index_cast %2454 : i32 to index
    %2457 = memref.load %arg2[%2456] : memref<288xf32, #tpu.memory_space<smem>>
    %2458 = vector.broadcast %2457 : f32 to vector<16x16xf32>
    %2459 = arith.mulf %2455, %2458 : vector<16x16xf32>
    %2460 = arith.addf %2446, %2459 : vector<16x16xf32>
    %c5_i32_1351 = arith.constant 5 : i32
    %2461 = arith.addi %0, %c5_i32_1351 : i32
    %c4_i32_1352 = arith.constant 4 : i32
    %2462 = arith.muli %2461, %c4_i32_1352 : i32
    %c1_i32_1353 = arith.constant 1 : i32
    %2463 = arith.addi %2462, %c1_i32_1353 : i32
    %c9_i32_1354 = arith.constant 9 : i32
    %2464 = arith.muli %2463, %c9_i32_1354 : i32
    %c0_i32_1355 = arith.constant 0 : i32
    %2465 = arith.addi %2464, %c0_i32_1355 : i32
    %c1_i32_1356 = arith.constant 1 : i32
    %2466 = arith.addi %2465, %c1_i32_1356 : i32
    %2467 = vector.extract_strided_slice %2448 {offsets = [0, 1], sizes = [16, 16], strides = [1, 1]} : vector<16x18xf32> to vector<16x16xf32>
    %2468 = arith.index_cast %2466 : i32 to index
    %2469 = memref.load %arg2[%2468] : memref<288xf32, #tpu.memory_space<smem>>
    %2470 = vector.broadcast %2469 : f32 to vector<16x16xf32>
    %2471 = arith.mulf %2467, %2470 : vector<16x16xf32>
    %2472 = arith.addf %2460, %2471 : vector<16x16xf32>
    %c5_i32_1357 = arith.constant 5 : i32
    %2473 = arith.addi %0, %c5_i32_1357 : i32
    %c4_i32_1358 = arith.constant 4 : i32
    %2474 = arith.muli %2473, %c4_i32_1358 : i32
    %c1_i32_1359 = arith.constant 1 : i32
    %2475 = arith.addi %2474, %c1_i32_1359 : i32
    %c9_i32_1360 = arith.constant 9 : i32
    %2476 = arith.muli %2475, %c9_i32_1360 : i32
    %c0_i32_1361 = arith.constant 0 : i32
    %2477 = arith.addi %2476, %c0_i32_1361 : i32
    %c2_i32_1362 = arith.constant 2 : i32
    %2478 = arith.addi %2477, %c2_i32_1362 : i32
    %2479 = vector.extract_strided_slice %2448 {offsets = [0, 2], sizes = [16, 16], strides = [1, 1]} : vector<16x18xf32> to vector<16x16xf32>
    %2480 = arith.index_cast %2478 : i32 to index
    %2481 = memref.load %arg2[%2480] : memref<288xf32, #tpu.memory_space<smem>>
    %2482 = vector.broadcast %2481 : f32 to vector<16x16xf32>
    %2483 = arith.mulf %2479, %2482 : vector<16x16xf32>
    %2484 = arith.addf %2472, %2483 : vector<16x16xf32>
    %c1_1363 = arith.constant 1 : index
    %c1_1364 = arith.constant 1 : index
    %c0_1365 = arith.constant 0 : index
    %2485 = vector.load %arg6[%c1_1363, %c1_1364, %c0_1365] : memref<4x18x18xf32, #tpu.memory_space<vmem>>, vector<1x16x18xf32>
    %2486 = vector.shape_cast %2485 : vector<1x16x18xf32> to vector<16x18xf32>
    %c5_i32_1366 = arith.constant 5 : i32
    %2487 = arith.addi %0, %c5_i32_1366 : i32
    %c4_i32_1367 = arith.constant 4 : i32
    %2488 = arith.muli %2487, %c4_i32_1367 : i32
    %c1_i32_1368 = arith.constant 1 : i32
    %2489 = arith.addi %2488, %c1_i32_1368 : i32
    %c9_i32_1369 = arith.constant 9 : i32
    %2490 = arith.muli %2489, %c9_i32_1369 : i32
    %c3_i32_1370 = arith.constant 3 : i32
    %2491 = arith.addi %2490, %c3_i32_1370 : i32
    %c0_i32_1371 = arith.constant 0 : i32
    %2492 = arith.addi %2491, %c0_i32_1371 : i32
    %2493 = vector.extract_strided_slice %2486 {offsets = [0, 0], sizes = [16, 16], strides = [1, 1]} : vector<16x18xf32> to vector<16x16xf32>
    %2494 = arith.index_cast %2492 : i32 to index
    %2495 = memref.load %arg2[%2494] : memref<288xf32, #tpu.memory_space<smem>>
    %2496 = vector.broadcast %2495 : f32 to vector<16x16xf32>
    %2497 = arith.mulf %2493, %2496 : vector<16x16xf32>
    %2498 = arith.addf %2484, %2497 : vector<16x16xf32>
    %c5_i32_1372 = arith.constant 5 : i32
    %2499 = arith.addi %0, %c5_i32_1372 : i32
    %c4_i32_1373 = arith.constant 4 : i32
    %2500 = arith.muli %2499, %c4_i32_1373 : i32
    %c1_i32_1374 = arith.constant 1 : i32
    %2501 = arith.addi %2500, %c1_i32_1374 : i32
    %c9_i32_1375 = arith.constant 9 : i32
    %2502 = arith.muli %2501, %c9_i32_1375 : i32
    %c3_i32_1376 = arith.constant 3 : i32
    %2503 = arith.addi %2502, %c3_i32_1376 : i32
    %c1_i32_1377 = arith.constant 1 : i32
    %2504 = arith.addi %2503, %c1_i32_1377 : i32
    %2505 = vector.extract_strided_slice %2486 {offsets = [0, 1], sizes = [16, 16], strides = [1, 1]} : vector<16x18xf32> to vector<16x16xf32>
    %2506 = arith.index_cast %2504 : i32 to index
    %2507 = memref.load %arg2[%2506] : memref<288xf32, #tpu.memory_space<smem>>
    %2508 = vector.broadcast %2507 : f32 to vector<16x16xf32>
    %2509 = arith.mulf %2505, %2508 : vector<16x16xf32>
    %2510 = arith.addf %2498, %2509 : vector<16x16xf32>
    %c5_i32_1378 = arith.constant 5 : i32
    %2511 = arith.addi %0, %c5_i32_1378 : i32
    %c4_i32_1379 = arith.constant 4 : i32
    %2512 = arith.muli %2511, %c4_i32_1379 : i32
    %c1_i32_1380 = arith.constant 1 : i32
    %2513 = arith.addi %2512, %c1_i32_1380 : i32
    %c9_i32_1381 = arith.constant 9 : i32
    %2514 = arith.muli %2513, %c9_i32_1381 : i32
    %c3_i32_1382 = arith.constant 3 : i32
    %2515 = arith.addi %2514, %c3_i32_1382 : i32
    %c2_i32_1383 = arith.constant 2 : i32
    %2516 = arith.addi %2515, %c2_i32_1383 : i32
    %2517 = vector.extract_strided_slice %2486 {offsets = [0, 2], sizes = [16, 16], strides = [1, 1]} : vector<16x18xf32> to vector<16x16xf32>
    %2518 = arith.index_cast %2516 : i32 to index
    %2519 = memref.load %arg2[%2518] : memref<288xf32, #tpu.memory_space<smem>>
    %2520 = vector.broadcast %2519 : f32 to vector<16x16xf32>
    %2521 = arith.mulf %2517, %2520 : vector<16x16xf32>
    %2522 = arith.addf %2510, %2521 : vector<16x16xf32>
    %c1_1384 = arith.constant 1 : index
    %c2_1385 = arith.constant 2 : index
    %c0_1386 = arith.constant 0 : index
    %2523 = vector.load %arg6[%c1_1384, %c2_1385, %c0_1386] : memref<4x18x18xf32, #tpu.memory_space<vmem>>, vector<1x16x18xf32>
    %2524 = vector.shape_cast %2523 : vector<1x16x18xf32> to vector<16x18xf32>
    %c5_i32_1387 = arith.constant 5 : i32
    %2525 = arith.addi %0, %c5_i32_1387 : i32
    %c4_i32_1388 = arith.constant 4 : i32
    %2526 = arith.muli %2525, %c4_i32_1388 : i32
    %c1_i32_1389 = arith.constant 1 : i32
    %2527 = arith.addi %2526, %c1_i32_1389 : i32
    %c9_i32_1390 = arith.constant 9 : i32
    %2528 = arith.muli %2527, %c9_i32_1390 : i32
    %c6_i32_1391 = arith.constant 6 : i32
    %2529 = arith.addi %2528, %c6_i32_1391 : i32
    %c0_i32_1392 = arith.constant 0 : i32
    %2530 = arith.addi %2529, %c0_i32_1392 : i32
    %2531 = vector.extract_strided_slice %2524 {offsets = [0, 0], sizes = [16, 16], strides = [1, 1]} : vector<16x18xf32> to vector<16x16xf32>
    %2532 = arith.index_cast %2530 : i32 to index
    %2533 = memref.load %arg2[%2532] : memref<288xf32, #tpu.memory_space<smem>>
    %2534 = vector.broadcast %2533 : f32 to vector<16x16xf32>
    %2535 = arith.mulf %2531, %2534 : vector<16x16xf32>
    %2536 = arith.addf %2522, %2535 : vector<16x16xf32>
    %c5_i32_1393 = arith.constant 5 : i32
    %2537 = arith.addi %0, %c5_i32_1393 : i32
    %c4_i32_1394 = arith.constant 4 : i32
    %2538 = arith.muli %2537, %c4_i32_1394 : i32
    %c1_i32_1395 = arith.constant 1 : i32
    %2539 = arith.addi %2538, %c1_i32_1395 : i32
    %c9_i32_1396 = arith.constant 9 : i32
    %2540 = arith.muli %2539, %c9_i32_1396 : i32
    %c6_i32_1397 = arith.constant 6 : i32
    %2541 = arith.addi %2540, %c6_i32_1397 : i32
    %c1_i32_1398 = arith.constant 1 : i32
    %2542 = arith.addi %2541, %c1_i32_1398 : i32
    %2543 = vector.extract_strided_slice %2524 {offsets = [0, 1], sizes = [16, 16], strides = [1, 1]} : vector<16x18xf32> to vector<16x16xf32>
    %2544 = arith.index_cast %2542 : i32 to index
    %2545 = memref.load %arg2[%2544] : memref<288xf32, #tpu.memory_space<smem>>
    %2546 = vector.broadcast %2545 : f32 to vector<16x16xf32>
    %2547 = arith.mulf %2543, %2546 : vector<16x16xf32>
    %2548 = arith.addf %2536, %2547 : vector<16x16xf32>
    %c5_i32_1399 = arith.constant 5 : i32
    %2549 = arith.addi %0, %c5_i32_1399 : i32
    %c4_i32_1400 = arith.constant 4 : i32
    %2550 = arith.muli %2549, %c4_i32_1400 : i32
    %c1_i32_1401 = arith.constant 1 : i32
    %2551 = arith.addi %2550, %c1_i32_1401 : i32
    %c9_i32_1402 = arith.constant 9 : i32
    %2552 = arith.muli %2551, %c9_i32_1402 : i32
    %c6_i32_1403 = arith.constant 6 : i32
    %2553 = arith.addi %2552, %c6_i32_1403 : i32
    %c2_i32_1404 = arith.constant 2 : i32
    %2554 = arith.addi %2553, %c2_i32_1404 : i32
    %2555 = vector.extract_strided_slice %2524 {offsets = [0, 2], sizes = [16, 16], strides = [1, 1]} : vector<16x18xf32> to vector<16x16xf32>
    %2556 = arith.index_cast %2554 : i32 to index
    %2557 = memref.load %arg2[%2556] : memref<288xf32, #tpu.memory_space<smem>>
    %2558 = vector.broadcast %2557 : f32 to vector<16x16xf32>
    %2559 = arith.mulf %2555, %2558 : vector<16x16xf32>
    %2560 = arith.addf %2548, %2559 : vector<16x16xf32>
    %c2_1405 = arith.constant 2 : index
    %c0_1406 = arith.constant 0 : index
    %c0_1407 = arith.constant 0 : index
    %2561 = vector.load %arg6[%c2_1405, %c0_1406, %c0_1407] : memref<4x18x18xf32, #tpu.memory_space<vmem>>, vector<1x16x18xf32>
    %2562 = vector.shape_cast %2561 : vector<1x16x18xf32> to vector<16x18xf32>
    %c5_i32_1408 = arith.constant 5 : i32
    %2563 = arith.addi %0, %c5_i32_1408 : i32
    %c4_i32_1409 = arith.constant 4 : i32
    %2564 = arith.muli %2563, %c4_i32_1409 : i32
    %c2_i32_1410 = arith.constant 2 : i32
    %2565 = arith.addi %2564, %c2_i32_1410 : i32
    %c9_i32_1411 = arith.constant 9 : i32
    %2566 = arith.muli %2565, %c9_i32_1411 : i32
    %c0_i32_1412 = arith.constant 0 : i32
    %2567 = arith.addi %2566, %c0_i32_1412 : i32
    %c0_i32_1413 = arith.constant 0 : i32
    %2568 = arith.addi %2567, %c0_i32_1413 : i32
    %2569 = vector.extract_strided_slice %2562 {offsets = [0, 0], sizes = [16, 16], strides = [1, 1]} : vector<16x18xf32> to vector<16x16xf32>
    %2570 = arith.index_cast %2568 : i32 to index
    %2571 = memref.load %arg2[%2570] : memref<288xf32, #tpu.memory_space<smem>>
    %2572 = vector.broadcast %2571 : f32 to vector<16x16xf32>
    %2573 = arith.mulf %2569, %2572 : vector<16x16xf32>
    %2574 = arith.addf %2560, %2573 : vector<16x16xf32>
    %c5_i32_1414 = arith.constant 5 : i32
    %2575 = arith.addi %0, %c5_i32_1414 : i32
    %c4_i32_1415 = arith.constant 4 : i32
    %2576 = arith.muli %2575, %c4_i32_1415 : i32
    %c2_i32_1416 = arith.constant 2 : i32
    %2577 = arith.addi %2576, %c2_i32_1416 : i32
    %c9_i32_1417 = arith.constant 9 : i32
    %2578 = arith.muli %2577, %c9_i32_1417 : i32
    %c0_i32_1418 = arith.constant 0 : i32
    %2579 = arith.addi %2578, %c0_i32_1418 : i32
    %c1_i32_1419 = arith.constant 1 : i32
    %2580 = arith.addi %2579, %c1_i32_1419 : i32
    %2581 = vector.extract_strided_slice %2562 {offsets = [0, 1], sizes = [16, 16], strides = [1, 1]} : vector<16x18xf32> to vector<16x16xf32>
    %2582 = arith.index_cast %2580 : i32 to index
    %2583 = memref.load %arg2[%2582] : memref<288xf32, #tpu.memory_space<smem>>
    %2584 = vector.broadcast %2583 : f32 to vector<16x16xf32>
    %2585 = arith.mulf %2581, %2584 : vector<16x16xf32>
    %2586 = arith.addf %2574, %2585 : vector<16x16xf32>
    %c5_i32_1420 = arith.constant 5 : i32
    %2587 = arith.addi %0, %c5_i32_1420 : i32
    %c4_i32_1421 = arith.constant 4 : i32
    %2588 = arith.muli %2587, %c4_i32_1421 : i32
    %c2_i32_1422 = arith.constant 2 : i32
    %2589 = arith.addi %2588, %c2_i32_1422 : i32
    %c9_i32_1423 = arith.constant 9 : i32
    %2590 = arith.muli %2589, %c9_i32_1423 : i32
    %c0_i32_1424 = arith.constant 0 : i32
    %2591 = arith.addi %2590, %c0_i32_1424 : i32
    %c2_i32_1425 = arith.constant 2 : i32
    %2592 = arith.addi %2591, %c2_i32_1425 : i32
    %2593 = vector.extract_strided_slice %2562 {offsets = [0, 2], sizes = [16, 16], strides = [1, 1]} : vector<16x18xf32> to vector<16x16xf32>
    %2594 = arith.index_cast %2592 : i32 to index
    %2595 = memref.load %arg2[%2594] : memref<288xf32, #tpu.memory_space<smem>>
    %2596 = vector.broadcast %2595 : f32 to vector<16x16xf32>
    %2597 = arith.mulf %2593, %2596 : vector<16x16xf32>
    %2598 = arith.addf %2586, %2597 : vector<16x16xf32>
    %c2_1426 = arith.constant 2 : index
    %c1_1427 = arith.constant 1 : index
    %c0_1428 = arith.constant 0 : index
    %2599 = vector.load %arg6[%c2_1426, %c1_1427, %c0_1428] : memref<4x18x18xf32, #tpu.memory_space<vmem>>, vector<1x16x18xf32>
    %2600 = vector.shape_cast %2599 : vector<1x16x18xf32> to vector<16x18xf32>
    %c5_i32_1429 = arith.constant 5 : i32
    %2601 = arith.addi %0, %c5_i32_1429 : i32
    %c4_i32_1430 = arith.constant 4 : i32
    %2602 = arith.muli %2601, %c4_i32_1430 : i32
    %c2_i32_1431 = arith.constant 2 : i32
    %2603 = arith.addi %2602, %c2_i32_1431 : i32
    %c9_i32_1432 = arith.constant 9 : i32
    %2604 = arith.muli %2603, %c9_i32_1432 : i32
    %c3_i32_1433 = arith.constant 3 : i32
    %2605 = arith.addi %2604, %c3_i32_1433 : i32
    %c0_i32_1434 = arith.constant 0 : i32
    %2606 = arith.addi %2605, %c0_i32_1434 : i32
    %2607 = vector.extract_strided_slice %2600 {offsets = [0, 0], sizes = [16, 16], strides = [1, 1]} : vector<16x18xf32> to vector<16x16xf32>
    %2608 = arith.index_cast %2606 : i32 to index
    %2609 = memref.load %arg2[%2608] : memref<288xf32, #tpu.memory_space<smem>>
    %2610 = vector.broadcast %2609 : f32 to vector<16x16xf32>
    %2611 = arith.mulf %2607, %2610 : vector<16x16xf32>
    %2612 = arith.addf %2598, %2611 : vector<16x16xf32>
    %c5_i32_1435 = arith.constant 5 : i32
    %2613 = arith.addi %0, %c5_i32_1435 : i32
    %c4_i32_1436 = arith.constant 4 : i32
    %2614 = arith.muli %2613, %c4_i32_1436 : i32
    %c2_i32_1437 = arith.constant 2 : i32
    %2615 = arith.addi %2614, %c2_i32_1437 : i32
    %c9_i32_1438 = arith.constant 9 : i32
    %2616 = arith.muli %2615, %c9_i32_1438 : i32
    %c3_i32_1439 = arith.constant 3 : i32
    %2617 = arith.addi %2616, %c3_i32_1439 : i32
    %c1_i32_1440 = arith.constant 1 : i32
    %2618 = arith.addi %2617, %c1_i32_1440 : i32
    %2619 = vector.extract_strided_slice %2600 {offsets = [0, 1], sizes = [16, 16], strides = [1, 1]} : vector<16x18xf32> to vector<16x16xf32>
    %2620 = arith.index_cast %2618 : i32 to index
    %2621 = memref.load %arg2[%2620] : memref<288xf32, #tpu.memory_space<smem>>
    %2622 = vector.broadcast %2621 : f32 to vector<16x16xf32>
    %2623 = arith.mulf %2619, %2622 : vector<16x16xf32>
    %2624 = arith.addf %2612, %2623 : vector<16x16xf32>
    %c5_i32_1441 = arith.constant 5 : i32
    %2625 = arith.addi %0, %c5_i32_1441 : i32
    %c4_i32_1442 = arith.constant 4 : i32
    %2626 = arith.muli %2625, %c4_i32_1442 : i32
    %c2_i32_1443 = arith.constant 2 : i32
    %2627 = arith.addi %2626, %c2_i32_1443 : i32
    %c9_i32_1444 = arith.constant 9 : i32
    %2628 = arith.muli %2627, %c9_i32_1444 : i32
    %c3_i32_1445 = arith.constant 3 : i32
    %2629 = arith.addi %2628, %c3_i32_1445 : i32
    %c2_i32_1446 = arith.constant 2 : i32
    %2630 = arith.addi %2629, %c2_i32_1446 : i32
    %2631 = vector.extract_strided_slice %2600 {offsets = [0, 2], sizes = [16, 16], strides = [1, 1]} : vector<16x18xf32> to vector<16x16xf32>
    %2632 = arith.index_cast %2630 : i32 to index
    %2633 = memref.load %arg2[%2632] : memref<288xf32, #tpu.memory_space<smem>>
    %2634 = vector.broadcast %2633 : f32 to vector<16x16xf32>
    %2635 = arith.mulf %2631, %2634 : vector<16x16xf32>
    %2636 = arith.addf %2624, %2635 : vector<16x16xf32>
    %c2_1447 = arith.constant 2 : index
    %c2_1448 = arith.constant 2 : index
    %c0_1449 = arith.constant 0 : index
    %2637 = vector.load %arg6[%c2_1447, %c2_1448, %c0_1449] : memref<4x18x18xf32, #tpu.memory_space<vmem>>, vector<1x16x18xf32>
    %2638 = vector.shape_cast %2637 : vector<1x16x18xf32> to vector<16x18xf32>
    %c5_i32_1450 = arith.constant 5 : i32
    %2639 = arith.addi %0, %c5_i32_1450 : i32
    %c4_i32_1451 = arith.constant 4 : i32
    %2640 = arith.muli %2639, %c4_i32_1451 : i32
    %c2_i32_1452 = arith.constant 2 : i32
    %2641 = arith.addi %2640, %c2_i32_1452 : i32
    %c9_i32_1453 = arith.constant 9 : i32
    %2642 = arith.muli %2641, %c9_i32_1453 : i32
    %c6_i32_1454 = arith.constant 6 : i32
    %2643 = arith.addi %2642, %c6_i32_1454 : i32
    %c0_i32_1455 = arith.constant 0 : i32
    %2644 = arith.addi %2643, %c0_i32_1455 : i32
    %2645 = vector.extract_strided_slice %2638 {offsets = [0, 0], sizes = [16, 16], strides = [1, 1]} : vector<16x18xf32> to vector<16x16xf32>
    %2646 = arith.index_cast %2644 : i32 to index
    %2647 = memref.load %arg2[%2646] : memref<288xf32, #tpu.memory_space<smem>>
    %2648 = vector.broadcast %2647 : f32 to vector<16x16xf32>
    %2649 = arith.mulf %2645, %2648 : vector<16x16xf32>
    %2650 = arith.addf %2636, %2649 : vector<16x16xf32>
    %c5_i32_1456 = arith.constant 5 : i32
    %2651 = arith.addi %0, %c5_i32_1456 : i32
    %c4_i32_1457 = arith.constant 4 : i32
    %2652 = arith.muli %2651, %c4_i32_1457 : i32
    %c2_i32_1458 = arith.constant 2 : i32
    %2653 = arith.addi %2652, %c2_i32_1458 : i32
    %c9_i32_1459 = arith.constant 9 : i32
    %2654 = arith.muli %2653, %c9_i32_1459 : i32
    %c6_i32_1460 = arith.constant 6 : i32
    %2655 = arith.addi %2654, %c6_i32_1460 : i32
    %c1_i32_1461 = arith.constant 1 : i32
    %2656 = arith.addi %2655, %c1_i32_1461 : i32
    %2657 = vector.extract_strided_slice %2638 {offsets = [0, 1], sizes = [16, 16], strides = [1, 1]} : vector<16x18xf32> to vector<16x16xf32>
    %2658 = arith.index_cast %2656 : i32 to index
    %2659 = memref.load %arg2[%2658] : memref<288xf32, #tpu.memory_space<smem>>
    %2660 = vector.broadcast %2659 : f32 to vector<16x16xf32>
    %2661 = arith.mulf %2657, %2660 : vector<16x16xf32>
    %2662 = arith.addf %2650, %2661 : vector<16x16xf32>
    %c5_i32_1462 = arith.constant 5 : i32
    %2663 = arith.addi %0, %c5_i32_1462 : i32
    %c4_i32_1463 = arith.constant 4 : i32
    %2664 = arith.muli %2663, %c4_i32_1463 : i32
    %c2_i32_1464 = arith.constant 2 : i32
    %2665 = arith.addi %2664, %c2_i32_1464 : i32
    %c9_i32_1465 = arith.constant 9 : i32
    %2666 = arith.muli %2665, %c9_i32_1465 : i32
    %c6_i32_1466 = arith.constant 6 : i32
    %2667 = arith.addi %2666, %c6_i32_1466 : i32
    %c2_i32_1467 = arith.constant 2 : i32
    %2668 = arith.addi %2667, %c2_i32_1467 : i32
    %2669 = vector.extract_strided_slice %2638 {offsets = [0, 2], sizes = [16, 16], strides = [1, 1]} : vector<16x18xf32> to vector<16x16xf32>
    %2670 = arith.index_cast %2668 : i32 to index
    %2671 = memref.load %arg2[%2670] : memref<288xf32, #tpu.memory_space<smem>>
    %2672 = vector.broadcast %2671 : f32 to vector<16x16xf32>
    %2673 = arith.mulf %2669, %2672 : vector<16x16xf32>
    %2674 = arith.addf %2662, %2673 : vector<16x16xf32>
    %c3_1468 = arith.constant 3 : index
    %c0_1469 = arith.constant 0 : index
    %c0_1470 = arith.constant 0 : index
    %2675 = vector.load %arg6[%c3_1468, %c0_1469, %c0_1470] : memref<4x18x18xf32, #tpu.memory_space<vmem>>, vector<1x16x18xf32>
    %2676 = vector.shape_cast %2675 : vector<1x16x18xf32> to vector<16x18xf32>
    %c5_i32_1471 = arith.constant 5 : i32
    %2677 = arith.addi %0, %c5_i32_1471 : i32
    %c4_i32_1472 = arith.constant 4 : i32
    %2678 = arith.muli %2677, %c4_i32_1472 : i32
    %c3_i32_1473 = arith.constant 3 : i32
    %2679 = arith.addi %2678, %c3_i32_1473 : i32
    %c9_i32_1474 = arith.constant 9 : i32
    %2680 = arith.muli %2679, %c9_i32_1474 : i32
    %c0_i32_1475 = arith.constant 0 : i32
    %2681 = arith.addi %2680, %c0_i32_1475 : i32
    %c0_i32_1476 = arith.constant 0 : i32
    %2682 = arith.addi %2681, %c0_i32_1476 : i32
    %2683 = vector.extract_strided_slice %2676 {offsets = [0, 0], sizes = [16, 16], strides = [1, 1]} : vector<16x18xf32> to vector<16x16xf32>
    %2684 = arith.index_cast %2682 : i32 to index
    %2685 = memref.load %arg2[%2684] : memref<288xf32, #tpu.memory_space<smem>>
    %2686 = vector.broadcast %2685 : f32 to vector<16x16xf32>
    %2687 = arith.mulf %2683, %2686 : vector<16x16xf32>
    %2688 = arith.addf %2674, %2687 : vector<16x16xf32>
    %c5_i32_1477 = arith.constant 5 : i32
    %2689 = arith.addi %0, %c5_i32_1477 : i32
    %c4_i32_1478 = arith.constant 4 : i32
    %2690 = arith.muli %2689, %c4_i32_1478 : i32
    %c3_i32_1479 = arith.constant 3 : i32
    %2691 = arith.addi %2690, %c3_i32_1479 : i32
    %c9_i32_1480 = arith.constant 9 : i32
    %2692 = arith.muli %2691, %c9_i32_1480 : i32
    %c0_i32_1481 = arith.constant 0 : i32
    %2693 = arith.addi %2692, %c0_i32_1481 : i32
    %c1_i32_1482 = arith.constant 1 : i32
    %2694 = arith.addi %2693, %c1_i32_1482 : i32
    %2695 = vector.extract_strided_slice %2676 {offsets = [0, 1], sizes = [16, 16], strides = [1, 1]} : vector<16x18xf32> to vector<16x16xf32>
    %2696 = arith.index_cast %2694 : i32 to index
    %2697 = memref.load %arg2[%2696] : memref<288xf32, #tpu.memory_space<smem>>
    %2698 = vector.broadcast %2697 : f32 to vector<16x16xf32>
    %2699 = arith.mulf %2695, %2698 : vector<16x16xf32>
    %2700 = arith.addf %2688, %2699 : vector<16x16xf32>
    %c5_i32_1483 = arith.constant 5 : i32
    %2701 = arith.addi %0, %c5_i32_1483 : i32
    %c4_i32_1484 = arith.constant 4 : i32
    %2702 = arith.muli %2701, %c4_i32_1484 : i32
    %c3_i32_1485 = arith.constant 3 : i32
    %2703 = arith.addi %2702, %c3_i32_1485 : i32
    %c9_i32_1486 = arith.constant 9 : i32
    %2704 = arith.muli %2703, %c9_i32_1486 : i32
    %c0_i32_1487 = arith.constant 0 : i32
    %2705 = arith.addi %2704, %c0_i32_1487 : i32
    %c2_i32_1488 = arith.constant 2 : i32
    %2706 = arith.addi %2705, %c2_i32_1488 : i32
    %2707 = vector.extract_strided_slice %2676 {offsets = [0, 2], sizes = [16, 16], strides = [1, 1]} : vector<16x18xf32> to vector<16x16xf32>
    %2708 = arith.index_cast %2706 : i32 to index
    %2709 = memref.load %arg2[%2708] : memref<288xf32, #tpu.memory_space<smem>>
    %2710 = vector.broadcast %2709 : f32 to vector<16x16xf32>
    %2711 = arith.mulf %2707, %2710 : vector<16x16xf32>
    %2712 = arith.addf %2700, %2711 : vector<16x16xf32>
    %c3_1489 = arith.constant 3 : index
    %c1_1490 = arith.constant 1 : index
    %c0_1491 = arith.constant 0 : index
    %2713 = vector.load %arg6[%c3_1489, %c1_1490, %c0_1491] : memref<4x18x18xf32, #tpu.memory_space<vmem>>, vector<1x16x18xf32>
    %2714 = vector.shape_cast %2713 : vector<1x16x18xf32> to vector<16x18xf32>
    %c5_i32_1492 = arith.constant 5 : i32
    %2715 = arith.addi %0, %c5_i32_1492 : i32
    %c4_i32_1493 = arith.constant 4 : i32
    %2716 = arith.muli %2715, %c4_i32_1493 : i32
    %c3_i32_1494 = arith.constant 3 : i32
    %2717 = arith.addi %2716, %c3_i32_1494 : i32
    %c9_i32_1495 = arith.constant 9 : i32
    %2718 = arith.muli %2717, %c9_i32_1495 : i32
    %c3_i32_1496 = arith.constant 3 : i32
    %2719 = arith.addi %2718, %c3_i32_1496 : i32
    %c0_i32_1497 = arith.constant 0 : i32
    %2720 = arith.addi %2719, %c0_i32_1497 : i32
    %2721 = vector.extract_strided_slice %2714 {offsets = [0, 0], sizes = [16, 16], strides = [1, 1]} : vector<16x18xf32> to vector<16x16xf32>
    %2722 = arith.index_cast %2720 : i32 to index
    %2723 = memref.load %arg2[%2722] : memref<288xf32, #tpu.memory_space<smem>>
    %2724 = vector.broadcast %2723 : f32 to vector<16x16xf32>
    %2725 = arith.mulf %2721, %2724 : vector<16x16xf32>
    %2726 = arith.addf %2712, %2725 : vector<16x16xf32>
    %c5_i32_1498 = arith.constant 5 : i32
    %2727 = arith.addi %0, %c5_i32_1498 : i32
    %c4_i32_1499 = arith.constant 4 : i32
    %2728 = arith.muli %2727, %c4_i32_1499 : i32
    %c3_i32_1500 = arith.constant 3 : i32
    %2729 = arith.addi %2728, %c3_i32_1500 : i32
    %c9_i32_1501 = arith.constant 9 : i32
    %2730 = arith.muli %2729, %c9_i32_1501 : i32
    %c3_i32_1502 = arith.constant 3 : i32
    %2731 = arith.addi %2730, %c3_i32_1502 : i32
    %c1_i32_1503 = arith.constant 1 : i32
    %2732 = arith.addi %2731, %c1_i32_1503 : i32
    %2733 = vector.extract_strided_slice %2714 {offsets = [0, 1], sizes = [16, 16], strides = [1, 1]} : vector<16x18xf32> to vector<16x16xf32>
    %2734 = arith.index_cast %2732 : i32 to index
    %2735 = memref.load %arg2[%2734] : memref<288xf32, #tpu.memory_space<smem>>
    %2736 = vector.broadcast %2735 : f32 to vector<16x16xf32>
    %2737 = arith.mulf %2733, %2736 : vector<16x16xf32>
    %2738 = arith.addf %2726, %2737 : vector<16x16xf32>
    %c5_i32_1504 = arith.constant 5 : i32
    %2739 = arith.addi %0, %c5_i32_1504 : i32
    %c4_i32_1505 = arith.constant 4 : i32
    %2740 = arith.muli %2739, %c4_i32_1505 : i32
    %c3_i32_1506 = arith.constant 3 : i32
    %2741 = arith.addi %2740, %c3_i32_1506 : i32
    %c9_i32_1507 = arith.constant 9 : i32
    %2742 = arith.muli %2741, %c9_i32_1507 : i32
    %c3_i32_1508 = arith.constant 3 : i32
    %2743 = arith.addi %2742, %c3_i32_1508 : i32
    %c2_i32_1509 = arith.constant 2 : i32
    %2744 = arith.addi %2743, %c2_i32_1509 : i32
    %2745 = vector.extract_strided_slice %2714 {offsets = [0, 2], sizes = [16, 16], strides = [1, 1]} : vector<16x18xf32> to vector<16x16xf32>
    %2746 = arith.index_cast %2744 : i32 to index
    %2747 = memref.load %arg2[%2746] : memref<288xf32, #tpu.memory_space<smem>>
    %2748 = vector.broadcast %2747 : f32 to vector<16x16xf32>
    %2749 = arith.mulf %2745, %2748 : vector<16x16xf32>
    %2750 = arith.addf %2738, %2749 : vector<16x16xf32>
    %c3_1510 = arith.constant 3 : index
    %c2_1511 = arith.constant 2 : index
    %c0_1512 = arith.constant 0 : index
    %2751 = vector.load %arg6[%c3_1510, %c2_1511, %c0_1512] : memref<4x18x18xf32, #tpu.memory_space<vmem>>, vector<1x16x18xf32>
    %2752 = vector.shape_cast %2751 : vector<1x16x18xf32> to vector<16x18xf32>
    %c5_i32_1513 = arith.constant 5 : i32
    %2753 = arith.addi %0, %c5_i32_1513 : i32
    %c4_i32_1514 = arith.constant 4 : i32
    %2754 = arith.muli %2753, %c4_i32_1514 : i32
    %c3_i32_1515 = arith.constant 3 : i32
    %2755 = arith.addi %2754, %c3_i32_1515 : i32
    %c9_i32_1516 = arith.constant 9 : i32
    %2756 = arith.muli %2755, %c9_i32_1516 : i32
    %c6_i32_1517 = arith.constant 6 : i32
    %2757 = arith.addi %2756, %c6_i32_1517 : i32
    %c0_i32_1518 = arith.constant 0 : i32
    %2758 = arith.addi %2757, %c0_i32_1518 : i32
    %2759 = vector.extract_strided_slice %2752 {offsets = [0, 0], sizes = [16, 16], strides = [1, 1]} : vector<16x18xf32> to vector<16x16xf32>
    %2760 = arith.index_cast %2758 : i32 to index
    %2761 = memref.load %arg2[%2760] : memref<288xf32, #tpu.memory_space<smem>>
    %2762 = vector.broadcast %2761 : f32 to vector<16x16xf32>
    %2763 = arith.mulf %2759, %2762 : vector<16x16xf32>
    %2764 = arith.addf %2750, %2763 : vector<16x16xf32>
    %c5_i32_1519 = arith.constant 5 : i32
    %2765 = arith.addi %0, %c5_i32_1519 : i32
    %c4_i32_1520 = arith.constant 4 : i32
    %2766 = arith.muli %2765, %c4_i32_1520 : i32
    %c3_i32_1521 = arith.constant 3 : i32
    %2767 = arith.addi %2766, %c3_i32_1521 : i32
    %c9_i32_1522 = arith.constant 9 : i32
    %2768 = arith.muli %2767, %c9_i32_1522 : i32
    %c6_i32_1523 = arith.constant 6 : i32
    %2769 = arith.addi %2768, %c6_i32_1523 : i32
    %c1_i32_1524 = arith.constant 1 : i32
    %2770 = arith.addi %2769, %c1_i32_1524 : i32
    %2771 = vector.extract_strided_slice %2752 {offsets = [0, 1], sizes = [16, 16], strides = [1, 1]} : vector<16x18xf32> to vector<16x16xf32>
    %2772 = arith.index_cast %2770 : i32 to index
    %2773 = memref.load %arg2[%2772] : memref<288xf32, #tpu.memory_space<smem>>
    %2774 = vector.broadcast %2773 : f32 to vector<16x16xf32>
    %2775 = arith.mulf %2771, %2774 : vector<16x16xf32>
    %2776 = arith.addf %2764, %2775 : vector<16x16xf32>
    %c5_i32_1525 = arith.constant 5 : i32
    %2777 = arith.addi %0, %c5_i32_1525 : i32
    %c4_i32_1526 = arith.constant 4 : i32
    %2778 = arith.muli %2777, %c4_i32_1526 : i32
    %c3_i32_1527 = arith.constant 3 : i32
    %2779 = arith.addi %2778, %c3_i32_1527 : i32
    %c9_i32_1528 = arith.constant 9 : i32
    %2780 = arith.muli %2779, %c9_i32_1528 : i32
    %c6_i32_1529 = arith.constant 6 : i32
    %2781 = arith.addi %2780, %c6_i32_1529 : i32
    %c2_i32_1530 = arith.constant 2 : i32
    %2782 = arith.addi %2781, %c2_i32_1530 : i32
    %2783 = vector.extract_strided_slice %2752 {offsets = [0, 2], sizes = [16, 16], strides = [1, 1]} : vector<16x18xf32> to vector<16x16xf32>
    %2784 = arith.index_cast %2782 : i32 to index
    %2785 = memref.load %arg2[%2784] : memref<288xf32, #tpu.memory_space<smem>>
    %2786 = vector.broadcast %2785 : f32 to vector<16x16xf32>
    %2787 = arith.mulf %2783, %2786 : vector<16x16xf32>
    %2788 = arith.addf %2776, %2787 : vector<16x16xf32>
    %cst_1531 = arith.constant 0.000000e+00 : f32
    %2789 = vector.broadcast %cst_1531 : f32 to vector<16x16xf32>
    %2790 = arith.maximumf %2788, %2789 : vector<16x16xf32>
    %c0_1532 = arith.constant 0 : index
    %c5 = arith.constant 5 : index
    %c0_1533 = arith.constant 0 : index
    %c0_1534 = arith.constant 0 : index
    %2791 = vector.load %arg5[%c0_1532, %c5, %c0_1533, %c0_1534] : memref<1x8x16x16xf32, #tpu.memory_space<vmem>>, vector<1x1x16x16xf32>
    %2792 = vector.shape_cast %2791 : vector<1x1x16x16xf32> to vector<16x16xf32>
    %2793 = vector.shape_cast %2790 : vector<16x16xf32> to vector<1x1x16x16xf32>
    tpu.vector_store %arg5[%c0_1532, %c5, %c0_1533, %c0_1534], %2793 {strides = array<i32>} : memref<1x8x16x16xf32, #tpu.memory_space<vmem>>, vector<1x1x16x16xf32>,
    %c6_i32_1535 = arith.constant 6 : i32
    %2794 = arith.addi %0, %c6_i32_1535 : i32
    %2795 = arith.index_cast %2794 : i32 to index
    %2796 = memref.load %arg3[%2795] : memref<8xf32, #tpu.memory_space<smem>>
    %2797 = vector.broadcast %2796 : f32 to vector<16x16xf32>
    %c0_1536 = arith.constant 0 : index
    %c0_1537 = arith.constant 0 : index
    %c0_1538 = arith.constant 0 : index
    %2798 = vector.load %arg6[%c0_1536, %c0_1537, %c0_1538] : memref<4x18x18xf32, #tpu.memory_space<vmem>>, vector<1x16x18xf32>
    %2799 = vector.shape_cast %2798 : vector<1x16x18xf32> to vector<16x18xf32>
    %c6_i32_1539 = arith.constant 6 : i32
    %2800 = arith.addi %0, %c6_i32_1539 : i32
    %c4_i32_1540 = arith.constant 4 : i32
    %2801 = arith.muli %2800, %c4_i32_1540 : i32
    %c0_i32_1541 = arith.constant 0 : i32
    %2802 = arith.addi %2801, %c0_i32_1541 : i32
    %c9_i32_1542 = arith.constant 9 : i32
    %2803 = arith.muli %2802, %c9_i32_1542 : i32
    %c0_i32_1543 = arith.constant 0 : i32
    %2804 = arith.addi %2803, %c0_i32_1543 : i32
    %c0_i32_1544 = arith.constant 0 : i32
    %2805 = arith.addi %2804, %c0_i32_1544 : i32
    %2806 = vector.extract_strided_slice %2799 {offsets = [0, 0], sizes = [16, 16], strides = [1, 1]} : vector<16x18xf32> to vector<16x16xf32>
    %2807 = arith.index_cast %2805 : i32 to index
    %2808 = memref.load %arg2[%2807] : memref<288xf32, #tpu.memory_space<smem>>
    %2809 = vector.broadcast %2808 : f32 to vector<16x16xf32>
    %2810 = arith.mulf %2806, %2809 : vector<16x16xf32>
    %2811 = arith.addf %2797, %2810 : vector<16x16xf32>
    %c6_i32_1545 = arith.constant 6 : i32
    %2812 = arith.addi %0, %c6_i32_1545 : i32
    %c4_i32_1546 = arith.constant 4 : i32
    %2813 = arith.muli %2812, %c4_i32_1546 : i32
    %c0_i32_1547 = arith.constant 0 : i32
    %2814 = arith.addi %2813, %c0_i32_1547 : i32
    %c9_i32_1548 = arith.constant 9 : i32
    %2815 = arith.muli %2814, %c9_i32_1548 : i32
    %c0_i32_1549 = arith.constant 0 : i32
    %2816 = arith.addi %2815, %c0_i32_1549 : i32
    %c1_i32_1550 = arith.constant 1 : i32
    %2817 = arith.addi %2816, %c1_i32_1550 : i32
    %2818 = vector.extract_strided_slice %2799 {offsets = [0, 1], sizes = [16, 16], strides = [1, 1]} : vector<16x18xf32> to vector<16x16xf32>
    %2819 = arith.index_cast %2817 : i32 to index
    %2820 = memref.load %arg2[%2819] : memref<288xf32, #tpu.memory_space<smem>>
    %2821 = vector.broadcast %2820 : f32 to vector<16x16xf32>
    %2822 = arith.mulf %2818, %2821 : vector<16x16xf32>
    %2823 = arith.addf %2811, %2822 : vector<16x16xf32>
    %c6_i32_1551 = arith.constant 6 : i32
    %2824 = arith.addi %0, %c6_i32_1551 : i32
    %c4_i32_1552 = arith.constant 4 : i32
    %2825 = arith.muli %2824, %c4_i32_1552 : i32
    %c0_i32_1553 = arith.constant 0 : i32
    %2826 = arith.addi %2825, %c0_i32_1553 : i32
    %c9_i32_1554 = arith.constant 9 : i32
    %2827 = arith.muli %2826, %c9_i32_1554 : i32
    %c0_i32_1555 = arith.constant 0 : i32
    %2828 = arith.addi %2827, %c0_i32_1555 : i32
    %c2_i32_1556 = arith.constant 2 : i32
    %2829 = arith.addi %2828, %c2_i32_1556 : i32
    %2830 = vector.extract_strided_slice %2799 {offsets = [0, 2], sizes = [16, 16], strides = [1, 1]} : vector<16x18xf32> to vector<16x16xf32>
    %2831 = arith.index_cast %2829 : i32 to index
    %2832 = memref.load %arg2[%2831] : memref<288xf32, #tpu.memory_space<smem>>
    %2833 = vector.broadcast %2832 : f32 to vector<16x16xf32>
    %2834 = arith.mulf %2830, %2833 : vector<16x16xf32>
    %2835 = arith.addf %2823, %2834 : vector<16x16xf32>
    %c0_1557 = arith.constant 0 : index
    %c1_1558 = arith.constant 1 : index
    %c0_1559 = arith.constant 0 : index
    %2836 = vector.load %arg6[%c0_1557, %c1_1558, %c0_1559] : memref<4x18x18xf32, #tpu.memory_space<vmem>>, vector<1x16x18xf32>
    %2837 = vector.shape_cast %2836 : vector<1x16x18xf32> to vector<16x18xf32>
    %c6_i32_1560 = arith.constant 6 : i32
    %2838 = arith.addi %0, %c6_i32_1560 : i32
    %c4_i32_1561 = arith.constant 4 : i32
    %2839 = arith.muli %2838, %c4_i32_1561 : i32
    %c0_i32_1562 = arith.constant 0 : i32
    %2840 = arith.addi %2839, %c0_i32_1562 : i32
    %c9_i32_1563 = arith.constant 9 : i32
    %2841 = arith.muli %2840, %c9_i32_1563 : i32
    %c3_i32_1564 = arith.constant 3 : i32
    %2842 = arith.addi %2841, %c3_i32_1564 : i32
    %c0_i32_1565 = arith.constant 0 : i32
    %2843 = arith.addi %2842, %c0_i32_1565 : i32
    %2844 = vector.extract_strided_slice %2837 {offsets = [0, 0], sizes = [16, 16], strides = [1, 1]} : vector<16x18xf32> to vector<16x16xf32>
    %2845 = arith.index_cast %2843 : i32 to index
    %2846 = memref.load %arg2[%2845] : memref<288xf32, #tpu.memory_space<smem>>
    %2847 = vector.broadcast %2846 : f32 to vector<16x16xf32>
    %2848 = arith.mulf %2844, %2847 : vector<16x16xf32>
    %2849 = arith.addf %2835, %2848 : vector<16x16xf32>
    %c6_i32_1566 = arith.constant 6 : i32
    %2850 = arith.addi %0, %c6_i32_1566 : i32
    %c4_i32_1567 = arith.constant 4 : i32
    %2851 = arith.muli %2850, %c4_i32_1567 : i32
    %c0_i32_1568 = arith.constant 0 : i32
    %2852 = arith.addi %2851, %c0_i32_1568 : i32
    %c9_i32_1569 = arith.constant 9 : i32
    %2853 = arith.muli %2852, %c9_i32_1569 : i32
    %c3_i32_1570 = arith.constant 3 : i32
    %2854 = arith.addi %2853, %c3_i32_1570 : i32
    %c1_i32_1571 = arith.constant 1 : i32
    %2855 = arith.addi %2854, %c1_i32_1571 : i32
    %2856 = vector.extract_strided_slice %2837 {offsets = [0, 1], sizes = [16, 16], strides = [1, 1]} : vector<16x18xf32> to vector<16x16xf32>
    %2857 = arith.index_cast %2855 : i32 to index
    %2858 = memref.load %arg2[%2857] : memref<288xf32, #tpu.memory_space<smem>>
    %2859 = vector.broadcast %2858 : f32 to vector<16x16xf32>
    %2860 = arith.mulf %2856, %2859 : vector<16x16xf32>
    %2861 = arith.addf %2849, %2860 : vector<16x16xf32>
    %c6_i32_1572 = arith.constant 6 : i32
    %2862 = arith.addi %0, %c6_i32_1572 : i32
    %c4_i32_1573 = arith.constant 4 : i32
    %2863 = arith.muli %2862, %c4_i32_1573 : i32
    %c0_i32_1574 = arith.constant 0 : i32
    %2864 = arith.addi %2863, %c0_i32_1574 : i32
    %c9_i32_1575 = arith.constant 9 : i32
    %2865 = arith.muli %2864, %c9_i32_1575 : i32
    %c3_i32_1576 = arith.constant 3 : i32
    %2866 = arith.addi %2865, %c3_i32_1576 : i32
    %c2_i32_1577 = arith.constant 2 : i32
    %2867 = arith.addi %2866, %c2_i32_1577 : i32
    %2868 = vector.extract_strided_slice %2837 {offsets = [0, 2], sizes = [16, 16], strides = [1, 1]} : vector<16x18xf32> to vector<16x16xf32>
    %2869 = arith.index_cast %2867 : i32 to index
    %2870 = memref.load %arg2[%2869] : memref<288xf32, #tpu.memory_space<smem>>
    %2871 = vector.broadcast %2870 : f32 to vector<16x16xf32>
    %2872 = arith.mulf %2868, %2871 : vector<16x16xf32>
    %2873 = arith.addf %2861, %2872 : vector<16x16xf32>
    %c0_1578 = arith.constant 0 : index
    %c2_1579 = arith.constant 2 : index
    %c0_1580 = arith.constant 0 : index
    %2874 = vector.load %arg6[%c0_1578, %c2_1579, %c0_1580] : memref<4x18x18xf32, #tpu.memory_space<vmem>>, vector<1x16x18xf32>
    %2875 = vector.shape_cast %2874 : vector<1x16x18xf32> to vector<16x18xf32>
    %c6_i32_1581 = arith.constant 6 : i32
    %2876 = arith.addi %0, %c6_i32_1581 : i32
    %c4_i32_1582 = arith.constant 4 : i32
    %2877 = arith.muli %2876, %c4_i32_1582 : i32
    %c0_i32_1583 = arith.constant 0 : i32
    %2878 = arith.addi %2877, %c0_i32_1583 : i32
    %c9_i32_1584 = arith.constant 9 : i32
    %2879 = arith.muli %2878, %c9_i32_1584 : i32
    %c6_i32_1585 = arith.constant 6 : i32
    %2880 = arith.addi %2879, %c6_i32_1585 : i32
    %c0_i32_1586 = arith.constant 0 : i32
    %2881 = arith.addi %2880, %c0_i32_1586 : i32
    %2882 = vector.extract_strided_slice %2875 {offsets = [0, 0], sizes = [16, 16], strides = [1, 1]} : vector<16x18xf32> to vector<16x16xf32>
    %2883 = arith.index_cast %2881 : i32 to index
    %2884 = memref.load %arg2[%2883] : memref<288xf32, #tpu.memory_space<smem>>
    %2885 = vector.broadcast %2884 : f32 to vector<16x16xf32>
    %2886 = arith.mulf %2882, %2885 : vector<16x16xf32>
    %2887 = arith.addf %2873, %2886 : vector<16x16xf32>
    %c6_i32_1587 = arith.constant 6 : i32
    %2888 = arith.addi %0, %c6_i32_1587 : i32
    %c4_i32_1588 = arith.constant 4 : i32
    %2889 = arith.muli %2888, %c4_i32_1588 : i32
    %c0_i32_1589 = arith.constant 0 : i32
    %2890 = arith.addi %2889, %c0_i32_1589 : i32
    %c9_i32_1590 = arith.constant 9 : i32
    %2891 = arith.muli %2890, %c9_i32_1590 : i32
    %c6_i32_1591 = arith.constant 6 : i32
    %2892 = arith.addi %2891, %c6_i32_1591 : i32
    %c1_i32_1592 = arith.constant 1 : i32
    %2893 = arith.addi %2892, %c1_i32_1592 : i32
    %2894 = vector.extract_strided_slice %2875 {offsets = [0, 1], sizes = [16, 16], strides = [1, 1]} : vector<16x18xf32> to vector<16x16xf32>
    %2895 = arith.index_cast %2893 : i32 to index
    %2896 = memref.load %arg2[%2895] : memref<288xf32, #tpu.memory_space<smem>>
    %2897 = vector.broadcast %2896 : f32 to vector<16x16xf32>
    %2898 = arith.mulf %2894, %2897 : vector<16x16xf32>
    %2899 = arith.addf %2887, %2898 : vector<16x16xf32>
    %c6_i32_1593 = arith.constant 6 : i32
    %2900 = arith.addi %0, %c6_i32_1593 : i32
    %c4_i32_1594 = arith.constant 4 : i32
    %2901 = arith.muli %2900, %c4_i32_1594 : i32
    %c0_i32_1595 = arith.constant 0 : i32
    %2902 = arith.addi %2901, %c0_i32_1595 : i32
    %c9_i32_1596 = arith.constant 9 : i32
    %2903 = arith.muli %2902, %c9_i32_1596 : i32
    %c6_i32_1597 = arith.constant 6 : i32
    %2904 = arith.addi %2903, %c6_i32_1597 : i32
    %c2_i32_1598 = arith.constant 2 : i32
    %2905 = arith.addi %2904, %c2_i32_1598 : i32
    %2906 = vector.extract_strided_slice %2875 {offsets = [0, 2], sizes = [16, 16], strides = [1, 1]} : vector<16x18xf32> to vector<16x16xf32>
    %2907 = arith.index_cast %2905 : i32 to index
    %2908 = memref.load %arg2[%2907] : memref<288xf32, #tpu.memory_space<smem>>
    %2909 = vector.broadcast %2908 : f32 to vector<16x16xf32>
    %2910 = arith.mulf %2906, %2909 : vector<16x16xf32>
    %2911 = arith.addf %2899, %2910 : vector<16x16xf32>
    %c1_1599 = arith.constant 1 : index
    %c0_1600 = arith.constant 0 : index
    %c0_1601 = arith.constant 0 : index
    %2912 = vector.load %arg6[%c1_1599, %c0_1600, %c0_1601] : memref<4x18x18xf32, #tpu.memory_space<vmem>>, vector<1x16x18xf32>
    %2913 = vector.shape_cast %2912 : vector<1x16x18xf32> to vector<16x18xf32>
    %c6_i32_1602 = arith.constant 6 : i32
    %2914 = arith.addi %0, %c6_i32_1602 : i32
    %c4_i32_1603 = arith.constant 4 : i32
    %2915 = arith.muli %2914, %c4_i32_1603 : i32
    %c1_i32_1604 = arith.constant 1 : i32
    %2916 = arith.addi %2915, %c1_i32_1604 : i32
    %c9_i32_1605 = arith.constant 9 : i32
    %2917 = arith.muli %2916, %c9_i32_1605 : i32
    %c0_i32_1606 = arith.constant 0 : i32
    %2918 = arith.addi %2917, %c0_i32_1606 : i32
    %c0_i32_1607 = arith.constant 0 : i32
    %2919 = arith.addi %2918, %c0_i32_1607 : i32
    %2920 = vector.extract_strided_slice %2913 {offsets = [0, 0], sizes = [16, 16], strides = [1, 1]} : vector<16x18xf32> to vector<16x16xf32>
    %2921 = arith.index_cast %2919 : i32 to index
    %2922 = memref.load %arg2[%2921] : memref<288xf32, #tpu.memory_space<smem>>
    %2923 = vector.broadcast %2922 : f32 to vector<16x16xf32>
    %2924 = arith.mulf %2920, %2923 : vector<16x16xf32>
    %2925 = arith.addf %2911, %2924 : vector<16x16xf32>
    %c6_i32_1608 = arith.constant 6 : i32
    %2926 = arith.addi %0, %c6_i32_1608 : i32
    %c4_i32_1609 = arith.constant 4 : i32
    %2927 = arith.muli %2926, %c4_i32_1609 : i32
    %c1_i32_1610 = arith.constant 1 : i32
    %2928 = arith.addi %2927, %c1_i32_1610 : i32
    %c9_i32_1611 = arith.constant 9 : i32
    %2929 = arith.muli %2928, %c9_i32_1611 : i32
    %c0_i32_1612 = arith.constant 0 : i32
    %2930 = arith.addi %2929, %c0_i32_1612 : i32
    %c1_i32_1613 = arith.constant 1 : i32
    %2931 = arith.addi %2930, %c1_i32_1613 : i32
    %2932 = vector.extract_strided_slice %2913 {offsets = [0, 1], sizes = [16, 16], strides = [1, 1]} : vector<16x18xf32> to vector<16x16xf32>
    %2933 = arith.index_cast %2931 : i32 to index
    %2934 = memref.load %arg2[%2933] : memref<288xf32, #tpu.memory_space<smem>>
    %2935 = vector.broadcast %2934 : f32 to vector<16x16xf32>
    %2936 = arith.mulf %2932, %2935 : vector<16x16xf32>
    %2937 = arith.addf %2925, %2936 : vector<16x16xf32>
    %c6_i32_1614 = arith.constant 6 : i32
    %2938 = arith.addi %0, %c6_i32_1614 : i32
    %c4_i32_1615 = arith.constant 4 : i32
    %2939 = arith.muli %2938, %c4_i32_1615 : i32
    %c1_i32_1616 = arith.constant 1 : i32
    %2940 = arith.addi %2939, %c1_i32_1616 : i32
    %c9_i32_1617 = arith.constant 9 : i32
    %2941 = arith.muli %2940, %c9_i32_1617 : i32
    %c0_i32_1618 = arith.constant 0 : i32
    %2942 = arith.addi %2941, %c0_i32_1618 : i32
    %c2_i32_1619 = arith.constant 2 : i32
    %2943 = arith.addi %2942, %c2_i32_1619 : i32
    %2944 = vector.extract_strided_slice %2913 {offsets = [0, 2], sizes = [16, 16], strides = [1, 1]} : vector<16x18xf32> to vector<16x16xf32>
    %2945 = arith.index_cast %2943 : i32 to index
    %2946 = memref.load %arg2[%2945] : memref<288xf32, #tpu.memory_space<smem>>
    %2947 = vector.broadcast %2946 : f32 to vector<16x16xf32>
    %2948 = arith.mulf %2944, %2947 : vector<16x16xf32>
    %2949 = arith.addf %2937, %2948 : vector<16x16xf32>
    %c1_1620 = arith.constant 1 : index
    %c1_1621 = arith.constant 1 : index
    %c0_1622 = arith.constant 0 : index
    %2950 = vector.load %arg6[%c1_1620, %c1_1621, %c0_1622] : memref<4x18x18xf32, #tpu.memory_space<vmem>>, vector<1x16x18xf32>
    %2951 = vector.shape_cast %2950 : vector<1x16x18xf32> to vector<16x18xf32>
    %c6_i32_1623 = arith.constant 6 : i32
    %2952 = arith.addi %0, %c6_i32_1623 : i32
    %c4_i32_1624 = arith.constant 4 : i32
    %2953 = arith.muli %2952, %c4_i32_1624 : i32
    %c1_i32_1625 = arith.constant 1 : i32
    %2954 = arith.addi %2953, %c1_i32_1625 : i32
    %c9_i32_1626 = arith.constant 9 : i32
    %2955 = arith.muli %2954, %c9_i32_1626 : i32
    %c3_i32_1627 = arith.constant 3 : i32
    %2956 = arith.addi %2955, %c3_i32_1627 : i32
    %c0_i32_1628 = arith.constant 0 : i32
    %2957 = arith.addi %2956, %c0_i32_1628 : i32
    %2958 = vector.extract_strided_slice %2951 {offsets = [0, 0], sizes = [16, 16], strides = [1, 1]} : vector<16x18xf32> to vector<16x16xf32>
    %2959 = arith.index_cast %2957 : i32 to index
    %2960 = memref.load %arg2[%2959] : memref<288xf32, #tpu.memory_space<smem>>
    %2961 = vector.broadcast %2960 : f32 to vector<16x16xf32>
    %2962 = arith.mulf %2958, %2961 : vector<16x16xf32>
    %2963 = arith.addf %2949, %2962 : vector<16x16xf32>
    %c6_i32_1629 = arith.constant 6 : i32
    %2964 = arith.addi %0, %c6_i32_1629 : i32
    %c4_i32_1630 = arith.constant 4 : i32
    %2965 = arith.muli %2964, %c4_i32_1630 : i32
    %c1_i32_1631 = arith.constant 1 : i32
    %2966 = arith.addi %2965, %c1_i32_1631 : i32
    %c9_i32_1632 = arith.constant 9 : i32
    %2967 = arith.muli %2966, %c9_i32_1632 : i32
    %c3_i32_1633 = arith.constant 3 : i32
    %2968 = arith.addi %2967, %c3_i32_1633 : i32
    %c1_i32_1634 = arith.constant 1 : i32
    %2969 = arith.addi %2968, %c1_i32_1634 : i32
    %2970 = vector.extract_strided_slice %2951 {offsets = [0, 1], sizes = [16, 16], strides = [1, 1]} : vector<16x18xf32> to vector<16x16xf32>
    %2971 = arith.index_cast %2969 : i32 to index
    %2972 = memref.load %arg2[%2971] : memref<288xf32, #tpu.memory_space<smem>>
    %2973 = vector.broadcast %2972 : f32 to vector<16x16xf32>
    %2974 = arith.mulf %2970, %2973 : vector<16x16xf32>
    %2975 = arith.addf %2963, %2974 : vector<16x16xf32>
    %c6_i32_1635 = arith.constant 6 : i32
    %2976 = arith.addi %0, %c6_i32_1635 : i32
    %c4_i32_1636 = arith.constant 4 : i32
    %2977 = arith.muli %2976, %c4_i32_1636 : i32
    %c1_i32_1637 = arith.constant 1 : i32
    %2978 = arith.addi %2977, %c1_i32_1637 : i32
    %c9_i32_1638 = arith.constant 9 : i32
    %2979 = arith.muli %2978, %c9_i32_1638 : i32
    %c3_i32_1639 = arith.constant 3 : i32
    %2980 = arith.addi %2979, %c3_i32_1639 : i32
    %c2_i32_1640 = arith.constant 2 : i32
    %2981 = arith.addi %2980, %c2_i32_1640 : i32
    %2982 = vector.extract_strided_slice %2951 {offsets = [0, 2], sizes = [16, 16], strides = [1, 1]} : vector<16x18xf32> to vector<16x16xf32>
    %2983 = arith.index_cast %2981 : i32 to index
    %2984 = memref.load %arg2[%2983] : memref<288xf32, #tpu.memory_space<smem>>
    %2985 = vector.broadcast %2984 : f32 to vector<16x16xf32>
    %2986 = arith.mulf %2982, %2985 : vector<16x16xf32>
    %2987 = arith.addf %2975, %2986 : vector<16x16xf32>
    %c1_1641 = arith.constant 1 : index
    %c2_1642 = arith.constant 2 : index
    %c0_1643 = arith.constant 0 : index
    %2988 = vector.load %arg6[%c1_1641, %c2_1642, %c0_1643] : memref<4x18x18xf32, #tpu.memory_space<vmem>>, vector<1x16x18xf32>
    %2989 = vector.shape_cast %2988 : vector<1x16x18xf32> to vector<16x18xf32>
    %c6_i32_1644 = arith.constant 6 : i32
    %2990 = arith.addi %0, %c6_i32_1644 : i32
    %c4_i32_1645 = arith.constant 4 : i32
    %2991 = arith.muli %2990, %c4_i32_1645 : i32
    %c1_i32_1646 = arith.constant 1 : i32
    %2992 = arith.addi %2991, %c1_i32_1646 : i32
    %c9_i32_1647 = arith.constant 9 : i32
    %2993 = arith.muli %2992, %c9_i32_1647 : i32
    %c6_i32_1648 = arith.constant 6 : i32
    %2994 = arith.addi %2993, %c6_i32_1648 : i32
    %c0_i32_1649 = arith.constant 0 : i32
    %2995 = arith.addi %2994, %c0_i32_1649 : i32
    %2996 = vector.extract_strided_slice %2989 {offsets = [0, 0], sizes = [16, 16], strides = [1, 1]} : vector<16x18xf32> to vector<16x16xf32>
    %2997 = arith.index_cast %2995 : i32 to index
    %2998 = memref.load %arg2[%2997] : memref<288xf32, #tpu.memory_space<smem>>
    %2999 = vector.broadcast %2998 : f32 to vector<16x16xf32>
    %3000 = arith.mulf %2996, %2999 : vector<16x16xf32>
    %3001 = arith.addf %2987, %3000 : vector<16x16xf32>
    %c6_i32_1650 = arith.constant 6 : i32
    %3002 = arith.addi %0, %c6_i32_1650 : i32
    %c4_i32_1651 = arith.constant 4 : i32
    %3003 = arith.muli %3002, %c4_i32_1651 : i32
    %c1_i32_1652 = arith.constant 1 : i32
    %3004 = arith.addi %3003, %c1_i32_1652 : i32
    %c9_i32_1653 = arith.constant 9 : i32
    %3005 = arith.muli %3004, %c9_i32_1653 : i32
    %c6_i32_1654 = arith.constant 6 : i32
    %3006 = arith.addi %3005, %c6_i32_1654 : i32
    %c1_i32_1655 = arith.constant 1 : i32
    %3007 = arith.addi %3006, %c1_i32_1655 : i32
    %3008 = vector.extract_strided_slice %2989 {offsets = [0, 1], sizes = [16, 16], strides = [1, 1]} : vector<16x18xf32> to vector<16x16xf32>
    %3009 = arith.index_cast %3007 : i32 to index
    %3010 = memref.load %arg2[%3009] : memref<288xf32, #tpu.memory_space<smem>>
    %3011 = vector.broadcast %3010 : f32 to vector<16x16xf32>
    %3012 = arith.mulf %3008, %3011 : vector<16x16xf32>
    %3013 = arith.addf %3001, %3012 : vector<16x16xf32>
    %c6_i32_1656 = arith.constant 6 : i32
    %3014 = arith.addi %0, %c6_i32_1656 : i32
    %c4_i32_1657 = arith.constant 4 : i32
    %3015 = arith.muli %3014, %c4_i32_1657 : i32
    %c1_i32_1658 = arith.constant 1 : i32
    %3016 = arith.addi %3015, %c1_i32_1658 : i32
    %c9_i32_1659 = arith.constant 9 : i32
    %3017 = arith.muli %3016, %c9_i32_1659 : i32
    %c6_i32_1660 = arith.constant 6 : i32
    %3018 = arith.addi %3017, %c6_i32_1660 : i32
    %c2_i32_1661 = arith.constant 2 : i32
    %3019 = arith.addi %3018, %c2_i32_1661 : i32
    %3020 = vector.extract_strided_slice %2989 {offsets = [0, 2], sizes = [16, 16], strides = [1, 1]} : vector<16x18xf32> to vector<16x16xf32>
    %3021 = arith.index_cast %3019 : i32 to index
    %3022 = memref.load %arg2[%3021] : memref<288xf32, #tpu.memory_space<smem>>
    %3023 = vector.broadcast %3022 : f32 to vector<16x16xf32>
    %3024 = arith.mulf %3020, %3023 : vector<16x16xf32>
    %3025 = arith.addf %3013, %3024 : vector<16x16xf32>
    %c2_1662 = arith.constant 2 : index
    %c0_1663 = arith.constant 0 : index
    %c0_1664 = arith.constant 0 : index
    %3026 = vector.load %arg6[%c2_1662, %c0_1663, %c0_1664] : memref<4x18x18xf32, #tpu.memory_space<vmem>>, vector<1x16x18xf32>
    %3027 = vector.shape_cast %3026 : vector<1x16x18xf32> to vector<16x18xf32>
    %c6_i32_1665 = arith.constant 6 : i32
    %3028 = arith.addi %0, %c6_i32_1665 : i32
    %c4_i32_1666 = arith.constant 4 : i32
    %3029 = arith.muli %3028, %c4_i32_1666 : i32
    %c2_i32_1667 = arith.constant 2 : i32
    %3030 = arith.addi %3029, %c2_i32_1667 : i32
    %c9_i32_1668 = arith.constant 9 : i32
    %3031 = arith.muli %3030, %c9_i32_1668 : i32
    %c0_i32_1669 = arith.constant 0 : i32
    %3032 = arith.addi %3031, %c0_i32_1669 : i32
    %c0_i32_1670 = arith.constant 0 : i32
    %3033 = arith.addi %3032, %c0_i32_1670 : i32
    %3034 = vector.extract_strided_slice %3027 {offsets = [0, 0], sizes = [16, 16], strides = [1, 1]} : vector<16x18xf32> to vector<16x16xf32>
    %3035 = arith.index_cast %3033 : i32 to index
    %3036 = memref.load %arg2[%3035] : memref<288xf32, #tpu.memory_space<smem>>
    %3037 = vector.broadcast %3036 : f32 to vector<16x16xf32>
    %3038 = arith.mulf %3034, %3037 : vector<16x16xf32>
    %3039 = arith.addf %3025, %3038 : vector<16x16xf32>
    %c6_i32_1671 = arith.constant 6 : i32
    %3040 = arith.addi %0, %c6_i32_1671 : i32
    %c4_i32_1672 = arith.constant 4 : i32
    %3041 = arith.muli %3040, %c4_i32_1672 : i32
    %c2_i32_1673 = arith.constant 2 : i32
    %3042 = arith.addi %3041, %c2_i32_1673 : i32
    %c9_i32_1674 = arith.constant 9 : i32
    %3043 = arith.muli %3042, %c9_i32_1674 : i32
    %c0_i32_1675 = arith.constant 0 : i32
    %3044 = arith.addi %3043, %c0_i32_1675 : i32
    %c1_i32_1676 = arith.constant 1 : i32
    %3045 = arith.addi %3044, %c1_i32_1676 : i32
    %3046 = vector.extract_strided_slice %3027 {offsets = [0, 1], sizes = [16, 16], strides = [1, 1]} : vector<16x18xf32> to vector<16x16xf32>
    %3047 = arith.index_cast %3045 : i32 to index
    %3048 = memref.load %arg2[%3047] : memref<288xf32, #tpu.memory_space<smem>>
    %3049 = vector.broadcast %3048 : f32 to vector<16x16xf32>
    %3050 = arith.mulf %3046, %3049 : vector<16x16xf32>
    %3051 = arith.addf %3039, %3050 : vector<16x16xf32>
    %c6_i32_1677 = arith.constant 6 : i32
    %3052 = arith.addi %0, %c6_i32_1677 : i32
    %c4_i32_1678 = arith.constant 4 : i32
    %3053 = arith.muli %3052, %c4_i32_1678 : i32
    %c2_i32_1679 = arith.constant 2 : i32
    %3054 = arith.addi %3053, %c2_i32_1679 : i32
    %c9_i32_1680 = arith.constant 9 : i32
    %3055 = arith.muli %3054, %c9_i32_1680 : i32
    %c0_i32_1681 = arith.constant 0 : i32
    %3056 = arith.addi %3055, %c0_i32_1681 : i32
    %c2_i32_1682 = arith.constant 2 : i32
    %3057 = arith.addi %3056, %c2_i32_1682 : i32
    %3058 = vector.extract_strided_slice %3027 {offsets = [0, 2], sizes = [16, 16], strides = [1, 1]} : vector<16x18xf32> to vector<16x16xf32>
    %3059 = arith.index_cast %3057 : i32 to index
    %3060 = memref.load %arg2[%3059] : memref<288xf32, #tpu.memory_space<smem>>
    %3061 = vector.broadcast %3060 : f32 to vector<16x16xf32>
    %3062 = arith.mulf %3058, %3061 : vector<16x16xf32>
    %3063 = arith.addf %3051, %3062 : vector<16x16xf32>
    %c2_1683 = arith.constant 2 : index
    %c1_1684 = arith.constant 1 : index
    %c0_1685 = arith.constant 0 : index
    %3064 = vector.load %arg6[%c2_1683, %c1_1684, %c0_1685] : memref<4x18x18xf32, #tpu.memory_space<vmem>>, vector<1x16x18xf32>
    %3065 = vector.shape_cast %3064 : vector<1x16x18xf32> to vector<16x18xf32>
    %c6_i32_1686 = arith.constant 6 : i32
    %3066 = arith.addi %0, %c6_i32_1686 : i32
    %c4_i32_1687 = arith.constant 4 : i32
    %3067 = arith.muli %3066, %c4_i32_1687 : i32
    %c2_i32_1688 = arith.constant 2 : i32
    %3068 = arith.addi %3067, %c2_i32_1688 : i32
    %c9_i32_1689 = arith.constant 9 : i32
    %3069 = arith.muli %3068, %c9_i32_1689 : i32
    %c3_i32_1690 = arith.constant 3 : i32
    %3070 = arith.addi %3069, %c3_i32_1690 : i32
    %c0_i32_1691 = arith.constant 0 : i32
    %3071 = arith.addi %3070, %c0_i32_1691 : i32
    %3072 = vector.extract_strided_slice %3065 {offsets = [0, 0], sizes = [16, 16], strides = [1, 1]} : vector<16x18xf32> to vector<16x16xf32>
    %3073 = arith.index_cast %3071 : i32 to index
    %3074 = memref.load %arg2[%3073] : memref<288xf32, #tpu.memory_space<smem>>
    %3075 = vector.broadcast %3074 : f32 to vector<16x16xf32>
    %3076 = arith.mulf %3072, %3075 : vector<16x16xf32>
    %3077 = arith.addf %3063, %3076 : vector<16x16xf32>
    %c6_i32_1692 = arith.constant 6 : i32
    %3078 = arith.addi %0, %c6_i32_1692 : i32
    %c4_i32_1693 = arith.constant 4 : i32
    %3079 = arith.muli %3078, %c4_i32_1693 : i32
    %c2_i32_1694 = arith.constant 2 : i32
    %3080 = arith.addi %3079, %c2_i32_1694 : i32
    %c9_i32_1695 = arith.constant 9 : i32
    %3081 = arith.muli %3080, %c9_i32_1695 : i32
    %c3_i32_1696 = arith.constant 3 : i32
    %3082 = arith.addi %3081, %c3_i32_1696 : i32
    %c1_i32_1697 = arith.constant 1 : i32
    %3083 = arith.addi %3082, %c1_i32_1697 : i32
    %3084 = vector.extract_strided_slice %3065 {offsets = [0, 1], sizes = [16, 16], strides = [1, 1]} : vector<16x18xf32> to vector<16x16xf32>
    %3085 = arith.index_cast %3083 : i32 to index
    %3086 = memref.load %arg2[%3085] : memref<288xf32, #tpu.memory_space<smem>>
    %3087 = vector.broadcast %3086 : f32 to vector<16x16xf32>
    %3088 = arith.mulf %3084, %3087 : vector<16x16xf32>
    %3089 = arith.addf %3077, %3088 : vector<16x16xf32>
    %c6_i32_1698 = arith.constant 6 : i32
    %3090 = arith.addi %0, %c6_i32_1698 : i32
    %c4_i32_1699 = arith.constant 4 : i32
    %3091 = arith.muli %3090, %c4_i32_1699 : i32
    %c2_i32_1700 = arith.constant 2 : i32
    %3092 = arith.addi %3091, %c2_i32_1700 : i32
    %c9_i32_1701 = arith.constant 9 : i32
    %3093 = arith.muli %3092, %c9_i32_1701 : i32
    %c3_i32_1702 = arith.constant 3 : i32
    %3094 = arith.addi %3093, %c3_i32_1702 : i32
    %c2_i32_1703 = arith.constant 2 : i32
    %3095 = arith.addi %3094, %c2_i32_1703 : i32
    %3096 = vector.extract_strided_slice %3065 {offsets = [0, 2], sizes = [16, 16], strides = [1, 1]} : vector<16x18xf32> to vector<16x16xf32>
    %3097 = arith.index_cast %3095 : i32 to index
    %3098 = memref.load %arg2[%3097] : memref<288xf32, #tpu.memory_space<smem>>
    %3099 = vector.broadcast %3098 : f32 to vector<16x16xf32>
    %3100 = arith.mulf %3096, %3099 : vector<16x16xf32>
    %3101 = arith.addf %3089, %3100 : vector<16x16xf32>
    %c2_1704 = arith.constant 2 : index
    %c2_1705 = arith.constant 2 : index
    %c0_1706 = arith.constant 0 : index
    %3102 = vector.load %arg6[%c2_1704, %c2_1705, %c0_1706] : memref<4x18x18xf32, #tpu.memory_space<vmem>>, vector<1x16x18xf32>
    %3103 = vector.shape_cast %3102 : vector<1x16x18xf32> to vector<16x18xf32>
    %c6_i32_1707 = arith.constant 6 : i32
    %3104 = arith.addi %0, %c6_i32_1707 : i32
    %c4_i32_1708 = arith.constant 4 : i32
    %3105 = arith.muli %3104, %c4_i32_1708 : i32
    %c2_i32_1709 = arith.constant 2 : i32
    %3106 = arith.addi %3105, %c2_i32_1709 : i32
    %c9_i32_1710 = arith.constant 9 : i32
    %3107 = arith.muli %3106, %c9_i32_1710 : i32
    %c6_i32_1711 = arith.constant 6 : i32
    %3108 = arith.addi %3107, %c6_i32_1711 : i32
    %c0_i32_1712 = arith.constant 0 : i32
    %3109 = arith.addi %3108, %c0_i32_1712 : i32
    %3110 = vector.extract_strided_slice %3103 {offsets = [0, 0], sizes = [16, 16], strides = [1, 1]} : vector<16x18xf32> to vector<16x16xf32>
    %3111 = arith.index_cast %3109 : i32 to index
    %3112 = memref.load %arg2[%3111] : memref<288xf32, #tpu.memory_space<smem>>
    %3113 = vector.broadcast %3112 : f32 to vector<16x16xf32>
    %3114 = arith.mulf %3110, %3113 : vector<16x16xf32>
    %3115 = arith.addf %3101, %3114 : vector<16x16xf32>
    %c6_i32_1713 = arith.constant 6 : i32
    %3116 = arith.addi %0, %c6_i32_1713 : i32
    %c4_i32_1714 = arith.constant 4 : i32
    %3117 = arith.muli %3116, %c4_i32_1714 : i32
    %c2_i32_1715 = arith.constant 2 : i32
    %3118 = arith.addi %3117, %c2_i32_1715 : i32
    %c9_i32_1716 = arith.constant 9 : i32
    %3119 = arith.muli %3118, %c9_i32_1716 : i32
    %c6_i32_1717 = arith.constant 6 : i32
    %3120 = arith.addi %3119, %c6_i32_1717 : i32
    %c1_i32_1718 = arith.constant 1 : i32
    %3121 = arith.addi %3120, %c1_i32_1718 : i32
    %3122 = vector.extract_strided_slice %3103 {offsets = [0, 1], sizes = [16, 16], strides = [1, 1]} : vector<16x18xf32> to vector<16x16xf32>
    %3123 = arith.index_cast %3121 : i32 to index
    %3124 = memref.load %arg2[%3123] : memref<288xf32, #tpu.memory_space<smem>>
    %3125 = vector.broadcast %3124 : f32 to vector<16x16xf32>
    %3126 = arith.mulf %3122, %3125 : vector<16x16xf32>
    %3127 = arith.addf %3115, %3126 : vector<16x16xf32>
    %c6_i32_1719 = arith.constant 6 : i32
    %3128 = arith.addi %0, %c6_i32_1719 : i32
    %c4_i32_1720 = arith.constant 4 : i32
    %3129 = arith.muli %3128, %c4_i32_1720 : i32
    %c2_i32_1721 = arith.constant 2 : i32
    %3130 = arith.addi %3129, %c2_i32_1721 : i32
    %c9_i32_1722 = arith.constant 9 : i32
    %3131 = arith.muli %3130, %c9_i32_1722 : i32
    %c6_i32_1723 = arith.constant 6 : i32
    %3132 = arith.addi %3131, %c6_i32_1723 : i32
    %c2_i32_1724 = arith.constant 2 : i32
    %3133 = arith.addi %3132, %c2_i32_1724 : i32
    %3134 = vector.extract_strided_slice %3103 {offsets = [0, 2], sizes = [16, 16], strides = [1, 1]} : vector<16x18xf32> to vector<16x16xf32>
    %3135 = arith.index_cast %3133 : i32 to index
    %3136 = memref.load %arg2[%3135] : memref<288xf32, #tpu.memory_space<smem>>
    %3137 = vector.broadcast %3136 : f32 to vector<16x16xf32>
    %3138 = arith.mulf %3134, %3137 : vector<16x16xf32>
    %3139 = arith.addf %3127, %3138 : vector<16x16xf32>
    %c3_1725 = arith.constant 3 : index
    %c0_1726 = arith.constant 0 : index
    %c0_1727 = arith.constant 0 : index
    %3140 = vector.load %arg6[%c3_1725, %c0_1726, %c0_1727] : memref<4x18x18xf32, #tpu.memory_space<vmem>>, vector<1x16x18xf32>
    %3141 = vector.shape_cast %3140 : vector<1x16x18xf32> to vector<16x18xf32>
    %c6_i32_1728 = arith.constant 6 : i32
    %3142 = arith.addi %0, %c6_i32_1728 : i32
    %c4_i32_1729 = arith.constant 4 : i32
    %3143 = arith.muli %3142, %c4_i32_1729 : i32
    %c3_i32_1730 = arith.constant 3 : i32
    %3144 = arith.addi %3143, %c3_i32_1730 : i32
    %c9_i32_1731 = arith.constant 9 : i32
    %3145 = arith.muli %3144, %c9_i32_1731 : i32
    %c0_i32_1732 = arith.constant 0 : i32
    %3146 = arith.addi %3145, %c0_i32_1732 : i32
    %c0_i32_1733 = arith.constant 0 : i32
    %3147 = arith.addi %3146, %c0_i32_1733 : i32
    %3148 = vector.extract_strided_slice %3141 {offsets = [0, 0], sizes = [16, 16], strides = [1, 1]} : vector<16x18xf32> to vector<16x16xf32>
    %3149 = arith.index_cast %3147 : i32 to index
    %3150 = memref.load %arg2[%3149] : memref<288xf32, #tpu.memory_space<smem>>
    %3151 = vector.broadcast %3150 : f32 to vector<16x16xf32>
    %3152 = arith.mulf %3148, %3151 : vector<16x16xf32>
    %3153 = arith.addf %3139, %3152 : vector<16x16xf32>
    %c6_i32_1734 = arith.constant 6 : i32
    %3154 = arith.addi %0, %c6_i32_1734 : i32
    %c4_i32_1735 = arith.constant 4 : i32
    %3155 = arith.muli %3154, %c4_i32_1735 : i32
    %c3_i32_1736 = arith.constant 3 : i32
    %3156 = arith.addi %3155, %c3_i32_1736 : i32
    %c9_i32_1737 = arith.constant 9 : i32
    %3157 = arith.muli %3156, %c9_i32_1737 : i32
    %c0_i32_1738 = arith.constant 0 : i32
    %3158 = arith.addi %3157, %c0_i32_1738 : i32
    %c1_i32_1739 = arith.constant 1 : i32
    %3159 = arith.addi %3158, %c1_i32_1739 : i32
    %3160 = vector.extract_strided_slice %3141 {offsets = [0, 1], sizes = [16, 16], strides = [1, 1]} : vector<16x18xf32> to vector<16x16xf32>
    %3161 = arith.index_cast %3159 : i32 to index
    %3162 = memref.load %arg2[%3161] : memref<288xf32, #tpu.memory_space<smem>>
    %3163 = vector.broadcast %3162 : f32 to vector<16x16xf32>
    %3164 = arith.mulf %3160, %3163 : vector<16x16xf32>
    %3165 = arith.addf %3153, %3164 : vector<16x16xf32>
    %c6_i32_1740 = arith.constant 6 : i32
    %3166 = arith.addi %0, %c6_i32_1740 : i32
    %c4_i32_1741 = arith.constant 4 : i32
    %3167 = arith.muli %3166, %c4_i32_1741 : i32
    %c3_i32_1742 = arith.constant 3 : i32
    %3168 = arith.addi %3167, %c3_i32_1742 : i32
    %c9_i32_1743 = arith.constant 9 : i32
    %3169 = arith.muli %3168, %c9_i32_1743 : i32
    %c0_i32_1744 = arith.constant 0 : i32
    %3170 = arith.addi %3169, %c0_i32_1744 : i32
    %c2_i32_1745 = arith.constant 2 : i32
    %3171 = arith.addi %3170, %c2_i32_1745 : i32
    %3172 = vector.extract_strided_slice %3141 {offsets = [0, 2], sizes = [16, 16], strides = [1, 1]} : vector<16x18xf32> to vector<16x16xf32>
    %3173 = arith.index_cast %3171 : i32 to index
    %3174 = memref.load %arg2[%3173] : memref<288xf32, #tpu.memory_space<smem>>
    %3175 = vector.broadcast %3174 : f32 to vector<16x16xf32>
    %3176 = arith.mulf %3172, %3175 : vector<16x16xf32>
    %3177 = arith.addf %3165, %3176 : vector<16x16xf32>
    %c3_1746 = arith.constant 3 : index
    %c1_1747 = arith.constant 1 : index
    %c0_1748 = arith.constant 0 : index
    %3178 = vector.load %arg6[%c3_1746, %c1_1747, %c0_1748] : memref<4x18x18xf32, #tpu.memory_space<vmem>>, vector<1x16x18xf32>
    %3179 = vector.shape_cast %3178 : vector<1x16x18xf32> to vector<16x18xf32>
    %c6_i32_1749 = arith.constant 6 : i32
    %3180 = arith.addi %0, %c6_i32_1749 : i32
    %c4_i32_1750 = arith.constant 4 : i32
    %3181 = arith.muli %3180, %c4_i32_1750 : i32
    %c3_i32_1751 = arith.constant 3 : i32
    %3182 = arith.addi %3181, %c3_i32_1751 : i32
    %c9_i32_1752 = arith.constant 9 : i32
    %3183 = arith.muli %3182, %c9_i32_1752 : i32
    %c3_i32_1753 = arith.constant 3 : i32
    %3184 = arith.addi %3183, %c3_i32_1753 : i32
    %c0_i32_1754 = arith.constant 0 : i32
    %3185 = arith.addi %3184, %c0_i32_1754 : i32
    %3186 = vector.extract_strided_slice %3179 {offsets = [0, 0], sizes = [16, 16], strides = [1, 1]} : vector<16x18xf32> to vector<16x16xf32>
    %3187 = arith.index_cast %3185 : i32 to index
    %3188 = memref.load %arg2[%3187] : memref<288xf32, #tpu.memory_space<smem>>
    %3189 = vector.broadcast %3188 : f32 to vector<16x16xf32>
    %3190 = arith.mulf %3186, %3189 : vector<16x16xf32>
    %3191 = arith.addf %3177, %3190 : vector<16x16xf32>
    %c6_i32_1755 = arith.constant 6 : i32
    %3192 = arith.addi %0, %c6_i32_1755 : i32
    %c4_i32_1756 = arith.constant 4 : i32
    %3193 = arith.muli %3192, %c4_i32_1756 : i32
    %c3_i32_1757 = arith.constant 3 : i32
    %3194 = arith.addi %3193, %c3_i32_1757 : i32
    %c9_i32_1758 = arith.constant 9 : i32
    %3195 = arith.muli %3194, %c9_i32_1758 : i32
    %c3_i32_1759 = arith.constant 3 : i32
    %3196 = arith.addi %3195, %c3_i32_1759 : i32
    %c1_i32_1760 = arith.constant 1 : i32
    %3197 = arith.addi %3196, %c1_i32_1760 : i32
    %3198 = vector.extract_strided_slice %3179 {offsets = [0, 1], sizes = [16, 16], strides = [1, 1]} : vector<16x18xf32> to vector<16x16xf32>
    %3199 = arith.index_cast %3197 : i32 to index
    %3200 = memref.load %arg2[%3199] : memref<288xf32, #tpu.memory_space<smem>>
    %3201 = vector.broadcast %3200 : f32 to vector<16x16xf32>
    %3202 = arith.mulf %3198, %3201 : vector<16x16xf32>
    %3203 = arith.addf %3191, %3202 : vector<16x16xf32>
    %c6_i32_1761 = arith.constant 6 : i32
    %3204 = arith.addi %0, %c6_i32_1761 : i32
    %c4_i32_1762 = arith.constant 4 : i32
    %3205 = arith.muli %3204, %c4_i32_1762 : i32
    %c3_i32_1763 = arith.constant 3 : i32
    %3206 = arith.addi %3205, %c3_i32_1763 : i32
    %c9_i32_1764 = arith.constant 9 : i32
    %3207 = arith.muli %3206, %c9_i32_1764 : i32
    %c3_i32_1765 = arith.constant 3 : i32
    %3208 = arith.addi %3207, %c3_i32_1765 : i32
    %c2_i32_1766 = arith.constant 2 : i32
    %3209 = arith.addi %3208, %c2_i32_1766 : i32
    %3210 = vector.extract_strided_slice %3179 {offsets = [0, 2], sizes = [16, 16], strides = [1, 1]} : vector<16x18xf32> to vector<16x16xf32>
    %3211 = arith.index_cast %3209 : i32 to index
    %3212 = memref.load %arg2[%3211] : memref<288xf32, #tpu.memory_space<smem>>
    %3213 = vector.broadcast %3212 : f32 to vector<16x16xf32>
    %3214 = arith.mulf %3210, %3213 : vector<16x16xf32>
    %3215 = arith.addf %3203, %3214 : vector<16x16xf32>
    %c3_1767 = arith.constant 3 : index
    %c2_1768 = arith.constant 2 : index
    %c0_1769 = arith.constant 0 : index
    %3216 = vector.load %arg6[%c3_1767, %c2_1768, %c0_1769] : memref<4x18x18xf32, #tpu.memory_space<vmem>>, vector<1x16x18xf32>
    %3217 = vector.shape_cast %3216 : vector<1x16x18xf32> to vector<16x18xf32>
    %c6_i32_1770 = arith.constant 6 : i32
    %3218 = arith.addi %0, %c6_i32_1770 : i32
    %c4_i32_1771 = arith.constant 4 : i32
    %3219 = arith.muli %3218, %c4_i32_1771 : i32
    %c3_i32_1772 = arith.constant 3 : i32
    %3220 = arith.addi %3219, %c3_i32_1772 : i32
    %c9_i32_1773 = arith.constant 9 : i32
    %3221 = arith.muli %3220, %c9_i32_1773 : i32
    %c6_i32_1774 = arith.constant 6 : i32
    %3222 = arith.addi %3221, %c6_i32_1774 : i32
    %c0_i32_1775 = arith.constant 0 : i32
    %3223 = arith.addi %3222, %c0_i32_1775 : i32
    %3224 = vector.extract_strided_slice %3217 {offsets = [0, 0], sizes = [16, 16], strides = [1, 1]} : vector<16x18xf32> to vector<16x16xf32>
    %3225 = arith.index_cast %3223 : i32 to index
    %3226 = memref.load %arg2[%3225] : memref<288xf32, #tpu.memory_space<smem>>
    %3227 = vector.broadcast %3226 : f32 to vector<16x16xf32>
    %3228 = arith.mulf %3224, %3227 : vector<16x16xf32>
    %3229 = arith.addf %3215, %3228 : vector<16x16xf32>
    %c6_i32_1776 = arith.constant 6 : i32
    %3230 = arith.addi %0, %c6_i32_1776 : i32
    %c4_i32_1777 = arith.constant 4 : i32
    %3231 = arith.muli %3230, %c4_i32_1777 : i32
    %c3_i32_1778 = arith.constant 3 : i32
    %3232 = arith.addi %3231, %c3_i32_1778 : i32
    %c9_i32_1779 = arith.constant 9 : i32
    %3233 = arith.muli %3232, %c9_i32_1779 : i32
    %c6_i32_1780 = arith.constant 6 : i32
    %3234 = arith.addi %3233, %c6_i32_1780 : i32
    %c1_i32_1781 = arith.constant 1 : i32
    %3235 = arith.addi %3234, %c1_i32_1781 : i32
    %3236 = vector.extract_strided_slice %3217 {offsets = [0, 1], sizes = [16, 16], strides = [1, 1]} : vector<16x18xf32> to vector<16x16xf32>
    %3237 = arith.index_cast %3235 : i32 to index
    %3238 = memref.load %arg2[%3237] : memref<288xf32, #tpu.memory_space<smem>>
    %3239 = vector.broadcast %3238 : f32 to vector<16x16xf32>
    %3240 = arith.mulf %3236, %3239 : vector<16x16xf32>
    %3241 = arith.addf %3229, %3240 : vector<16x16xf32>
    %c6_i32_1782 = arith.constant 6 : i32
    %3242 = arith.addi %0, %c6_i32_1782 : i32
    %c4_i32_1783 = arith.constant 4 : i32
    %3243 = arith.muli %3242, %c4_i32_1783 : i32
    %c3_i32_1784 = arith.constant 3 : i32
    %3244 = arith.addi %3243, %c3_i32_1784 : i32
    %c9_i32_1785 = arith.constant 9 : i32
    %3245 = arith.muli %3244, %c9_i32_1785 : i32
    %c6_i32_1786 = arith.constant 6 : i32
    %3246 = arith.addi %3245, %c6_i32_1786 : i32
    %c2_i32_1787 = arith.constant 2 : i32
    %3247 = arith.addi %3246, %c2_i32_1787 : i32
    %3248 = vector.extract_strided_slice %3217 {offsets = [0, 2], sizes = [16, 16], strides = [1, 1]} : vector<16x18xf32> to vector<16x16xf32>
    %3249 = arith.index_cast %3247 : i32 to index
    %3250 = memref.load %arg2[%3249] : memref<288xf32, #tpu.memory_space<smem>>
    %3251 = vector.broadcast %3250 : f32 to vector<16x16xf32>
    %3252 = arith.mulf %3248, %3251 : vector<16x16xf32>
    %3253 = arith.addf %3241, %3252 : vector<16x16xf32>
    %cst_1788 = arith.constant 0.000000e+00 : f32
    %3254 = vector.broadcast %cst_1788 : f32 to vector<16x16xf32>
    %3255 = arith.maximumf %3253, %3254 : vector<16x16xf32>
    %c0_1789 = arith.constant 0 : index
    %c6 = arith.constant 6 : index
    %c0_1790 = arith.constant 0 : index
    %c0_1791 = arith.constant 0 : index
    %3256 = vector.load %arg5[%c0_1789, %c6, %c0_1790, %c0_1791] : memref<1x8x16x16xf32, #tpu.memory_space<vmem>>, vector<1x1x16x16xf32>
    %3257 = vector.shape_cast %3256 : vector<1x1x16x16xf32> to vector<16x16xf32>
    %3258 = vector.shape_cast %3255 : vector<16x16xf32> to vector<1x1x16x16xf32>
    tpu.vector_store %arg5[%c0_1789, %c6, %c0_1790, %c0_1791], %3258 {strides = array<i32>} : memref<1x8x16x16xf32, #tpu.memory_space<vmem>>, vector<1x1x16x16xf32>,
    %c7_i32 = arith.constant 7 : i32
    %3259 = arith.addi %0, %c7_i32 : i32
    %3260 = arith.index_cast %3259 : i32 to index
    %3261 = memref.load %arg3[%3260] : memref<8xf32, #tpu.memory_space<smem>>
    %3262 = vector.broadcast %3261 : f32 to vector<16x16xf32>
    %c0_1792 = arith.constant 0 : index
    %c0_1793 = arith.constant 0 : index
    %c0_1794 = arith.constant 0 : index
    %3263 = vector.load %arg6[%c0_1792, %c0_1793, %c0_1794] : memref<4x18x18xf32, #tpu.memory_space<vmem>>, vector<1x16x18xf32>
    %3264 = vector.shape_cast %3263 : vector<1x16x18xf32> to vector<16x18xf32>
    %c7_i32_1795 = arith.constant 7 : i32
    %3265 = arith.addi %0, %c7_i32_1795 : i32
    %c4_i32_1796 = arith.constant 4 : i32
    %3266 = arith.muli %3265, %c4_i32_1796 : i32
    %c0_i32_1797 = arith.constant 0 : i32
    %3267 = arith.addi %3266, %c0_i32_1797 : i32
    %c9_i32_1798 = arith.constant 9 : i32
    %3268 = arith.muli %3267, %c9_i32_1798 : i32
    %c0_i32_1799 = arith.constant 0 : i32
    %3269 = arith.addi %3268, %c0_i32_1799 : i32
    %c0_i32_1800 = arith.constant 0 : i32
    %3270 = arith.addi %3269, %c0_i32_1800 : i32
    %3271 = vector.extract_strided_slice %3264 {offsets = [0, 0], sizes = [16, 16], strides = [1, 1]} : vector<16x18xf32> to vector<16x16xf32>
    %3272 = arith.index_cast %3270 : i32 to index
    %3273 = memref.load %arg2[%3272] : memref<288xf32, #tpu.memory_space<smem>>
    %3274 = vector.broadcast %3273 : f32 to vector<16x16xf32>
    %3275 = arith.mulf %3271, %3274 : vector<16x16xf32>
    %3276 = arith.addf %3262, %3275 : vector<16x16xf32>
    %c7_i32_1801 = arith.constant 7 : i32
    %3277 = arith.addi %0, %c7_i32_1801 : i32
    %c4_i32_1802 = arith.constant 4 : i32
    %3278 = arith.muli %3277, %c4_i32_1802 : i32
    %c0_i32_1803 = arith.constant 0 : i32
    %3279 = arith.addi %3278, %c0_i32_1803 : i32
    %c9_i32_1804 = arith.constant 9 : i32
    %3280 = arith.muli %3279, %c9_i32_1804 : i32
    %c0_i32_1805 = arith.constant 0 : i32
    %3281 = arith.addi %3280, %c0_i32_1805 : i32
    %c1_i32_1806 = arith.constant 1 : i32
    %3282 = arith.addi %3281, %c1_i32_1806 : i32
    %3283 = vector.extract_strided_slice %3264 {offsets = [0, 1], sizes = [16, 16], strides = [1, 1]} : vector<16x18xf32> to vector<16x16xf32>
    %3284 = arith.index_cast %3282 : i32 to index
    %3285 = memref.load %arg2[%3284] : memref<288xf32, #tpu.memory_space<smem>>
    %3286 = vector.broadcast %3285 : f32 to vector<16x16xf32>
    %3287 = arith.mulf %3283, %3286 : vector<16x16xf32>
    %3288 = arith.addf %3276, %3287 : vector<16x16xf32>
    %c7_i32_1807 = arith.constant 7 : i32
    %3289 = arith.addi %0, %c7_i32_1807 : i32
    %c4_i32_1808 = arith.constant 4 : i32
    %3290 = arith.muli %3289, %c4_i32_1808 : i32
    %c0_i32_1809 = arith.constant 0 : i32
    %3291 = arith.addi %3290, %c0_i32_1809 : i32
    %c9_i32_1810 = arith.constant 9 : i32
    %3292 = arith.muli %3291, %c9_i32_1810 : i32
    %c0_i32_1811 = arith.constant 0 : i32
    %3293 = arith.addi %3292, %c0_i32_1811 : i32
    %c2_i32_1812 = arith.constant 2 : i32
    %3294 = arith.addi %3293, %c2_i32_1812 : i32
    %3295 = vector.extract_strided_slice %3264 {offsets = [0, 2], sizes = [16, 16], strides = [1, 1]} : vector<16x18xf32> to vector<16x16xf32>
    %3296 = arith.index_cast %3294 : i32 to index
    %3297 = memref.load %arg2[%3296] : memref<288xf32, #tpu.memory_space<smem>>
    %3298 = vector.broadcast %3297 : f32 to vector<16x16xf32>
    %3299 = arith.mulf %3295, %3298 : vector<16x16xf32>
    %3300 = arith.addf %3288, %3299 : vector<16x16xf32>
    %c0_1813 = arith.constant 0 : index
    %c1_1814 = arith.constant 1 : index
    %c0_1815 = arith.constant 0 : index
    %3301 = vector.load %arg6[%c0_1813, %c1_1814, %c0_1815] : memref<4x18x18xf32, #tpu.memory_space<vmem>>, vector<1x16x18xf32>
    %3302 = vector.shape_cast %3301 : vector<1x16x18xf32> to vector<16x18xf32>
    %c7_i32_1816 = arith.constant 7 : i32
    %3303 = arith.addi %0, %c7_i32_1816 : i32
    %c4_i32_1817 = arith.constant 4 : i32
    %3304 = arith.muli %3303, %c4_i32_1817 : i32
    %c0_i32_1818 = arith.constant 0 : i32
    %3305 = arith.addi %3304, %c0_i32_1818 : i32
    %c9_i32_1819 = arith.constant 9 : i32
    %3306 = arith.muli %3305, %c9_i32_1819 : i32
    %c3_i32_1820 = arith.constant 3 : i32
    %3307 = arith.addi %3306, %c3_i32_1820 : i32
    %c0_i32_1821 = arith.constant 0 : i32
    %3308 = arith.addi %3307, %c0_i32_1821 : i32
    %3309 = vector.extract_strided_slice %3302 {offsets = [0, 0], sizes = [16, 16], strides = [1, 1]} : vector<16x18xf32> to vector<16x16xf32>
    %3310 = arith.index_cast %3308 : i32 to index
    %3311 = memref.load %arg2[%3310] : memref<288xf32, #tpu.memory_space<smem>>
    %3312 = vector.broadcast %3311 : f32 to vector<16x16xf32>
    %3313 = arith.mulf %3309, %3312 : vector<16x16xf32>
    %3314 = arith.addf %3300, %3313 : vector<16x16xf32>
    %c7_i32_1822 = arith.constant 7 : i32
    %3315 = arith.addi %0, %c7_i32_1822 : i32
    %c4_i32_1823 = arith.constant 4 : i32
    %3316 = arith.muli %3315, %c4_i32_1823 : i32
    %c0_i32_1824 = arith.constant 0 : i32
    %3317 = arith.addi %3316, %c0_i32_1824 : i32
    %c9_i32_1825 = arith.constant 9 : i32
    %3318 = arith.muli %3317, %c9_i32_1825 : i32
    %c3_i32_1826 = arith.constant 3 : i32
    %3319 = arith.addi %3318, %c3_i32_1826 : i32
    %c1_i32_1827 = arith.constant 1 : i32
    %3320 = arith.addi %3319, %c1_i32_1827 : i32
    %3321 = vector.extract_strided_slice %3302 {offsets = [0, 1], sizes = [16, 16], strides = [1, 1]} : vector<16x18xf32> to vector<16x16xf32>
    %3322 = arith.index_cast %3320 : i32 to index
    %3323 = memref.load %arg2[%3322] : memref<288xf32, #tpu.memory_space<smem>>
    %3324 = vector.broadcast %3323 : f32 to vector<16x16xf32>
    %3325 = arith.mulf %3321, %3324 : vector<16x16xf32>
    %3326 = arith.addf %3314, %3325 : vector<16x16xf32>
    %c7_i32_1828 = arith.constant 7 : i32
    %3327 = arith.addi %0, %c7_i32_1828 : i32
    %c4_i32_1829 = arith.constant 4 : i32
    %3328 = arith.muli %3327, %c4_i32_1829 : i32
    %c0_i32_1830 = arith.constant 0 : i32
    %3329 = arith.addi %3328, %c0_i32_1830 : i32
    %c9_i32_1831 = arith.constant 9 : i32
    %3330 = arith.muli %3329, %c9_i32_1831 : i32
    %c3_i32_1832 = arith.constant 3 : i32
    %3331 = arith.addi %3330, %c3_i32_1832 : i32
    %c2_i32_1833 = arith.constant 2 : i32
    %3332 = arith.addi %3331, %c2_i32_1833 : i32
    %3333 = vector.extract_strided_slice %3302 {offsets = [0, 2], sizes = [16, 16], strides = [1, 1]} : vector<16x18xf32> to vector<16x16xf32>
    %3334 = arith.index_cast %3332 : i32 to index
    %3335 = memref.load %arg2[%3334] : memref<288xf32, #tpu.memory_space<smem>>
    %3336 = vector.broadcast %3335 : f32 to vector<16x16xf32>
    %3337 = arith.mulf %3333, %3336 : vector<16x16xf32>
    %3338 = arith.addf %3326, %3337 : vector<16x16xf32>
    %c0_1834 = arith.constant 0 : index
    %c2_1835 = arith.constant 2 : index
    %c0_1836 = arith.constant 0 : index
    %3339 = vector.load %arg6[%c0_1834, %c2_1835, %c0_1836] : memref<4x18x18xf32, #tpu.memory_space<vmem>>, vector<1x16x18xf32>
    %3340 = vector.shape_cast %3339 : vector<1x16x18xf32> to vector<16x18xf32>
    %c7_i32_1837 = arith.constant 7 : i32
    %3341 = arith.addi %0, %c7_i32_1837 : i32
    %c4_i32_1838 = arith.constant 4 : i32
    %3342 = arith.muli %3341, %c4_i32_1838 : i32
    %c0_i32_1839 = arith.constant 0 : i32
    %3343 = arith.addi %3342, %c0_i32_1839 : i32
    %c9_i32_1840 = arith.constant 9 : i32
    %3344 = arith.muli %3343, %c9_i32_1840 : i32
    %c6_i32_1841 = arith.constant 6 : i32
    %3345 = arith.addi %3344, %c6_i32_1841 : i32
    %c0_i32_1842 = arith.constant 0 : i32
    %3346 = arith.addi %3345, %c0_i32_1842 : i32
    %3347 = vector.extract_strided_slice %3340 {offsets = [0, 0], sizes = [16, 16], strides = [1, 1]} : vector<16x18xf32> to vector<16x16xf32>
    %3348 = arith.index_cast %3346 : i32 to index
    %3349 = memref.load %arg2[%3348] : memref<288xf32, #tpu.memory_space<smem>>
    %3350 = vector.broadcast %3349 : f32 to vector<16x16xf32>
    %3351 = arith.mulf %3347, %3350 : vector<16x16xf32>
    %3352 = arith.addf %3338, %3351 : vector<16x16xf32>
    %c7_i32_1843 = arith.constant 7 : i32
    %3353 = arith.addi %0, %c7_i32_1843 : i32
    %c4_i32_1844 = arith.constant 4 : i32
    %3354 = arith.muli %3353, %c4_i32_1844 : i32
    %c0_i32_1845 = arith.constant 0 : i32
    %3355 = arith.addi %3354, %c0_i32_1845 : i32
    %c9_i32_1846 = arith.constant 9 : i32
    %3356 = arith.muli %3355, %c9_i32_1846 : i32
    %c6_i32_1847 = arith.constant 6 : i32
    %3357 = arith.addi %3356, %c6_i32_1847 : i32
    %c1_i32_1848 = arith.constant 1 : i32
    %3358 = arith.addi %3357, %c1_i32_1848 : i32
    %3359 = vector.extract_strided_slice %3340 {offsets = [0, 1], sizes = [16, 16], strides = [1, 1]} : vector<16x18xf32> to vector<16x16xf32>
    %3360 = arith.index_cast %3358 : i32 to index
    %3361 = memref.load %arg2[%3360] : memref<288xf32, #tpu.memory_space<smem>>
    %3362 = vector.broadcast %3361 : f32 to vector<16x16xf32>
    %3363 = arith.mulf %3359, %3362 : vector<16x16xf32>
    %3364 = arith.addf %3352, %3363 : vector<16x16xf32>
    %c7_i32_1849 = arith.constant 7 : i32
    %3365 = arith.addi %0, %c7_i32_1849 : i32
    %c4_i32_1850 = arith.constant 4 : i32
    %3366 = arith.muli %3365, %c4_i32_1850 : i32
    %c0_i32_1851 = arith.constant 0 : i32
    %3367 = arith.addi %3366, %c0_i32_1851 : i32
    %c9_i32_1852 = arith.constant 9 : i32
    %3368 = arith.muli %3367, %c9_i32_1852 : i32
    %c6_i32_1853 = arith.constant 6 : i32
    %3369 = arith.addi %3368, %c6_i32_1853 : i32
    %c2_i32_1854 = arith.constant 2 : i32
    %3370 = arith.addi %3369, %c2_i32_1854 : i32
    %3371 = vector.extract_strided_slice %3340 {offsets = [0, 2], sizes = [16, 16], strides = [1, 1]} : vector<16x18xf32> to vector<16x16xf32>
    %3372 = arith.index_cast %3370 : i32 to index
    %3373 = memref.load %arg2[%3372] : memref<288xf32, #tpu.memory_space<smem>>
    %3374 = vector.broadcast %3373 : f32 to vector<16x16xf32>
    %3375 = arith.mulf %3371, %3374 : vector<16x16xf32>
    %3376 = arith.addf %3364, %3375 : vector<16x16xf32>
    %c1_1855 = arith.constant 1 : index
    %c0_1856 = arith.constant 0 : index
    %c0_1857 = arith.constant 0 : index
    %3377 = vector.load %arg6[%c1_1855, %c0_1856, %c0_1857] : memref<4x18x18xf32, #tpu.memory_space<vmem>>, vector<1x16x18xf32>
    %3378 = vector.shape_cast %3377 : vector<1x16x18xf32> to vector<16x18xf32>
    %c7_i32_1858 = arith.constant 7 : i32
    %3379 = arith.addi %0, %c7_i32_1858 : i32
    %c4_i32_1859 = arith.constant 4 : i32
    %3380 = arith.muli %3379, %c4_i32_1859 : i32
    %c1_i32_1860 = arith.constant 1 : i32
    %3381 = arith.addi %3380, %c1_i32_1860 : i32
    %c9_i32_1861 = arith.constant 9 : i32
    %3382 = arith.muli %3381, %c9_i32_1861 : i32
    %c0_i32_1862 = arith.constant 0 : i32
    %3383 = arith.addi %3382, %c0_i32_1862 : i32
    %c0_i32_1863 = arith.constant 0 : i32
    %3384 = arith.addi %3383, %c0_i32_1863 : i32
    %3385 = vector.extract_strided_slice %3378 {offsets = [0, 0], sizes = [16, 16], strides = [1, 1]} : vector<16x18xf32> to vector<16x16xf32>
    %3386 = arith.index_cast %3384 : i32 to index
    %3387 = memref.load %arg2[%3386] : memref<288xf32, #tpu.memory_space<smem>>
    %3388 = vector.broadcast %3387 : f32 to vector<16x16xf32>
    %3389 = arith.mulf %3385, %3388 : vector<16x16xf32>
    %3390 = arith.addf %3376, %3389 : vector<16x16xf32>
    %c7_i32_1864 = arith.constant 7 : i32
    %3391 = arith.addi %0, %c7_i32_1864 : i32
    %c4_i32_1865 = arith.constant 4 : i32
    %3392 = arith.muli %3391, %c4_i32_1865 : i32
    %c1_i32_1866 = arith.constant 1 : i32
    %3393 = arith.addi %3392, %c1_i32_1866 : i32
    %c9_i32_1867 = arith.constant 9 : i32
    %3394 = arith.muli %3393, %c9_i32_1867 : i32
    %c0_i32_1868 = arith.constant 0 : i32
    %3395 = arith.addi %3394, %c0_i32_1868 : i32
    %c1_i32_1869 = arith.constant 1 : i32
    %3396 = arith.addi %3395, %c1_i32_1869 : i32
    %3397 = vector.extract_strided_slice %3378 {offsets = [0, 1], sizes = [16, 16], strides = [1, 1]} : vector<16x18xf32> to vector<16x16xf32>
    %3398 = arith.index_cast %3396 : i32 to index
    %3399 = memref.load %arg2[%3398] : memref<288xf32, #tpu.memory_space<smem>>
    %3400 = vector.broadcast %3399 : f32 to vector<16x16xf32>
    %3401 = arith.mulf %3397, %3400 : vector<16x16xf32>
    %3402 = arith.addf %3390, %3401 : vector<16x16xf32>
    %c7_i32_1870 = arith.constant 7 : i32
    %3403 = arith.addi %0, %c7_i32_1870 : i32
    %c4_i32_1871 = arith.constant 4 : i32
    %3404 = arith.muli %3403, %c4_i32_1871 : i32
    %c1_i32_1872 = arith.constant 1 : i32
    %3405 = arith.addi %3404, %c1_i32_1872 : i32
    %c9_i32_1873 = arith.constant 9 : i32
    %3406 = arith.muli %3405, %c9_i32_1873 : i32
    %c0_i32_1874 = arith.constant 0 : i32
    %3407 = arith.addi %3406, %c0_i32_1874 : i32
    %c2_i32_1875 = arith.constant 2 : i32
    %3408 = arith.addi %3407, %c2_i32_1875 : i32
    %3409 = vector.extract_strided_slice %3378 {offsets = [0, 2], sizes = [16, 16], strides = [1, 1]} : vector<16x18xf32> to vector<16x16xf32>
    %3410 = arith.index_cast %3408 : i32 to index
    %3411 = memref.load %arg2[%3410] : memref<288xf32, #tpu.memory_space<smem>>
    %3412 = vector.broadcast %3411 : f32 to vector<16x16xf32>
    %3413 = arith.mulf %3409, %3412 : vector<16x16xf32>
    %3414 = arith.addf %3402, %3413 : vector<16x16xf32>
    %c1_1876 = arith.constant 1 : index
    %c1_1877 = arith.constant 1 : index
    %c0_1878 = arith.constant 0 : index
    %3415 = vector.load %arg6[%c1_1876, %c1_1877, %c0_1878] : memref<4x18x18xf32, #tpu.memory_space<vmem>>, vector<1x16x18xf32>
    %3416 = vector.shape_cast %3415 : vector<1x16x18xf32> to vector<16x18xf32>
    %c7_i32_1879 = arith.constant 7 : i32
    %3417 = arith.addi %0, %c7_i32_1879 : i32
    %c4_i32_1880 = arith.constant 4 : i32
    %3418 = arith.muli %3417, %c4_i32_1880 : i32
    %c1_i32_1881 = arith.constant 1 : i32
    %3419 = arith.addi %3418, %c1_i32_1881 : i32
    %c9_i32_1882 = arith.constant 9 : i32
    %3420 = arith.muli %3419, %c9_i32_1882 : i32
    %c3_i32_1883 = arith.constant 3 : i32
    %3421 = arith.addi %3420, %c3_i32_1883 : i32
    %c0_i32_1884 = arith.constant 0 : i32
    %3422 = arith.addi %3421, %c0_i32_1884 : i32
    %3423 = vector.extract_strided_slice %3416 {offsets = [0, 0], sizes = [16, 16], strides = [1, 1]} : vector<16x18xf32> to vector<16x16xf32>
    %3424 = arith.index_cast %3422 : i32 to index
    %3425 = memref.load %arg2[%3424] : memref<288xf32, #tpu.memory_space<smem>>
    %3426 = vector.broadcast %3425 : f32 to vector<16x16xf32>
    %3427 = arith.mulf %3423, %3426 : vector<16x16xf32>
    %3428 = arith.addf %3414, %3427 : vector<16x16xf32>
    %c7_i32_1885 = arith.constant 7 : i32
    %3429 = arith.addi %0, %c7_i32_1885 : i32
    %c4_i32_1886 = arith.constant 4 : i32
    %3430 = arith.muli %3429, %c4_i32_1886 : i32
    %c1_i32_1887 = arith.constant 1 : i32
    %3431 = arith.addi %3430, %c1_i32_1887 : i32
    %c9_i32_1888 = arith.constant 9 : i32
    %3432 = arith.muli %3431, %c9_i32_1888 : i32
    %c3_i32_1889 = arith.constant 3 : i32
    %3433 = arith.addi %3432, %c3_i32_1889 : i32
    %c1_i32_1890 = arith.constant 1 : i32
    %3434 = arith.addi %3433, %c1_i32_1890 : i32
    %3435 = vector.extract_strided_slice %3416 {offsets = [0, 1], sizes = [16, 16], strides = [1, 1]} : vector<16x18xf32> to vector<16x16xf32>
    %3436 = arith.index_cast %3434 : i32 to index
    %3437 = memref.load %arg2[%3436] : memref<288xf32, #tpu.memory_space<smem>>
    %3438 = vector.broadcast %3437 : f32 to vector<16x16xf32>
    %3439 = arith.mulf %3435, %3438 : vector<16x16xf32>
    %3440 = arith.addf %3428, %3439 : vector<16x16xf32>
    %c7_i32_1891 = arith.constant 7 : i32
    %3441 = arith.addi %0, %c7_i32_1891 : i32
    %c4_i32_1892 = arith.constant 4 : i32
    %3442 = arith.muli %3441, %c4_i32_1892 : i32
    %c1_i32_1893 = arith.constant 1 : i32
    %3443 = arith.addi %3442, %c1_i32_1893 : i32
    %c9_i32_1894 = arith.constant 9 : i32
    %3444 = arith.muli %3443, %c9_i32_1894 : i32
    %c3_i32_1895 = arith.constant 3 : i32
    %3445 = arith.addi %3444, %c3_i32_1895 : i32
    %c2_i32_1896 = arith.constant 2 : i32
    %3446 = arith.addi %3445, %c2_i32_1896 : i32
    %3447 = vector.extract_strided_slice %3416 {offsets = [0, 2], sizes = [16, 16], strides = [1, 1]} : vector<16x18xf32> to vector<16x16xf32>
    %3448 = arith.index_cast %3446 : i32 to index
    %3449 = memref.load %arg2[%3448] : memref<288xf32, #tpu.memory_space<smem>>
    %3450 = vector.broadcast %3449 : f32 to vector<16x16xf32>
    %3451 = arith.mulf %3447, %3450 : vector<16x16xf32>
    %3452 = arith.addf %3440, %3451 : vector<16x16xf32>
    %c1_1897 = arith.constant 1 : index
    %c2_1898 = arith.constant 2 : index
    %c0_1899 = arith.constant 0 : index
    %3453 = vector.load %arg6[%c1_1897, %c2_1898, %c0_1899] : memref<4x18x18xf32, #tpu.memory_space<vmem>>, vector<1x16x18xf32>
    %3454 = vector.shape_cast %3453 : vector<1x16x18xf32> to vector<16x18xf32>
    %c7_i32_1900 = arith.constant 7 : i32
    %3455 = arith.addi %0, %c7_i32_1900 : i32
    %c4_i32_1901 = arith.constant 4 : i32
    %3456 = arith.muli %3455, %c4_i32_1901 : i32
    %c1_i32_1902 = arith.constant 1 : i32
    %3457 = arith.addi %3456, %c1_i32_1902 : i32
    %c9_i32_1903 = arith.constant 9 : i32
    %3458 = arith.muli %3457, %c9_i32_1903 : i32
    %c6_i32_1904 = arith.constant 6 : i32
    %3459 = arith.addi %3458, %c6_i32_1904 : i32
    %c0_i32_1905 = arith.constant 0 : i32
    %3460 = arith.addi %3459, %c0_i32_1905 : i32
    %3461 = vector.extract_strided_slice %3454 {offsets = [0, 0], sizes = [16, 16], strides = [1, 1]} : vector<16x18xf32> to vector<16x16xf32>
    %3462 = arith.index_cast %3460 : i32 to index
    %3463 = memref.load %arg2[%3462] : memref<288xf32, #tpu.memory_space<smem>>
    %3464 = vector.broadcast %3463 : f32 to vector<16x16xf32>
    %3465 = arith.mulf %3461, %3464 : vector<16x16xf32>
    %3466 = arith.addf %3452, %3465 : vector<16x16xf32>
    %c7_i32_1906 = arith.constant 7 : i32
    %3467 = arith.addi %0, %c7_i32_1906 : i32
    %c4_i32_1907 = arith.constant 4 : i32
    %3468 = arith.muli %3467, %c4_i32_1907 : i32
    %c1_i32_1908 = arith.constant 1 : i32
    %3469 = arith.addi %3468, %c1_i32_1908 : i32
    %c9_i32_1909 = arith.constant 9 : i32
    %3470 = arith.muli %3469, %c9_i32_1909 : i32
    %c6_i32_1910 = arith.constant 6 : i32
    %3471 = arith.addi %3470, %c6_i32_1910 : i32
    %c1_i32_1911 = arith.constant 1 : i32
    %3472 = arith.addi %3471, %c1_i32_1911 : i32
    %3473 = vector.extract_strided_slice %3454 {offsets = [0, 1], sizes = [16, 16], strides = [1, 1]} : vector<16x18xf32> to vector<16x16xf32>
    %3474 = arith.index_cast %3472 : i32 to index
    %3475 = memref.load %arg2[%3474] : memref<288xf32, #tpu.memory_space<smem>>
    %3476 = vector.broadcast %3475 : f32 to vector<16x16xf32>
    %3477 = arith.mulf %3473, %3476 : vector<16x16xf32>
    %3478 = arith.addf %3466, %3477 : vector<16x16xf32>
    %c7_i32_1912 = arith.constant 7 : i32
    %3479 = arith.addi %0, %c7_i32_1912 : i32
    %c4_i32_1913 = arith.constant 4 : i32
    %3480 = arith.muli %3479, %c4_i32_1913 : i32
    %c1_i32_1914 = arith.constant 1 : i32
    %3481 = arith.addi %3480, %c1_i32_1914 : i32
    %c9_i32_1915 = arith.constant 9 : i32
    %3482 = arith.muli %3481, %c9_i32_1915 : i32
    %c6_i32_1916 = arith.constant 6 : i32
    %3483 = arith.addi %3482, %c6_i32_1916 : i32
    %c2_i32_1917 = arith.constant 2 : i32
    %3484 = arith.addi %3483, %c2_i32_1917 : i32
    %3485 = vector.extract_strided_slice %3454 {offsets = [0, 2], sizes = [16, 16], strides = [1, 1]} : vector<16x18xf32> to vector<16x16xf32>
    %3486 = arith.index_cast %3484 : i32 to index
    %3487 = memref.load %arg2[%3486] : memref<288xf32, #tpu.memory_space<smem>>
    %3488 = vector.broadcast %3487 : f32 to vector<16x16xf32>
    %3489 = arith.mulf %3485, %3488 : vector<16x16xf32>
    %3490 = arith.addf %3478, %3489 : vector<16x16xf32>
    %c2_1918 = arith.constant 2 : index
    %c0_1919 = arith.constant 0 : index
    %c0_1920 = arith.constant 0 : index
    %3491 = vector.load %arg6[%c2_1918, %c0_1919, %c0_1920] : memref<4x18x18xf32, #tpu.memory_space<vmem>>, vector<1x16x18xf32>
    %3492 = vector.shape_cast %3491 : vector<1x16x18xf32> to vector<16x18xf32>
    %c7_i32_1921 = arith.constant 7 : i32
    %3493 = arith.addi %0, %c7_i32_1921 : i32
    %c4_i32_1922 = arith.constant 4 : i32
    %3494 = arith.muli %3493, %c4_i32_1922 : i32
    %c2_i32_1923 = arith.constant 2 : i32
    %3495 = arith.addi %3494, %c2_i32_1923 : i32
    %c9_i32_1924 = arith.constant 9 : i32
    %3496 = arith.muli %3495, %c9_i32_1924 : i32
    %c0_i32_1925 = arith.constant 0 : i32
    %3497 = arith.addi %3496, %c0_i32_1925 : i32
    %c0_i32_1926 = arith.constant 0 : i32
    %3498 = arith.addi %3497, %c0_i32_1926 : i32
    %3499 = vector.extract_strided_slice %3492 {offsets = [0, 0], sizes = [16, 16], strides = [1, 1]} : vector<16x18xf32> to vector<16x16xf32>
    %3500 = arith.index_cast %3498 : i32 to index
    %3501 = memref.load %arg2[%3500] : memref<288xf32, #tpu.memory_space<smem>>
    %3502 = vector.broadcast %3501 : f32 to vector<16x16xf32>
    %3503 = arith.mulf %3499, %3502 : vector<16x16xf32>
    %3504 = arith.addf %3490, %3503 : vector<16x16xf32>
    %c7_i32_1927 = arith.constant 7 : i32
    %3505 = arith.addi %0, %c7_i32_1927 : i32
    %c4_i32_1928 = arith.constant 4 : i32
    %3506 = arith.muli %3505, %c4_i32_1928 : i32
    %c2_i32_1929 = arith.constant 2 : i32
    %3507 = arith.addi %3506, %c2_i32_1929 : i32
    %c9_i32_1930 = arith.constant 9 : i32
    %3508 = arith.muli %3507, %c9_i32_1930 : i32
    %c0_i32_1931 = arith.constant 0 : i32
    %3509 = arith.addi %3508, %c0_i32_1931 : i32
    %c1_i32_1932 = arith.constant 1 : i32
    %3510 = arith.addi %3509, %c1_i32_1932 : i32
    %3511 = vector.extract_strided_slice %3492 {offsets = [0, 1], sizes = [16, 16], strides = [1, 1]} : vector<16x18xf32> to vector<16x16xf32>
    %3512 = arith.index_cast %3510 : i32 to index
    %3513 = memref.load %arg2[%3512] : memref<288xf32, #tpu.memory_space<smem>>
    %3514 = vector.broadcast %3513 : f32 to vector<16x16xf32>
    %3515 = arith.mulf %3511, %3514 : vector<16x16xf32>
    %3516 = arith.addf %3504, %3515 : vector<16x16xf32>
    %c7_i32_1933 = arith.constant 7 : i32
    %3517 = arith.addi %0, %c7_i32_1933 : i32
    %c4_i32_1934 = arith.constant 4 : i32
    %3518 = arith.muli %3517, %c4_i32_1934 : i32
    %c2_i32_1935 = arith.constant 2 : i32
    %3519 = arith.addi %3518, %c2_i32_1935 : i32
    %c9_i32_1936 = arith.constant 9 : i32
    %3520 = arith.muli %3519, %c9_i32_1936 : i32
    %c0_i32_1937 = arith.constant 0 : i32
    %3521 = arith.addi %3520, %c0_i32_1937 : i32
    %c2_i32_1938 = arith.constant 2 : i32
    %3522 = arith.addi %3521, %c2_i32_1938 : i32
    %3523 = vector.extract_strided_slice %3492 {offsets = [0, 2], sizes = [16, 16], strides = [1, 1]} : vector<16x18xf32> to vector<16x16xf32>
    %3524 = arith.index_cast %3522 : i32 to index
    %3525 = memref.load %arg2[%3524] : memref<288xf32, #tpu.memory_space<smem>>
    %3526 = vector.broadcast %3525 : f32 to vector<16x16xf32>
    %3527 = arith.mulf %3523, %3526 : vector<16x16xf32>
    %3528 = arith.addf %3516, %3527 : vector<16x16xf32>
    %c2_1939 = arith.constant 2 : index
    %c1_1940 = arith.constant 1 : index
    %c0_1941 = arith.constant 0 : index
    %3529 = vector.load %arg6[%c2_1939, %c1_1940, %c0_1941] : memref<4x18x18xf32, #tpu.memory_space<vmem>>, vector<1x16x18xf32>
    %3530 = vector.shape_cast %3529 : vector<1x16x18xf32> to vector<16x18xf32>
    %c7_i32_1942 = arith.constant 7 : i32
    %3531 = arith.addi %0, %c7_i32_1942 : i32
    %c4_i32_1943 = arith.constant 4 : i32
    %3532 = arith.muli %3531, %c4_i32_1943 : i32
    %c2_i32_1944 = arith.constant 2 : i32
    %3533 = arith.addi %3532, %c2_i32_1944 : i32
    %c9_i32_1945 = arith.constant 9 : i32
    %3534 = arith.muli %3533, %c9_i32_1945 : i32
    %c3_i32_1946 = arith.constant 3 : i32
    %3535 = arith.addi %3534, %c3_i32_1946 : i32
    %c0_i32_1947 = arith.constant 0 : i32
    %3536 = arith.addi %3535, %c0_i32_1947 : i32
    %3537 = vector.extract_strided_slice %3530 {offsets = [0, 0], sizes = [16, 16], strides = [1, 1]} : vector<16x18xf32> to vector<16x16xf32>
    %3538 = arith.index_cast %3536 : i32 to index
    %3539 = memref.load %arg2[%3538] : memref<288xf32, #tpu.memory_space<smem>>
    %3540 = vector.broadcast %3539 : f32 to vector<16x16xf32>
    %3541 = arith.mulf %3537, %3540 : vector<16x16xf32>
    %3542 = arith.addf %3528, %3541 : vector<16x16xf32>
    %c7_i32_1948 = arith.constant 7 : i32
    %3543 = arith.addi %0, %c7_i32_1948 : i32
    %c4_i32_1949 = arith.constant 4 : i32
    %3544 = arith.muli %3543, %c4_i32_1949 : i32
    %c2_i32_1950 = arith.constant 2 : i32
    %3545 = arith.addi %3544, %c2_i32_1950 : i32
    %c9_i32_1951 = arith.constant 9 : i32
    %3546 = arith.muli %3545, %c9_i32_1951 : i32
    %c3_i32_1952 = arith.constant 3 : i32
    %3547 = arith.addi %3546, %c3_i32_1952 : i32
    %c1_i32_1953 = arith.constant 1 : i32
    %3548 = arith.addi %3547, %c1_i32_1953 : i32
    %3549 = vector.extract_strided_slice %3530 {offsets = [0, 1], sizes = [16, 16], strides = [1, 1]} : vector<16x18xf32> to vector<16x16xf32>
    %3550 = arith.index_cast %3548 : i32 to index
    %3551 = memref.load %arg2[%3550] : memref<288xf32, #tpu.memory_space<smem>>
    %3552 = vector.broadcast %3551 : f32 to vector<16x16xf32>
    %3553 = arith.mulf %3549, %3552 : vector<16x16xf32>
    %3554 = arith.addf %3542, %3553 : vector<16x16xf32>
    %c7_i32_1954 = arith.constant 7 : i32
    %3555 = arith.addi %0, %c7_i32_1954 : i32
    %c4_i32_1955 = arith.constant 4 : i32
    %3556 = arith.muli %3555, %c4_i32_1955 : i32
    %c2_i32_1956 = arith.constant 2 : i32
    %3557 = arith.addi %3556, %c2_i32_1956 : i32
    %c9_i32_1957 = arith.constant 9 : i32
    %3558 = arith.muli %3557, %c9_i32_1957 : i32
    %c3_i32_1958 = arith.constant 3 : i32
    %3559 = arith.addi %3558, %c3_i32_1958 : i32
    %c2_i32_1959 = arith.constant 2 : i32
    %3560 = arith.addi %3559, %c2_i32_1959 : i32
    %3561 = vector.extract_strided_slice %3530 {offsets = [0, 2], sizes = [16, 16], strides = [1, 1]} : vector<16x18xf32> to vector<16x16xf32>
    %3562 = arith.index_cast %3560 : i32 to index
    %3563 = memref.load %arg2[%3562] : memref<288xf32, #tpu.memory_space<smem>>
    %3564 = vector.broadcast %3563 : f32 to vector<16x16xf32>
    %3565 = arith.mulf %3561, %3564 : vector<16x16xf32>
    %3566 = arith.addf %3554, %3565 : vector<16x16xf32>
    %c2_1960 = arith.constant 2 : index
    %c2_1961 = arith.constant 2 : index
    %c0_1962 = arith.constant 0 : index
    %3567 = vector.load %arg6[%c2_1960, %c2_1961, %c0_1962] : memref<4x18x18xf32, #tpu.memory_space<vmem>>, vector<1x16x18xf32>
    %3568 = vector.shape_cast %3567 : vector<1x16x18xf32> to vector<16x18xf32>
    %c7_i32_1963 = arith.constant 7 : i32
    %3569 = arith.addi %0, %c7_i32_1963 : i32
    %c4_i32_1964 = arith.constant 4 : i32
    %3570 = arith.muli %3569, %c4_i32_1964 : i32
    %c2_i32_1965 = arith.constant 2 : i32
    %3571 = arith.addi %3570, %c2_i32_1965 : i32
    %c9_i32_1966 = arith.constant 9 : i32
    %3572 = arith.muli %3571, %c9_i32_1966 : i32
    %c6_i32_1967 = arith.constant 6 : i32
    %3573 = arith.addi %3572, %c6_i32_1967 : i32
    %c0_i32_1968 = arith.constant 0 : i32
    %3574 = arith.addi %3573, %c0_i32_1968 : i32
    %3575 = vector.extract_strided_slice %3568 {offsets = [0, 0], sizes = [16, 16], strides = [1, 1]} : vector<16x18xf32> to vector<16x16xf32>
    %3576 = arith.index_cast %3574 : i32 to index
    %3577 = memref.load %arg2[%3576] : memref<288xf32, #tpu.memory_space<smem>>
    %3578 = vector.broadcast %3577 : f32 to vector<16x16xf32>
    %3579 = arith.mulf %3575, %3578 : vector<16x16xf32>
    %3580 = arith.addf %3566, %3579 : vector<16x16xf32>
    %c7_i32_1969 = arith.constant 7 : i32
    %3581 = arith.addi %0, %c7_i32_1969 : i32
    %c4_i32_1970 = arith.constant 4 : i32
    %3582 = arith.muli %3581, %c4_i32_1970 : i32
    %c2_i32_1971 = arith.constant 2 : i32
    %3583 = arith.addi %3582, %c2_i32_1971 : i32
    %c9_i32_1972 = arith.constant 9 : i32
    %3584 = arith.muli %3583, %c9_i32_1972 : i32
    %c6_i32_1973 = arith.constant 6 : i32
    %3585 = arith.addi %3584, %c6_i32_1973 : i32
    %c1_i32_1974 = arith.constant 1 : i32
    %3586 = arith.addi %3585, %c1_i32_1974 : i32
    %3587 = vector.extract_strided_slice %3568 {offsets = [0, 1], sizes = [16, 16], strides = [1, 1]} : vector<16x18xf32> to vector<16x16xf32>
    %3588 = arith.index_cast %3586 : i32 to index
    %3589 = memref.load %arg2[%3588] : memref<288xf32, #tpu.memory_space<smem>>
    %3590 = vector.broadcast %3589 : f32 to vector<16x16xf32>
    %3591 = arith.mulf %3587, %3590 : vector<16x16xf32>
    %3592 = arith.addf %3580, %3591 : vector<16x16xf32>
    %c7_i32_1975 = arith.constant 7 : i32
    %3593 = arith.addi %0, %c7_i32_1975 : i32
    %c4_i32_1976 = arith.constant 4 : i32
    %3594 = arith.muli %3593, %c4_i32_1976 : i32
    %c2_i32_1977 = arith.constant 2 : i32
    %3595 = arith.addi %3594, %c2_i32_1977 : i32
    %c9_i32_1978 = arith.constant 9 : i32
    %3596 = arith.muli %3595, %c9_i32_1978 : i32
    %c6_i32_1979 = arith.constant 6 : i32
    %3597 = arith.addi %3596, %c6_i32_1979 : i32
    %c2_i32_1980 = arith.constant 2 : i32
    %3598 = arith.addi %3597, %c2_i32_1980 : i32
    %3599 = vector.extract_strided_slice %3568 {offsets = [0, 2], sizes = [16, 16], strides = [1, 1]} : vector<16x18xf32> to vector<16x16xf32>
    %3600 = arith.index_cast %3598 : i32 to index
    %3601 = memref.load %arg2[%3600] : memref<288xf32, #tpu.memory_space<smem>>
    %3602 = vector.broadcast %3601 : f32 to vector<16x16xf32>
    %3603 = arith.mulf %3599, %3602 : vector<16x16xf32>
    %3604 = arith.addf %3592, %3603 : vector<16x16xf32>
    %c3_1981 = arith.constant 3 : index
    %c0_1982 = arith.constant 0 : index
    %c0_1983 = arith.constant 0 : index
    %3605 = vector.load %arg6[%c3_1981, %c0_1982, %c0_1983] : memref<4x18x18xf32, #tpu.memory_space<vmem>>, vector<1x16x18xf32>
    %3606 = vector.shape_cast %3605 : vector<1x16x18xf32> to vector<16x18xf32>
    %c7_i32_1984 = arith.constant 7 : i32
    %3607 = arith.addi %0, %c7_i32_1984 : i32
    %c4_i32_1985 = arith.constant 4 : i32
    %3608 = arith.muli %3607, %c4_i32_1985 : i32
    %c3_i32_1986 = arith.constant 3 : i32
    %3609 = arith.addi %3608, %c3_i32_1986 : i32
    %c9_i32_1987 = arith.constant 9 : i32
    %3610 = arith.muli %3609, %c9_i32_1987 : i32
    %c0_i32_1988 = arith.constant 0 : i32
    %3611 = arith.addi %3610, %c0_i32_1988 : i32
    %c0_i32_1989 = arith.constant 0 : i32
    %3612 = arith.addi %3611, %c0_i32_1989 : i32
    %3613 = vector.extract_strided_slice %3606 {offsets = [0, 0], sizes = [16, 16], strides = [1, 1]} : vector<16x18xf32> to vector<16x16xf32>
    %3614 = arith.index_cast %3612 : i32 to index
    %3615 = memref.load %arg2[%3614] : memref<288xf32, #tpu.memory_space<smem>>
    %3616 = vector.broadcast %3615 : f32 to vector<16x16xf32>
    %3617 = arith.mulf %3613, %3616 : vector<16x16xf32>
    %3618 = arith.addf %3604, %3617 : vector<16x16xf32>
    %c7_i32_1990 = arith.constant 7 : i32
    %3619 = arith.addi %0, %c7_i32_1990 : i32
    %c4_i32_1991 = arith.constant 4 : i32
    %3620 = arith.muli %3619, %c4_i32_1991 : i32
    %c3_i32_1992 = arith.constant 3 : i32
    %3621 = arith.addi %3620, %c3_i32_1992 : i32
    %c9_i32_1993 = arith.constant 9 : i32
    %3622 = arith.muli %3621, %c9_i32_1993 : i32
    %c0_i32_1994 = arith.constant 0 : i32
    %3623 = arith.addi %3622, %c0_i32_1994 : i32
    %c1_i32_1995 = arith.constant 1 : i32
    %3624 = arith.addi %3623, %c1_i32_1995 : i32
    %3625 = vector.extract_strided_slice %3606 {offsets = [0, 1], sizes = [16, 16], strides = [1, 1]} : vector<16x18xf32> to vector<16x16xf32>
    %3626 = arith.index_cast %3624 : i32 to index
    %3627 = memref.load %arg2[%3626] : memref<288xf32, #tpu.memory_space<smem>>
    %3628 = vector.broadcast %3627 : f32 to vector<16x16xf32>
    %3629 = arith.mulf %3625, %3628 : vector<16x16xf32>
    %3630 = arith.addf %3618, %3629 : vector<16x16xf32>
    %c7_i32_1996 = arith.constant 7 : i32
    %3631 = arith.addi %0, %c7_i32_1996 : i32
    %c4_i32_1997 = arith.constant 4 : i32
    %3632 = arith.muli %3631, %c4_i32_1997 : i32
    %c3_i32_1998 = arith.constant 3 : i32
    %3633 = arith.addi %3632, %c3_i32_1998 : i32
    %c9_i32_1999 = arith.constant 9 : i32
    %3634 = arith.muli %3633, %c9_i32_1999 : i32
    %c0_i32_2000 = arith.constant 0 : i32
    %3635 = arith.addi %3634, %c0_i32_2000 : i32
    %c2_i32_2001 = arith.constant 2 : i32
    %3636 = arith.addi %3635, %c2_i32_2001 : i32
    %3637 = vector.extract_strided_slice %3606 {offsets = [0, 2], sizes = [16, 16], strides = [1, 1]} : vector<16x18xf32> to vector<16x16xf32>
    %3638 = arith.index_cast %3636 : i32 to index
    %3639 = memref.load %arg2[%3638] : memref<288xf32, #tpu.memory_space<smem>>
    %3640 = vector.broadcast %3639 : f32 to vector<16x16xf32>
    %3641 = arith.mulf %3637, %3640 : vector<16x16xf32>
    %3642 = arith.addf %3630, %3641 : vector<16x16xf32>
    %c3_2002 = arith.constant 3 : index
    %c1_2003 = arith.constant 1 : index
    %c0_2004 = arith.constant 0 : index
    %3643 = vector.load %arg6[%c3_2002, %c1_2003, %c0_2004] : memref<4x18x18xf32, #tpu.memory_space<vmem>>, vector<1x16x18xf32>
    %3644 = vector.shape_cast %3643 : vector<1x16x18xf32> to vector<16x18xf32>
    %c7_i32_2005 = arith.constant 7 : i32
    %3645 = arith.addi %0, %c7_i32_2005 : i32
    %c4_i32_2006 = arith.constant 4 : i32
    %3646 = arith.muli %3645, %c4_i32_2006 : i32
    %c3_i32_2007 = arith.constant 3 : i32
    %3647 = arith.addi %3646, %c3_i32_2007 : i32
    %c9_i32_2008 = arith.constant 9 : i32
    %3648 = arith.muli %3647, %c9_i32_2008 : i32
    %c3_i32_2009 = arith.constant 3 : i32
    %3649 = arith.addi %3648, %c3_i32_2009 : i32
    %c0_i32_2010 = arith.constant 0 : i32
    %3650 = arith.addi %3649, %c0_i32_2010 : i32
    %3651 = vector.extract_strided_slice %3644 {offsets = [0, 0], sizes = [16, 16], strides = [1, 1]} : vector<16x18xf32> to vector<16x16xf32>
    %3652 = arith.index_cast %3650 : i32 to index
    %3653 = memref.load %arg2[%3652] : memref<288xf32, #tpu.memory_space<smem>>
    %3654 = vector.broadcast %3653 : f32 to vector<16x16xf32>
    %3655 = arith.mulf %3651, %3654 : vector<16x16xf32>
    %3656 = arith.addf %3642, %3655 : vector<16x16xf32>
    %c7_i32_2011 = arith.constant 7 : i32
    %3657 = arith.addi %0, %c7_i32_2011 : i32
    %c4_i32_2012 = arith.constant 4 : i32
    %3658 = arith.muli %3657, %c4_i32_2012 : i32
    %c3_i32_2013 = arith.constant 3 : i32
    %3659 = arith.addi %3658, %c3_i32_2013 : i32
    %c9_i32_2014 = arith.constant 9 : i32
    %3660 = arith.muli %3659, %c9_i32_2014 : i32
    %c3_i32_2015 = arith.constant 3 : i32
    %3661 = arith.addi %3660, %c3_i32_2015 : i32
    %c1_i32_2016 = arith.constant 1 : i32
    %3662 = arith.addi %3661, %c1_i32_2016 : i32
    %3663 = vector.extract_strided_slice %3644 {offsets = [0, 1], sizes = [16, 16], strides = [1, 1]} : vector<16x18xf32> to vector<16x16xf32>
    %3664 = arith.index_cast %3662 : i32 to index
    %3665 = memref.load %arg2[%3664] : memref<288xf32, #tpu.memory_space<smem>>
    %3666 = vector.broadcast %3665 : f32 to vector<16x16xf32>
    %3667 = arith.mulf %3663, %3666 : vector<16x16xf32>
    %3668 = arith.addf %3656, %3667 : vector<16x16xf32>
    %c7_i32_2017 = arith.constant 7 : i32
    %3669 = arith.addi %0, %c7_i32_2017 : i32
    %c4_i32_2018 = arith.constant 4 : i32
    %3670 = arith.muli %3669, %c4_i32_2018 : i32
    %c3_i32_2019 = arith.constant 3 : i32
    %3671 = arith.addi %3670, %c3_i32_2019 : i32
    %c9_i32_2020 = arith.constant 9 : i32
    %3672 = arith.muli %3671, %c9_i32_2020 : i32
    %c3_i32_2021 = arith.constant 3 : i32
    %3673 = arith.addi %3672, %c3_i32_2021 : i32
    %c2_i32_2022 = arith.constant 2 : i32
    %3674 = arith.addi %3673, %c2_i32_2022 : i32
    %3675 = vector.extract_strided_slice %3644 {offsets = [0, 2], sizes = [16, 16], strides = [1, 1]} : vector<16x18xf32> to vector<16x16xf32>
    %3676 = arith.index_cast %3674 : i32 to index
    %3677 = memref.load %arg2[%3676] : memref<288xf32, #tpu.memory_space<smem>>
    %3678 = vector.broadcast %3677 : f32 to vector<16x16xf32>
    %3679 = arith.mulf %3675, %3678 : vector<16x16xf32>
    %3680 = arith.addf %3668, %3679 : vector<16x16xf32>
    %c3_2023 = arith.constant 3 : index
    %c2_2024 = arith.constant 2 : index
    %c0_2025 = arith.constant 0 : index
    %3681 = vector.load %arg6[%c3_2023, %c2_2024, %c0_2025] : memref<4x18x18xf32, #tpu.memory_space<vmem>>, vector<1x16x18xf32>
    %3682 = vector.shape_cast %3681 : vector<1x16x18xf32> to vector<16x18xf32>
    %c7_i32_2026 = arith.constant 7 : i32
    %3683 = arith.addi %0, %c7_i32_2026 : i32
    %c4_i32_2027 = arith.constant 4 : i32
    %3684 = arith.muli %3683, %c4_i32_2027 : i32
    %c3_i32_2028 = arith.constant 3 : i32
    %3685 = arith.addi %3684, %c3_i32_2028 : i32
    %c9_i32_2029 = arith.constant 9 : i32
    %3686 = arith.muli %3685, %c9_i32_2029 : i32
    %c6_i32_2030 = arith.constant 6 : i32
    %3687 = arith.addi %3686, %c6_i32_2030 : i32
    %c0_i32_2031 = arith.constant 0 : i32
    %3688 = arith.addi %3687, %c0_i32_2031 : i32
    %3689 = vector.extract_strided_slice %3682 {offsets = [0, 0], sizes = [16, 16], strides = [1, 1]} : vector<16x18xf32> to vector<16x16xf32>
    %3690 = arith.index_cast %3688 : i32 to index
    %3691 = memref.load %arg2[%3690] : memref<288xf32, #tpu.memory_space<smem>>
    %3692 = vector.broadcast %3691 : f32 to vector<16x16xf32>
    %3693 = arith.mulf %3689, %3692 : vector<16x16xf32>
    %3694 = arith.addf %3680, %3693 : vector<16x16xf32>
    %c7_i32_2032 = arith.constant 7 : i32
    %3695 = arith.addi %0, %c7_i32_2032 : i32
    %c4_i32_2033 = arith.constant 4 : i32
    %3696 = arith.muli %3695, %c4_i32_2033 : i32
    %c3_i32_2034 = arith.constant 3 : i32
    %3697 = arith.addi %3696, %c3_i32_2034 : i32
    %c9_i32_2035 = arith.constant 9 : i32
    %3698 = arith.muli %3697, %c9_i32_2035 : i32
    %c6_i32_2036 = arith.constant 6 : i32
    %3699 = arith.addi %3698, %c6_i32_2036 : i32
    %c1_i32_2037 = arith.constant 1 : i32
    %3700 = arith.addi %3699, %c1_i32_2037 : i32
    %3701 = vector.extract_strided_slice %3682 {offsets = [0, 1], sizes = [16, 16], strides = [1, 1]} : vector<16x18xf32> to vector<16x16xf32>
    %3702 = arith.index_cast %3700 : i32 to index
    %3703 = memref.load %arg2[%3702] : memref<288xf32, #tpu.memory_space<smem>>
    %3704 = vector.broadcast %3703 : f32 to vector<16x16xf32>
    %3705 = arith.mulf %3701, %3704 : vector<16x16xf32>
    %3706 = arith.addf %3694, %3705 : vector<16x16xf32>
    %c7_i32_2038 = arith.constant 7 : i32
    %3707 = arith.addi %0, %c7_i32_2038 : i32
    %c4_i32_2039 = arith.constant 4 : i32
    %3708 = arith.muli %3707, %c4_i32_2039 : i32
    %c3_i32_2040 = arith.constant 3 : i32
    %3709 = arith.addi %3708, %c3_i32_2040 : i32
    %c9_i32_2041 = arith.constant 9 : i32
    %3710 = arith.muli %3709, %c9_i32_2041 : i32
    %c6_i32_2042 = arith.constant 6 : i32
    %3711 = arith.addi %3710, %c6_i32_2042 : i32
    %c2_i32_2043 = arith.constant 2 : i32
    %3712 = arith.addi %3711, %c2_i32_2043 : i32
    %3713 = vector.extract_strided_slice %3682 {offsets = [0, 2], sizes = [16, 16], strides = [1, 1]} : vector<16x18xf32> to vector<16x16xf32>
    %3714 = arith.index_cast %3712 : i32 to index
    %3715 = memref.load %arg2[%3714] : memref<288xf32, #tpu.memory_space<smem>>
    %3716 = vector.broadcast %3715 : f32 to vector<16x16xf32>
    %3717 = arith.mulf %3713, %3716 : vector<16x16xf32>
    %3718 = arith.addf %3706, %3717 : vector<16x16xf32>
    %cst_2044 = arith.constant 0.000000e+00 : f32
    %3719 = vector.broadcast %cst_2044 : f32 to vector<16x16xf32>
    %3720 = arith.maximumf %3718, %3719 : vector<16x16xf32>
    %c0_2045 = arith.constant 0 : index
    %c7 = arith.constant 7 : index
    %c0_2046 = arith.constant 0 : index
    %c0_2047 = arith.constant 0 : index
    %3721 = vector.load %arg5[%c0_2045, %c7, %c0_2046, %c0_2047] : memref<1x8x16x16xf32, #tpu.memory_space<vmem>>, vector<1x1x16x16xf32>
    %3722 = vector.shape_cast %3721 : vector<1x1x16x16xf32> to vector<16x16xf32>
    %3723 = vector.shape_cast %3720 : vector<16x16xf32> to vector<1x1x16x16xf32>
    tpu.vector_store %arg5[%c0_2045, %c7, %c0_2046, %c0_2047], %3723 {strides = array<i32>} : memref<1x8x16x16xf32, #tpu.memory_space<vmem>>, vector<1x1x16x16xf32>,
    return
  }
  func.func @transform_0(%arg0: i32, %arg1: i32, %arg2: memref<288xf32, #tpu.memory_space<smem>>, %arg3: memref<8xf32, #tpu.memory_space<smem>>) -> (i32, i32, i32, i32) {
    %c0_i32 = arith.constant 0 : i32
    %c0_i32_0 = arith.constant 0 : i32
    %c0_i32_1 = arith.constant 0 : i32
    %c0_i32_2 = arith.constant 0 : i32
    return %arg0, %c0_i32, %c0_i32_0, %c0_i32_1 : i32, i32, i32, i32
  }
  func.func @transform_1(%arg0: i32, %arg1: i32, %arg2: memref<288xf32, #tpu.memory_space<smem>>, %arg3: memref<8xf32, #tpu.memory_space<smem>>) -> (i32, i32, i32, i32) {
    %c0_i32 = arith.constant 0 : i32
    %c0_i32_0 = arith.constant 0 : i32
    %c0_i32_1 = arith.constant 0 : i32
    return %arg0, %arg1, %c0_i32, %c0_i32_0 : i32, i32, i32, i32
  }
}

</mosaic_0001>

<llo_original>
// kernel: conv_bn_relu.1
$region0: #{conv_bn_relu.1}
  #allocation0 [shape = 'u32[]', space=smem, size = 0x4, offset = 0x4, fixed_abs, tag = 'smem constant byte address 0x4 - core index']
  #allocation1 [shape = 'u32[144,128]{1,0:T(1,128)}', space=vmem, size = 0x12000, scoped, tag = 'internal scratch']
  #allocation2 [shape = 'f32[4,18,18]{2,1,0:T(8,128)}', space=vmem, size = 0xc000, scoped, tag = 'scratch operand']
  #allocation3 [shape = 's32[1]{0}', space=sflag, size = 0x4, scoped, tag = 'scoped memory for conv_bn_relu.1']
  #allocation4 [shape = 'u8[1536]{0}', space=smem, size = 0x600, scoped, tag = 'prefetched SMEM operand 0']
  #allocation5 [shape = 'u8[512]{0}', space=smem, size = 0x200, scoped, tag = 'prefetched SMEM operand 1']
  %s0 = inlined_call_operand.vmem [shape: f32[288], index: 0, kind: input, shape index: {}]
  %s1 = inlined_call_operand.vmem [shape: f32[8], index: 1, kind: input, shape index: {}]
  %s2 = inlined_call_operand.vmem [shape: f32[2,4,16,16], index: 2, kind: input, shape index: {}]
  %s3 = inlined_call_operand.hbm [shape: f32[2,8,16,16], index: 3, kind: output, shape index: {}]
  %s4 = sld [smem:[#allocation0]]
  $region41: #{conv_bn_relu.1} parent=0
    _
  %s6 = ssub.s32 1, %s4
  %s7 = scalar_select 0, %s6, %s4
  %s8 = sshll.u32 %s0, 4
  %s9 = int_to_ptr.vmem [resolvable:$true] %s8
  %11 = dma.vmem_to_smem %s9, 48, [#allocation4], [#allocation3]
  %s12 = sshll.u32 %s1, 4
  %s13 = int_to_ptr.vmem [resolvable:$true] %s12
  %15 = dma.vmem_to_smem %s13, 16, [#allocation5], [#allocation3]
  %16 = dma.done [#allocation3], 64
  %17 = sfence
  $region1: #{conv_bn_relu.1} parent=0
    #allocation6 [shape = 'u8[131072]{0}', space=vmem, size = 0x20000, scoped, tag = 'output window, operand 0']
    #allocation7 [shape = 's32[2]{0}', space=sflag, size = 0x8, scoped, tag = 'scoped memory for conv_bn_relu.1']
    %18 = vsyncpa [#allocation7], 0
    %s19 = scalar_lea.sflag [#allocation7], 1
    %20 = vsyncpa %s19, 0
    loop: start=0, step=1, limit=4
    $region2: #{conv_bn_relu.1} parent=1 // loop_pre_header
      _
    $region3: #{conv_bn_relu.1} parent=1 // loop_header
      %s22 = sphi 0, %s26
      %p23 = scmp.ge.s32.totalorder %s22, 4
      %s29 = sphi 0, %s41
      %s30 = sphi 0, %s37
      %s31 = sphi 0, %s29
      %s32 = sphi 0, %s30
      %s33 = sphi 0, %s31
      %s34 = sphi 0, %s32
      %s44 = sphi 0, %s46
      %s47 = sphi 0, %s44
      %s48 = sphi 0, %s47
      %s64 = sphi 0, %s48
      %s72 = sphi 0, %s74
      %s75 = sphi 0, %s72
      %s76 = sphi 0, %s75
      %s92 = sphi 0, %s76
    $region4: #{conv_bn_relu.1} parent=1 // loop_header_branch
      %25 = sbr.rel (%p23) target = $region8
    $region5: #{conv_bn_relu.1} parent=1 // loop_body
      %s27 = ssub.s32 %s22, 1
      %s28 = ssub.s32 %s22, 2
      %s35 = sadd.s32 1, %s30
      %p36 = scmp.ge.s32.totalorder %s35, 1
      %s37 = scalar_select %p36, 0, %s35
      %s38 = sadd.s32 1, %s29
      %s39 = scalar_select %p36, %s38, %s29
      %p40 = scmp.ge.s32.totalorder %s39, 2
      %s41 = scalar_select %p40, 0, %s39
      %s42 = ssub.s32 %s29, %s41
      %p43 = scmp.eq.s32.totalorder %s42, 0
      %s45 = sadd.s32 %s44, 1
      %s46 = scalar_select %p43, %s44, %s45
      %p49 = pneg %p43
      %p50 = scmp.eq.s32.totalorder %s22, 1
      %p51 = por %p49, %p50
      %p52 = scmp.ne.s32.totalorder %s44, %s47
      %p53 = scmp.eq.s32.totalorder %s22, 0
      %p54 = por %p52, %p53
      %p55 = scmp.ne.s32.totalorder %s44, %s47
      %p56 = scmp.eq.s32.totalorder %s27, 1
      %p57 = por %p55, %p56
      %p58 = scmp.ne.s32.totalorder %s47, %s48
      %p59 = scmp.eq.s32.totalorder %s27, 0
      %p60 = por %p58, %p59
      %p61 = scmp.ne.s32.totalorder %s47, %s48
      %p62 = scmp.eq.s32.totalorder %s28, 1
      %p63 = por %p61, %p62
      %p65 = scmp.ne.s32.totalorder %s48, %s64
      %p66 = scmp.eq.s32.totalorder %s28, 0
      %p67 = por %p65, %p66
      %s68 = ssub.s32 %s29, %s41
      %s69 = ssub.s32 %s30, %s37
      %s70 = sor.u32 %s68, %s69
      %p71 = scmp.eq.s32.totalorder %s70, 0
      %s73 = sadd.s32 %s72, 1
      %s74 = scalar_select %p71, %s72, %s73
      %p77 = pneg %p71
      %p78 = scmp.eq.s32.totalorder %s22, 1
      %p79 = por %p77, %p78
      %p80 = scmp.ne.s32.totalorder %s72, %s75
      %p81 = scmp.eq.s32.totalorder %s22, 0
      %p82 = por %p80, %p81
      %p83 = scmp.ne.s32.totalorder %s72, %s75
      %p84 = scmp.eq.s32.totalorder %s27, 1
      %p85 = por %p83, %p84
      %p86 = scmp.ne.s32.totalorder %s75, %s76
      %p87 = scmp.eq.s32.totalorder %s27, 0
      %p88 = por %p86, %p87
      %p89 = scmp.ne.s32.totalorder %s75, %s76
      %p90 = scmp.eq.s32.totalorder %s28, 1
      %p91 = por %p89, %p90
      %p93 = scmp.ne.s32.totalorder %s76, %s92
      %p94 = scmp.eq.s32.totalorder %s28, 0
      %p95 = por %p93, %p94
      %p96 = scmp.le.s32.totalorder 1, %s22
      %p97 = scmp.lt.s32.totalorder %s22, 3
      %p98 = pnand %p96, %p97
      %p99 = pneg %p98
      // Predicated region
      $region9: #{conv_bn_relu.1} parent=5 // pred_check
        _
      $region10: #{conv_bn_relu.1} parent=5 // pred_check_branch
        %101 = sbr.rel (%p98) target = $region12
      $region11: #{conv_bn_relu.1} parent=5 // pred_region
        %s102 = ssub.s32 %s22, 1
      $region12: #{conv_bn_relu.1} parent=5 // pred_fallthru
        _
      %p103 = scmp.lt.s32.totalorder %s22, 2
      // Predicated region
      $region13: #{conv_bn_relu.1} parent=5 // pred_check
        %p104 = pneg %p103
      $region14: #{conv_bn_relu.1} parent=5 // pred_check_branch
        %106 = sbr.rel (%p104) target = $region16
      $region15: #{conv_bn_relu.1} parent=5 // pred_region
        // Predicated region
        $region17: #{conv_bn_relu.1} parent=15 // pred_check
          %p107 = pneg %p54
        $region18: #{conv_bn_relu.1} parent=15 // pred_check_branch
          %109 = sbr.rel (%p107) target = $region20
        $region19: #{conv_bn_relu.1} parent=15 // pred_region
          %p110 = scmp.lt.s32.totalorder %s29, 1
          %s111 = scalar_select %p110, %s29, 1
          %s112 = smul.addr %s111, 8
          %s113 = smul.addr %s112, 8
          %s114 = scalar_lea.vmem %s2, %s113
        $region20: #{conv_bn_relu.1} parent=15 // pred_fallthru
          _
      $region16: #{conv_bn_relu.1} parent=5 // pred_fallthru
        _
      %p115 = scmp.le.s32.totalorder 1, %s22
      %p116 = scmp.lt.s32.totalorder %s22, 3
      %p117 = pnand %p115, %p116
      %p118 = pneg %p117
      // Predicated region
      $region21: #{conv_bn_relu.1} parent=5 // pred_check
        _
      $region22: #{conv_bn_relu.1} parent=5 // pred_check_branch
        %120 = sbr.rel (%p117) target = $region24
      $region23: #{conv_bn_relu.1} parent=5 // pred_region
        %s121 = ssub.s32 %s22, 1
        %p122 = scmp.lt.s32.totalorder %s31, 1
        %s123 = scalar_select %p122, %s31, 1
        %s124 = smul.addr %s123, 8
        %s125 = smul.addr %s124, 8
        %s126 = scalar_lea.vmem %s2, %s125
        %p127 = pneg %p60
        %p128 = pneg %p57
        %p129 = pneg %p88
        %p130 = pneg %p85
        %s131 = sand.u32 %s75, 1
        %s132 = scalar_lea.sflag [#allocation7], %s131
        %s133 = sand.u32 %s75, 1
        %s134 = smul.addr %s133, 128
        %s135 = scalar_lea.vmem [#allocation6], %s134
        %p136 = scmp.lt.s32.totalorder %s31, 1
        %s137 = scalar_select %p136, %s31, 1
        %s138 = smul.addr %s137, 8
        %s139 = smul.addr %s138, 8
        %s140 = scalar_lea.vmem %s2, %s139
        %s141 = smul.u32 8, %s32
        %s142 = smul.u32 %s32, 8
        %p143 = scmp.eq.s32.totalorder %s32, 0
        // Predicated region
        $region25: #{conv_bn_relu.1} parent=23 // pred_check
          %p144 = pneg %p143
        $region26: #{conv_bn_relu.1} parent=23 // pred_check_branch
          %146 = sbr.rel (%p144) target = $region28
        $region27: #{conv_bn_relu.1} parent=23 // pred_region
          %vm147 = vcmask 139264
          %148 = vst.msk [vmem:[#allocation2] sm:$0x1] %vm147, 0.0
          %149 = vst.msk [vmem:[#allocation2 + $0x18] sm:$0x1] %vm147, 0.0
          %150 = vst.msk [vmem:[#allocation2 + $0x30] sm:$0x1] %vm147, 0.0
          %151 = vst.msk [vmem:[#allocation2 + $0x48] sm:$0x1] %vm147, 0.0
          %152 = vst.msk [vmem:[#allocation2 + $0x11] sm:$0x1] %vm147, 0.0
          %153 = vst.msk [vmem:[#allocation2 + $0x29] sm:$0x1] %vm147, 0.0
          %154 = vst.msk [vmem:[#allocation2 + $0x41] sm:$0x1] %vm147, 0.0
          %155 = vst.msk [vmem:[#allocation2 + $0x59] sm:$0x1] %vm147, 0.0
          %vm156 = vcmask 7168
          %157 = vst.msk [vmem:[#allocation2 + $0x1] sm:$0xff] %vm156, 0.0
          %158 = vst.msk [vmem:[#allocation2 + $0x9] sm:$0xff] %vm156, 0.0
          %159 = vst.msk [vmem:[#allocation2 + $0x19] sm:$0xff] %vm156, 0.0
          %160 = vst.msk [vmem:[#allocation2 + $0x21] sm:$0xff] %vm156, 0.0
          %161 = vst.msk [vmem:[#allocation2 + $0x31] sm:$0xff] %vm156, 0.0
          %162 = vst.msk [vmem:[#allocation2 + $0x39] sm:$0xff] %vm156, 0.0
          %163 = vst.msk [vmem:[#allocation2 + $0x49] sm:$0xff] %vm156, 0.0
          %164 = vst.msk [vmem:[#allocation2 + $0x51] sm:$0xff] %vm156, 0.0
          %vm165 = vcmask 146568
          %166 = vst.msk [vmem:[#allocation2 + $0x1] sm:$0xff] %vm165, 0.0
          %167 = vst.msk [vmem:[#allocation2 + $0x9] sm:$0xff] %vm165, 0.0
          %168 = vst.msk [vmem:[#allocation2 + $0x19] sm:$0xff] %vm165, 0.0
          %169 = vst.msk [vmem:[#allocation2 + $0x21] sm:$0xff] %vm165, 0.0
          %170 = vst.msk [vmem:[#allocation2 + $0x31] sm:$0xff] %vm165, 0.0
          %171 = vst.msk [vmem:[#allocation2 + $0x39] sm:$0xff] %vm165, 0.0
          %172 = vst.msk [vmem:[#allocation2 + $0x49] sm:$0xff] %vm165, 0.0
          %173 = vst.msk [vmem:[#allocation2 + $0x51] sm:$0xff] %vm165, 0.0
          %v174 = vld [vmem:[%s140] sm:$0xff]
          %v175 = vld [vmem:[%s140 + $0x8] sm:$0xff]
          %v176 = vld [vmem:[%s140 + $0x10] sm:$0xff]
          %v177 = vld [vmem:[%s140 + $0x18] sm:$0xff]
          %v178 = vld [vmem:[%s140 + $0x20] sm:$0xff]
          %v179 = vld [vmem:[%s140 + $0x28] sm:$0xff]
          %v180 = vld [vmem:[%s140 + $0x30] sm:$0xff]
          %v181 = vld [vmem:[%s140 + $0x38] sm:$0xff]
          %190 = vrot.lane.b32.xlu0 %v174, 1
          %v191 = vpop.permute.xlu0 %190
          %192 = vrot.lane.b32.xlu0 %v175, 1
          %v193 = vpop.permute.xlu0 %192
          %194 = vrot.lane.b32.xlu0 %v176, 1
          %v195 = vpop.permute.xlu0 %194
          %196 = vrot.lane.b32.xlu0 %v177, 1
          %v197 = vpop.permute.xlu0 %196
          %198 = vrot.lane.b32.xlu0 %v178, 1
          %v199 = vpop.permute.xlu0 %198
          %200 = vrot.lane.b32.xlu0 %v179, 1
          %v201 = vpop.permute.xlu0 %200
          %202 = vrot.lane.b32.xlu0 %v180, 1
          %v203 = vpop.permute.xlu0 %202
          %204 = vrot.lane.b32.xlu0 %v181, 1
          %v205 = vpop.permute.xlu0 %204
          %vm214 = vcmask 138248
          %215 = vst.msk [vmem:[#allocation2 + $0x1] sm:$0xff] %vm214, %v191
          %216 = vst.msk [vmem:[#allocation2 + $0x9] sm:$0xff] %vm214, %v193
          %217 = vst.msk [vmem:[#allocation2 + $0x19] sm:$0xff] %vm214, %v195
          %218 = vst.msk [vmem:[#allocation2 + $0x21] sm:$0xff] %vm214, %v197
          %219 = vst.msk [vmem:[#allocation2 + $0x31] sm:$0xff] %vm214, %v199
          %220 = vst.msk [vmem:[#allocation2 + $0x39] sm:$0xff] %vm214, %v201
          %221 = vst.msk [vmem:[#allocation2 + $0x49] sm:$0xff] %vm214, %v203
          %222 = vst.msk [vmem:[#allocation2 + $0x51] sm:$0xff] %vm214, %v205
        $region28: #{conv_bn_relu.1} parent=23 // pred_fallthru
          _
        %s223 = sld [smem:[#allocation5 + %s142]]
        %v224 = vstv %s223
        %v225 = vld [vmem:[#allocation2] sm:$0xff]
        %v226 = vld [vmem:[#allocation2 + $0x8] sm:$0xff]
        %s227 = smul.u32 %s32, 288
        %s228 = sld [smem:[#allocation4 + %s227]]
        %v229 = vstv %s228
        %v230 = vmul.f32 %v225, %v229
        %v231 = vmul.f32 %v226, %v229
        %v232 = vadd.f32 %v224, %v230
        %v233 = vadd.f32 %v224, %v231
        %s234 = sadd.s32 %s227, 1
        %s235 = sld [smem:[#allocation4 + %s234]]
        %v236 = vstv %s235
        %v237 = vmul.f32 %v225, %v236
        %v238 = vmul.f32 %v226, %v236
        %241 = vrot.lane.b32.xlu0 %v237, 127
        %v242 = vpop.permute.xlu0 %241
        %243 = vrot.lane.b32.xlu0 %v238, 127
        %v244 = vpop.permute.xlu0 %243
        %v247 = vadd.f32 %v232, %v242
        %v248 = vadd.f32 %v233, %v244
        %s249 = sadd.s32 %s227, 2
        %s250 = sld [smem:[#allocation4 + %s249]]
        %v251 = vstv %s250
        %v252 = vmul.f32 %v225, %v251
        %v253 = vmul.f32 %v226, %v251
        %256 = vrot.lane.b32.xlu0 %v252, 126
        %v257 = vpop.permute.xlu0 %256
        %258 = vrot.lane.b32.xlu0 %v253, 126
        %v259 = vpop.permute.xlu0 %258
        %v262 = vadd.f32 %v247, %v257
        %v263 = vadd.f32 %v248, %v259
        %v264 = vld [vmem:[#allocation2 + $0x1] sm:$0xff]
        %v265 = vld [vmem:[#allocation2 + $0x9] sm:$0xff]
        %s266 = sadd.s32 %s227, 3
        %s267 = sld [smem:[#allocation4 + %s266]]
        %v268 = vstv %s267
        %v269 = vmul.f32 %v264, %v268
        %v270 = vmul.f32 %v265, %v268
        %v271 = vadd.f32 %v262, %v269
        %v272 = vadd.f32 %v263, %v270
        %s273 = sadd.s32 %s227, 4
        %s274 = sld [smem:[#allocation4 + %s273]]
        %v275 = vstv %s274
        %v276 = vmul.f32 %v264, %v275
        %v277 = vmul.f32 %v265, %v275
        %280 = vrot.lane.b32.xlu0 %v276, 127
        %v281 = vpop.permute.xlu0 %280
        %282 = vrot.lane.b32.xlu0 %v277, 127
        %v283 = vpop.permute.xlu0 %282
        %v286 = vadd.f32 %v271, %v281
        %v287 = vadd.f32 %v272, %v283
        %s288 = sadd.s32 %s227, 5
        %s289 = sld [smem:[#allocation4 + %s288]]
        %v290 = vstv %s289
        %v291 = vmul.f32 %v264, %v290
        %v292 = vmul.f32 %v265, %v290
        %295 = vrot.lane.b32.xlu0 %v291, 126
        %v296 = vpop.permute.xlu0 %295
        %297 = vrot.lane.b32.xlu0 %v292, 126
        %v298 = vpop.permute.xlu0 %297
        %v301 = vadd.f32 %v286, %v296
        %v302 = vadd.f32 %v287, %v298
        %v303 = vld [vmem:[#allocation2 + $0x2] sm:$0xff]
        %v304 = vld [vmem:[#allocation2 + $0xa] sm:$0xff]
        %s305 = sadd.s32 %s227, 6
        %s306 = sld [smem:[#allocation4 + %s305]]
        %v307 = vstv %s306
        %v308 = vmul.f32 %v303, %v307
        %v309 = vmul.f32 %v304, %v307
        %v310 = vadd.f32 %v301, %v308
        %v311 = vadd.f32 %v302, %v309
        %s312 = sadd.s32 %s227, 7
        %s313 = sld [smem:[#allocation4 + %s312]]
        %v314 = vstv %s313
        %v315 = vmul.f32 %v303, %v314
        %v316 = vmul.f32 %v304, %v314
        %319 = vrot.lane.b32.xlu0 %v315, 127
        %v320 = vpop.permute.xlu0 %319
        %321 = vrot.lane.b32.xlu0 %v316, 127
        %v322 = vpop.permute.xlu0 %321
        %v325 = vadd.f32 %v310, %v320
        %v326 = vadd.f32 %v311, %v322
        %s327 = sadd.s32 %s227, 8
        %s328 = sld [smem:[#allocation4 + %s327]]
        %v329 = vstv %s328
        %v330 = vmul.f32 %v303, %v329
        %v331 = vmul.f32 %v304, %v329
        %334 = vrot.lane.b32.xlu0 %v330, 126
        %v335 = vpop.permute.xlu0 %334
        %336 = vrot.lane.b32.xlu0 %v331, 126
        %v337 = vpop.permute.xlu0 %336
        %v340 = vadd.f32 %v325, %v335
        %v341 = vadd.f32 %v326, %v337
        %s342 = scalar_lea.vmem [#allocation2], 24
        %v343 = vld [vmem:[%s342] sm:$0xff]
        %v344 = vld [vmem:[%s342 + $0x8] sm:$0xff]
        %s345 = smul.u32 %s32, 32
        %s346 = sadd.s32 %s345, 1
        %s347 = smul.u32 %s346, 9
        %s348 = sld [smem:[#allocation4 + %s347]]
        %v349 = vstv %s348
        %v350 = vmul.f32 %v343, %v349
        %v351 = vmul.f32 %v344, %v349
        %v352 = vadd.f32 %v340, %v350
        %v353 = vadd.f32 %v341, %v351
        %s354 = sadd.s32 %s347, 1
        %s355 = sld [smem:[#allocation4 + %s354]]
        %v356 = vstv %s355
        %v357 = vmul.f32 %v343, %v356
        %v358 = vmul.f32 %v344, %v356
        %361 = vrot.lane.b32.xlu0 %v357, 127
        %v362 = vpop.permute.xlu0 %361
        %363 = vrot.lane.b32.xlu0 %v358, 127
        %v364 = vpop.permute.xlu0 %363
        %v367 = vadd.f32 %v352, %v362
        %v368 = vadd.f32 %v353, %v364
        %s369 = sadd.s32 %s347, 2
        %s370 = sld [smem:[#allocation4 + %s369]]
        %v371 = vstv %s370
        %v372 = vmul.f32 %v343, %v371
        %v373 = vmul.f32 %v344, %v371
        %376 = vrot.lane.b32.xlu0 %v372, 126
        %v377 = vpop.permute.xlu0 %376
        %378 = vrot.lane.b32.xlu0 %v373, 126
        %v379 = vpop.permute.xlu0 %378
        %v382 = vadd.f32 %v367, %v377
        %v383 = vadd.f32 %v368, %v379
        %v384 = vld [vmem:[%s342 + $0x1] sm:$0xff]
        %v385 = vld [vmem:[%s342 + $0x9] sm:$0xff]
        %s386 = sadd.s32 %s347, 3
        %s387 = sld [smem:[#allocation4 + %s386]]
        %v388 = vstv %s387
        %v389 = vmul.f32 %v384, %v388
        %v390 = vmul.f32 %v385, %v388
        %v391 = vadd.f32 %v382, %v389
        %v392 = vadd.f32 %v383, %v390
        %s393 = sadd.s32 %s347, 4
        %s394 = sld [smem:[#allocation4 + %s393]]
        %v395 = vstv %s394
        %v396 = vmul.f32 %v384, %v395
        %v397 = vmul.f32 %v385, %v395
        %400 = vrot.lane.b32.xlu0 %v396, 127
        %v401 = vpop.permute.xlu0 %400
        %402 = vrot.lane.b32.xlu0 %v397, 127
        %v403 = vpop.permute.xlu0 %402
        %v406 = vadd.f32 %v391, %v401
        %v407 = vadd.f32 %v392, %v403
        %s408 = sadd.s32 %s347, 5
        %s409 = sld [smem:[#allocation4 + %s408]]
        %v410 = vstv %s409
        %v411 = vmul.f32 %v384, %v410
        %v412 = vmul.f32 %v385, %v410
        %415 = vrot.lane.b32.xlu0 %v411, 126
        %v416 = vpop.permute.xlu0 %415
        %417 = vrot.lane.b32.xlu0 %v412, 126
        %v418 = vpop.permute.xlu0 %417
        %v421 = vadd.f32 %v406, %v416
        %v422 = vadd.f32 %v407, %v418
        %v423 = vld [vmem:[%s342 + $0x2] sm:$0xff]
        %v424 = vld [vmem:[%s342 + $0xa] sm:$0xff]
        %s425 = sadd.s32 %s347, 6
        %s426 = sld [smem:[#allocation4 + %s425]]
        %v427 = vstv %s426
        %v428 = vmul.f32 %v423, %v427
        %v429 = vmul.f32 %v424, %v427
        %v430 = vadd.f32 %v421, %v428
        %v431 = vadd.f32 %v422, %v429
        %s432 = sadd.s32 %s347, 7
        %s433 = sld [smem:[#allocation4 + %s432]]
        %v434 = vstv %s433
        %v435 = vmul.f32 %v423, %v434
        %v436 = vmul.f32 %v424, %v434
        %439 = vrot.lane.b32.xlu0 %v435, 127
        %v440 = vpop.permute.xlu0 %439
        %441 = vrot.lane.b32.xlu0 %v436, 127
        %v442 = vpop.permute.xlu0 %441
        %v445 = vadd.f32 %v430, %v440
        %v446 = vadd.f32 %v431, %v442
        %s447 = sadd.s32 %s347, 8
        %s448 = sld [smem:[#allocation4 + %s447]]
        %v449 = vstv %s448
        %v450 = vmul.f32 %v423, %v449
        %v451 = vmul.f32 %v424, %v449
        %454 = vrot.lane.b32.xlu0 %v450, 126
        %v455 = vpop.permute.xlu0 %454
        %456 = vrot.lane.b32.xlu0 %v451, 126
        %v457 = vpop.permute.xlu0 %456
        %v460 = vadd.f32 %v445, %v455
        %v461 = vadd.f32 %v446, %v457
        %s462 = scalar_lea.vmem [#allocation2], 48
        %v463 = vld [vmem:[%s462] sm:$0xff]
        %v464 = vld [vmem:[%s462 + $0x8] sm:$0xff]
        %s465 = sadd.s32 %s345, 2
        %s466 = smul.u32 %s465, 9
        %s467 = sld [smem:[#allocation4 + %s466]]
        %v468 = vstv %s467
        %v469 = vmul.f32 %v463, %v468
        %v470 = vmul.f32 %v464, %v468
        %v471 = vadd.f32 %v460, %v469
        %v472 = vadd.f32 %v461, %v470
        %s473 = sadd.s32 %s466, 1
        %s474 = sld [smem:[#allocation4 + %s473]]
        %v475 = vstv %s474
        %v476 = vmul.f32 %v463, %v475
        %v477 = vmul.f32 %v464, %v475
        %480 = vrot.lane.b32.xlu0 %v476, 127
        %v481 = vpop.permute.xlu0 %480
        %482 = vrot.lane.b32.xlu0 %v477, 127
        %v483 = vpop.permute.xlu0 %482
        %v486 = vadd.f32 %v471, %v481
        %v487 = vadd.f32 %v472, %v483
        %s488 = sadd.s32 %s466, 2
        %s489 = sld [smem:[#allocation4 + %s488]]
        %v490 = vstv %s489
        %v491 = vmul.f32 %v463, %v490
        %v492 = vmul.f32 %v464, %v490
        %495 = vrot.lane.b32.xlu0 %v491, 126
        %v496 = vpop.permute.xlu0 %495
        %497 = vrot.lane.b32.xlu0 %v492, 126
        %v498 = vpop.permute.xlu0 %497
        %v501 = vadd.f32 %v486, %v496
        %v502 = vadd.f32 %v487, %v498
        %v503 = vld [vmem:[%s462 + $0x1] sm:$0xff]
        %v504 = vld [vmem:[%s462 + $0x9] sm:$0xff]
        %s505 = sadd.s32 %s466, 3
        %s506 = sld [smem:[#allocation4 + %s505]]
        %v507 = vstv %s506
        %v508 = vmul.f32 %v503, %v507
        %v509 = vmul.f32 %v504, %v507
        %v510 = vadd.f32 %v501, %v508
        %v511 = vadd.f32 %v502, %v509
        %s512 = sadd.s32 %s466, 4
        %s513 = sld [smem:[#allocation4 + %s512]]
        %v514 = vstv %s513
        %v515 = vmul.f32 %v503, %v514
        %v516 = vmul.f32 %v504, %v514
        %519 = vrot.lane.b32.xlu0 %v515, 127
        %v520 = vpop.permute.xlu0 %519
        %521 = vrot.lane.b32.xlu0 %v516, 127
        %v522 = vpop.permute.xlu0 %521
        %v525 = vadd.f32 %v510, %v520
        %v526 = vadd.f32 %v511, %v522
        %s527 = sadd.s32 %s466, 5
        %s528 = sld [smem:[#allocation4 + %s527]]
        %v529 = vstv %s528
        %v530 = vmul.f32 %v503, %v529
        %v531 = vmul.f32 %v504, %v529
        %534 = vrot.lane.b32.xlu0 %v530, 126
        %v535 = vpop.permute.xlu0 %534
        %536 = vrot.lane.b32.xlu0 %v531, 126
        %v537 = vpop.permute.xlu0 %536
        %v540 = vadd.f32 %v525, %v535
        %v541 = vadd.f32 %v526, %v537
        %v542 = vld [vmem:[%s462 + $0x2] sm:$0xff]
        %v543 = vld [vmem:[%s462 + $0xa] sm:$0xff]
        %s544 = sadd.s32 %s466, 6
        %s545 = sld [smem:[#allocation4 + %s544]]
        %v546 = vstv %s545
        %v547 = vmul.f32 %v542, %v546
        %v548 = vmul.f32 %v543, %v546
        %v549 = vadd.f32 %v540, %v547
        %v550 = vadd.f32 %v541, %v548
        %s551 = sadd.s32 %s466, 7
        %s552 = sld [smem:[#allocation4 + %s551]]
        %v553 = vstv %s552
        %v554 = vmul.f32 %v542, %v553
        %v555 = vmul.f32 %v543, %v553
        %558 = vrot.lane.b32.xlu0 %v554, 127
        %v559 = vpop.permute.xlu0 %558
        %560 = vrot.lane.b32.xlu0 %v555, 127
        %v561 = vpop.permute.xlu0 %560
        %v564 = vadd.f32 %v549, %v559
        %v565 = vadd.f32 %v550, %v561
        %s566 = sadd.s32 %s466, 8
        %s567 = sld [smem:[#allocation4 + %s566]]
        %v568 = vstv %s567
        %v569 = vmul.f32 %v542, %v568
        %v570 = vmul.f32 %v543, %v568
        %573 = vrot.lane.b32.xlu0 %v569, 126
        %v574 = vpop.permute.xlu0 %573
        %575 = vrot.lane.b32.xlu0 %v570, 126
        %v576 = vpop.permute.xlu0 %575
        %v579 = vadd.f32 %v564, %v574
        %v580 = vadd.f32 %v565, %v576
        %s581 = scalar_lea.vmem [#allocation2], 72
        %v582 = vld [vmem:[%s581] sm:$0xff]
        %v583 = vld [vmem:[%s581 + $0x8] sm:$0xff]
        %s584 = sadd.s32 %s345, 3
        %s585 = smul.u32 %s584, 9
        %s586 = sld [smem:[#allocation4 + %s585]]
        %v587 = vstv %s586
        %v588 = vmul.f32 %v582, %v587
        %v589 = vmul.f32 %v583, %v587
        %v590 = vadd.f32 %v579, %v588
        %v591 = vadd.f32 %v580, %v589
        %s592 = sadd.s32 %s585, 1
        %s593 = sld [smem:[#allocation4 + %s592]]
        %v594 = vstv %s593
        %v595 = vmul.f32 %v582, %v594
        %v596 = vmul.f32 %v583, %v594
        %599 = vrot.lane.b32.xlu0 %v595, 127
        %v600 = vpop.permute.xlu0 %599
        %601 = vrot.lane.b32.xlu0 %v596, 127
        %v602 = vpop.permute.xlu0 %601
        %v605 = vadd.f32 %v590, %v600
        %v606 = vadd.f32 %v591, %v602
        %s607 = sadd.s32 %s585, 2
        %s608 = sld [smem:[#allocation4 + %s607]]
        %v609 = vstv %s608
        %v610 = vmul.f32 %v582, %v609
        %v611 = vmul.f32 %v583, %v609
        %614 = vrot.lane.b32.xlu0 %v610, 126
        %v615 = vpop.permute.xlu0 %614
        %616 = vrot.lane.b32.xlu0 %v611, 126
        %v617 = vpop.permute.xlu0 %616
        %v620 = vadd.f32 %v605, %v615
        %v621 = vadd.f32 %v606, %v617
        %v622 = vld [vmem:[%s581 + $0x1] sm:$0xff]
        %v623 = vld [vmem:[%s581 + $0x9] sm:$0xff]
        %s624 = sadd.s32 %s585, 3
        %s625 = sld [smem:[#allocation4 + %s624]]
        %v626 = vstv %s625
        %v627 = vmul.f32 %v622, %v626
        %v628 = vmul.f32 %v623, %v626
        %v629 = vadd.f32 %v620, %v627
        %v630 = vadd.f32 %v621, %v628
        %s631 = sadd.s32 %s585, 4
        %s632 = sld [smem:[#allocation4 + %s631]]
        %v633 = vstv %s632
        %v634 = vmul.f32 %v622, %v633
        %v635 = vmul.f32 %v623, %v633
        %638 = vrot.lane.b32.xlu0 %v634, 127
        %v639 = vpop.permute.xlu0 %638
        %640 = vrot.lane.b32.xlu0 %v635, 127
        %v641 = vpop.permute.xlu0 %640
        %v644 = vadd.f32 %v629, %v639
        %v645 = vadd.f32 %v630, %v641
        %s646 = sadd.s32 %s585, 5
        %s647 = sld [smem:[#allocation4 + %s646]]
        %v648 = vstv %s647
        %v649 = vmul.f32 %v622, %v648
        %v650 = vmul.f32 %v623, %v648
        %653 = vrot.lane.b32.xlu0 %v649, 126
        %v654 = vpop.permute.xlu0 %653
        %655 = vrot.lane.b32.xlu0 %v650, 126
        %v656 = vpop.permute.xlu0 %655
        %v659 = vadd.f32 %v644, %v654
        %v660 = vadd.f32 %v645, %v656
        %v661 = vld [vmem:[%s581 + $0x2] sm:$0xff]
        %v662 = vld [vmem:[%s581 + $0xa] sm:$0xff]
        %s663 = sadd.s32 %s585, 6
        %s664 = sld [smem:[#allocation4 + %s663]]
        %v665 = vstv %s664
        %v666 = vmul.f32 %v661, %v665
        %v667 = vmul.f32 %v662, %v665
        %v668 = vadd.f32 %v659, %v666
        %v669 = vadd.f32 %v660, %v667
        %s670 = sadd.s32 %s585, 7
        %s671 = sld [smem:[#allocation4 + %s670]]
        %v672 = vstv %s671
        %v673 = vmul.f32 %v661, %v672
        %v674 = vmul.f32 %v662, %v672
        %677 = vrot.lane.b32.xlu0 %v673, 127
        %v678 = vpop.permute.xlu0 %677
        %679 = vrot.lane.b32.xlu0 %v674, 127
        %v680 = vpop.permute.xlu0 %679
        %v683 = vadd.f32 %v668, %v678
        %v684 = vadd.f32 %v669, %v680
        %s685 = sadd.s32 %s585, 8
        %s686 = sld [smem:[#allocation4 + %s685]]
        %v687 = vstv %s686
        %v688 = vmul.f32 %v661, %v687
        %v689 = vmul.f32 %v662, %v687
        %692 = vrot.lane.b32.xlu0 %v688, 126
        %v693 = vpop.permute.xlu0 %692
        %694 = vrot.lane.b32.xlu0 %v689, 126
        %v695 = vpop.permute.xlu0 %694
        %v698 = vadd.f32 %v683, %v693
        %v699 = vadd.f32 %v684, %v695
        %v700 = vmax.f32 %v698, 0.0
        %v701 = vmax.f32 %v699, 0.0
        %vm702 = vcmask 130048
        %703 = vst.msk [vmem:[%s135] sm:$0xff] %vm702, %v700
        %704 = vst.msk [vmem:[%s135 + $0x8] sm:$0xff] %vm702, %v701
        %s705 = sadd.s32 %s142, 1
        %s706 = sld [smem:[#allocation5 + %s705]]
        %v707 = vstv %s706
        %v708 = vld [vmem:[#allocation2] sm:$0xff]
        %v709 = vld [vmem:[#allocation2 + $0x8] sm:$0xff]
        %s710 = smul.u32 %s705, 36
        %s711 = sld [smem:[#allocation4 + %s710]]
        %v712 = vstv %s711
        %v713 = vmul.f32 %v708, %v712
        %v714 = vmul.f32 %v709, %v712
        %v715 = vadd.f32 %v707, %v713
        %v716 = vadd.f32 %v707, %v714
        %s717 = sadd.s32 %s710, 1
        %s718 = sld [smem:[#allocation4 + %s717]]
        %v719 = vstv %s718
        %v720 = vmul.f32 %v708, %v719
        %v721 = vmul.f32 %v709, %v719
        %724 = vrot.lane.b32.xlu0 %v720, 127
        %v725 = vpop.permute.xlu0 %724
        %726 = vrot.lane.b32.xlu0 %v721, 127
        %v727 = vpop.permute.xlu0 %726
        %v730 = vadd.f32 %v715, %v725
        %v731 = vadd.f32 %v716, %v727
        %s732 = sadd.s32 %s710, 2
        %s733 = sld [smem:[#allocation4 + %s732]]
        %v734 = vstv %s733
        %v735 = vmul.f32 %v708, %v734
        %v736 = vmul.f32 %v709, %v734
        %739 = vrot.lane.b32.xlu0 %v735, 126
        %v740 = vpop.permute.xlu0 %739
        %741 = vrot.lane.b32.xlu0 %v736, 126
        %v742 = vpop.permute.xlu0 %741
        %v745 = vadd.f32 %v730, %v740
        %v746 = vadd.f32 %v731, %v742
        %v747 = vld [vmem:[#allocation2 + $0x1] sm:$0xff]
        %v748 = vld [vmem:[#allocation2 + $0x9] sm:$0xff]
        %s749 = sadd.s32 %s710, 3
        %s750 = sld [smem:[#allocation4 + %s749]]
        %v751 = vstv %s750
        %v752 = vmul.f32 %v747, %v751
        %v753 = vmul.f32 %v748, %v751
        %v754 = vadd.f32 %v745, %v752
        %v755 = vadd.f32 %v746, %v753
        %s756 = sadd.s32 %s710, 4
        %s757 = sld [smem:[#allocation4 + %s756]]
        %v758 = vstv %s757
        %v759 = vmul.f32 %v747, %v758
        %v760 = vmul.f32 %v748, %v758
        %763 = vrot.lane.b32.xlu0 %v759, 127
        %v764 = vpop.permute.xlu0 %763
        %765 = vrot.lane.b32.xlu0 %v760, 127
        %v766 = vpop.permute.xlu0 %765
        %v769 = vadd.f32 %v754, %v764
        %v770 = vadd.f32 %v755, %v766
        %s771 = sadd.s32 %s710, 5
        %s772 = sld [smem:[#allocation4 + %s771]]
        %v773 = vstv %s772
        %v774 = vmul.f32 %v747, %v773
        %v775 = vmul.f32 %v748, %v773
        %778 = vrot.lane.b32.xlu0 %v774, 126
        %v779 = vpop.permute.xlu0 %778
        %780 = vrot.lane.b32.xlu0 %v775, 126
        %v781 = vpop.permute.xlu0 %780
        %v784 = vadd.f32 %v769, %v779
        %v785 = vadd.f32 %v770, %v781
        %v786 = vld [vmem:[#allocation2 + $0x2] sm:$0xff]
        %v787 = vld [vmem:[#allocation2 + $0xa] sm:$0xff]
        %s788 = sadd.s32 %s710, 6
        %s789 = sld [smem:[#allocation4 + %s788]]
        %v790 = vstv %s789
        %v791 = vmul.f32 %v786, %v790
        %v792 = vmul.f32 %v787, %v790
        %v793 = vadd.f32 %v784, %v791
        %v794 = vadd.f32 %v785, %v792
        %s795 = sadd.s32 %s710, 7
        %s796 = sld [smem:[#allocation4 + %s795]]
        %v797 = vstv %s796
        %v798 = vmul.f32 %v786, %v797
        %v799 = vmul.f32 %v787, %v797
        %802 = vrot.lane.b32.xlu0 %v798, 127
        %v803 = vpop.permute.xlu0 %802
        %804 = vrot.lane.b32.xlu0 %v799, 127
        %v805 = vpop.permute.xlu0 %804
        %v808 = vadd.f32 %v793, %v803
        %v809 = vadd.f32 %v794, %v805
        %s810 = sadd.s32 %s710, 8
        %s811 = sld [smem:[#allocation4 + %s810]]
        %v812 = vstv %s811
        %v813 = vmul.f32 %v786, %v812
        %v814 = vmul.f32 %v787, %v812
        %817 = vrot.lane.b32.xlu0 %v813, 126
        %v818 = vpop.permute.xlu0 %817
        %819 = vrot.lane.b32.xlu0 %v814, 126
        %v820 = vpop.permute.xlu0 %819
        %v823 = vadd.f32 %v808, %v818
        %v824 = vadd.f32 %v809, %v820
        %v825 = vld [vmem:[%s342] sm:$0xff]
        %v826 = vld [vmem:[%s342 + $0x8] sm:$0xff]
        %s827 = smul.u32 %s705, 4
        %s828 = sadd.s32 %s827, 1
        %s829 = smul.u32 %s828, 9
        %s830 = sld [smem:[#allocation4 + %s829]]
        %v831 = vstv %s830
        %v832 = vmul.f32 %v825, %v831
        %v833 = vmul.f32 %v826, %v831
        %v834 = vadd.f32 %v823, %v832
        %v835 = vadd.f32 %v824, %v833
        %s836 = sadd.s32 %s829, 1
        %s837 = sld [smem:[#allocation4 + %s836]]
        %v838 = vstv %s837
        %v839 = vmul.f32 %v825, %v838
        %v840 = vmul.f32 %v826, %v838
        %843 = vrot.lane.b32.xlu0 %v839, 127
        %v844 = vpop.permute.xlu0 %843
        %845 = vrot.lane.b32.xlu0 %v840, 127
        %v846 = vpop.permute.xlu0 %845
        %v849 = vadd.f32 %v834, %v844
        %v850 = vadd.f32 %v835, %v846
        %s851 = sadd.s32 %s829, 2
        %s852 = sld [smem:[#allocation4 + %s851]]
        %v853 = vstv %s852
        %v854 = vmul.f32 %v825, %v853
        %v855 = vmul.f32 %v826, %v853
        %858 = vrot.lane.b32.xlu0 %v854, 126
        %v859 = vpop.permute.xlu0 %858
        %860 = vrot.lane.b32.xlu0 %v855, 126
        %v861 = vpop.permute.xlu0 %860
        %v864 = vadd.f32 %v849, %v859
        %v865 = vadd.f32 %v850, %v861
        %v866 = vld [vmem:[%s342 + $0x1] sm:$0xff]
        %v867 = vld [vmem:[%s342 + $0x9] sm:$0xff]
        %s868 = sadd.s32 %s829, 3
        %s869 = sld [smem:[#allocation4 + %s868]]
        %v870 = vstv %s869
        %v871 = vmul.f32 %v866, %v870
        %v872 = vmul.f32 %v867, %v870
        %v873 = vadd.f32 %v864, %v871
        %v874 = vadd.f32 %v865, %v872
        %s875 = sadd.s32 %s829, 4
        %s876 = sld [smem:[#allocation4 + %s875]]
        %v877 = vstv %s876
        %v878 = vmul.f32 %v866, %v877
        %v879 = vmul.f32 %v867, %v877
        %882 = vrot.lane.b32.xlu0 %v878, 127
        %v883 = vpop.permute.xlu0 %882
        %884 = vrot.lane.b32.xlu0 %v879, 127
        %v885 = vpop.permute.xlu0 %884
        %v888 = vadd.f32 %v873, %v883
        %v889 = vadd.f32 %v874, %v885
        %s890 = sadd.s32 %s829, 5
        %s891 = sld [smem:[#allocation4 + %s890]]
        %v892 = vstv %s891
        %v893 = vmul.f32 %v866, %v892
        %v894 = vmul.f32 %v867, %v892
        %897 = vrot.lane.b32.xlu0 %v893, 126
        %v898 = vpop.permute.xlu0 %897
        %899 = vrot.lane.b32.xlu0 %v894, 126
        %v900 = vpop.permute.xlu0 %899
        %v903 = vadd.f32 %v888, %v898
        %v904 = vadd.f32 %v889, %v900
        %v905 = vld [vmem:[%s342 + $0x2] sm:$0xff]
        %v906 = vld [vmem:[%s342 + $0xa] sm:$0xff]
        %s907 = sadd.s32 %s829, 6
        %s908 = sld [smem:[#allocation4 + %s907]]
        %v909 = vstv %s908
        %v910 = vmul.f32 %v905, %v909
        %v911 = vmul.f32 %v906, %v909
        %v912 = vadd.f32 %v903, %v910
        %v913 = vadd.f32 %v904, %v911
        %s914 = sadd.s32 %s829, 7
        %s915 = sld [smem:[#allocation4 + %s914]]
        %v916 = vstv %s915
        %v917 = vmul.f32 %v905, %v916
        %v918 = vmul.f32 %v906, %v916
        %921 = vrot.lane.b32.xlu0 %v917, 127
        %v922 = vpop.permute.xlu0 %921
        %923 = vrot.lane.b32.xlu0 %v918, 127
        %v924 = vpop.permute.xlu0 %923
        %v927 = vadd.f32 %v912, %v922
        %v928 = vadd.f32 %v913, %v924
        %s929 = sadd.s32 %s829, 8
        %s930 = sld [smem:[#allocation4 + %s929]]
        %v931 = vstv %s930
        %v932 = vmul.f32 %v905, %v931
        %v933 = vmul.f32 %v906, %v931
        %936 = vrot.lane.b32.xlu0 %v932, 126
        %v937 = vpop.permute.xlu0 %936
        %938 = vrot.lane.b32.xlu0 %v933, 126
        %v939 = vpop.permute.xlu0 %938
        %v942 = vadd.f32 %v927, %v937
        %v943 = vadd.f32 %v928, %v939
        %v944 = vld [vmem:[%s462] sm:$0xff]
        %v945 = vld [vmem:[%s462 + $0x8] sm:$0xff]
        %s946 = sadd.s32 %s827, 2
        %s947 = smul.u32 %s946, 9
        %s948 = sld [smem:[#allocation4 + %s947]]
        %v949 = vstv %s948
        %v950 = vmul.f32 %v944, %v949
        %v951 = vmul.f32 %v945, %v949
        %v952 = vadd.f32 %v942, %v950
        %v953 = vadd.f32 %v943, %v951
        %s954 = sadd.s32 %s947, 1
        %s955 = sld [smem:[#allocation4 + %s954]]
        %v956 = vstv %s955
        %v957 = vmul.f32 %v944, %v956
        %v958 = vmul.f32 %v945, %v956
        %961 = vrot.lane.b32.xlu0 %v957, 127
        %v962 = vpop.permute.xlu0 %961
        %963 = vrot.lane.b32.xlu0 %v958, 127
        %v964 = vpop.permute.xlu0 %963
        %v967 = vadd.f32 %v952, %v962
        %v968 = vadd.f32 %v953, %v964
        %s969 = sadd.s32 %s947, 2
        %s970 = sld [smem:[#allocation4 + %s969]]
        %v971 = vstv %s970
        %v972 = vmul.f32 %v944, %v971
        %v973 = vmul.f32 %v945, %v971
        %976 = vrot.lane.b32.xlu0 %v972, 126
        %v977 = vpop.permute.xlu0 %976
        %978 = vrot.lane.b32.xlu0 %v973, 126
        %v979 = vpop.permute.xlu0 %978
        %v982 = vadd.f32 %v967, %v977
        %v983 = vadd.f32 %v968, %v979
        %v984 = vld [vmem:[%s462 + $0x1] sm:$0xff]
        %v985 = vld [vmem:[%s462 + $0x9] sm:$0xff]
        %s986 = sadd.s32 %s947, 3
        %s987 = sld [smem:[#allocation4 + %s986]]
        %v988 = vstv %s987
        %v989 = vmul.f32 %v984, %v988
        %v990 = vmul.f32 %v985, %v988
        %v991 = vadd.f32 %v982, %v989
        %v992 = vadd.f32 %v983, %v990
        %s993 = sadd.s32 %s947, 4
        %s994 = sld [smem:[#allocation4 + %s993]]
        %v995 = vstv %s994
        %v996 = vmul.f32 %v984, %v995
        %v997 = vmul.f32 %v985, %v995
        %1000 = vrot.lane.b32.xlu0 %v996, 127
        %v1001 = vpop.permute.xlu0 %1000
        %1002 = vrot.lane.b32.xlu0 %v997, 127
        %v1003 = vpop.permute.xlu0 %1002
        %v1006 = vadd.f32 %v991, %v1001
        %v1007 = vadd.f32 %v992, %v1003
        %s1008 = sadd.s32 %s947, 5
        %s1009 = sld [smem:[#allocation4 + %s1008]]
        %v1010 = vstv %s1009
        %v1011 = vmul.f32 %v984, %v1010
        %v1012 = vmul.f32 %v985, %v1010
        %1015 = vrot.lane.b32.xlu0 %v1011, 126
        %v1016 = vpop.permute.xlu0 %1015
        %1017 = vrot.lane.b32.xlu0 %v1012, 126
        %v1018 = vpop.permute.xlu0 %1017
        %v1021 = vadd.f32 %v1006, %v1016
        %v1022 = vadd.f32 %v1007, %v1018
        %v1023 = vld [vmem:[%s462 + $0x2] sm:$0xff]
        %v1024 = vld [vmem:[%s462 + $0xa] sm:$0xff]
        %s1025 = sadd.s32 %s947, 6
        %s1026 = sld [smem:[#allocation4 + %s1025]]
        %v1027 = vstv %s1026
        %v1028 = vmul.f32 %v1023, %v1027
        %v1029 = vmul.f32 %v1024, %v1027
        %v1030 = vadd.f32 %v1021, %v1028
        %v1031 = vadd.f32 %v1022, %v1029
        %s1032 = sadd.s32 %s947, 7
        %s1033 = sld [smem:[#allocation4 + %s1032]]
        %v1034 = vstv %s1033
        %v1035 = vmul.f32 %v1023, %v1034
        %v1036 = vmul.f32 %v1024, %v1034
        %1039 = vrot.lane.b32.xlu0 %v1035, 127
        %v1040 = vpop.permute.xlu0 %1039
        %1041 = vrot.lane.b32.xlu0 %v1036, 127
        %v1042 = vpop.permute.xlu0 %1041
        %v1045 = vadd.f32 %v1030, %v1040
        %v1046 = vadd.f32 %v1031, %v1042
        %s1047 = sadd.s32 %s947, 8
        %s1048 = sld [smem:[#allocation4 + %s1047]]
        %v1049 = vstv %s1048
        %v1050 = vmul.f32 %v1023, %v1049
        %v1051 = vmul.f32 %v1024, %v1049
        %1054 = vrot.lane.b32.xlu0 %v1050, 126
        %v1055 = vpop.permute.xlu0 %1054
        %1056 = vrot.lane.b32.xlu0 %v1051, 126
        %v1057 = vpop.permute.xlu0 %1056
        %v1060 = vadd.f32 %v1045, %v1055
        %v1061 = vadd.f32 %v1046, %v1057
        %v1062 = vld [vmem:[%s581] sm:$0xff]
        %v1063 = vld [vmem:[%s581 + $0x8] sm:$0xff]
        %s1064 = sadd.s32 %s827, 3
        %s1065 = smul.u32 %s1064, 9
        %s1066 = sld [smem:[#allocation4 + %s1065]]
        %v1067 = vstv %s1066
        %v1068 = vmul.f32 %v1062, %v1067
        %v1069 = vmul.f32 %v1063, %v1067
        %v1070 = vadd.f32 %v1060, %v1068
        %v1071 = vadd.f32 %v1061, %v1069
        %s1072 = sadd.s32 %s1065, 1
        %s1073 = sld [smem:[#allocation4 + %s1072]]
        %v1074 = vstv %s1073
        %v1075 = vmul.f32 %v1062, %v1074
        %v1076 = vmul.f32 %v1063, %v1074
        %1079 = vrot.lane.b32.xlu0 %v1075, 127
        %v1080 = vpop.permute.xlu0 %1079
        %1081 = vrot.lane.b32.xlu0 %v1076, 127
        %v1082 = vpop.permute.xlu0 %1081
        %v1085 = vadd.f32 %v1070, %v1080
        %v1086 = vadd.f32 %v1071, %v1082
        %s1087 = sadd.s32 %s1065, 2
        %s1088 = sld [smem:[#allocation4 + %s1087]]
        %v1089 = vstv %s1088
        %v1090 = vmul.f32 %v1062, %v1089
        %v1091 = vmul.f32 %v1063, %v1089
        %1094 = vrot.lane.b32.xlu0 %v1090, 126
        %v1095 = vpop.permute.xlu0 %1094
        %1096 = vrot.lane.b32.xlu0 %v1091, 126
        %v1097 = vpop.permute.xlu0 %1096
        %v1100 = vadd.f32 %v1085, %v1095
        %v1101 = vadd.f32 %v1086, %v1097
        %v1102 = vld [vmem:[%s581 + $0x1] sm:$0xff]
        %v1103 = vld [vmem:[%s581 + $0x9] sm:$0xff]
        %s1104 = sadd.s32 %s1065, 3
        %s1105 = sld [smem:[#allocation4 + %s1104]]
        %v1106 = vstv %s1105
        %v1107 = vmul.f32 %v1102, %v1106
        %v1108 = vmul.f32 %v1103, %v1106
        %v1109 = vadd.f32 %v1100, %v1107
        %v1110 = vadd.f32 %v1101, %v1108
        %s1111 = sadd.s32 %s1065, 4
        %s1112 = sld [smem:[#allocation4 + %s1111]]
        %v1113 = vstv %s1112
        %v1114 = vmul.f32 %v1102, %v1113
        %v1115 = vmul.f32 %v1103, %v1113
        %1118 = vrot.lane.b32.xlu0 %v1114, 127
        %v1119 = vpop.permute.xlu0 %1118
        %1120 = vrot.lane.b32.xlu0 %v1115, 127
        %v1121 = vpop.permute.xlu0 %1120
        %v1124 = vadd.f32 %v1109, %v1119
        %v1125 = vadd.f32 %v1110, %v1121
        %s1126 = sadd.s32 %s1065, 5
        %s1127 = sld [smem:[#allocation4 + %s1126]]
        %v1128 = vstv %s1127
        %v1129 = vmul.f32 %v1102, %v1128
        %v1130 = vmul.f32 %v1103, %v1128
        %1133 = vrot.lane.b32.xlu0 %v1129, 126
        %v1134 = vpop.permute.xlu0 %1133
        %1135 = vrot.lane.b32.xlu0 %v1130, 126
        %v1136 = vpop.permute.xlu0 %1135
        %v1139 = vadd.f32 %v1124, %v1134
        %v1140 = vadd.f32 %v1125, %v1136
        %v1141 = vld [vmem:[%s581 + $0x2] sm:$0xff]
        %v1142 = vld [vmem:[%s581 + $0xa] sm:$0xff]
        %s1143 = sadd.s32 %s1065, 6
        %s1144 = sld [smem:[#allocation4 + %s1143]]
        %v1145 = vstv %s1144
        %v1146 = vmul.f32 %v1141, %v1145
        %v1147 = vmul.f32 %v1142, %v1145
        %v1148 = vadd.f32 %v1139, %v1146
        %v1149 = vadd.f32 %v1140, %v1147
        %s1150 = sadd.s32 %s1065, 7
        %s1151 = sld [smem:[#allocation4 + %s1150]]
        %v1152 = vstv %s1151
        %v1153 = vmul.f32 %v1141, %v1152
        %v1154 = vmul.f32 %v1142, %v1152
        %1157 = vrot.lane.b32.xlu0 %v1153, 127
        %v1158 = vpop.permute.xlu0 %1157
        %1159 = vrot.lane.b32.xlu0 %v1154, 127
        %v1160 = vpop.permute.xlu0 %1159
        %v1163 = vadd.f32 %v1148, %v1158
        %v1164 = vadd.f32 %v1149, %v1160
        %s1165 = sadd.s32 %s1065, 8
        %s1166 = sld [smem:[#allocation4 + %s1165]]
        %v1167 = vstv %s1166
        %v1168 = vmul.f32 %v1141, %v1167
        %v1169 = vmul.f32 %v1142, %v1167
        %1172 = vrot.lane.b32.xlu0 %v1168, 126
        %v1173 = vpop.permute.xlu0 %1172
        %1174 = vrot.lane.b32.xlu0 %v1169, 126
        %v1175 = vpop.permute.xlu0 %1174
        %v1178 = vadd.f32 %v1163, %v1173
        %v1179 = vadd.f32 %v1164, %v1175
        %v1180 = vmax.f32 %v1178, 0.0
        %v1181 = vmax.f32 %v1179, 0.0
        %s1182 = scalar_lea.vmem %s135, 16 [#allocation6]
        %1183 = vst.msk [vmem:[%s1182] sm:$0xff] %vm702, %v1180
        %1184 = vst.msk [vmem:[%s1182 + $0x8] sm:$0xff] %vm702, %v1181
        %s1185 = sadd.s32 %s142, 2
        %s1186 = sld [smem:[#allocation5 + %s1185]]
        %v1187 = vstv %s1186
        %v1188 = vld [vmem:[#allocation2] sm:$0xff]
        %v1189 = vld [vmem:[#allocation2 + $0x8] sm:$0xff]
        %s1190 = smul.u32 %s1185, 36
        %s1191 = sld [smem:[#allocation4 + %s1190]]
        %v1192 = vstv %s1191
        %v1193 = vmul.f32 %v1188, %v1192
        %v1194 = vmul.f32 %v1189, %v1192
        %v1195 = vadd.f32 %v1187, %v1193
        %v1196 = vadd.f32 %v1187, %v1194
        %s1197 = sadd.s32 %s1190, 1
        %s1198 = sld [smem:[#allocation4 + %s1197]]
        %v1199 = vstv %s1198
        %v1200 = vmul.f32 %v1188, %v1199
        %v1201 = vmul.f32 %v1189, %v1199
        %1204 = vrot.lane.b32.xlu0 %v1200, 127
        %v1205 = vpop.permute.xlu0 %1204
        %1206 = vrot.lane.b32.xlu0 %v1201, 127
        %v1207 = vpop.permute.xlu0 %1206
        %v1210 = vadd.f32 %v1195, %v1205
        %v1211 = vadd.f32 %v1196, %v1207
        %s1212 = sadd.s32 %s1190, 2
        %s1213 = sld [smem:[#allocation4 + %s1212]]
        %v1214 = vstv %s1213
        %v1215 = vmul.f32 %v1188, %v1214
        %v1216 = vmul.f32 %v1189, %v1214
        %1219 = vrot.lane.b32.xlu0 %v1215, 126
        %v1220 = vpop.permute.xlu0 %1219
        %1221 = vrot.lane.b32.xlu0 %v1216, 126
        %v1222 = vpop.permute.xlu0 %1221
        %v1225 = vadd.f32 %v1210, %v1220
        %v1226 = vadd.f32 %v1211, %v1222
        %v1227 = vld [vmem:[#allocation2 + $0x1] sm:$0xff]
        %v1228 = vld [vmem:[#allocation2 + $0x9] sm:$0xff]
        %s1229 = sadd.s32 %s1190, 3
        %s1230 = sld [smem:[#allocation4 + %s1229]]
        %v1231 = vstv %s1230
        %v1232 = vmul.f32 %v1227, %v1231
        %v1233 = vmul.f32 %v1228, %v1231
        %v1234 = vadd.f32 %v1225, %v1232
        %v1235 = vadd.f32 %v1226, %v1233
        %s1236 = sadd.s32 %s1190, 4
        %s1237 = sld [smem:[#allocation4 + %s1236]]
        %v1238 = vstv %s1237
        %v1239 = vmul.f32 %v1227, %v1238
        %v1240 = vmul.f32 %v1228, %v1238
        %1243 = vrot.lane.b32.xlu0 %v1239, 127
        %v1244 = vpop.permute.xlu0 %1243
        %1245 = vrot.lane.b32.xlu0 %v1240, 127
        %v1246 = vpop.permute.xlu0 %1245
        %v1249 = vadd.f32 %v1234, %v1244
        %v1250 = vadd.f32 %v1235, %v1246
        %s1251 = sadd.s32 %s1190, 5
        %s1252 = sld [smem:[#allocation4 + %s1251]]
        %v1253 = vstv %s1252
        %v1254 = vmul.f32 %v1227, %v1253
        %v1255 = vmul.f32 %v1228, %v1253
        %1258 = vrot.lane.b32.xlu0 %v1254, 126
        %v1259 = vpop.permute.xlu0 %1258
        %1260 = vrot.lane.b32.xlu0 %v1255, 126
        %v1261 = vpop.permute.xlu0 %1260
        %v1264 = vadd.f32 %v1249, %v1259
        %v1265 = vadd.f32 %v1250, %v1261
        %v1266 = vld [vmem:[#allocation2 + $0x2] sm:$0xff]
        %v1267 = vld [vmem:[#allocation2 + $0xa] sm:$0xff]
        %s1268 = sadd.s32 %s1190, 6
        %s1269 = sld [smem:[#allocation4 + %s1268]]
        %v1270 = vstv %s1269
        %v1271 = vmul.f32 %v1266, %v1270
        %v1272 = vmul.f32 %v1267, %v1270
        %v1273 = vadd.f32 %v1264, %v1271
        %v1274 = vadd.f32 %v1265, %v1272
        %s1275 = sadd.s32 %s1190, 7
        %s1276 = sld [smem:[#allocation4 + %s1275]]
        %v1277 = vstv %s1276
        %v1278 = vmul.f32 %v1266, %v1277
        %v1279 = vmul.f32 %v1267, %v1277
        %1282 = vrot.lane.b32.xlu0 %v1278, 127
        %v1283 = vpop.permute.xlu0 %1282
        %1284 = vrot.lane.b32.xlu0 %v1279, 127
        %v1285 = vpop.permute.xlu0 %1284
        %v1288 = vadd.f32 %v1273, %v1283
        %v1289 = vadd.f32 %v1274, %v1285
        %s1290 = sadd.s32 %s1190, 8
        %s1291 = sld [smem:[#allocation4 + %s1290]]
        %v1292 = vstv %s1291
        %v1293 = vmul.f32 %v1266, %v1292
        %v1294 = vmul.f32 %v1267, %v1292
        %1297 = vrot.lane.b32.xlu0 %v1293, 126
        %v1298 = vpop.permute.xlu0 %1297
        %1299 = vrot.lane.b32.xlu0 %v1294, 126
        %v1300 = vpop.permute.xlu0 %1299
        %v1303 = vadd.f32 %v1288, %v1298
        %v1304 = vadd.f32 %v1289, %v1300
        %v1305 = vld [vmem:[%s342] sm:$0xff]
        %v1306 = vld [vmem:[%s342 + $0x8] sm:$0xff]
        %s1307 = smul.u32 %s1185, 4
        %s1308 = sadd.s32 %s1307, 1
        %s1309 = smul.u32 %s1308, 9
        %s1310 = sld [smem:[#allocation4 + %s1309]]
        %v1311 = vstv %s1310
        %v1312 = vmul.f32 %v1305, %v1311
        %v1313 = vmul.f32 %v1306, %v1311
        %v1314 = vadd.f32 %v1303, %v1312
        %v1315 = vadd.f32 %v1304, %v1313
        %s1316 = sadd.s32 %s1309, 1
        %s1317 = sld [smem:[#allocation4 + %s1316]]
        %v1318 = vstv %s1317
        %v1319 = vmul.f32 %v1305, %v1318
        %v1320 = vmul.f32 %v1306, %v1318
        %1323 = vrot.lane.b32.xlu0 %v1319, 127
        %v1324 = vpop.permute.xlu0 %1323
        %1325 = vrot.lane.b32.xlu0 %v1320, 127
        %v1326 = vpop.permute.xlu0 %1325
        %v1329 = vadd.f32 %v1314, %v1324
        %v1330 = vadd.f32 %v1315, %v1326
        %s1331 = sadd.s32 %s1309, 2
        %s1332 = sld [smem:[#allocation4 + %s1331]]
        %v1333 = vstv %s1332
        %v1334 = vmul.f32 %v1305, %v1333
        %v1335 = vmul.f32 %v1306, %v1333
        %1338 = vrot.lane.b32.xlu0 %v1334, 126
        %v1339 = vpop.permute.xlu0 %1338
        %1340 = vrot.lane.b32.xlu0 %v1335, 126
        %v1341 = vpop.permute.xlu0 %1340
        %v1344 = vadd.f32 %v1329, %v1339
        %v1345 = vadd.f32 %v1330, %v1341
        %v1346 = vld [vmem:[%s342 + $0x1] sm:$0xff]
        %v1347 = vld [vmem:[%s342 + $0x9] sm:$0xff]
        %s1348 = sadd.s32 %s1309, 3
        %s1349 = sld [smem:[#allocation4 + %s1348]]
        %v1350 = vstv %s1349
        %v1351 = vmul.f32 %v1346, %v1350
        %v1352 = vmul.f32 %v1347, %v1350
        %v1353 = vadd.f32 %v1344, %v1351
        %v1354 = vadd.f32 %v1345, %v1352
        %s1355 = sadd.s32 %s1309, 4
        %s1356 = sld [smem:[#allocation4 + %s1355]]
        %v1357 = vstv %s1356
        %v1358 = vmul.f32 %v1346, %v1357
        %v1359 = vmul.f32 %v1347, %v1357
        %1362 = vrot.lane.b32.xlu0 %v1358, 127
        %v1363 = vpop.permute.xlu0 %1362
        %1364 = vrot.lane.b32.xlu0 %v1359, 127
        %v1365 = vpop.permute.xlu0 %1364
        %v1368 = vadd.f32 %v1353, %v1363
        %v1369 = vadd.f32 %v1354, %v1365
        %s1370 = sadd.s32 %s1309, 5
        %s1371 = sld [smem:[#allocation4 + %s1370]]
        %v1372 = vstv %s1371
        %v1373 = vmul.f32 %v1346, %v1372
        %v1374 = vmul.f32 %v1347, %v1372
        %1377 = vrot.lane.b32.xlu0 %v1373, 126
        %v1378 = vpop.permute.xlu0 %1377
        %1379 = vrot.lane.b32.xlu0 %v1374, 126
        %v1380 = vpop.permute.xlu0 %1379
        %v1383 = vadd.f32 %v1368, %v1378
        %v1384 = vadd.f32 %v1369, %v1380
        %v1385 = vld [vmem:[%s342 + $0x2] sm:$0xff]
        %v1386 = vld [vmem:[%s342 + $0xa] sm:$0xff]
        %s1387 = sadd.s32 %s1309, 6
        %s1388 = sld [smem:[#allocation4 + %s1387]]
        %v1389 = vstv %s1388
        %v1390 = vmul.f32 %v1385, %v1389
        %v1391 = vmul.f32 %v1386, %v1389
        %v1392 = vadd.f32 %v1383, %v1390
        %v1393 = vadd.f32 %v1384, %v1391
        %s1394 = sadd.s32 %s1309, 7
        %s1395 = sld [smem:[#allocation4 + %s1394]]
        %v1396 = vstv %s1395
        %v1397 = vmul.f32 %v1385, %v1396
        %v1398 = vmul.f32 %v1386, %v1396
        %1401 = vrot.lane.b32.xlu0 %v1397, 127
        %v1402 = vpop.permute.xlu0 %1401
        %1403 = vrot.lane.b32.xlu0 %v1398, 127
        %v1404 = vpop.permute.xlu0 %1403
        %v1407 = vadd.f32 %v1392, %v1402
        %v1408 = vadd.f32 %v1393, %v1404
        %s1409 = sadd.s32 %s1309, 8
        %s1410 = sld [smem:[#allocation4 + %s1409]]
        %v1411 = vstv %s1410
        %v1412 = vmul.f32 %v1385, %v1411
        %v1413 = vmul.f32 %v1386, %v1411
        %1416 = vrot.lane.b32.xlu0 %v1412, 126
        %v1417 = vpop.permute.xlu0 %1416
        %1418 = vrot.lane.b32.xlu0 %v1413, 126
        %v1419 = vpop.permute.xlu0 %1418
        %v1422 = vadd.f32 %v1407, %v1417
        %v1423 = vadd.f32 %v1408, %v1419
        %v1424 = vld [vmem:[%s462] sm:$0xff]
        %v1425 = vld [vmem:[%s462 + $0x8] sm:$0xff]
        %s1426 = sadd.s32 %s1307, 2
        %s1427 = smul.u32 %s1426, 9
        %s1428 = sld [smem:[#allocation4 + %s1427]]
        %v1429 = vstv %s1428
        %v1430 = vmul.f32 %v1424, %v1429
        %v1431 = vmul.f32 %v1425, %v1429
        %v1432 = vadd.f32 %v1422, %v1430
        %v1433 = vadd.f32 %v1423, %v1431
        %s1434 = sadd.s32 %s1427, 1
        %s1435 = sld [smem:[#allocation4 + %s1434]]
        %v1436 = vstv %s1435
        %v1437 = vmul.f32 %v1424, %v1436
        %v1438 = vmul.f32 %v1425, %v1436
        %1441 = vrot.lane.b32.xlu0 %v1437, 127
        %v1442 = vpop.permute.xlu0 %1441
        %1443 = vrot.lane.b32.xlu0 %v1438, 127
        %v1444 = vpop.permute.xlu0 %1443
        %v1447 = vadd.f32 %v1432, %v1442
        %v1448 = vadd.f32 %v1433, %v1444
        %s1449 = sadd.s32 %s1427, 2
        %s1450 = sld [smem:[#allocation4 + %s1449]]
        %v1451 = vstv %s1450
        %v1452 = vmul.f32 %v1424, %v1451
        %v1453 = vmul.f32 %v1425, %v1451
        %1456 = vrot.lane.b32.xlu0 %v1452, 126
        %v1457 = vpop.permute.xlu0 %1456
        %1458 = vrot.lane.b32.xlu0 %v1453, 126
        %v1459 = vpop.permute.xlu0 %1458
        %v1462 = vadd.f32 %v1447, %v1457
        %v1463 = vadd.f32 %v1448, %v1459
        %v1464 = vld [vmem:[%s462 + $0x1] sm:$0xff]
        %v1465 = vld [vmem:[%s462 + $0x9] sm:$0xff]
        %s1466 = sadd.s32 %s1427, 3
        %s1467 = sld [smem:[#allocation4 + %s1466]]
        %v1468 = vstv %s1467
        %v1469 = vmul.f32 %v1464, %v1468
        %v1470 = vmul.f32 %v1465, %v1468
        %v1471 = vadd.f32 %v1462, %v1469
        %v1472 = vadd.f32 %v1463, %v1470
        %s1473 = sadd.s32 %s1427, 4
        %s1474 = sld [smem:[#allocation4 + %s1473]]
        %v1475 = vstv %s1474
        %v1476 = vmul.f32 %v1464, %v1475
        %v1477 = vmul.f32 %v1465, %v1475
        %1480 = vrot.lane.b32.xlu0 %v1476, 127
        %v1481 = vpop.permute.xlu0 %1480
        %1482 = vrot.lane.b32.xlu0 %v1477, 127
        %v1483 = vpop.permute.xlu0 %1482
        %v1486 = vadd.f32 %v1471, %v1481
        %v1487 = vadd.f32 %v1472, %v1483
        %s1488 = sadd.s32 %s1427, 5
        %s1489 = sld [smem:[#allocation4 + %s1488]]
        %v1490 = vstv %s1489
        %v1491 = vmul.f32 %v1464, %v1490
        %v1492 = vmul.f32 %v1465, %v1490
        %1495 = vrot.lane.b32.xlu0 %v1491, 126
        %v1496 = vpop.permute.xlu0 %1495
        %1497 = vrot.lane.b32.xlu0 %v1492, 126
        %v1498 = vpop.permute.xlu0 %1497
        %v1501 = vadd.f32 %v1486, %v1496
        %v1502 = vadd.f32 %v1487, %v1498
        %v1503 = vld [vmem:[%s462 + $0x2] sm:$0xff]
        %v1504 = vld [vmem:[%s462 + $0xa] sm:$0xff]
        %s1505 = sadd.s32 %s1427, 6
        %s1506 = sld [smem:[#allocation4 + %s1505]]
        %v1507 = vstv %s1506
        %v1508 = vmul.f32 %v1503, %v1507
        %v1509 = vmul.f32 %v1504, %v1507
        %v1510 = vadd.f32 %v1501, %v1508
        %v1511 = vadd.f32 %v1502, %v1509
        %s1512 = sadd.s32 %s1427, 7
        %s1513 = sld [smem:[#allocation4 + %s1512]]
        %v1514 = vstv %s1513
        %v1515 = vmul.f32 %v1503, %v1514
        %v1516 = vmul.f32 %v1504, %v1514
        %1519 = vrot.lane.b32.xlu0 %v1515, 127
        %v1520 = vpop.permute.xlu0 %1519
        %1521 = vrot.lane.b32.xlu0 %v1516, 127
        %v1522 = vpop.permute.xlu0 %1521
        %v1525 = vadd.f32 %v1510, %v1520
        %v1526 = vadd.f32 %v1511, %v1522
        %s1527 = sadd.s32 %s1427, 8
        %s1528 = sld [smem:[#allocation4 + %s1527]]
        %v1529 = vstv %s1528
        %v1530 = vmul.f32 %v1503, %v1529
        %v1531 = vmul.f32 %v1504, %v1529
        %1534 = vrot.lane.b32.xlu0 %v1530, 126
        %v1535 = vpop.permute.xlu0 %1534
        %1536 = vrot.lane.b32.xlu0 %v1531, 126
        %v1537 = vpop.permute.xlu0 %1536
        %v1540 = vadd.f32 %v1525, %v1535
        %v1541 = vadd.f32 %v1526, %v1537
        %v1542 = vld [vmem:[%s581] sm:$0xff]
        %v1543 = vld [vmem:[%s581 + $0x8] sm:$0xff]
        %s1544 = sadd.s32 %s1307, 3
        %s1545 = smul.u32 %s1544, 9
        %s1546 = sld [smem:[#allocation4 + %s1545]]
        %v1547 = vstv %s1546
        %v1548 = vmul.f32 %v1542, %v1547
        %v1549 = vmul.f32 %v1543, %v1547
        %v1550 = vadd.f32 %v1540, %v1548
        %v1551 = vadd.f32 %v1541, %v1549
        %s1552 = sadd.s32 %s1545, 1
        %s1553 = sld [smem:[#allocation4 + %s1552]]
        %v1554 = vstv %s1553
        %v1555 = vmul.f32 %v1542, %v1554
        %v1556 = vmul.f32 %v1543, %v1554
        %1559 = vrot.lane.b32.xlu0 %v1555, 127
        %v1560 = vpop.permute.xlu0 %1559
        %1561 = vrot.lane.b32.xlu0 %v1556, 127
        %v1562 = vpop.permute.xlu0 %1561
        %v1565 = vadd.f32 %v1550, %v1560
        %v1566 = vadd.f32 %v1551, %v1562
        %s1567 = sadd.s32 %s1545, 2
        %s1568 = sld [smem:[#allocation4 + %s1567]]
        %v1569 = vstv %s1568
        %v1570 = vmul.f32 %v1542, %v1569
        %v1571 = vmul.f32 %v1543, %v1569
        %1574 = vrot.lane.b32.xlu0 %v1570, 126
        %v1575 = vpop.permute.xlu0 %1574
        %1576 = vrot.lane.b32.xlu0 %v1571, 126
        %v1577 = vpop.permute.xlu0 %1576
        %v1580 = vadd.f32 %v1565, %v1575
        %v1581 = vadd.f32 %v1566, %v1577
        %v1582 = vld [vmem:[%s581 + $0x1] sm:$0xff]
        %v1583 = vld [vmem:[%s581 + $0x9] sm:$0xff]
        %s1584 = sadd.s32 %s1545, 3
        %s1585 = sld [smem:[#allocation4 + %s1584]]
        %v1586 = vstv %s1585
        %v1587 = vmul.f32 %v1582, %v1586
        %v1588 = vmul.f32 %v1583, %v1586
        %v1589 = vadd.f32 %v1580, %v1587
        %v1590 = vadd.f32 %v1581, %v1588
        %s1591 = sadd.s32 %s1545, 4
        %s1592 = sld [smem:[#allocation4 + %s1591]]
        %v1593 = vstv %s1592
        %v1594 = vmul.f32 %v1582, %v1593
        %v1595 = vmul.f32 %v1583, %v1593
        %1598 = vrot.lane.b32.xlu0 %v1594, 127
        %v1599 = vpop.permute.xlu0 %1598
        %1600 = vrot.lane.b32.xlu0 %v1595, 127
        %v1601 = vpop.permute.xlu0 %1600
        %v1604 = vadd.f32 %v1589, %v1599
        %v1605 = vadd.f32 %v1590, %v1601
        %s1606 = sadd.s32 %s1545, 5
        %s1607 = sld [smem:[#allocation4 + %s1606]]
        %v1608 = vstv %s1607
        %v1609 = vmul.f32 %v1582, %v1608
        %v1610 = vmul.f32 %v1583, %v1608
        %1613 = vrot.lane.b32.xlu0 %v1609, 126
        %v1614 = vpop.permute.xlu0 %1613
        %1615 = vrot.lane.b32.xlu0 %v1610, 126
        %v1616 = vpop.permute.xlu0 %1615
        %v1619 = vadd.f32 %v1604, %v1614
        %v1620 = vadd.f32 %v1605, %v1616
        %v1621 = vld [vmem:[%s581 + $0x2] sm:$0xff]
        %v1622 = vld [vmem:[%s581 + $0xa] sm:$0xff]
        %s1623 = sadd.s32 %s1545, 6
        %s1624 = sld [smem:[#allocation4 + %s1623]]
        %v1625 = vstv %s1624
        %v1626 = vmul.f32 %v1621, %v1625
        %v1627 = vmul.f32 %v1622, %v1625
        %v1628 = vadd.f32 %v1619, %v1626
        %v1629 = vadd.f32 %v1620, %v1627
        %s1630 = sadd.s32 %s1545, 7
        %s1631 = sld [smem:[#allocation4 + %s1630]]
        %v1632 = vstv %s1631
        %v1633 = vmul.f32 %v1621, %v1632
        %v1634 = vmul.f32 %v1622, %v1632
        %1637 = vrot.lane.b32.xlu0 %v1633, 127
        %v1638 = vpop.permute.xlu0 %1637
        %1639 = vrot.lane.b32.xlu0 %v1634, 127
        %v1640 = vpop.permute.xlu0 %1639
        %v1643 = vadd.f32 %v1628, %v1638
        %v1644 = vadd.f32 %v1629, %v1640
        %s1645 = sadd.s32 %s1545, 8
        %s1646 = sld [smem:[#allocation4 + %s1645]]
        %v1647 = vstv %s1646
        %v1648 = vmul.f32 %v1621, %v1647
        %v1649 = vmul.f32 %v1622, %v1647
        %1652 = vrot.lane.b32.xlu0 %v1648, 126
        %v1653 = vpop.permute.xlu0 %1652
        %1654 = vrot.lane.b32.xlu0 %v1649, 126
        %v1655 = vpop.permute.xlu0 %1654
        %v1658 = vadd.f32 %v1643, %v1653
        %v1659 = vadd.f32 %v1644, %v1655
        %v1660 = vmax.f32 %v1658, 0.0
        %v1661 = vmax.f32 %v1659, 0.0
        %s1662 = scalar_lea.vmem %s135, 32 [#allocation6]
        %1663 = vst.msk [vmem:[%s1662] sm:$0xff] %vm702, %v1660
        %1664 = vst.msk [vmem:[%s1662 + $0x8] sm:$0xff] %vm702, %v1661
        %s1665 = sadd.s32 %s142, 3
        %s1666 = sld [smem:[#allocation5 + %s1665]]
        %v1667 = vstv %s1666
        %v1668 = vld [vmem:[#allocation2] sm:$0xff]
        %v1669 = vld [vmem:[#allocation2 + $0x8] sm:$0xff]
        %s1670 = smul.u32 %s1665, 36
        %s1671 = sld [smem:[#allocation4 + %s1670]]
        %v1672 = vstv %s1671
        %v1673 = vmul.f32 %v1668, %v1672
        %v1674 = vmul.f32 %v1669, %v1672
        %v1675 = vadd.f32 %v1667, %v1673
        %v1676 = vadd.f32 %v1667, %v1674
        %s1677 = sadd.s32 %s1670, 1
        %s1678 = sld [smem:[#allocation4 + %s1677]]
        %v1679 = vstv %s1678
        %v1680 = vmul.f32 %v1668, %v1679
        %v1681 = vmul.f32 %v1669, %v1679
        %1684 = vrot.lane.b32.xlu0 %v1680, 127
        %v1685 = vpop.permute.xlu0 %1684
        %1686 = vrot.lane.b32.xlu0 %v1681, 127
        %v1687 = vpop.permute.xlu0 %1686
        %v1690 = vadd.f32 %v1675, %v1685
        %v1691 = vadd.f32 %v1676, %v1687
        %s1692 = sadd.s32 %s1670, 2
        %s1693 = sld [smem:[#allocation4 + %s1692]]
        %v1694 = vstv %s1693
        %v1695 = vmul.f32 %v1668, %v1694
        %v1696 = vmul.f32 %v1669, %v1694
        %1699 = vrot.lane.b32.xlu0 %v1695, 126
        %v1700 = vpop.permute.xlu0 %1699
        %1701 = vrot.lane.b32.xlu0 %v1696, 126
        %v1702 = vpop.permute.xlu0 %1701
        %v1705 = vadd.f32 %v1690, %v1700
        %v1706 = vadd.f32 %v1691, %v1702
        %v1707 = vld [vmem:[#allocation2 + $0x1] sm:$0xff]
        %v1708 = vld [vmem:[#allocation2 + $0x9] sm:$0xff]
        %s1709 = sadd.s32 %s1670, 3
        %s1710 = sld [smem:[#allocation4 + %s1709]]
        %v1711 = vstv %s1710
        %v1712 = vmul.f32 %v1707, %v1711
        %v1713 = vmul.f32 %v1708, %v1711
        %v1714 = vadd.f32 %v1705, %v1712
        %v1715 = vadd.f32 %v1706, %v1713
        %s1716 = sadd.s32 %s1670, 4
        %s1717 = sld [smem:[#allocation4 + %s1716]]
        %v1718 = vstv %s1717
        %v1719 = vmul.f32 %v1707, %v1718
        %v1720 = vmul.f32 %v1708, %v1718
        %1723 = vrot.lane.b32.xlu0 %v1719, 127
        %v1724 = vpop.permute.xlu0 %1723
        %1725 = vrot.lane.b32.xlu0 %v1720, 127
        %v1726 = vpop.permute.xlu0 %1725
        %v1729 = vadd.f32 %v1714, %v1724
        %v1730 = vadd.f32 %v1715, %v1726
        %s1731 = sadd.s32 %s1670, 5
        %s1732 = sld [smem:[#allocation4 + %s1731]]
        %v1733 = vstv %s1732
        %v1734 = vmul.f32 %v1707, %v1733
        %v1735 = vmul.f32 %v1708, %v1733
        %1738 = vrot.lane.b32.xlu0 %v1734, 126
        %v1739 = vpop.permute.xlu0 %1738
        %1740 = vrot.lane.b32.xlu0 %v1735, 126
        %v1741 = vpop.permute.xlu0 %1740
        %v1744 = vadd.f32 %v1729, %v1739
        %v1745 = vadd.f32 %v1730, %v1741
        %v1746 = vld [vmem:[#allocation2 + $0x2] sm:$0xff]
        %v1747 = vld [vmem:[#allocation2 + $0xa] sm:$0xff]
        %s1748 = sadd.s32 %s1670, 6
        %s1749 = sld [smem:[#allocation4 + %s1748]]
        %v1750 = vstv %s1749
        %v1751 = vmul.f32 %v1746, %v1750
        %v1752 = vmul.f32 %v1747, %v1750
        %v1753 = vadd.f32 %v1744, %v1751
        %v1754 = vadd.f32 %v1745, %v1752
        %s1755 = sadd.s32 %s1670, 7
        %s1756 = sld [smem:[#allocation4 + %s1755]]
        %v1757 = vstv %s1756
        %v1758 = vmul.f32 %v1746, %v1757
        %v1759 = vmul.f32 %v1747, %v1757
        %1762 = vrot.lane.b32.xlu0 %v1758, 127
        %v1763 = vpop.permute.xlu0 %1762
        %1764 = vrot.lane.b32.xlu0 %v1759, 127
        %v1765 = vpop.permute.xlu0 %1764
        %v1768 = vadd.f32 %v1753, %v1763
        %v1769 = vadd.f32 %v1754, %v1765
        %s1770 = sadd.s32 %s1670, 8
        %s1771 = sld [smem:[#allocation4 + %s1770]]
        %v1772 = vstv %s1771
        %v1773 = vmul.f32 %v1746, %v1772
        %v1774 = vmul.f32 %v1747, %v1772
        %1777 = vrot.lane.b32.xlu0 %v1773, 126
        %v1778 = vpop.permute.xlu0 %1777
        %1779 = vrot.lane.b32.xlu0 %v1774, 126
        %v1780 = vpop.permute.xlu0 %1779
        %v1783 = vadd.f32 %v1768, %v1778
        %v1784 = vadd.f32 %v1769, %v1780
        %v1785 = vld [vmem:[%s342] sm:$0xff]
        %v1786 = vld [vmem:[%s342 + $0x8] sm:$0xff]
        %s1787 = smul.u32 %s1665, 4
        %s1788 = sadd.s32 %s1787, 1
        %s1789 = smul.u32 %s1788, 9
        %s1790 = sld [smem:[#allocation4 + %s1789]]
        %v1791 = vstv %s1790
        %v1792 = vmul.f32 %v1785, %v1791
        %v1793 = vmul.f32 %v1786, %v1791
        %v1794 = vadd.f32 %v1783, %v1792
        %v1795 = vadd.f32 %v1784, %v1793
        %s1796 = sadd.s32 %s1789, 1
        %s1797 = sld [smem:[#allocation4 + %s1796]]
        %v1798 = vstv %s1797
        %v1799 = vmul.f32 %v1785, %v1798
        %v1800 = vmul.f32 %v1786, %v1798
        %1803 = vrot.lane.b32.xlu0 %v1799, 127
        %v1804 = vpop.permute.xlu0 %1803
        %1805 = vrot.lane.b32.xlu0 %v1800, 127
        %v1806 = vpop.permute.xlu0 %1805
        %v1809 = vadd.f32 %v1794, %v1804
        %v1810 = vadd.f32 %v1795, %v1806
        %s1811 = sadd.s32 %s1789, 2
        %s1812 = sld [smem:[#allocation4 + %s1811]]
        %v1813 = vstv %s1812
        %v1814 = vmul.f32 %v1785, %v1813
        %v1815 = vmul.f32 %v1786, %v1813
        %1818 = vrot.lane.b32.xlu0 %v1814, 126
        %v1819 = vpop.permute.xlu0 %1818
        %1820 = vrot.lane.b32.xlu0 %v1815, 126
        %v1821 = vpop.permute.xlu0 %1820
        %v1824 = vadd.f32 %v1809, %v1819
        %v1825 = vadd.f32 %v1810, %v1821
        %v1826 = vld [vmem:[%s342 + $0x1] sm:$0xff]
        %v1827 = vld [vmem:[%s342 + $0x9] sm:$0xff]
        %s1828 = sadd.s32 %s1789, 3
        %s1829 = sld [smem:[#allocation4 + %s1828]]
        %v1830 = vstv %s1829
        %v1831 = vmul.f32 %v1826, %v1830
        %v1832 = vmul.f32 %v1827, %v1830
        %v1833 = vadd.f32 %v1824, %v1831
        %v1834 = vadd.f32 %v1825, %v1832
        %s1835 = sadd.s32 %s1789, 4
        %s1836 = sld [smem:[#allocation4 + %s1835]]
        %v1837 = vstv %s1836
        %v1838 = vmul.f32 %v1826, %v1837
        %v1839 = vmul.f32 %v1827, %v1837
        %1842 = vrot.lane.b32.xlu0 %v1838, 127
        %v1843 = vpop.permute.xlu0 %1842
        %1844 = vrot.lane.b32.xlu0 %v1839, 127
        %v1845 = vpop.permute.xlu0 %1844
        %v1848 = vadd.f32 %v1833, %v1843
        %v1849 = vadd.f32 %v1834, %v1845
        %s1850 = sadd.s32 %s1789, 5
        %s1851 = sld [smem:[#allocation4 + %s1850]]
        %v1852 = vstv %s1851
        %v1853 = vmul.f32 %v1826, %v1852
        %v1854 = vmul.f32 %v1827, %v1852
        %1857 = vrot.lane.b32.xlu0 %v1853, 126
        %v1858 = vpop.permute.xlu0 %1857
        %1859 = vrot.lane.b32.xlu0 %v1854, 126
        %v1860 = vpop.permute.xlu0 %1859
        %v1863 = vadd.f32 %v1848, %v1858
        %v1864 = vadd.f32 %v1849, %v1860
        %v1865 = vld [vmem:[%s342 + $0x2] sm:$0xff]
        %v1866 = vld [vmem:[%s342 + $0xa] sm:$0xff]
        %s1867 = sadd.s32 %s1789, 6
        %s1868 = sld [smem:[#allocation4 + %s1867]]
        %v1869 = vstv %s1868
        %v1870 = vmul.f32 %v1865, %v1869
        %v1871 = vmul.f32 %v1866, %v1869
        %v1872 = vadd.f32 %v1863, %v1870
        %v1873 = vadd.f32 %v1864, %v1871
        %s1874 = sadd.s32 %s1789, 7
        %s1875 = sld [smem:[#allocation4 + %s1874]]
        %v1876 = vstv %s1875
        %v1877 = vmul.f32 %v1865, %v1876
        %v1878 = vmul.f32 %v1866, %v1876
        %1881 = vrot.lane.b32.xlu0 %v1877, 127
        %v1882 = vpop.permute.xlu0 %1881
        %1883 = vrot.lane.b32.xlu0 %v1878, 127
        %v1884 = vpop.permute.xlu0 %1883
        %v1887 = vadd.f32 %v1872, %v1882
        %v1888 = vadd.f32 %v1873, %v1884
        %s1889 = sadd.s32 %s1789, 8
        %s1890 = sld [smem:[#allocation4 + %s1889]]
        %v1891 = vstv %s1890
        %v1892 = vmul.f32 %v1865, %v1891
        %v1893 = vmul.f32 %v1866, %v1891
        %1896 = vrot.lane.b32.xlu0 %v1892, 126
        %v1897 = vpop.permute.xlu0 %1896
        %1898 = vrot.lane.b32.xlu0 %v1893, 126
        %v1899 = vpop.permute.xlu0 %1898
        %v1902 = vadd.f32 %v1887, %v1897
        %v1903 = vadd.f32 %v1888, %v1899
        %v1904 = vld [vmem:[%s462] sm:$0xff]
        %v1905 = vld [vmem:[%s462 + $0x8] sm:$0xff]
        %s1906 = sadd.s32 %s1787, 2
        %s1907 = smul.u32 %s1906, 9
        %s1908 = sld [smem:[#allocation4 + %s1907]]
        %v1909 = vstv %s1908
        %v1910 = vmul.f32 %v1904, %v1909
        %v1911 = vmul.f32 %v1905, %v1909
        %v1912 = vadd.f32 %v1902, %v1910
        %v1913 = vadd.f32 %v1903, %v1911
        %s1914 = sadd.s32 %s1907, 1
        %s1915 = sld [smem:[#allocation4 + %s1914]]
        %v1916 = vstv %s1915
        %v1917 = vmul.f32 %v1904, %v1916
        %v1918 = vmul.f32 %v1905, %v1916
        %1921 = vrot.lane.b32.xlu0 %v1917, 127
        %v1922 = vpop.permute.xlu0 %1921
        %1923 = vrot.lane.b32.xlu0 %v1918, 127
        %v1924 = vpop.permute.xlu0 %1923
        %v1927 = vadd.f32 %v1912, %v1922
        %v1928 = vadd.f32 %v1913, %v1924
        %s1929 = sadd.s32 %s1907, 2
        %s1930 = sld [smem:[#allocation4 + %s1929]]
        %v1931 = vstv %s1930
        %v1932 = vmul.f32 %v1904, %v1931
        %v1933 = vmul.f32 %v1905, %v1931
        %1936 = vrot.lane.b32.xlu0 %v1932, 126
        %v1937 = vpop.permute.xlu0 %1936
        %1938 = vrot.lane.b32.xlu0 %v1933, 126
        %v1939 = vpop.permute.xlu0 %1938
        %v1942 = vadd.f32 %v1927, %v1937
        %v1943 = vadd.f32 %v1928, %v1939
        %v1944 = vld [vmem:[%s462 + $0x1] sm:$0xff]
        %v1945 = vld [vmem:[%s462 + $0x9] sm:$0xff]
        %s1946 = sadd.s32 %s1907, 3
        %s1947 = sld [smem:[#allocation4 + %s1946]]
        %v1948 = vstv %s1947
        %v1949 = vmul.f32 %v1944, %v1948
        %v1950 = vmul.f32 %v1945, %v1948
        %v1951 = vadd.f32 %v1942, %v1949
        %v1952 = vadd.f32 %v1943, %v1950
        %s1953 = sadd.s32 %s1907, 4
        %s1954 = sld [smem:[#allocation4 + %s1953]]
        %v1955 = vstv %s1954
        %v1956 = vmul.f32 %v1944, %v1955
        %v1957 = vmul.f32 %v1945, %v1955
        %1960 = vrot.lane.b32.xlu0 %v1956, 127
        %v1961 = vpop.permute.xlu0 %1960
        %1962 = vrot.lane.b32.xlu0 %v1957, 127
        %v1963 = vpop.permute.xlu0 %1962
        %v1966 = vadd.f32 %v1951, %v1961
        %v1967 = vadd.f32 %v1952, %v1963
        %s1968 = sadd.s32 %s1907, 5
        %s1969 = sld [smem:[#allocation4 + %s1968]]
        %v1970 = vstv %s1969
        %v1971 = vmul.f32 %v1944, %v1970
        %v1972 = vmul.f32 %v1945, %v1970
        %1975 = vrot.lane.b32.xlu0 %v1971, 126
        %v1976 = vpop.permute.xlu0 %1975
        %1977 = vrot.lane.b32.xlu0 %v1972, 126
        %v1978 = vpop.permute.xlu0 %1977
        %v1981 = vadd.f32 %v1966, %v1976
        %v1982 = vadd.f32 %v1967, %v1978
        %v1983 = vld [vmem:[%s462 + $0x2] sm:$0xff]
        %v1984 = vld [vmem:[%s462 + $0xa] sm:$0xff]
        %s1985 = sadd.s32 %s1907, 6
        %s1986 = sld [smem:[#allocation4 + %s1985]]
        %v1987 = vstv %s1986
        %v1988 = vmul.f32 %v1983, %v1987
        %v1989 = vmul.f32 %v1984, %v1987
        %v1990 = vadd.f32 %v1981, %v1988
        %v1991 = vadd.f32 %v1982, %v1989
        %s1992 = sadd.s32 %s1907, 7
        %s1993 = sld [smem:[#allocation4 + %s1992]]
        %v1994 = vstv %s1993
        %v1995 = vmul.f32 %v1983, %v1994
        %v1996 = vmul.f32 %v1984, %v1994
        %1999 = vrot.lane.b32.xlu0 %v1995, 127
        %v2000 = vpop.permute.xlu0 %1999
        %2001 = vrot.lane.b32.xlu0 %v1996, 127
        %v2002 = vpop.permute.xlu0 %2001
        %v2005 = vadd.f32 %v1990, %v2000
        %v2006 = vadd.f32 %v1991, %v2002
        %s2007 = sadd.s32 %s1907, 8
        %s2008 = sld [smem:[#allocation4 + %s2007]]
        %v2009 = vstv %s2008
        %v2010 = vmul.f32 %v1983, %v2009
        %v2011 = vmul.f32 %v1984, %v2009
        %2014 = vrot.lane.b32.xlu0 %v2010, 126
        %v2015 = vpop.permute.xlu0 %2014
        %2016 = vrot.lane.b32.xlu0 %v2011, 126
        %v2017 = vpop.permute.xlu0 %2016
        %v2020 = vadd.f32 %v2005, %v2015
        %v2021 = vadd.f32 %v2006, %v2017
        %v2022 = vld [vmem:[%s581] sm:$0xff]
        %v2023 = vld [vmem:[%s581 + $0x8] sm:$0xff]
        %s2024 = sadd.s32 %s1787, 3
        %s2025 = smul.u32 %s2024, 9
        %s2026 = sld [smem:[#allocation4 + %s2025]]
        %v2027 = vstv %s2026
        %v2028 = vmul.f32 %v2022, %v2027
        %v2029 = vmul.f32 %v2023, %v2027
        %v2030 = vadd.f32 %v2020, %v2028
        %v2031 = vadd.f32 %v2021, %v2029
        %s2032 = sadd.s32 %s2025, 1
        %s2033 = sld [smem:[#allocation4 + %s2032]]
        %v2034 = vstv %s2033
        %v2035 = vmul.f32 %v2022, %v2034
        %v2036 = vmul.f32 %v2023, %v2034
        %2039 = vrot.lane.b32.xlu0 %v2035, 127
        %v2040 = vpop.permute.xlu0 %2039
        %2041 = vrot.lane.b32.xlu0 %v2036, 127
        %v2042 = vpop.permute.xlu0 %2041
        %v2045 = vadd.f32 %v2030, %v2040
        %v2046 = vadd.f32 %v2031, %v2042
        %s2047 = sadd.s32 %s2025, 2
        %s2048 = sld [smem:[#allocation4 + %s2047]]
        %v2049 = vstv %s2048
        %v2050 = vmul.f32 %v2022, %v2049
        %v2051 = vmul.f32 %v2023, %v2049
        %2054 = vrot.lane.b32.xlu0 %v2050, 126
        %v2055 = vpop.permute.xlu0 %2054
        %2056 = vrot.lane.b32.xlu0 %v2051, 126
        %v2057 = vpop.permute.xlu0 %2056
        %v2060 = vadd.f32 %v2045, %v2055
        %v2061 = vadd.f32 %v2046, %v2057
        %v2062 = vld [vmem:[%s581 + $0x1] sm:$0xff]
        %v2063 = vld [vmem:[%s581 + $0x9] sm:$0xff]
        %s2064 = sadd.s32 %s2025, 3
        %s2065 = sld [smem:[#allocation4 + %s2064]]
        %v2066 = vstv %s2065
        %v2067 = vmul.f32 %v2062, %v2066
        %v2068 = vmul.f32 %v2063, %v2066
        %v2069 = vadd.f32 %v2060, %v2067
        %v2070 = vadd.f32 %v2061, %v2068
        %s2071 = sadd.s32 %s2025, 4
        %s2072 = sld [smem:[#allocation4 + %s2071]]
        %v2073 = vstv %s2072
        %v2074 = vmul.f32 %v2062, %v2073
        %v2075 = vmul.f32 %v2063, %v2073
        %2078 = vrot.lane.b32.xlu0 %v2074, 127
        %v2079 = vpop.permute.xlu0 %2078
        %2080 = vrot.lane.b32.xlu0 %v2075, 127
        %v2081 = vpop.permute.xlu0 %2080
        %v2084 = vadd.f32 %v2069, %v2079
        %v2085 = vadd.f32 %v2070, %v2081
        %s2086 = sadd.s32 %s2025, 5
        %s2087 = sld [smem:[#allocation4 + %s2086]]
        %v2088 = vstv %s2087
        %v2089 = vmul.f32 %v2062, %v2088
        %v2090 = vmul.f32 %v2063, %v2088
        %2093 = vrot.lane.b32.xlu0 %v2089, 126
        %v2094 = vpop.permute.xlu0 %2093
        %2095 = vrot.lane.b32.xlu0 %v2090, 126
        %v2096 = vpop.permute.xlu0 %2095
        %v2099 = vadd.f32 %v2084, %v2094
        %v2100 = vadd.f32 %v2085, %v2096
        %v2101 = vld [vmem:[%s581 + $0x2] sm:$0xff]
        %v2102 = vld [vmem:[%s581 + $0xa] sm:$0xff]
        %s2103 = sadd.s32 %s2025, 6
        %s2104 = sld [smem:[#allocation4 + %s2103]]
        %v2105 = vstv %s2104
        %v2106 = vmul.f32 %v2101, %v2105
        %v2107 = vmul.f32 %v2102, %v2105
        %v2108 = vadd.f32 %v2099, %v2106
        %v2109 = vadd.f32 %v2100, %v2107
        %s2110 = sadd.s32 %s2025, 7
        %s2111 = sld [smem:[#allocation4 + %s2110]]
        %v2112 = vstv %s2111
        %v2113 = vmul.f32 %v2101, %v2112
        %v2114 = vmul.f32 %v2102, %v2112
        %2117 = vrot.lane.b32.xlu0 %v2113, 127
        %v2118 = vpop.permute.xlu0 %2117
        %2119 = vrot.lane.b32.xlu0 %v2114, 127
        %v2120 = vpop.permute.xlu0 %2119
        %v2123 = vadd.f32 %v2108, %v2118
        %v2124 = vadd.f32 %v2109, %v2120
        %s2125 = sadd.s32 %s2025, 8
        %s2126 = sld [smem:[#allocation4 + %s2125]]
        %v2127 = vstv %s2126
        %v2128 = vmul.f32 %v2101, %v2127
        %v2129 = vmul.f32 %v2102, %v2127
        %2132 = vrot.lane.b32.xlu0 %v2128, 126
        %v2133 = vpop.permute.xlu0 %2132
        %2134 = vrot.lane.b32.xlu0 %v2129, 126
        %v2135 = vpop.permute.xlu0 %2134
        %v2138 = vadd.f32 %v2123, %v2133
        %v2139 = vadd.f32 %v2124, %v2135
        %v2140 = vmax.f32 %v2138, 0.0
        %v2141 = vmax.f32 %v2139, 0.0
        %s2142 = scalar_lea.vmem %s135, 48 [#allocation6]
        %2143 = vst.msk [vmem:[%s2142] sm:$0xff] %vm702, %v2140
        %2144 = vst.msk [vmem:[%s2142 + $0x8] sm:$0xff] %vm702, %v2141
        %s2145 = sadd.s32 %s142, 4
        %s2146 = sld [smem:[#allocation5 + %s2145]]
        %v2147 = vstv %s2146
        %v2148 = vld [vmem:[#allocation2] sm:$0xff]
        %v2149 = vld [vmem:[#allocation2 + $0x8] sm:$0xff]
        %s2150 = smul.u32 %s2145, 36
        %s2151 = sld [smem:[#allocation4 + %s2150]]
        %v2152 = vstv %s2151
        %v2153 = vmul.f32 %v2148, %v2152
        %v2154 = vmul.f32 %v2149, %v2152
        %v2155 = vadd.f32 %v2147, %v2153
        %v2156 = vadd.f32 %v2147, %v2154
        %s2157 = sadd.s32 %s2150, 1
        %s2158 = sld [smem:[#allocation4 + %s2157]]
        %v2159 = vstv %s2158
        %v2160 = vmul.f32 %v2148, %v2159
        %v2161 = vmul.f32 %v2149, %v2159
        %2164 = vrot.lane.b32.xlu0 %v2160, 127
        %v2165 = vpop.permute.xlu0 %2164
        %2166 = vrot.lane.b32.xlu0 %v2161, 127
        %v2167 = vpop.permute.xlu0 %2166
        %v2170 = vadd.f32 %v2155, %v2165
        %v2171 = vadd.f32 %v2156, %v2167
        %s2172 = sadd.s32 %s2150, 2
        %s2173 = sld [smem:[#allocation4 + %s2172]]
        %v2174 = vstv %s2173
        %v2175 = vmul.f32 %v2148, %v2174
        %v2176 = vmul.f32 %v2149, %v2174
        %2179 = vrot.lane.b32.xlu0 %v2175, 126
        %v2180 = vpop.permute.xlu0 %2179
        %2181 = vrot.lane.b32.xlu0 %v2176, 126
        %v2182 = vpop.permute.xlu0 %2181
        %v2185 = vadd.f32 %v2170, %v2180
        %v2186 = vadd.f32 %v2171, %v2182
        %v2187 = vld [vmem:[#allocation2 + $0x1] sm:$0xff]
        %v2188 = vld [vmem:[#allocation2 + $0x9] sm:$0xff]
        %s2189 = sadd.s32 %s2150, 3
        %s2190 = sld [smem:[#allocation4 + %s2189]]
        %v2191 = vstv %s2190
        %v2192 = vmul.f32 %v2187, %v2191
        %v2193 = vmul.f32 %v2188, %v2191
        %v2194 = vadd.f32 %v2185, %v2192
        %v2195 = vadd.f32 %v2186, %v2193
        %s2196 = sadd.s32 %s2150, 4
        %s2197 = sld [smem:[#allocation4 + %s2196]]
        %v2198 = vstv %s2197
        %v2199 = vmul.f32 %v2187, %v2198
        %v2200 = vmul.f32 %v2188, %v2198
        %2203 = vrot.lane.b32.xlu0 %v2199, 127
        %v2204 = vpop.permute.xlu0 %2203
        %2205 = vrot.lane.b32.xlu0 %v2200, 127
        %v2206 = vpop.permute.xlu0 %2205
        %v2209 = vadd.f32 %v2194, %v2204
        %v2210 = vadd.f32 %v2195, %v2206
        %s2211 = sadd.s32 %s2150, 5
        %s2212 = sld [smem:[#allocation4 + %s2211]]
        %v2213 = vstv %s2212
        %v2214 = vmul.f32 %v2187, %v2213
        %v2215 = vmul.f32 %v2188, %v2213
        %2218 = vrot.lane.b32.xlu0 %v2214, 126
        %v2219 = vpop.permute.xlu0 %2218
        %2220 = vrot.lane.b32.xlu0 %v2215, 126
        %v2221 = vpop.permute.xlu0 %2220
        %v2224 = vadd.f32 %v2209, %v2219
        %v2225 = vadd.f32 %v2210, %v2221
        %v2226 = vld [vmem:[#allocation2 + $0x2] sm:$0xff]
        %v2227 = vld [vmem:[#allocation2 + $0xa] sm:$0xff]
        %s2228 = sadd.s32 %s2150, 6
        %s2229 = sld [smem:[#allocation4 + %s2228]]
        %v2230 = vstv %s2229
        %v2231 = vmul.f32 %v2226, %v2230
        %v2232 = vmul.f32 %v2227, %v2230
        %v2233 = vadd.f32 %v2224, %v2231
        %v2234 = vadd.f32 %v2225, %v2232
        %s2235 = sadd.s32 %s2150, 7
        %s2236 = sld [smem:[#allocation4 + %s2235]]
        %v2237 = vstv %s2236
        %v2238 = vmul.f32 %v2226, %v2237
        %v2239 = vmul.f32 %v2227, %v2237
        %2242 = vrot.lane.b32.xlu0 %v2238, 127
        %v2243 = vpop.permute.xlu0 %2242
        %2244 = vrot.lane.b32.xlu0 %v2239, 127
        %v2245 = vpop.permute.xlu0 %2244
        %v2248 = vadd.f32 %v2233, %v2243
        %v2249 = vadd.f32 %v2234, %v2245
        %s2250 = sadd.s32 %s2150, 8
        %s2251 = sld [smem:[#allocation4 + %s2250]]
        %v2252 = vstv %s2251
        %v2253 = vmul.f32 %v2226, %v2252
        %v2254 = vmul.f32 %v2227, %v2252
        %2257 = vrot.lane.b32.xlu0 %v2253, 126
        %v2258 = vpop.permute.xlu0 %2257
        %2259 = vrot.lane.b32.xlu0 %v2254, 126
        %v2260 = vpop.permute.xlu0 %2259
        %v2263 = vadd.f32 %v2248, %v2258
        %v2264 = vadd.f32 %v2249, %v2260
        %v2265 = vld [vmem:[%s342] sm:$0xff]
        %v2266 = vld [vmem:[%s342 + $0x8] sm:$0xff]
        %s2267 = smul.u32 %s2145, 4
        %s2268 = sadd.s32 %s2267, 1
        %s2269 = smul.u32 %s2268, 9
        %s2270 = sld [smem:[#allocation4 + %s2269]]
        %v2271 = vstv %s2270
        %v2272 = vmul.f32 %v2265, %v2271
        %v2273 = vmul.f32 %v2266, %v2271
        %v2274 = vadd.f32 %v2263, %v2272
        %v2275 = vadd.f32 %v2264, %v2273
        %s2276 = sadd.s32 %s2269, 1
        %s2277 = sld [smem:[#allocation4 + %s2276]]
        %v2278 = vstv %s2277
        %v2279 = vmul.f32 %v2265, %v2278
        %v2280 = vmul.f32 %v2266, %v2278
        %2283 = vrot.lane.b32.xlu0 %v2279, 127
        %v2284 = vpop.permute.xlu0 %2283
        %2285 = vrot.lane.b32.xlu0 %v2280, 127
        %v2286 = vpop.permute.xlu0 %2285
        %v2289 = vadd.f32 %v2274, %v2284
        %v2290 = vadd.f32 %v2275, %v2286
        %s2291 = sadd.s32 %s2269, 2
        %s2292 = sld [smem:[#allocation4 + %s2291]]
        %v2293 = vstv %s2292
        %v2294 = vmul.f32 %v2265, %v2293
        %v2295 = vmul.f32 %v2266, %v2293
        %2298 = vrot.lane.b32.xlu0 %v2294, 126
        %v2299 = vpop.permute.xlu0 %2298
        %2300 = vrot.lane.b32.xlu0 %v2295, 126
        %v2301 = vpop.permute.xlu0 %2300
        %v2304 = vadd.f32 %v2289, %v2299
        %v2305 = vadd.f32 %v2290, %v2301
        %v2306 = vld [vmem:[%s342 + $0x1] sm:$0xff]
        %v2307 = vld [vmem:[%s342 + $0x9] sm:$0xff]
        %s2308 = sadd.s32 %s2269, 3
        %s2309 = sld [smem:[#allocation4 + %s2308]]
        %v2310 = vstv %s2309
        %v2311 = vmul.f32 %v2306, %v2310
        %v2312 = vmul.f32 %v2307, %v2310
        %v2313 = vadd.f32 %v2304, %v2311
        %v2314 = vadd.f32 %v2305, %v2312
        %s2315 = sadd.s32 %s2269, 4
        %s2316 = sld [smem:[#allocation4 + %s2315]]
        %v2317 = vstv %s2316
        %v2318 = vmul.f32 %v2306, %v2317
        %v2319 = vmul.f32 %v2307, %v2317
        %2322 = vrot.lane.b32.xlu0 %v2318, 127
        %v2323 = vpop.permute.xlu0 %2322
        %2324 = vrot.lane.b32.xlu0 %v2319, 127
        %v2325 = vpop.permute.xlu0 %2324
        %v2328 = vadd.f32 %v2313, %v2323
        %v2329 = vadd.f32 %v2314, %v2325
        %s2330 = sadd.s32 %s2269, 5
        %s2331 = sld [smem:[#allocation4 + %s2330]]
        %v2332 = vstv %s2331
        %v2333 = vmul.f32 %v2306, %v2332
        %v2334 = vmul.f32 %v2307, %v2332
        %2337 = vrot.lane.b32.xlu0 %v2333, 126
        %v2338 = vpop.permute.xlu0 %2337
        %2339 = vrot.lane.b32.xlu0 %v2334, 126
        %v2340 = vpop.permute.xlu0 %2339
        %v2343 = vadd.f32 %v2328, %v2338
        %v2344 = vadd.f32 %v2329, %v2340
        %v2345 = vld [vmem:[%s342 + $0x2] sm:$0xff]
        %v2346 = vld [vmem:[%s342 + $0xa] sm:$0xff]
        %s2347 = sadd.s32 %s2269, 6
        %s2348 = sld [smem:[#allocation4 + %s2347]]
        %v2349 = vstv %s2348
        %v2350 = vmul.f32 %v2345, %v2349
        %v2351 = vmul.f32 %v2346, %v2349
        %v2352 = vadd.f32 %v2343, %v2350
        %v2353 = vadd.f32 %v2344, %v2351
        %s2354 = sadd.s32 %s2269, 7
        %s2355 = sld [smem:[#allocation4 + %s2354]]
        %v2356 = vstv %s2355
        %v2357 = vmul.f32 %v2345, %v2356
        %v2358 = vmul.f32 %v2346, %v2356
        %2361 = vrot.lane.b32.xlu0 %v2357, 127
        %v2362 = vpop.permute.xlu0 %2361
        %2363 = vrot.lane.b32.xlu0 %v2358, 127
        %v2364 = vpop.permute.xlu0 %2363
        %v2367 = vadd.f32 %v2352, %v2362
        %v2368 = vadd.f32 %v2353, %v2364
        %s2369 = sadd.s32 %s2269, 8
        %s2370 = sld [smem:[#allocation4 + %s2369]]
        %v2371 = vstv %s2370
        %v2372 = vmul.f32 %v2345, %v2371
        %v2373 = vmul.f32 %v2346, %v2371
        %2376 = vrot.lane.b32.xlu0 %v2372, 126
        %v2377 = vpop.permute.xlu0 %2376
        %2378 = vrot.lane.b32.xlu0 %v2373, 126
        %v2379 = vpop.permute.xlu0 %2378
        %v2382 = vadd.f32 %v2367, %v2377
        %v2383 = vadd.f32 %v2368, %v2379
        %v2384 = vld [vmem:[%s462] sm:$0xff]
        %v2385 = vld [vmem:[%s462 + $0x8] sm:$0xff]
        %s2386 = sadd.s32 %s2267, 2
        %s2387 = smul.u32 %s2386, 9
        %s2388 = sld [smem:[#allocation4 + %s2387]]
        %v2389 = vstv %s2388
        %v2390 = vmul.f32 %v2384, %v2389
        %v2391 = vmul.f32 %v2385, %v2389
        %v2392 = vadd.f32 %v2382, %v2390
        %v2393 = vadd.f32 %v2383, %v2391
        %s2394 = sadd.s32 %s2387, 1
        %s2395 = sld [smem:[#allocation4 + %s2394]]
        %v2396 = vstv %s2395
        %v2397 = vmul.f32 %v2384, %v2396
        %v2398 = vmul.f32 %v2385, %v2396
        %2401 = vrot.lane.b32.xlu0 %v2397, 127
        %v2402 = vpop.permute.xlu0 %2401
        %2403 = vrot.lane.b32.xlu0 %v2398, 127
        %v2404 = vpop.permute.xlu0 %2403
        %v2407 = vadd.f32 %v2392, %v2402
        %v2408 = vadd.f32 %v2393, %v2404
        %s2409 = sadd.s32 %s2387, 2
        %s2410 = sld [smem:[#allocation4 + %s2409]]
        %v2411 = vstv %s2410
        %v2412 = vmul.f32 %v2384, %v2411
        %v2413 = vmul.f32 %v2385, %v2411
        %2416 = vrot.lane.b32.xlu0 %v2412, 126
        %v2417 = vpop.permute.xlu0 %2416
        %2418 = vrot.lane.b32.xlu0 %v2413, 126
        %v2419 = vpop.permute.xlu0 %2418
        %v2422 = vadd.f32 %v2407, %v2417
        %v2423 = vadd.f32 %v2408, %v2419
        %v2424 = vld [vmem:[%s462 + $0x1] sm:$0xff]
        %v2425 = vld [vmem:[%s462 + $0x9] sm:$0xff]
        %s2426 = sadd.s32 %s2387, 3
        %s2427 = sld [smem:[#allocation4 + %s2426]]
        %v2428 = vstv %s2427
        %v2429 = vmul.f32 %v2424, %v2428
        %v2430 = vmul.f32 %v2425, %v2428
        %v2431 = vadd.f32 %v2422, %v2429
        %v2432 = vadd.f32 %v2423, %v2430
        %s2433 = sadd.s32 %s2387, 4
        %s2434 = sld [smem:[#allocation4 + %s2433]]
        %v2435 = vstv %s2434
        %v2436 = vmul.f32 %v2424, %v2435
        %v2437 = vmul.f32 %v2425, %v2435
        %2440 = vrot.lane.b32.xlu0 %v2436, 127
        %v2441 = vpop.permute.xlu0 %2440
        %2442 = vrot.lane.b32.xlu0 %v2437, 127
        %v2443 = vpop.permute.xlu0 %2442
        %v2446 = vadd.f32 %v2431, %v2441
        %v2447 = vadd.f32 %v2432, %v2443
        %s2448 = sadd.s32 %s2387, 5
        %s2449 = sld [smem:[#allocation4 + %s2448]]
        %v2450 = vstv %s2449
        %v2451 = vmul.f32 %v2424, %v2450
        %v2452 = vmul.f32 %v2425, %v2450
        %2455 = vrot.lane.b32.xlu0 %v2451, 126
        %v2456 = vpop.permute.xlu0 %2455
        %2457 = vrot.lane.b32.xlu0 %v2452, 126
        %v2458 = vpop.permute.xlu0 %2457
        %v2461 = vadd.f32 %v2446, %v2456
        %v2462 = vadd.f32 %v2447, %v2458
        %v2463 = vld [vmem:[%s462 + $0x2] sm:$0xff]
        %v2464 = vld [vmem:[%s462 + $0xa] sm:$0xff]
        %s2465 = sadd.s32 %s2387, 6
        %s2466 = sld [smem:[#allocation4 + %s2465]]
        %v2467 = vstv %s2466
        %v2468 = vmul.f32 %v2463, %v2467
        %v2469 = vmul.f32 %v2464, %v2467
        %v2470 = vadd.f32 %v2461, %v2468
        %v2471 = vadd.f32 %v2462, %v2469
        %s2472 = sadd.s32 %s2387, 7
        %s2473 = sld [smem:[#allocation4 + %s2472]]
        %v2474 = vstv %s2473
        %v2475 = vmul.f32 %v2463, %v2474
        %v2476 = vmul.f32 %v2464, %v2474
        %2479 = vrot.lane.b32.xlu0 %v2475, 127
        %v2480 = vpop.permute.xlu0 %2479
        %2481 = vrot.lane.b32.xlu0 %v2476, 127
        %v2482 = vpop.permute.xlu0 %2481
        %v2485 = vadd.f32 %v2470, %v2480
        %v2486 = vadd.f32 %v2471, %v2482
        %s2487 = sadd.s32 %s2387, 8
        %s2488 = sld [smem:[#allocation4 + %s2487]]
        %v2489 = vstv %s2488
        %v2490 = vmul.f32 %v2463, %v2489
        %v2491 = vmul.f32 %v2464, %v2489
        %2494 = vrot.lane.b32.xlu0 %v2490, 126
        %v2495 = vpop.permute.xlu0 %2494
        %2496 = vrot.lane.b32.xlu0 %v2491, 126
        %v2497 = vpop.permute.xlu0 %2496
        %v2500 = vadd.f32 %v2485, %v2495
        %v2501 = vadd.f32 %v2486, %v2497
        %v2502 = vld [vmem:[%s581] sm:$0xff]
        %v2503 = vld [vmem:[%s581 + $0x8] sm:$0xff]
        %s2504 = sadd.s32 %s2267, 3
        %s2505 = smul.u32 %s2504, 9
        %s2506 = sld [smem:[#allocation4 + %s2505]]
        %v2507 = vstv %s2506
        %v2508 = vmul.f32 %v2502, %v2507
        %v2509 = vmul.f32 %v2503, %v2507
        %v2510 = vadd.f32 %v2500, %v2508
        %v2511 = vadd.f32 %v2501, %v2509
        %s2512 = sadd.s32 %s2505, 1
        %s2513 = sld [smem:[#allocation4 + %s2512]]
        %v2514 = vstv %s2513
        %v2515 = vmul.f32 %v2502, %v2514
        %v2516 = vmul.f32 %v2503, %v2514
        %2519 = vrot.lane.b32.xlu0 %v2515, 127
        %v2520 = vpop.permute.xlu0 %2519
        %2521 = vrot.lane.b32.xlu0 %v2516, 127
        %v2522 = vpop.permute.xlu0 %2521
        %v2525 = vadd.f32 %v2510, %v2520
        %v2526 = vadd.f32 %v2511, %v2522
        %s2527 = sadd.s32 %s2505, 2
        %s2528 = sld [smem:[#allocation4 + %s2527]]
        %v2529 = vstv %s2528
        %v2530 = vmul.f32 %v2502, %v2529
        %v2531 = vmul.f32 %v2503, %v2529
        %2534 = vrot.lane.b32.xlu0 %v2530, 126
        %v2535 = vpop.permute.xlu0 %2534
        %2536 = vrot.lane.b32.xlu0 %v2531, 126
        %v2537 = vpop.permute.xlu0 %2536
        %v2540 = vadd.f32 %v2525, %v2535
        %v2541 = vadd.f32 %v2526, %v2537
        %v2542 = vld [vmem:[%s581 + $0x1] sm:$0xff]
        %v2543 = vld [vmem:[%s581 + $0x9] sm:$0xff]
        %s2544 = sadd.s32 %s2505, 3
        %s2545 = sld [smem:[#allocation4 + %s2544]]
        %v2546 = vstv %s2545
        %v2547 = vmul.f32 %v2542, %v2546
        %v2548 = vmul.f32 %v2543, %v2546
        %v2549 = vadd.f32 %v2540, %v2547
        %v2550 = vadd.f32 %v2541, %v2548
        %s2551 = sadd.s32 %s2505, 4
        %s2552 = sld [smem:[#allocation4 + %s2551]]
        %v2553 = vstv %s2552
        %v2554 = vmul.f32 %v2542, %v2553
        %v2555 = vmul.f32 %v2543, %v2553
        %2558 = vrot.lane.b32.xlu0 %v2554, 127
        %v2559 = vpop.permute.xlu0 %2558
        %2560 = vrot.lane.b32.xlu0 %v2555, 127
        %v2561 = vpop.permute.xlu0 %2560
        %v2564 = vadd.f32 %v2549, %v2559
        %v2565 = vadd.f32 %v2550, %v2561
        %s2566 = sadd.s32 %s2505, 5
        %s2567 = sld [smem:[#allocation4 + %s2566]]
        %v2568 = vstv %s2567
        %v2569 = vmul.f32 %v2542, %v2568
        %v2570 = vmul.f32 %v2543, %v2568
        %2573 = vrot.lane.b32.xlu0 %v2569, 126
        %v2574 = vpop.permute.xlu0 %2573
        %2575 = vrot.lane.b32.xlu0 %v2570, 126
        %v2576 = vpop.permute.xlu0 %2575
        %v2579 = vadd.f32 %v2564, %v2574
        %v2580 = vadd.f32 %v2565, %v2576
        %v2581 = vld [vmem:[%s581 + $0x2] sm:$0xff]
        %v2582 = vld [vmem:[%s581 + $0xa] sm:$0xff]
        %s2583 = sadd.s32 %s2505, 6
        %s2584 = sld [smem:[#allocation4 + %s2583]]
        %v2585 = vstv %s2584
        %v2586 = vmul.f32 %v2581, %v2585
        %v2587 = vmul.f32 %v2582, %v2585
        %v2588 = vadd.f32 %v2579, %v2586
        %v2589 = vadd.f32 %v2580, %v2587
        %s2590 = sadd.s32 %s2505, 7
        %s2591 = sld [smem:[#allocation4 + %s2590]]
        %v2592 = vstv %s2591
        %v2593 = vmul.f32 %v2581, %v2592
        %v2594 = vmul.f32 %v2582, %v2592
        %2597 = vrot.lane.b32.xlu0 %v2593, 127
        %v2598 = vpop.permute.xlu0 %2597
        %2599 = vrot.lane.b32.xlu0 %v2594, 127
        %v2600 = vpop.permute.xlu0 %2599
        %v2603 = vadd.f32 %v2588, %v2598
        %v2604 = vadd.f32 %v2589, %v2600
        %s2605 = sadd.s32 %s2505, 8
        %s2606 = sld [smem:[#allocation4 + %s2605]]
        %v2607 = vstv %s2606
        %v2608 = vmul.f32 %v2581, %v2607
        %v2609 = vmul.f32 %v2582, %v2607
        %2612 = vrot.lane.b32.xlu0 %v2608, 126
        %v2613 = vpop.permute.xlu0 %2612
        %2614 = vrot.lane.b32.xlu0 %v2609, 126
        %v2615 = vpop.permute.xlu0 %2614
        %v2618 = vadd.f32 %v2603, %v2613
        %v2619 = vadd.f32 %v2604, %v2615
        %v2620 = vmax.f32 %v2618, 0.0
        %v2621 = vmax.f32 %v2619, 0.0
        %s2622 = scalar_lea.vmem %s135, 64 [#allocation6]
        %2623 = vst.msk [vmem:[%s2622] sm:$0xff] %vm702, %v2620
        %2624 = vst.msk [vmem:[%s2622 + $0x8] sm:$0xff] %vm702, %v2621
        %s2625 = sadd.s32 %s142, 5
        %s2626 = sld [smem:[#allocation5 + %s2625]]
        %v2627 = vstv %s2626
        %v2628 = vld [vmem:[#allocation2] sm:$0xff]
        %v2629 = vld [vmem:[#allocation2 + $0x8] sm:$0xff]
        %s2630 = smul.u32 %s2625, 36
        %s2631 = sld [smem:[#allocation4 + %s2630]]
        %v2632 = vstv %s2631
        %v2633 = vmul.f32 %v2628, %v2632
        %v2634 = vmul.f32 %v2629, %v2632
        %v2635 = vadd.f32 %v2627, %v2633
        %v2636 = vadd.f32 %v2627, %v2634
        %s2637 = sadd.s32 %s2630, 1
        %s2638 = sld [smem:[#allocation4 + %s2637]]
        %v2639 = vstv %s2638
        %v2640 = vmul.f32 %v2628, %v2639
        %v2641 = vmul.f32 %v2629, %v2639
        %2644 = vrot.lane.b32.xlu0 %v2640, 127
        %v2645 = vpop.permute.xlu0 %2644
        %2646 = vrot.lane.b32.xlu0 %v2641, 127
        %v2647 = vpop.permute.xlu0 %2646
        %v2650 = vadd.f32 %v2635, %v2645
        %v2651 = vadd.f32 %v2636, %v2647
        %s2652 = sadd.s32 %s2630, 2
        %s2653 = sld [smem:[#allocation4 + %s2652]]
        %v2654 = vstv %s2653
        %v2655 = vmul.f32 %v2628, %v2654
        %v2656 = vmul.f32 %v2629, %v2654
        %2659 = vrot.lane.b32.xlu0 %v2655, 126
        %v2660 = vpop.permute.xlu0 %2659
        %2661 = vrot.lane.b32.xlu0 %v2656, 126
        %v2662 = vpop.permute.xlu0 %2661
        %v2665 = vadd.f32 %v2650, %v2660
        %v2666 = vadd.f32 %v2651, %v2662
        %v2667 = vld [vmem:[#allocation2 + $0x1] sm:$0xff]
        %v2668 = vld [vmem:[#allocation2 + $0x9] sm:$0xff]
        %s2669 = sadd.s32 %s2630, 3
        %s2670 = sld [smem:[#allocation4 + %s2669]]
        %v2671 = vstv %s2670
        %v2672 = vmul.f32 %v2667, %v2671
        %v2673 = vmul.f32 %v2668, %v2671
        %v2674 = vadd.f32 %v2665, %v2672
        %v2675 = vadd.f32 %v2666, %v2673
        %s2676 = sadd.s32 %s2630, 4
        %s2677 = sld [smem:[#allocation4 + %s2676]]
        %v2678 = vstv %s2677
        %v2679 = vmul.f32 %v2667, %v2678
        %v2680 = vmul.f32 %v2668, %v2678
        %2683 = vrot.lane.b32.xlu0 %v2679, 127
        %v2684 = vpop.permute.xlu0 %2683
        %2685 = vrot.lane.b32.xlu0 %v2680, 127
        %v2686 = vpop.permute.xlu0 %2685
        %v2689 = vadd.f32 %v2674, %v2684
        %v2690 = vadd.f32 %v2675, %v2686
        %s2691 = sadd.s32 %s2630, 5
        %s2692 = sld [smem:[#allocation4 + %s2691]]
        %v2693 = vstv %s2692
        %v2694 = vmul.f32 %v2667, %v2693
        %v2695 = vmul.f32 %v2668, %v2693
        %2698 = vrot.lane.b32.xlu0 %v2694, 126
        %v2699 = vpop.permute.xlu0 %2698
        %2700 = vrot.lane.b32.xlu0 %v2695, 126
        %v2701 = vpop.permute.xlu0 %2700
        %v2704 = vadd.f32 %v2689, %v2699
        %v2705 = vadd.f32 %v2690, %v2701
        %v2706 = vld [vmem:[#allocation2 + $0x2] sm:$0xff]
        %v2707 = vld [vmem:[#allocation2 + $0xa] sm:$0xff]
        %s2708 = sadd.s32 %s2630, 6
        %s2709 = sld [smem:[#allocation4 + %s2708]]
        %v2710 = vstv %s2709
        %v2711 = vmul.f32 %v2706, %v2710
        %v2712 = vmul.f32 %v2707, %v2710
        %v2713 = vadd.f32 %v2704, %v2711
        %v2714 = vadd.f32 %v2705, %v2712
        %s2715 = sadd.s32 %s2630, 7
        %s2716 = sld [smem:[#allocation4 + %s2715]]
        %v2717 = vstv %s2716
        %v2718 = vmul.f32 %v2706, %v2717
        %v2719 = vmul.f32 %v2707, %v2717
        %2722 = vrot.lane.b32.xlu0 %v2718, 127
        %v2723 = vpop.permute.xlu0 %2722
        %2724 = vrot.lane.b32.xlu0 %v2719, 127
        %v2725 = vpop.permute.xlu0 %2724
        %v2728 = vadd.f32 %v2713, %v2723
        %v2729 = vadd.f32 %v2714, %v2725
        %s2730 = sadd.s32 %s2630, 8
        %s2731 = sld [smem:[#allocation4 + %s2730]]
        %v2732 = vstv %s2731
        %v2733 = vmul.f32 %v2706, %v2732
        %v2734 = vmul.f32 %v2707, %v2732
        %2737 = vrot.lane.b32.xlu0 %v2733, 126
        %v2738 = vpop.permute.xlu0 %2737
        %2739 = vrot.lane.b32.xlu0 %v2734, 126
        %v2740 = vpop.permute.xlu0 %2739
        %v2743 = vadd.f32 %v2728, %v2738
        %v2744 = vadd.f32 %v2729, %v2740
        %v2745 = vld [vmem:[%s342] sm:$0xff]
        %v2746 = vld [vmem:[%s342 + $0x8] sm:$0xff]
        %s2747 = smul.u32 %s2625, 4
        %s2748 = sadd.s32 %s2747, 1
        %s2749 = smul.u32 %s2748, 9
        %s2750 = sld [smem:[#allocation4 + %s2749]]
        %v2751 = vstv %s2750
        %v2752 = vmul.f32 %v2745, %v2751
        %v2753 = vmul.f32 %v2746, %v2751
        %v2754 = vadd.f32 %v2743, %v2752
        %v2755 = vadd.f32 %v2744, %v2753
        %s2756 = sadd.s32 %s2749, 1
        %s2757 = sld [smem:[#allocation4 + %s2756]]
        %v2758 = vstv %s2757
        %v2759 = vmul.f32 %v2745, %v2758
        %v2760 = vmul.f32 %v2746, %v2758
        %2763 = vrot.lane.b32.xlu0 %v2759, 127
        %v2764 = vpop.permute.xlu0 %2763
        %2765 = vrot.lane.b32.xlu0 %v2760, 127
        %v2766 = vpop.permute.xlu0 %2765
        %v2769 = vadd.f32 %v2754, %v2764
        %v2770 = vadd.f32 %v2755, %v2766
        %s2771 = sadd.s32 %s2749, 2
        %s2772 = sld [smem:[#allocation4 + %s2771]]
        %v2773 = vstv %s2772
        %v2774 = vmul.f32 %v2745, %v2773
        %v2775 = vmul.f32 %v2746, %v2773
        %2778 = vrot.lane.b32.xlu0 %v2774, 126
        %v2779 = vpop.permute.xlu0 %2778
        %2780 = vrot.lane.b32.xlu0 %v2775, 126
        %v2781 = vpop.permute.xlu0 %2780
        %v2784 = vadd.f32 %v2769, %v2779
        %v2785 = vadd.f32 %v2770, %v2781
        %v2786 = vld [vmem:[%s342 + $0x1] sm:$0xff]
        %v2787 = vld [vmem:[%s342 + $0x9] sm:$0xff]
        %s2788 = sadd.s32 %s2749, 3
        %s2789 = sld [smem:[#allocation4 + %s2788]]
        %v2790 = vstv %s2789
        %v2791 = vmul.f32 %v2786, %v2790
        %v2792 = vmul.f32 %v2787, %v2790
        %v2793 = vadd.f32 %v2784, %v2791
        %v2794 = vadd.f32 %v2785, %v2792
        %s2795 = sadd.s32 %s2749, 4
        %s2796 = sld [smem:[#allocation4 + %s2795]]
        %v2797 = vstv %s2796
        %v2798 = vmul.f32 %v2786, %v2797
        %v2799 = vmul.f32 %v2787, %v2797
        %2802 = vrot.lane.b32.xlu0 %v2798, 127
        %v2803 = vpop.permute.xlu0 %2802
        %2804 = vrot.lane.b32.xlu0 %v2799, 127
        %v2805 = vpop.permute.xlu0 %2804
        %v2808 = vadd.f32 %v2793, %v2803
        %v2809 = vadd.f32 %v2794, %v2805
        %s2810 = sadd.s32 %s2749, 5
        %s2811 = sld [smem:[#allocation4 + %s2810]]
        %v2812 = vstv %s2811
        %v2813 = vmul.f32 %v2786, %v2812
        %v2814 = vmul.f32 %v2787, %v2812
        %2817 = vrot.lane.b32.xlu0 %v2813, 126
        %v2818 = vpop.permute.xlu0 %2817
        %2819 = vrot.lane.b32.xlu0 %v2814, 126
        %v2820 = vpop.permute.xlu0 %2819
        %v2823 = vadd.f32 %v2808, %v2818
        %v2824 = vadd.f32 %v2809, %v2820
        %v2825 = vld [vmem:[%s342 + $0x2] sm:$0xff]
        %v2826 = vld [vmem:[%s342 + $0xa] sm:$0xff]
        %s2827 = sadd.s32 %s2749, 6
        %s2828 = sld [smem:[#allocation4 + %s2827]]
        %v2829 = vstv %s2828
        %v2830 = vmul.f32 %v2825, %v2829
        %v2831 = vmul.f32 %v2826, %v2829
        %v2832 = vadd.f32 %v2823, %v2830
        %v2833 = vadd.f32 %v2824, %v2831
        %s2834 = sadd.s32 %s2749, 7
        %s2835 = sld [smem:[#allocation4 + %s2834]]
        %v2836 = vstv %s2835
        %v2837 = vmul.f32 %v2825, %v2836
        %v2838 = vmul.f32 %v2826, %v2836
        %2841 = vrot.lane.b32.xlu0 %v2837, 127
        %v2842 = vpop.permute.xlu0 %2841
        %2843 = vrot.lane.b32.xlu0 %v2838, 127
        %v2844 = vpop.permute.xlu0 %2843
        %v2847 = vadd.f32 %v2832, %v2842
        %v2848 = vadd.f32 %v2833, %v2844
        %s2849 = sadd.s32 %s2749, 8
        %s2850 = sld [smem:[#allocation4 + %s2849]]
        %v2851 = vstv %s2850
        %v2852 = vmul.f32 %v2825, %v2851
        %v2853 = vmul.f32 %v2826, %v2851
        %2856 = vrot.lane.b32.xlu0 %v2852, 126
        %v2857 = vpop.permute.xlu0 %2856
        %2858 = vrot.lane.b32.xlu0 %v2853, 126
        %v2859 = vpop.permute.xlu0 %2858
        %v2862 = vadd.f32 %v2847, %v2857
        %v2863 = vadd.f32 %v2848, %v2859
        %v2864 = vld [vmem:[%s462] sm:$0xff]
        %v2865 = vld [vmem:[%s462 + $0x8] sm:$0xff]
        %s2866 = sadd.s32 %s2747, 2
        %s2867 = smul.u32 %s2866, 9
        %s2868 = sld [smem:[#allocation4 + %s2867]]
        %v2869 = vstv %s2868
        %v2870 = vmul.f32 %v2864, %v2869
        %v2871 = vmul.f32 %v2865, %v2869
        %v2872 = vadd.f32 %v2862, %v2870
        %v2873 = vadd.f32 %v2863, %v2871
        %s2874 = sadd.s32 %s2867, 1
        %s2875 = sld [smem:[#allocation4 + %s2874]]
        %v2876 = vstv %s2875
        %v2877 = vmul.f32 %v2864, %v2876
        %v2878 = vmul.f32 %v2865, %v2876
        %2881 = vrot.lane.b32.xlu0 %v2877, 127
        %v2882 = vpop.permute.xlu0 %2881
        %2883 = vrot.lane.b32.xlu0 %v2878, 127
        %v2884 = vpop.permute.xlu0 %2883
        %v2887 = vadd.f32 %v2872, %v2882
        %v2888 = vadd.f32 %v2873, %v2884
        %s2889 = sadd.s32 %s2867, 2
        %s2890 = sld [smem:[#allocation4 + %s2889]]
        %v2891 = vstv %s2890
        %v2892 = vmul.f32 %v2864, %v2891
        %v2893 = vmul.f32 %v2865, %v2891
        %2896 = vrot.lane.b32.xlu0 %v2892, 126
        %v2897 = vpop.permute.xlu0 %2896
        %2898 = vrot.lane.b32.xlu0 %v2893, 126
        %v2899 = vpop.permute.xlu0 %2898
        %v2902 = vadd.f32 %v2887, %v2897
        %v2903 = vadd.f32 %v2888, %v2899
        %v2904 = vld [vmem:[%s462 + $0x1] sm:$0xff]
        %v2905 = vld [vmem:[%s462 + $0x9] sm:$0xff]
        %s2906 = sadd.s32 %s2867, 3
        %s2907 = sld [smem:[#allocation4 + %s2906]]
        %v2908 = vstv %s2907
        %v2909 = vmul.f32 %v2904, %v2908
        %v2910 = vmul.f32 %v2905, %v2908
        %v2911 = vadd.f32 %v2902, %v2909
        %v2912 = vadd.f32 %v2903, %v2910
        %s2913 = sadd.s32 %s2867, 4
        %s2914 = sld [smem:[#allocation4 + %s2913]]
        %v2915 = vstv %s2914
        %v2916 = vmul.f32 %v2904, %v2915
        %v2917 = vmul.f32 %v2905, %v2915
        %2920 = vrot.lane.b32.xlu0 %v2916, 127
        %v2921 = vpop.permute.xlu0 %2920
        %2922 = vrot.lane.b32.xlu0 %v2917, 127
        %v2923 = vpop.permute.xlu0 %2922
        %v2926 = vadd.f32 %v2911, %v2921
        %v2927 = vadd.f32 %v2912, %v2923
        %s2928 = sadd.s32 %s2867, 5
        %s2929 = sld [smem:[#allocation4 + %s2928]]
        %v2930 = vstv %s2929
        %v2931 = vmul.f32 %v2904, %v2930
        %v2932 = vmul.f32 %v2905, %v2930
        %2935 = vrot.lane.b32.xlu0 %v2931, 126
        %v2936 = vpop.permute.xlu0 %2935
        %2937 = vrot.lane.b32.xlu0 %v2932, 126
        %v2938 = vpop.permute.xlu0 %2937
        %v2941 = vadd.f32 %v2926, %v2936
        %v2942 = vadd.f32 %v2927, %v2938
        %v2943 = vld [vmem:[%s462 + $0x2] sm:$0xff]
        %v2944 = vld [vmem:[%s462 + $0xa] sm:$0xff]
        %s2945 = sadd.s32 %s2867, 6
        %s2946 = sld [smem:[#allocation4 + %s2945]]
        %v2947 = vstv %s2946
        %v2948 = vmul.f32 %v2943, %v2947
        %v2949 = vmul.f32 %v2944, %v2947
        %v2950 = vadd.f32 %v2941, %v2948
        %v2951 = vadd.f32 %v2942, %v2949
        %s2952 = sadd.s32 %s2867, 7
        %s2953 = sld [smem:[#allocation4 + %s2952]]
        %v2954 = vstv %s2953
        %v2955 = vmul.f32 %v2943, %v2954
        %v2956 = vmul.f32 %v2944, %v2954
        %2959 = vrot.lane.b32.xlu0 %v2955, 127
        %v2960 = vpop.permute.xlu0 %2959
        %2961 = vrot.lane.b32.xlu0 %v2956, 127
        %v2962 = vpop.permute.xlu0 %2961
        %v2965 = vadd.f32 %v2950, %v2960
        %v2966 = vadd.f32 %v2951, %v2962
        %s2967 = sadd.s32 %s2867, 8
        %s2968 = sld [smem:[#allocation4 + %s2967]]
        %v2969 = vstv %s2968
        %v2970 = vmul.f32 %v2943, %v2969
        %v2971 = vmul.f32 %v2944, %v2969
        %2974 = vrot.lane.b32.xlu0 %v2970, 126
        %v2975 = vpop.permute.xlu0 %2974
        %2976 = vrot.lane.b32.xlu0 %v2971, 126
        %v2977 = vpop.permute.xlu0 %2976
        %v2980 = vadd.f32 %v2965, %v2975
        %v2981 = vadd.f32 %v2966, %v2977
        %v2982 = vld [vmem:[%s581] sm:$0xff]
        %v2983 = vld [vmem:[%s581 + $0x8] sm:$0xff]
        %s2984 = sadd.s32 %s2747, 3
        %s2985 = smul.u32 %s2984, 9
        %s2986 = sld [smem:[#allocation4 + %s2985]]
        %v2987 = vstv %s2986
        %v2988 = vmul.f32 %v2982, %v2987
        %v2989 = vmul.f32 %v2983, %v2987
        %v2990 = vadd.f32 %v2980, %v2988
        %v2991 = vadd.f32 %v2981, %v2989
        %s2992 = sadd.s32 %s2985, 1
        %s2993 = sld [smem:[#allocation4 + %s2992]]
        %v2994 = vstv %s2993
        %v2995 = vmul.f32 %v2982, %v2994
        %v2996 = vmul.f32 %v2983, %v2994
        %2999 = vrot.lane.b32.xlu0 %v2995, 127
        %v3000 = vpop.permute.xlu0 %2999
        %3001 = vrot.lane.b32.xlu0 %v2996, 127
        %v3002 = vpop.permute.xlu0 %3001
        %v3005 = vadd.f32 %v2990, %v3000
        %v3006 = vadd.f32 %v2991, %v3002
        %s3007 = sadd.s32 %s2985, 2
        %s3008 = sld [smem:[#allocation4 + %s3007]]
        %v3009 = vstv %s3008
        %v3010 = vmul.f32 %v2982, %v3009
        %v3011 = vmul.f32 %v2983, %v3009
        %3014 = vrot.lane.b32.xlu0 %v3010, 126
        %v3015 = vpop.permute.xlu0 %3014
        %3016 = vrot.lane.b32.xlu0 %v3011, 126
        %v3017 = vpop.permute.xlu0 %3016
        %v3020 = vadd.f32 %v3005, %v3015
        %v3021 = vadd.f32 %v3006, %v3017
        %v3022 = vld [vmem:[%s581 + $0x1] sm:$0xff]
        %v3023 = vld [vmem:[%s581 + $0x9] sm:$0xff]
        %s3024 = sadd.s32 %s2985, 3
        %s3025 = sld [smem:[#allocation4 + %s3024]]
        %v3026 = vstv %s3025
        %v3027 = vmul.f32 %v3022, %v3026
        %v3028 = vmul.f32 %v3023, %v3026
        %v3029 = vadd.f32 %v3020, %v3027
        %v3030 = vadd.f32 %v3021, %v3028
        %s3031 = sadd.s32 %s2985, 4
        %s3032 = sld [smem:[#allocation4 + %s3031]]
        %v3033 = vstv %s3032
        %v3034 = vmul.f32 %v3022, %v3033
        %v3035 = vmul.f32 %v3023, %v3033
        %3038 = vrot.lane.b32.xlu0 %v3034, 127
        %v3039 = vpop.permute.xlu0 %3038
        %3040 = vrot.lane.b32.xlu0 %v3035, 127
        %v3041 = vpop.permute.xlu0 %3040
        %v3044 = vadd.f32 %v3029, %v3039
        %v3045 = vadd.f32 %v3030, %v3041
        %s3046 = sadd.s32 %s2985, 5
        %s3047 = sld [smem:[#allocation4 + %s3046]]
        %v3048 = vstv %s3047
        %v3049 = vmul.f32 %v3022, %v3048
        %v3050 = vmul.f32 %v3023, %v3048
        %3053 = vrot.lane.b32.xlu0 %v3049, 126
        %v3054 = vpop.permute.xlu0 %3053
        %3055 = vrot.lane.b32.xlu0 %v3050, 126
        %v3056 = vpop.permute.xlu0 %3055
        %v3059 = vadd.f32 %v3044, %v3054
        %v3060 = vadd.f32 %v3045, %v3056
        %v3061 = vld [vmem:[%s581 + $0x2] sm:$0xff]
        %v3062 = vld [vmem:[%s581 + $0xa] sm:$0xff]
        %s3063 = sadd.s32 %s2985, 6
        %s3064 = sld [smem:[#allocation4 + %s3063]]
        %v3065 = vstv %s3064
        %v3066 = vmul.f32 %v3061, %v3065
        %v3067 = vmul.f32 %v3062, %v3065
        %v3068 = vadd.f32 %v3059, %v3066
        %v3069 = vadd.f32 %v3060, %v3067
        %s3070 = sadd.s32 %s2985, 7
        %s3071 = sld [smem:[#allocation4 + %s3070]]
        %v3072 = vstv %s3071
        %v3073 = vmul.f32 %v3061, %v3072
        %v3074 = vmul.f32 %v3062, %v3072
        %3077 = vrot.lane.b32.xlu0 %v3073, 127
        %v3078 = vpop.permute.xlu0 %3077
        %3079 = vrot.lane.b32.xlu0 %v3074, 127
        %v3080 = vpop.permute.xlu0 %3079
        %v3083 = vadd.f32 %v3068, %v3078
        %v3084 = vadd.f32 %v3069, %v3080
        %s3085 = sadd.s32 %s2985, 8
        %s3086 = sld [smem:[#allocation4 + %s3085]]
        %v3087 = vstv %s3086
        %v3088 = vmul.f32 %v3061, %v3087
        %v3089 = vmul.f32 %v3062, %v3087
        %3092 = vrot.lane.b32.xlu0 %v3088, 126
        %v3093 = vpop.permute.xlu0 %3092
        %3094 = vrot.lane.b32.xlu0 %v3089, 126
        %v3095 = vpop.permute.xlu0 %3094
        %v3098 = vadd.f32 %v3083, %v3093
        %v3099 = vadd.f32 %v3084, %v3095
        %v3100 = vmax.f32 %v3098, 0.0
        %v3101 = vmax.f32 %v3099, 0.0
        %s3102 = scalar_lea.vmem %s135, 80 [#allocation6]
        %3103 = vst.msk [vmem:[%s3102] sm:$0xff] %vm702, %v3100
        %3104 = vst.msk [vmem:[%s3102 + $0x8] sm:$0xff] %vm702, %v3101
        %s3105 = sadd.s32 %s142, 6
        %s3106 = sld [smem:[#allocation5 + %s3105]]
        %v3107 = vstv %s3106
        %v3108 = vld [vmem:[#allocation2] sm:$0xff]
        %v3109 = vld [vmem:[#allocation2 + $0x8] sm:$0xff]
        %s3110 = smul.u32 %s3105, 36
        %s3111 = sld [smem:[#allocation4 + %s3110]]
        %v3112 = vstv %s3111
        %v3113 = vmul.f32 %v3108, %v3112
        %v3114 = vmul.f32 %v3109, %v3112
        %v3115 = vadd.f32 %v3107, %v3113
        %v3116 = vadd.f32 %v3107, %v3114
        %s3117 = sadd.s32 %s3110, 1
        %s3118 = sld [smem:[#allocation4 + %s3117]]
        %v3119 = vstv %s3118
        %v3120 = vmul.f32 %v3108, %v3119
        %v3121 = vmul.f32 %v3109, %v3119
        %3124 = vrot.lane.b32.xlu0 %v3120, 127
        %v3125 = vpop.permute.xlu0 %3124
        %3126 = vrot.lane.b32.xlu0 %v3121, 127
        %v3127 = vpop.permute.xlu0 %3126
        %v3130 = vadd.f32 %v3115, %v3125
        %v3131 = vadd.f32 %v3116, %v3127
        %s3132 = sadd.s32 %s3110, 2
        %s3133 = sld [smem:[#allocation4 + %s3132]]
        %v3134 = vstv %s3133
        %v3135 = vmul.f32 %v3108, %v3134
        %v3136 = vmul.f32 %v3109, %v3134
        %3139 = vrot.lane.b32.xlu0 %v3135, 126
        %v3140 = vpop.permute.xlu0 %3139
        %3141 = vrot.lane.b32.xlu0 %v3136, 126
        %v3142 = vpop.permute.xlu0 %3141
        %v3145 = vadd.f32 %v3130, %v3140
        %v3146 = vadd.f32 %v3131, %v3142
        %v3147 = vld [vmem:[#allocation2 + $0x1] sm:$0xff]
        %v3148 = vld [vmem:[#allocation2 + $0x9] sm:$0xff]
        %s3149 = sadd.s32 %s3110, 3
        %s3150 = sld [smem:[#allocation4 + %s3149]]
        %v3151 = vstv %s3150
        %v3152 = vmul.f32 %v3147, %v3151
        %v3153 = vmul.f32 %v3148, %v3151
        %v3154 = vadd.f32 %v3145, %v3152
        %v3155 = vadd.f32 %v3146, %v3153
        %s3156 = sadd.s32 %s3110, 4
        %s3157 = sld [smem:[#allocation4 + %s3156]]
        %v3158 = vstv %s3157
        %v3159 = vmul.f32 %v3147, %v3158
        %v3160 = vmul.f32 %v3148, %v3158
        %3163 = vrot.lane.b32.xlu0 %v3159, 127
        %v3164 = vpop.permute.xlu0 %3163
        %3165 = vrot.lane.b32.xlu0 %v3160, 127
        %v3166 = vpop.permute.xlu0 %3165
        %v3169 = vadd.f32 %v3154, %v3164
        %v3170 = vadd.f32 %v3155, %v3166
        %s3171 = sadd.s32 %s3110, 5
        %s3172 = sld [smem:[#allocation4 + %s3171]]
        %v3173 = vstv %s3172
        %v3174 = vmul.f32 %v3147, %v3173
        %v3175 = vmul.f32 %v3148, %v3173
        %3178 = vrot.lane.b32.xlu0 %v3174, 126
        %v3179 = vpop.permute.xlu0 %3178
        %3180 = vrot.lane.b32.xlu0 %v3175, 126
        %v3181 = vpop.permute.xlu0 %3180
        %v3184 = vadd.f32 %v3169, %v3179
        %v3185 = vadd.f32 %v3170, %v3181
        %v3186 = vld [vmem:[#allocation2 + $0x2] sm:$0xff]
        %v3187 = vld [vmem:[#allocation2 + $0xa] sm:$0xff]
        %s3188 = sadd.s32 %s3110, 6
        %s3189 = sld [smem:[#allocation4 + %s3188]]
        %v3190 = vstv %s3189
        %v3191 = vmul.f32 %v3186, %v3190
        %v3192 = vmul.f32 %v3187, %v3190
        %v3193 = vadd.f32 %v3184, %v3191
        %v3194 = vadd.f32 %v3185, %v3192
        %s3195 = sadd.s32 %s3110, 7
        %s3196 = sld [smem:[#allocation4 + %s3195]]
        %v3197 = vstv %s3196
        %v3198 = vmul.f32 %v3186, %v3197
        %v3199 = vmul.f32 %v3187, %v3197
        %3202 = vrot.lane.b32.xlu0 %v3198, 127
        %v3203 = vpop.permute.xlu0 %3202
        %3204 = vrot.lane.b32.xlu0 %v3199, 127
        %v3205 = vpop.permute.xlu0 %3204
        %v3208 = vadd.f32 %v3193, %v3203
        %v3209 = vadd.f32 %v3194, %v3205
        %s3210 = sadd.s32 %s3110, 8
        %s3211 = sld [smem:[#allocation4 + %s3210]]
        %v3212 = vstv %s3211
        %v3213 = vmul.f32 %v3186, %v3212
        %v3214 = vmul.f32 %v3187, %v3212
        %3217 = vrot.lane.b32.xlu0 %v3213, 126
        %v3218 = vpop.permute.xlu0 %3217
        %3219 = vrot.lane.b32.xlu0 %v3214, 126
        %v3220 = vpop.permute.xlu0 %3219
        %v3223 = vadd.f32 %v3208, %v3218
        %v3224 = vadd.f32 %v3209, %v3220
        %v3225 = vld [vmem:[%s342] sm:$0xff]
        %v3226 = vld [vmem:[%s342 + $0x8] sm:$0xff]
        %s3227 = smul.u32 %s3105, 4
        %s3228 = sadd.s32 %s3227, 1
        %s3229 = smul.u32 %s3228, 9
        %s3230 = sld [smem:[#allocation4 + %s3229]]
        %v3231 = vstv %s3230
        %v3232 = vmul.f32 %v3225, %v3231
        %v3233 = vmul.f32 %v3226, %v3231
        %v3234 = vadd.f32 %v3223, %v3232
        %v3235 = vadd.f32 %v3224, %v3233
        %s3236 = sadd.s32 %s3229, 1
        %s3237 = sld [smem:[#allocation4 + %s3236]]
        %v3238 = vstv %s3237
        %v3239 = vmul.f32 %v3225, %v3238
        %v3240 = vmul.f32 %v3226, %v3238
        %3243 = vrot.lane.b32.xlu0 %v3239, 127
        %v3244 = vpop.permute.xlu0 %3243
        %3245 = vrot.lane.b32.xlu0 %v3240, 127
        %v3246 = vpop.permute.xlu0 %3245
        %v3249 = vadd.f32 %v3234, %v3244
        %v3250 = vadd.f32 %v3235, %v3246
        %s3251 = sadd.s32 %s3229, 2
        %s3252 = sld [smem:[#allocation4 + %s3251]]
        %v3253 = vstv %s3252
        %v3254 = vmul.f32 %v3225, %v3253
        %v3255 = vmul.f32 %v3226, %v3253
        %3258 = vrot.lane.b32.xlu0 %v3254, 126
        %v3259 = vpop.permute.xlu0 %3258
        %3260 = vrot.lane.b32.xlu0 %v3255, 126
        %v3261 = vpop.permute.xlu0 %3260
        %v3264 = vadd.f32 %v3249, %v3259
        %v3265 = vadd.f32 %v3250, %v3261
        %v3266 = vld [vmem:[%s342 + $0x1] sm:$0xff]
        %v3267 = vld [vmem:[%s342 + $0x9] sm:$0xff]
        %s3268 = sadd.s32 %s3229, 3
        %s3269 = sld [smem:[#allocation4 + %s3268]]
        %v3270 = vstv %s3269
        %v3271 = vmul.f32 %v3266, %v3270
        %v3272 = vmul.f32 %v3267, %v3270
        %v3273 = vadd.f32 %v3264, %v3271
        %v3274 = vadd.f32 %v3265, %v3272
        %s3275 = sadd.s32 %s3229, 4
        %s3276 = sld [smem:[#allocation4 + %s3275]]
        %v3277 = vstv %s3276
        %v3278 = vmul.f32 %v3266, %v3277
        %v3279 = vmul.f32 %v3267, %v3277
        %3282 = vrot.lane.b32.xlu0 %v3278, 127
        %v3283 = vpop.permute.xlu0 %3282
        %3284 = vrot.lane.b32.xlu0 %v3279, 127
        %v3285 = vpop.permute.xlu0 %3284
        %v3288 = vadd.f32 %v3273, %v3283
        %v3289 = vadd.f32 %v3274, %v3285
        %s3290 = sadd.s32 %s3229, 5
        %s3291 = sld [smem:[#allocation4 + %s3290]]
        %v3292 = vstv %s3291
        %v3293 = vmul.f32 %v3266, %v3292
        %v3294 = vmul.f32 %v3267, %v3292
        %3297 = vrot.lane.b32.xlu0 %v3293, 126
        %v3298 = vpop.permute.xlu0 %3297
        %3299 = vrot.lane.b32.xlu0 %v3294, 126
        %v3300 = vpop.permute.xlu0 %3299
        %v3303 = vadd.f32 %v3288, %v3298
        %v3304 = vadd.f32 %v3289, %v3300
        %v3305 = vld [vmem:[%s342 + $0x2] sm:$0xff]
        %v3306 = vld [vmem:[%s342 + $0xa] sm:$0xff]
        %s3307 = sadd.s32 %s3229, 6
        %s3308 = sld [smem:[#allocation4 + %s3307]]
        %v3309 = vstv %s3308
        %v3310 = vmul.f32 %v3305, %v3309
        %v3311 = vmul.f32 %v3306, %v3309
        %v3312 = vadd.f32 %v3303, %v3310
        %v3313 = vadd.f32 %v3304, %v3311
        %s3314 = sadd.s32 %s3229, 7
        %s3315 = sld [smem:[#allocation4 + %s3314]]
        %v3316 = vstv %s3315
        %v3317 = vmul.f32 %v3305, %v3316
        %v3318 = vmul.f32 %v3306, %v3316
        %3321 = vrot.lane.b32.xlu0 %v3317, 127
        %v3322 = vpop.permute.xlu0 %3321
        %3323 = vrot.lane.b32.xlu0 %v3318, 127
        %v3324 = vpop.permute.xlu0 %3323
        %v3327 = vadd.f32 %v3312, %v3322
        %v3328 = vadd.f32 %v3313, %v3324
        %s3329 = sadd.s32 %s3229, 8
        %s3330 = sld [smem:[#allocation4 + %s3329]]
        %v3331 = vstv %s3330
        %v3332 = vmul.f32 %v3305, %v3331
        %v3333 = vmul.f32 %v3306, %v3331
        %3336 = vrot.lane.b32.xlu0 %v3332, 126
        %v3337 = vpop.permute.xlu0 %3336
        %3338 = vrot.lane.b32.xlu0 %v3333, 126
        %v3339 = vpop.permute.xlu0 %3338
        %v3342 = vadd.f32 %v3327, %v3337
        %v3343 = vadd.f32 %v3328, %v3339
        %v3344 = vld [vmem:[%s462] sm:$0xff]
        %v3345 = vld [vmem:[%s462 + $0x8] sm:$0xff]
        %s3346 = sadd.s32 %s3227, 2
        %s3347 = smul.u32 %s3346, 9
        %s3348 = sld [smem:[#allocation4 + %s3347]]
        %v3349 = vstv %s3348
        %v3350 = vmul.f32 %v3344, %v3349
        %v3351 = vmul.f32 %v3345, %v3349
        %v3352 = vadd.f32 %v3342, %v3350
        %v3353 = vadd.f32 %v3343, %v3351
        %s3354 = sadd.s32 %s3347, 1
        %s3355 = sld [smem:[#allocation4 + %s3354]]
        %v3356 = vstv %s3355
        %v3357 = vmul.f32 %v3344, %v3356
        %v3358 = vmul.f32 %v3345, %v3356
        %3361 = vrot.lane.b32.xlu0 %v3357, 127
        %v3362 = vpop.permute.xlu0 %3361
        %3363 = vrot.lane.b32.xlu0 %v3358, 127
        %v3364 = vpop.permute.xlu0 %3363
        %v3367 = vadd.f32 %v3352, %v3362
        %v3368 = vadd.f32 %v3353, %v3364
        %s3369 = sadd.s32 %s3347, 2
        %s3370 = sld [smem:[#allocation4 + %s3369]]
        %v3371 = vstv %s3370
        %v3372 = vmul.f32 %v3344, %v3371
        %v3373 = vmul.f32 %v3345, %v3371
        %3376 = vrot.lane.b32.xlu0 %v3372, 126
        %v3377 = vpop.permute.xlu0 %3376
        %3378 = vrot.lane.b32.xlu0 %v3373, 126
        %v3379 = vpop.permute.xlu0 %3378
        %v3382 = vadd.f32 %v3367, %v3377
        %v3383 = vadd.f32 %v3368, %v3379
        %v3384 = vld [vmem:[%s462 + $0x1] sm:$0xff]
        %v3385 = vld [vmem:[%s462 + $0x9] sm:$0xff]
        %s3386 = sadd.s32 %s3347, 3
        %s3387 = sld [smem:[#allocation4 + %s3386]]
        %v3388 = vstv %s3387
        %v3389 = vmul.f32 %v3384, %v3388
        %v3390 = vmul.f32 %v3385, %v3388
        %v3391 = vadd.f32 %v3382, %v3389
        %v3392 = vadd.f32 %v3383, %v3390
        %s3393 = sadd.s32 %s3347, 4
        %s3394 = sld [smem:[#allocation4 + %s3393]]
        %v3395 = vstv %s3394
        %v3396 = vmul.f32 %v3384, %v3395
        %v3397 = vmul.f32 %v3385, %v3395
        %3400 = vrot.lane.b32.xlu0 %v3396, 127
        %v3401 = vpop.permute.xlu0 %3400
        %3402 = vrot.lane.b32.xlu0 %v3397, 127
        %v3403 = vpop.permute.xlu0 %3402
        %v3406 = vadd.f32 %v3391, %v3401
        %v3407 = vadd.f32 %v3392, %v3403
        %s3408 = sadd.s32 %s3347, 5
        %s3409 = sld [smem:[#allocation4 + %s3408]]
        %v3410 = vstv %s3409
        %v3411 = vmul.f32 %v3384, %v3410
        %v3412 = vmul.f32 %v3385, %v3410
        %3415 = vrot.lane.b32.xlu0 %v3411, 126
        %v3416 = vpop.permute.xlu0 %3415
        %3417 = vrot.lane.b32.xlu0 %v3412, 126
        %v3418 = vpop.permute.xlu0 %3417
        %v3421 = vadd.f32 %v3406, %v3416
        %v3422 = vadd.f32 %v3407, %v3418
        %v3423 = vld [vmem:[%s462 + $0x2] sm:$0xff]
        %v3424 = vld [vmem:[%s462 + $0xa] sm:$0xff]
        %s3425 = sadd.s32 %s3347, 6
        %s3426 = sld [smem:[#allocation4 + %s3425]]
        %v3427 = vstv %s3426
        %v3428 = vmul.f32 %v3423, %v3427
        %v3429 = vmul.f32 %v3424, %v3427
        %v3430 = vadd.f32 %v3421, %v3428
        %v3431 = vadd.f32 %v3422, %v3429
        %s3432 = sadd.s32 %s3347, 7
        %s3433 = sld [smem:[#allocation4 + %s3432]]
        %v3434 = vstv %s3433
        %v3435 = vmul.f32 %v3423, %v3434
        %v3436 = vmul.f32 %v3424, %v3434
        %3439 = vrot.lane.b32.xlu0 %v3435, 127
        %v3440 = vpop.permute.xlu0 %3439
        %3441 = vrot.lane.b32.xlu0 %v3436, 127
        %v3442 = vpop.permute.xlu0 %3441
        %v3445 = vadd.f32 %v3430, %v3440
        %v3446 = vadd.f32 %v3431, %v3442
        %s3447 = sadd.s32 %s3347, 8
        %s3448 = sld [smem:[#allocation4 + %s3447]]
        %v3449 = vstv %s3448
        %v3450 = vmul.f32 %v3423, %v3449
        %v3451 = vmul.f32 %v3424, %v3449
        %3454 = vrot.lane.b32.xlu0 %v3450, 126
        %v3455 = vpop.permute.xlu0 %3454
        %3456 = vrot.lane.b32.xlu0 %v3451, 126
        %v3457 = vpop.permute.xlu0 %3456
        %v3460 = vadd.f32 %v3445, %v3455
        %v3461 = vadd.f32 %v3446, %v3457
        %v3462 = vld [vmem:[%s581] sm:$0xff]
        %v3463 = vld [vmem:[%s581 + $0x8] sm:$0xff]
        %s3464 = sadd.s32 %s3227, 3
        %s3465 = smul.u32 %s3464, 9
        %s3466 = sld [smem:[#allocation4 + %s3465]]
        %v3467 = vstv %s3466
        %v3468 = vmul.f32 %v3462, %v3467
        %v3469 = vmul.f32 %v3463, %v3467
        %v3470 = vadd.f32 %v3460, %v3468
        %v3471 = vadd.f32 %v3461, %v3469
        %s3472 = sadd.s32 %s3465, 1
        %s3473 = sld [smem:[#allocation4 + %s3472]]
        %v3474 = vstv %s3473
        %v3475 = vmul.f32 %v3462, %v3474
        %v3476 = vmul.f32 %v3463, %v3474
        %3479 = vrot.lane.b32.xlu0 %v3475, 127
        %v3480 = vpop.permute.xlu0 %3479
        %3481 = vrot.lane.b32.xlu0 %v3476, 127
        %v3482 = vpop.permute.xlu0 %3481
        %v3485 = vadd.f32 %v3470, %v3480
        %v3486 = vadd.f32 %v3471, %v3482
        %s3487 = sadd.s32 %s3465, 2
        %s3488 = sld [smem:[#allocation4 + %s3487]]
        %v3489 = vstv %s3488
        %v3490 = vmul.f32 %v3462, %v3489
        %v3491 = vmul.f32 %v3463, %v3489
        %3494 = vrot.lane.b32.xlu0 %v3490, 126
        %v3495 = vpop.permute.xlu0 %3494
        %3496 = vrot.lane.b32.xlu0 %v3491, 126
        %v3497 = vpop.permute.xlu0 %3496
        %v3500 = vadd.f32 %v3485, %v3495
        %v3501 = vadd.f32 %v3486, %v3497
        %v3502 = vld [vmem:[%s581 + $0x1] sm:$0xff]
        %v3503 = vld [vmem:[%s581 + $0x9] sm:$0xff]
        %s3504 = sadd.s32 %s3465, 3
        %s3505 = sld [smem:[#allocation4 + %s3504]]
        %v3506 = vstv %s3505
        %v3507 = vmul.f32 %v3502, %v3506
        %v3508 = vmul.f32 %v3503, %v3506
        %v3509 = vadd.f32 %v3500, %v3507
        %v3510 = vadd.f32 %v3501, %v3508
        %s3511 = sadd.s32 %s3465, 4
        %s3512 = sld [smem:[#allocation4 + %s3511]]
        %v3513 = vstv %s3512
        %v3514 = vmul.f32 %v3502, %v3513
        %v3515 = vmul.f32 %v3503, %v3513
        %3518 = vrot.lane.b32.xlu0 %v3514, 127
        %v3519 = vpop.permute.xlu0 %3518
        %3520 = vrot.lane.b32.xlu0 %v3515, 127
        %v3521 = vpop.permute.xlu0 %3520
        %v3524 = vadd.f32 %v3509, %v3519
        %v3525 = vadd.f32 %v3510, %v3521
        %s3526 = sadd.s32 %s3465, 5
        %s3527 = sld [smem:[#allocation4 + %s3526]]
        %v3528 = vstv %s3527
        %v3529 = vmul.f32 %v3502, %v3528
        %v3530 = vmul.f32 %v3503, %v3528
        %3533 = vrot.lane.b32.xlu0 %v3529, 126
        %v3534 = vpop.permute.xlu0 %3533
        %3535 = vrot.lane.b32.xlu0 %v3530, 126
        %v3536 = vpop.permute.xlu0 %3535
        %v3539 = vadd.f32 %v3524, %v3534
        %v3540 = vadd.f32 %v3525, %v3536
        %v3541 = vld [vmem:[%s581 + $0x2] sm:$0xff]
        %v3542 = vld [vmem:[%s581 + $0xa] sm:$0xff]
        %s3543 = sadd.s32 %s3465, 6
        %s3544 = sld [smem:[#allocation4 + %s3543]]
        %v3545 = vstv %s3544
        %v3546 = vmul.f32 %v3541, %v3545
        %v3547 = vmul.f32 %v3542, %v3545
        %v3548 = vadd.f32 %v3539, %v3546
        %v3549 = vadd.f32 %v3540, %v3547
        %s3550 = sadd.s32 %s3465, 7
        %s3551 = sld [smem:[#allocation4 + %s3550]]
        %v3552 = vstv %s3551
        %v3553 = vmul.f32 %v3541, %v3552
        %v3554 = vmul.f32 %v3542, %v3552
        %3557 = vrot.lane.b32.xlu0 %v3553, 127
        %v3558 = vpop.permute.xlu0 %3557
        %3559 = vrot.lane.b32.xlu0 %v3554, 127
        %v3560 = vpop.permute.xlu0 %3559
        %v3563 = vadd.f32 %v3548, %v3558
        %v3564 = vadd.f32 %v3549, %v3560
        %s3565 = sadd.s32 %s3465, 8
        %s3566 = sld [smem:[#allocation4 + %s3565]]
        %v3567 = vstv %s3566
        %v3568 = vmul.f32 %v3541, %v3567
        %v3569 = vmul.f32 %v3542, %v3567
        %3572 = vrot.lane.b32.xlu0 %v3568, 126
        %v3573 = vpop.permute.xlu0 %3572
        %3574 = vrot.lane.b32.xlu0 %v3569, 126
        %v3575 = vpop.permute.xlu0 %3574
        %v3578 = vadd.f32 %v3563, %v3573
        %v3579 = vadd.f32 %v3564, %v3575
        %v3580 = vmax.f32 %v3578, 0.0
        %v3581 = vmax.f32 %v3579, 0.0
        %s3582 = scalar_lea.vmem %s135, 96 [#allocation6]
        %3583 = vst.msk [vmem:[%s3582] sm:$0xff] %vm702, %v3580
        %3584 = vst.msk [vmem:[%s3582 + $0x8] sm:$0xff] %vm702, %v3581
        %s3585 = sadd.s32 %s142, 7
        %s3586 = sld [smem:[#allocation5 + %s3585]]
        %v3587 = vstv %s3586
        %v3588 = vld [vmem:[#allocation2] sm:$0xff]
        %v3589 = vld [vmem:[#allocation2 + $0x8] sm:$0xff]
        %s3590 = smul.u32 %s3585, 36
        %s3591 = sld [smem:[#allocation4 + %s3590]]
        %v3592 = vstv %s3591
        %v3593 = vmul.f32 %v3588, %v3592
        %v3594 = vmul.f32 %v3589, %v3592
        %v3595 = vadd.f32 %v3587, %v3593
        %v3596 = vadd.f32 %v3587, %v3594
        %s3597 = sadd.s32 %s3590, 1
        %s3598 = sld [smem:[#allocation4 + %s3597]]
        %v3599 = vstv %s3598
        %v3600 = vmul.f32 %v3588, %v3599
        %v3601 = vmul.f32 %v3589, %v3599
        %3604 = vrot.lane.b32.xlu0 %v3600, 127
        %v3605 = vpop.permute.xlu0 %3604
        %3606 = vrot.lane.b32.xlu0 %v3601, 127
        %v3607 = vpop.permute.xlu0 %3606
        %v3610 = vadd.f32 %v3595, %v3605
        %v3611 = vadd.f32 %v3596, %v3607
        %s3612 = sadd.s32 %s3590, 2
        %s3613 = sld [smem:[#allocation4 + %s3612]]
        %v3614 = vstv %s3613
        %v3615 = vmul.f32 %v3588, %v3614
        %v3616 = vmul.f32 %v3589, %v3614
        %3619 = vrot.lane.b32.xlu0 %v3615, 126
        %v3620 = vpop.permute.xlu0 %3619
        %3621 = vrot.lane.b32.xlu0 %v3616, 126
        %v3622 = vpop.permute.xlu0 %3621
        %v3625 = vadd.f32 %v3610, %v3620
        %v3626 = vadd.f32 %v3611, %v3622
        %v3627 = vld [vmem:[#allocation2 + $0x1] sm:$0xff]
        %v3628 = vld [vmem:[#allocation2 + $0x9] sm:$0xff]
        %s3629 = sadd.s32 %s3590, 3
        %s3630 = sld [smem:[#allocation4 + %s3629]]
        %v3631 = vstv %s3630
        %v3632 = vmul.f32 %v3627, %v3631
        %v3633 = vmul.f32 %v3628, %v3631
        %v3634 = vadd.f32 %v3625, %v3632
        %v3635 = vadd.f32 %v3626, %v3633
        %s3636 = sadd.s32 %s3590, 4
        %s3637 = sld [smem:[#allocation4 + %s3636]]
        %v3638 = vstv %s3637
        %v3639 = vmul.f32 %v3627, %v3638
        %v3640 = vmul.f32 %v3628, %v3638
        %3643 = vrot.lane.b32.xlu0 %v3639, 127
        %v3644 = vpop.permute.xlu0 %3643
        %3645 = vrot.lane.b32.xlu0 %v3640, 127
        %v3646 = vpop.permute.xlu0 %3645
        %v3649 = vadd.f32 %v3634, %v3644
        %v3650 = vadd.f32 %v3635, %v3646
        %s3651 = sadd.s32 %s3590, 5
        %s3652 = sld [smem:[#allocation4 + %s3651]]
        %v3653 = vstv %s3652
        %v3654 = vmul.f32 %v3627, %v3653
        %v3655 = vmul.f32 %v3628, %v3653
        %3658 = vrot.lane.b32.xlu0 %v3654, 126
        %v3659 = vpop.permute.xlu0 %3658
        %3660 = vrot.lane.b32.xlu0 %v3655, 126
        %v3661 = vpop.permute.xlu0 %3660
        %v3664 = vadd.f32 %v3649, %v3659
        %v3665 = vadd.f32 %v3650, %v3661
        %v3666 = vld [vmem:[#allocation2 + $0x2] sm:$0xff]
        %v3667 = vld [vmem:[#allocation2 + $0xa] sm:$0xff]
        %s3668 = sadd.s32 %s3590, 6
        %s3669 = sld [smem:[#allocation4 + %s3668]]
        %v3670 = vstv %s3669
        %v3671 = vmul.f32 %v3666, %v3670
        %v3672 = vmul.f32 %v3667, %v3670
        %v3673 = vadd.f32 %v3664, %v3671
        %v3674 = vadd.f32 %v3665, %v3672
        %s3675 = sadd.s32 %s3590, 7
        %s3676 = sld [smem:[#allocation4 + %s3675]]
        %v3677 = vstv %s3676
        %v3678 = vmul.f32 %v3666, %v3677
        %v3679 = vmul.f32 %v3667, %v3677
        %3682 = vrot.lane.b32.xlu0 %v3678, 127
        %v3683 = vpop.permute.xlu0 %3682
        %3684 = vrot.lane.b32.xlu0 %v3679, 127
        %v3685 = vpop.permute.xlu0 %3684
        %v3688 = vadd.f32 %v3673, %v3683
        %v3689 = vadd.f32 %v3674, %v3685
        %s3690 = sadd.s32 %s3590, 8
        %s3691 = sld [smem:[#allocation4 + %s3690]]
        %v3692 = vstv %s3691
        %v3693 = vmul.f32 %v3666, %v3692
        %v3694 = vmul.f32 %v3667, %v3692
        %3697 = vrot.lane.b32.xlu0 %v3693, 126
        %v3698 = vpop.permute.xlu0 %3697
        %3699 = vrot.lane.b32.xlu0 %v3694, 126
        %v3700 = vpop.permute.xlu0 %3699
        %v3703 = vadd.f32 %v3688, %v3698
        %v3704 = vadd.f32 %v3689, %v3700
        %v3705 = vld [vmem:[%s342] sm:$0xff]
        %v3706 = vld [vmem:[%s342 + $0x8] sm:$0xff]
        %s3707 = smul.u32 %s3585, 4
        %s3708 = sadd.s32 %s3707, 1
        %s3709 = smul.u32 %s3708, 9
        %s3710 = sld [smem:[#allocation4 + %s3709]]
        %v3711 = vstv %s3710
        %v3712 = vmul.f32 %v3705, %v3711
        %v3713 = vmul.f32 %v3706, %v3711
        %v3714 = vadd.f32 %v3703, %v3712
        %v3715 = vadd.f32 %v3704, %v3713
        %s3716 = sadd.s32 %s3709, 1
        %s3717 = sld [smem:[#allocation4 + %s3716]]
        %v3718 = vstv %s3717
        %v3719 = vmul.f32 %v3705, %v3718
        %v3720 = vmul.f32 %v3706, %v3718
        %3723 = vrot.lane.b32.xlu0 %v3719, 127
        %v3724 = vpop.permute.xlu0 %3723
        %3725 = vrot.lane.b32.xlu0 %v3720, 127
        %v3726 = vpop.permute.xlu0 %3725
        %v3729 = vadd.f32 %v3714, %v3724
        %v3730 = vadd.f32 %v3715, %v3726
        %s3731 = sadd.s32 %s3709, 2
        %s3732 = sld [smem:[#allocation4 + %s3731]]
        %v3733 = vstv %s3732
        %v3734 = vmul.f32 %v3705, %v3733
        %v3735 = vmul.f32 %v3706, %v3733
        %3738 = vrot.lane.b32.xlu0 %v3734, 126
        %v3739 = vpop.permute.xlu0 %3738
        %3740 = vrot.lane.b32.xlu0 %v3735, 126
        %v3741 = vpop.permute.xlu0 %3740
        %v3744 = vadd.f32 %v3729, %v3739
        %v3745 = vadd.f32 %v3730, %v3741
        %v3746 = vld [vmem:[%s342 + $0x1] sm:$0xff]
        %v3747 = vld [vmem:[%s342 + $0x9] sm:$0xff]
        %s3748 = sadd.s32 %s3709, 3
        %s3749 = sld [smem:[#allocation4 + %s3748]]
        %v3750 = vstv %s3749
        %v3751 = vmul.f32 %v3746, %v3750
        %v3752 = vmul.f32 %v3747, %v3750
        %v3753 = vadd.f32 %v3744, %v3751
        %v3754 = vadd.f32 %v3745, %v3752
        %s3755 = sadd.s32 %s3709, 4
        %s3756 = sld [smem:[#allocation4 + %s3755]]
        %v3757 = vstv %s3756
        %v3758 = vmul.f32 %v3746, %v3757
        %v3759 = vmul.f32 %v3747, %v3757
        %3762 = vrot.lane.b32.xlu0 %v3758, 127
        %v3763 = vpop.permute.xlu0 %3762
        %3764 = vrot.lane.b32.xlu0 %v3759, 127
        %v3765 = vpop.permute.xlu0 %3764
        %v3768 = vadd.f32 %v3753, %v3763
        %v3769 = vadd.f32 %v3754, %v3765
        %s3770 = sadd.s32 %s3709, 5
        %s3771 = sld [smem:[#allocation4 + %s3770]]
        %v3772 = vstv %s3771
        %v3773 = vmul.f32 %v3746, %v3772
        %v3774 = vmul.f32 %v3747, %v3772
        %3777 = vrot.lane.b32.xlu0 %v3773, 126
        %v3778 = vpop.permute.xlu0 %3777
        %3779 = vrot.lane.b32.xlu0 %v3774, 126
        %v3780 = vpop.permute.xlu0 %3779
        %v3783 = vadd.f32 %v3768, %v3778
        %v3784 = vadd.f32 %v3769, %v3780
        %v3785 = vld [vmem:[%s342 + $0x2] sm:$0xff]
        %v3786 = vld [vmem:[%s342 + $0xa] sm:$0xff]
        %s3787 = sadd.s32 %s3709, 6
        %s3788 = sld [smem:[#allocation4 + %s3787]]
        %v3789 = vstv %s3788
        %v3790 = vmul.f32 %v3785, %v3789
        %v3791 = vmul.f32 %v3786, %v3789
        %v3792 = vadd.f32 %v3783, %v3790
        %v3793 = vadd.f32 %v3784, %v3791
        %s3794 = sadd.s32 %s3709, 7
        %s3795 = sld [smem:[#allocation4 + %s3794]]
        %v3796 = vstv %s3795
        %v3797 = vmul.f32 %v3785, %v3796
        %v3798 = vmul.f32 %v3786, %v3796
        %3801 = vrot.lane.b32.xlu0 %v3797, 127
        %v3802 = vpop.permute.xlu0 %3801
        %3803 = vrot.lane.b32.xlu0 %v3798, 127
        %v3804 = vpop.permute.xlu0 %3803
        %v3807 = vadd.f32 %v3792, %v3802
        %v3808 = vadd.f32 %v3793, %v3804
        %s3809 = sadd.s32 %s3709, 8
        %s3810 = sld [smem:[#allocation4 + %s3809]]
        %v3811 = vstv %s3810
        %v3812 = vmul.f32 %v3785, %v3811
        %v3813 = vmul.f32 %v3786, %v3811
        %3816 = vrot.lane.b32.xlu0 %v3812, 126
        %v3817 = vpop.permute.xlu0 %3816
        %3818 = vrot.lane.b32.xlu0 %v3813, 126
        %v3819 = vpop.permute.xlu0 %3818
        %v3822 = vadd.f32 %v3807, %v3817
        %v3823 = vadd.f32 %v3808, %v3819
        %v3824 = vld [vmem:[%s462] sm:$0xff]
        %v3825 = vld [vmem:[%s462 + $0x8] sm:$0xff]
        %s3826 = sadd.s32 %s3707, 2
        %s3827 = smul.u32 %s3826, 9
        %s3828 = sld [smem:[#allocation4 + %s3827]]
        %v3829 = vstv %s3828
        %v3830 = vmul.f32 %v3824, %v3829
        %v3831 = vmul.f32 %v3825, %v3829
        %v3832 = vadd.f32 %v3822, %v3830
        %v3833 = vadd.f32 %v3823, %v3831
        %s3834 = sadd.s32 %s3827, 1
        %s3835 = sld [smem:[#allocation4 + %s3834]]
        %v3836 = vstv %s3835
        %v3837 = vmul.f32 %v3824, %v3836
        %v3838 = vmul.f32 %v3825, %v3836
        %3841 = vrot.lane.b32.xlu0 %v3837, 127
        %v3842 = vpop.permute.xlu0 %3841
        %3843 = vrot.lane.b32.xlu0 %v3838, 127
        %v3844 = vpop.permute.xlu0 %3843
        %v3847 = vadd.f32 %v3832, %v3842
        %v3848 = vadd.f32 %v3833, %v3844
        %s3849 = sadd.s32 %s3827, 2
        %s3850 = sld [smem:[#allocation4 + %s3849]]
        %v3851 = vstv %s3850
        %v3852 = vmul.f32 %v3824, %v3851
        %v3853 = vmul.f32 %v3825, %v3851
        %3856 = vrot.lane.b32.xlu0 %v3852, 126
        %v3857 = vpop.permute.xlu0 %3856
        %3858 = vrot.lane.b32.xlu0 %v3853, 126
        %v3859 = vpop.permute.xlu0 %3858
        %v3862 = vadd.f32 %v3847, %v3857
        %v3863 = vadd.f32 %v3848, %v3859
        %v3864 = vld [vmem:[%s462 + $0x1] sm:$0xff]
        %v3865 = vld [vmem:[%s462 + $0x9] sm:$0xff]
        %s3866 = sadd.s32 %s3827, 3
        %s3867 = sld [smem:[#allocation4 + %s3866]]
        %v3868 = vstv %s3867
        %v3869 = vmul.f32 %v3864, %v3868
        %v3870 = vmul.f32 %v3865, %v3868
        %v3871 = vadd.f32 %v3862, %v3869
        %v3872 = vadd.f32 %v3863, %v3870
        %s3873 = sadd.s32 %s3827, 4
        %s3874 = sld [smem:[#allocation4 + %s3873]]
        %v3875 = vstv %s3874
        %v3876 = vmul.f32 %v3864, %v3875
        %v3877 = vmul.f32 %v3865, %v3875
        %3880 = vrot.lane.b32.xlu0 %v3876, 127
        %v3881 = vpop.permute.xlu0 %3880
        %3882 = vrot.lane.b32.xlu0 %v3877, 127
        %v3883 = vpop.permute.xlu0 %3882
        %v3886 = vadd.f32 %v3871, %v3881
        %v3887 = vadd.f32 %v3872, %v3883
        %s3888 = sadd.s32 %s3827, 5
        %s3889 = sld [smem:[#allocation4 + %s3888]]
        %v3890 = vstv %s3889
        %v3891 = vmul.f32 %v3864, %v3890
        %v3892 = vmul.f32 %v3865, %v3890
        %3895 = vrot.lane.b32.xlu0 %v3891, 126
        %v3896 = vpop.permute.xlu0 %3895
        %3897 = vrot.lane.b32.xlu0 %v3892, 126
        %v3898 = vpop.permute.xlu0 %3897
        %v3901 = vadd.f32 %v3886, %v3896
        %v3902 = vadd.f32 %v3887, %v3898
        %v3903 = vld [vmem:[%s462 + $0x2] sm:$0xff]
        %v3904 = vld [vmem:[%s462 + $0xa] sm:$0xff]
        %s3905 = sadd.s32 %s3827, 6
        %s3906 = sld [smem:[#allocation4 + %s3905]]
        %v3907 = vstv %s3906
        %v3908 = vmul.f32 %v3903, %v3907
        %v3909 = vmul.f32 %v3904, %v3907
        %v3910 = vadd.f32 %v3901, %v3908
        %v3911 = vadd.f32 %v3902, %v3909
        %s3912 = sadd.s32 %s3827, 7
        %s3913 = sld [smem:[#allocation4 + %s3912]]
        %v3914 = vstv %s3913
        %v3915 = vmul.f32 %v3903, %v3914
        %v3916 = vmul.f32 %v3904, %v3914
        %3919 = vrot.lane.b32.xlu0 %v3915, 127
        %v3920 = vpop.permute.xlu0 %3919
        %3921 = vrot.lane.b32.xlu0 %v3916, 127
        %v3922 = vpop.permute.xlu0 %3921
        %v3925 = vadd.f32 %v3910, %v3920
        %v3926 = vadd.f32 %v3911, %v3922
        %s3927 = sadd.s32 %s3827, 8
        %s3928 = sld [smem:[#allocation4 + %s3927]]
        %v3929 = vstv %s3928
        %v3930 = vmul.f32 %v3903, %v3929
        %v3931 = vmul.f32 %v3904, %v3929
        %3934 = vrot.lane.b32.xlu0 %v3930, 126
        %v3935 = vpop.permute.xlu0 %3934
        %3936 = vrot.lane.b32.xlu0 %v3931, 126
        %v3937 = vpop.permute.xlu0 %3936
        %v3940 = vadd.f32 %v3925, %v3935
        %v3941 = vadd.f32 %v3926, %v3937
        %v3942 = vld [vmem:[%s581] sm:$0xff]
        %v3943 = vld [vmem:[%s581 + $0x8] sm:$0xff]
        %s3944 = sadd.s32 %s3707, 3
        %s3945 = smul.u32 %s3944, 9
        %s3946 = sld [smem:[#allocation4 + %s3945]]
        %v3947 = vstv %s3946
        %v3948 = vmul.f32 %v3942, %v3947
        %v3949 = vmul.f32 %v3943, %v3947
        %v3950 = vadd.f32 %v3940, %v3948
        %v3951 = vadd.f32 %v3941, %v3949
        %s3952 = sadd.s32 %s3945, 1
        %s3953 = sld [smem:[#allocation4 + %s3952]]
        %v3954 = vstv %s3953
        %v3955 = vmul.f32 %v3942, %v3954
        %v3956 = vmul.f32 %v3943, %v3954
        %3959 = vrot.lane.b32.xlu0 %v3955, 127
        %v3960 = vpop.permute.xlu0 %3959
        %3961 = vrot.lane.b32.xlu0 %v3956, 127
        %v3962 = vpop.permute.xlu0 %3961
        %v3965 = vadd.f32 %v3950, %v3960
        %v3966 = vadd.f32 %v3951, %v3962
        %s3967 = sadd.s32 %s3945, 2
        %s3968 = sld [smem:[#allocation4 + %s3967]]
        %v3969 = vstv %s3968
        %v3970 = vmul.f32 %v3942, %v3969
        %v3971 = vmul.f32 %v3943, %v3969
        %3974 = vrot.lane.b32.xlu0 %v3970, 126
        %v3975 = vpop.permute.xlu0 %3974
        %3976 = vrot.lane.b32.xlu0 %v3971, 126
        %v3977 = vpop.permute.xlu0 %3976
        %v3980 = vadd.f32 %v3965, %v3975
        %v3981 = vadd.f32 %v3966, %v3977
        %v3982 = vld [vmem:[%s581 + $0x1] sm:$0xff]
        %v3983 = vld [vmem:[%s581 + $0x9] sm:$0xff]
        %s3984 = sadd.s32 %s3945, 3
        %s3985 = sld [smem:[#allocation4 + %s3984]]
        %v3986 = vstv %s3985
        %v3987 = vmul.f32 %v3982, %v3986
        %v3988 = vmul.f32 %v3983, %v3986
        %v3989 = vadd.f32 %v3980, %v3987
        %v3990 = vadd.f32 %v3981, %v3988
        %s3991 = sadd.s32 %s3945, 4
        %s3992 = sld [smem:[#allocation4 + %s3991]]
        %v3993 = vstv %s3992
        %v3994 = vmul.f32 %v3982, %v3993
        %v3995 = vmul.f32 %v3983, %v3993
        %3998 = vrot.lane.b32.xlu0 %v3994, 127
        %v3999 = vpop.permute.xlu0 %3998
        %4000 = vrot.lane.b32.xlu0 %v3995, 127
        %v4001 = vpop.permute.xlu0 %4000
        %v4004 = vadd.f32 %v3989, %v3999
        %v4005 = vadd.f32 %v3990, %v4001
        %s4006 = sadd.s32 %s3945, 5
        %s4007 = sld [smem:[#allocation4 + %s4006]]
        %v4008 = vstv %s4007
        %v4009 = vmul.f32 %v3982, %v4008
        %v4010 = vmul.f32 %v3983, %v4008
        %4013 = vrot.lane.b32.xlu0 %v4009, 126
        %v4014 = vpop.permute.xlu0 %4013
        %4015 = vrot.lane.b32.xlu0 %v4010, 126
        %v4016 = vpop.permute.xlu0 %4015
        %v4019 = vadd.f32 %v4004, %v4014
        %v4020 = vadd.f32 %v4005, %v4016
        %v4021 = vld [vmem:[%s581 + $0x2] sm:$0xff]
        %v4022 = vld [vmem:[%s581 + $0xa] sm:$0xff]
        %s4023 = sadd.s32 %s3945, 6
        %s4024 = sld [smem:[#allocation4 + %s4023]]
        %v4025 = vstv %s4024
        %v4026 = vmul.f32 %v4021, %v4025
        %v4027 = vmul.f32 %v4022, %v4025
        %v4028 = vadd.f32 %v4019, %v4026
        %v4029 = vadd.f32 %v4020, %v4027
        %s4030 = sadd.s32 %s3945, 7
        %s4031 = sld [smem:[#allocation4 + %s4030]]
        %v4032 = vstv %s4031
        %v4033 = vmul.f32 %v4021, %v4032
        %v4034 = vmul.f32 %v4022, %v4032
        %4037 = vrot.lane.b32.xlu0 %v4033, 127
        %v4038 = vpop.permute.xlu0 %4037
        %4039 = vrot.lane.b32.xlu0 %v4034, 127
        %v4040 = vpop.permute.xlu0 %4039
        %v4043 = vadd.f32 %v4028, %v4038
        %v4044 = vadd.f32 %v4029, %v4040
        %s4045 = sadd.s32 %s3945, 8
        %s4046 = sld [smem:[#allocation4 + %s4045]]
        %v4047 = vstv %s4046
        %v4048 = vmul.f32 %v4021, %v4047
        %v4049 = vmul.f32 %v4022, %v4047
        %4052 = vrot.lane.b32.xlu0 %v4048, 126
        %v4053 = vpop.permute.xlu0 %4052
        %4054 = vrot.lane.b32.xlu0 %v4049, 126
        %v4055 = vpop.permute.xlu0 %4054
        %v4058 = vadd.f32 %v4043, %v4053
        %v4059 = vadd.f32 %v4044, %v4055
        %v4060 = vmax.f32 %v4058, 0.0
        %v4061 = vmax.f32 %v4059, 0.0
        %s4062 = scalar_lea.vmem %s135, 112 [#allocation6]
        %4063 = vst.msk [vmem:[%s4062] sm:$0xff] %vm702, %v4060
        %4064 = vst.msk [vmem:[%s4062 + $0x8] sm:$0xff] %vm702, %v4061
        %s4065 = sand.u32 %s75, 1
        %s4066 = scalar_lea.sflag [#allocation7], %s4065
        %s4067 = sand.u32 %s75, 1
        %s4068 = smul.addr %s4067, 128
        %s4069 = scalar_lea.vmem [#allocation6], %s4068
        // Predicated region
        $region29: #{conv_bn_relu.1} parent=23 // pred_check
          %p4070 = pneg %p85
        $region30: #{conv_bn_relu.1} parent=23 // pred_check_branch
          %4072 = sbr.rel (%p4070) target = $region32
        $region31: #{conv_bn_relu.1} parent=23 // pred_region
          %s4073 = smul.u32 8, %s32
          %s4075 = ssub.s32 2048, 2048
          %4076 = vsyncadd %s4066, %s4075
          %s4077 = smul.addr %s4073, 2
          %s4078 = smul.addr %s31, 16
          %s4079 = sadd.s32 %s4077, %s4078
          %s4080 = smul.addr %s4079, 128
          %s4081 = scalar_lea.hbm %s3, %s4080
          %s4082 = sshll.u32 %s4069, 4
          %s4083 = int_to_ptr.vmem [resolvable:$true] %s4082
          %4088 = dma.vmem_to_hbm [thread:$0]  %s4083, 2048, %s4081, %s4066, 128, 128, 8
        $region32: #{conv_bn_relu.1} parent=23 // pred_fallthru
          _
      $region24: #{conv_bn_relu.1} parent=5 // pred_fallthru
        _
      %p4089 = scmp.le.s32.totalorder 2, %s22
      // Predicated region
      $region33: #{conv_bn_relu.1} parent=5 // pred_check
        %p4090 = pneg %p4089
      $region34: #{conv_bn_relu.1} parent=5 // pred_check_branch
        %4092 = sbr.rel (%p4090) target = $region36
      $region35: #{conv_bn_relu.1} parent=5 // pred_region
        %s4093 = ssub.s32 %s22, 2
        // Predicated region
        $region37: #{conv_bn_relu.1} parent=35 // pred_check
          %p4094 = pneg %p91
        $region38: #{conv_bn_relu.1} parent=35 // pred_check_branch
          %4096 = sbr.rel (%p4094) target = $region40
        $region39: #{conv_bn_relu.1} parent=35 // pred_region
          %s4097 = sand.u32 %s76, 1
          %s4098 = scalar_lea.sflag [#allocation7], %s4097
          %s4099 = sand.u32 %s76, 1
          %s4100 = smul.addr %s4099, 128
          %s4101 = scalar_lea.vmem [#allocation6], %s4100
          %4102 = dma.done %s4098, 2048
        $region40: #{conv_bn_relu.1} parent=35 // pred_fallthru
          _
      $region36: #{conv_bn_relu.1} parent=5 // pred_fallthru
        _
    $region6: #{conv_bn_relu.1} parent=1 // loop_footer
      %s26 = sadd.s32 1, %s22
    $region7: #{conv_bn_relu.1} parent=1 // loop_footer_branch
      %21 = sbr.rel target = $region3
    $region8: #{conv_bn_relu.1} parent=1 // loop_exit
      _
    %4103 = vsyncpa [#allocation7], 1
    %s4104 = scalar_lea.sflag [#allocation7], 1
    %4105 = vsyncpa %s4104, 1

</llo_original>
